<compile_context>
chip_gen: v6e
topology: v6e:2x2x1
jax: 0.10.0
libtpu: 0.0.40
codegen_flags: <defaults>
</compile_context>

<pallas_src>
import functools

import jax
import jax.numpy as jnp
from jax.experimental import pallas as pl
from jax.experimental.pallas import tpu as pltpu

K = 5    # conv kernel size for all three convs
PAD = 2  # padding=(2, 2), stride=1 -> "same" spatial size


def _round_up(x, m):
    return (x + m - 1) // m * m


# --------------- conv1: spatial-in-lanes VPU conv + pool + sigmoid ----------
def _conv1_vpu_kernel(x_ref, w_ref, b_ref, o_ref, pad_ref, *, NB, H, W, Cout):
    # x_ref:   (NB, H, W)        f32, W in the lane axis (dense, no Cin padding)
    # w_ref:   (K*K, Cout)       f32 in SMEM (scalar weights)
    # b_ref:   (Cout,)           f32 in SMEM
    # o_ref:   (NB, Cout, H//2, W//2)   NCHW output (full-lane stores)
    # pad_ref: (NB, H+4, W+4)    persistent VMEM scratch
    Hp, Wp = H + 2 * PAD, W + 2 * PAD

    # Zero ONLY the 2-pixel halo strips (order-independent -> safe with the
    # "parallel" batch axis); the interior is fully overwritten every step.
    pad_ref[:, :PAD, :] = jnp.zeros((NB, PAD, Wp), jnp.float32)
    pad_ref[:, PAD + H:, :] = jnp.zeros((NB, PAD, Wp), jnp.float32)
    pad_ref[:, :, :PAD] = jnp.zeros((NB, Hp, PAD), jnp.float32)
    pad_ref[:, :, PAD + W:] = jnp.zeros((NB, Hp, PAD), jnp.float32)
    pad_ref[:, PAD:PAD + H, PAD:PAD + W] = x_ref[...]
    xp = pad_ref[...]

    # 25 shifted taps (shared across output channels).
    taps = [xp[:, ky:ky + H, kx:kx + W] for ky in range(K) for kx in range(K)]

    Ho, Wo = H // 2, W // 2
    # 0/1 selection matrices for the lane-direction (W) pool: avoids lane-dim
    # reshapes, the two small matmuls ride the otherwise idle MXU.
    rows = jax.lax.broadcasted_iota(jnp.int32, (W, Wo), 0)
    cols = jax.lax.broadcasted_iota(jnp.int32, (W, Wo), 1)
    sel_even = (rows == 2 * cols).astype(jnp.float32)
    sel_odd = (rows == 2 * cols + 1).astype(jnp.float32)

    for co in range(Cout):
        acc = w_ref[0, co] * taps[0]
        for t in range(1, K * K):
            acc = acc + w_ref[t, co] * taps[t]
        acc = acc + b_ref[co]
        # H (sublane) pool: split the sublane dim, lane dim untouched.
        a2 = acc.reshape(NB, Ho, 2, W)
        hmax = jnp.maximum(a2[:, :, 0, :], a2[:, :, 1, :])          # (NB,Ho,W)
        flat = hmax.reshape(NB * Ho, W)
        pooled = jnp.maximum(
            jnp.dot(flat, sel_even, preferred_element_type=jnp.float32),
            jnp.dot(flat, sel_odd, preferred_element_type=jnp.float32))
        o_ref[:, co, :, :] = jax.nn.sigmoid(pooled).reshape(NB, Ho, Wo)


def conv1_stage(x_nhw, w_flat, b, *, nb=1):
    """Fused conv1(5x5, pad 2) + maxpool(2,2) + sigmoid, Cin == 1."""
    N, H, W_ = x_nhw.shape
    Cout = w_flat.shape[1]
    assert N % nb == 0
    Ho, Wo = H // 2, W_ // 2
    kern = functools.partial(_conv1_vpu_kernel, NB=nb, H=H, W=W_, Cout=Cout)
    return pl.pallas_call(
        kern,
        out_shape=jax.ShapeDtypeStruct((N, Cout, Ho, Wo), jnp.float32),
        grid=(N // nb,),
        in_specs=[
            pl.BlockSpec((nb, H, W_), lambda n: (n, 0, 0)),
            pl.BlockSpec(memory_space=pltpu.MemorySpace.SMEM),
            pl.BlockSpec(memory_space=pltpu.MemorySpace.SMEM),
        ],
        out_specs=pl.BlockSpec((nb, Cout, Ho, Wo), lambda n: (n, 0, 0, 0)),
        scratch_shapes=[
            pltpu.VMEM((nb, H + 2 * PAD, W_ + 2 * PAD), jnp.float32)],
        compiler_params=pltpu.CompilerParams(
            dimension_semantics=("parallel",)),   # shard batch across TCs
    )(x_nhw, w_flat, b)


# ---------- conv2/conv3: lane-padded im2col + MXU (+ pool + sigmoid) --------
def _conv_im2col_kernel(x_ref, w_ref, b_ref, o_ref, pad_ref, patch_ref, *,
                        NB, H, W, Cin, Cout, Kpad, pool):
    # x_ref:     (NB, H, W, Cin)        NHWC input block
    # w_ref:     (Kpad, Cout)           im2col weights, rows zero-padded to Kpad
    # b_ref:     (1, Cout)
    # o_ref:     (NB, H, W, Cout) or (NB, H//2, W//2, Cout) when pool=True
    # pad_ref:   (NB, H+4, W+4, Cin)    zero-padded input scratch
    # patch_ref: (NB, H, W, Kpad)       lane-padded im2col patches scratch
    Hp, Wp = H + 2 * PAD, W + 2 * PAD
    KKC = K * K * Cin

    # Halo-only zeroing (interior + real patch columns overwritten each step;
    # order-independent so it is safe under the "parallel" batch axis).
    pad_ref[:, :PAD, :, :] = jnp.zeros((NB, PAD, Wp, Cin), jnp.float32)
    pad_ref[:, PAD + H:, :, :] = jnp.zeros((NB, PAD, Wp, Cin), jnp.float32)
    pad_ref[:, :, :PAD, :] = jnp.zeros((NB, Hp, PAD, Cin), jnp.float32)
    pad_ref[:, :, PAD + W:, :] = jnp.zeros((NB, Hp, PAD, Cin), jnp.float32)
    pad_ref[:, PAD:PAD + H, PAD:PAD + W, :] = x_ref[...]
    if Kpad > KKC:
        patch_ref[:, :, :, KKC:] = jnp.zeros((NB, H, W, Kpad - KKC),
                                             jnp.float32)
    xp = pad_ref[...]

    # im2col taps written at static offsets (no 25-way concatenate); the
    # (ky, kx, cin) column order matches the weight reshape in prepare_params.
    for t in range(K * K):
        ky, kx = divmod(t, K)
        patch_ref[:, :, :, t * Cin:(t + 1) * Cin] = xp[:, ky:ky + H,
                                                       kx:kx + W, :]

    patches = patch_ref[...].reshape(NB * H * W, Kpad)
    acc = jnp.dot(patches, w_ref[...], preferred_element_type=jnp.float32)
    acc = acc + b_ref[...]                       # (NB*H*W, Cout) + (1, Cout)
    y = acc.reshape(NB, H, W, Cout)

    if pool:
        y = y.reshape(NB, H // 2, 2, W, Cout)
        y = jnp.maximum(y[:, :, 0], y[:, :, 1])           # (NB, H/2, W, Cout)
        y = y.reshape(NB, H // 2, W // 2, 2, Cout)
        y = jnp.maximum(y[:, :, :, 0], y[:, :, :, 1])     # (NB, H/2, W/2, Cout)
        o_ref[...] = jax.nn.sigmoid(y)
    else:
        o_ref[...] = y


def conv_im2col_stage(x_nhwc, w_flat, b, *, pool, nb=1):
    """Fused conv(5x5, pad 2, stride 1) [+ maxpool(2,2) + sigmoid], im2col/MXU."""
    N, H, W_, Cin = x_nhwc.shape
    Kpad, Cout = w_flat.shape
    assert N % nb == 0 and Kpad % 128 == 0 and Kpad >= K * K * Cin
    Ho, Wo = (H // 2, W_ // 2) if pool else (H, W_)
    kern = functools.partial(_conv_im2col_kernel, NB=nb, H=H, W=W_, Cin=Cin,
                             Cout=Cout, Kpad=Kpad, pool=pool)
    flops = 2 * N * H * W_ * Kpad * Cout
    bytes_accessed = 4 * (N * H * W_ * Cin + Kpad * Cout + N * Ho * Wo * Cout)
    transc = N * Ho * Wo * Cout if pool else 0
    return pl.pallas_call(
        kern,
        out_shape=jax.ShapeDtypeStruct((N, Ho, Wo, Cout), jnp.float32),
        grid=(N // nb,),
        in_specs=[
            pl.BlockSpec((nb, H, W_, Cin), lambda n: (n, 0, 0, 0)),
            pl.BlockSpec((Kpad, Cout), lambda n: (0, 0)),
            pl.BlockSpec((1, Cout), lambda n: (0, 0)),
        ],
        out_specs=pl.BlockSpec((nb, Ho, Wo, Cout), lambda n: (n, 0, 0, 0)),
        scratch_shapes=[
            pltpu.VMEM((nb, H + 2 * PAD, W_ + 2 * PAD, Cin), jnp.float32),
            pltpu.VMEM((nb, H, W_, Kpad), jnp.float32),
        ],
        compiler_params=pltpu.CompilerParams(
            dimension_semantics=("parallel",)),
        cost_estimate=pl.CostEstimate(flops=flops, transcendentals=transc,
                                      bytes_accessed=bytes_accessed),
    )(x_nhwc, w_flat, b.reshape(1, Cout))


# ------------ FC head: fc1 partials (cross-core F split) + combine ----------
def _fc1_partial_kernel(x_ref, w1_ref, o_ref):
    # x_ref: (N, tf) f32, w1_ref: (tf, H1) bf16, o_ref: (1, N, H1) f32 partial.
    @pl.when(pl.program_id(1) == 0)
    def _():
        o_ref[...] = jnp.zeros_like(o_ref)
    # fw1 streams from HBM as bf16 (the head is weight-bandwidth-bound); the
    # cheap in-VMEM upcast keeps a full f32 accumulate in the output block.
    o_ref[...] += jnp.dot(
        x_ref[...], w1_ref[...].astype(jnp.float32),
        preferred_element_type=jnp.float32)[None, :, :]


def _fc_combine_kernel(p_ref, b1_ref, w2_ref, b2_ref, o_ref):
    h = jnp.sum(p_ref[...], axis=0) + b1_ref[...]            # (N, H1)
    logits = jnp.dot(h, w2_ref[...],
                     preferred_element_type=jnp.float32) + b2_ref[...]
    m = jnp.max(logits, axis=1, keepdims=True)
    z = logits - m
    o_ref[...] = z - jnp.log(jnp.sum(jnp.exp(z), axis=1, keepdims=True))


def _pick_tile_f(Fp, cap):
    """Largest 128-multiple divisor of Fp that is <= cap (Fp is a 128-mult)."""
    best, t = 128, 128
    while t <= min(cap, Fp):
        if Fp % t == 0:
            best = t
        t += 128
    return best


def fc_head(x_flat, w1_bf16, b1, w2, b2, *, cap=32768):
    N, F = x_flat.shape
    H1 = w1_bf16.shape[1]
    C = w2.shape[1]
    # F is a 128-multiple by construction (conv3 Cout padded to 128).
    assert F % 128 == 0
    # 2-way split of the reduction across a leading "parallel" axis so both
    # v7x TensorCores stream weights (harmless sequential outer loop on
    # single-TC v5e/v6e).
    P = 2 if F % 256 == 0 else 1
    Fp = F // P
    tf_ = _pick_tile_f(Fp, cap)
    KS = Fp // tf_
    vmem_bytes = 2 * (tf_ * H1 * 2 + N * tf_ * 4) + P * N * H1 * 4 + (16 << 20)

    partial = pl.pallas_call(
        _fc1_partial_kernel,
        out_shape=jax.ShapeDtypeStruct((P, N, H1), jnp.float32),
        grid=(P, KS),
        in_specs=[
            pl.BlockSpec((N, tf_), lambda p, k: (0, p * KS + k)),
            pl.BlockSpec((tf_, H1), lambda p, k: (p * KS + k, 0)),
        ],
        out_specs=pl.BlockSpec((1, N, H1), lambda p, k: (p, 0, 0)),
        compiler_params=pltpu.CompilerParams(
            dimension_semantics=("parallel", "arbitrary"),
            vmem_limit_bytes=int(vmem_bytes)),
        cost_estimate=pl.CostEstimate(
            flops=2 * N * F * H1, transcendentals=0,
            bytes_accessed=F * H1 * 2 + N * F * 4 + P * N * H1 * 4),
    )(x_flat, w1_bf16)

    # Tiny combine: sum partials, +b1, fc2, log_softmax (single step, all VMEM).
    return pl.pallas_call(
        _fc_combine_kernel,
        out_shape=jax.ShapeDtypeStruct((N, C), jnp.float32),
    )(partial, b1.reshape(1, H1), w2, b2.reshape(1, C))


# ------------------------------ param preparation ---------------------------
COUT3_PAD = 128  # conv3 Cout 120 -> 128 (lane-exact stores, F a 128-multiple)


def prepare_params(params, image_dim):
    """One-time weight re-layout (init-time, not per forward):
      * conv1 HWIO weights -> (K*K, 6) SMEM scalar table.
      * conv2/conv3 HWIO weights -> im2col (Kpad, Cout) with K rows zero-padded
        to a 128-multiple; conv3 additionally gets Cout padded 120 -> 128.
      * fc1 rows permuted from NCHW-flatten to NHWC-flatten order (channel dim
        padded to 128 with zero rows) and stored in bfloat16."""
    Hc = image_dim // 4

    def im2col_w(w, kpad, cout_pad=None):
        kk, cout = K * K * w.shape[2], w.shape[3]
        wf = w.reshape(kk, cout)
        wf = jnp.pad(wf, ((0, kpad - kk), (0, 0)))
        if cout_pad is not None and cout_pad > cout:
            wf = jnp.pad(wf, ((0, 0), (0, cout_pad - cout)))
        return wf

    b3p = jnp.pad(params["b3"], (0, COUT3_PAD - params["b3"].shape[0]))

    fw1 = params["fw1"]
    H1 = fw1.shape[1]
    fw1 = fw1.reshape(120, Hc, Hc, H1)
    fw1 = jnp.pad(fw1, ((0, COUT3_PAD - 120), (0, 0), (0, 0), (0, 0)))
    fw1 = fw1.transpose(1, 2, 0, 3).reshape(Hc * Hc * COUT3_PAD, H1)

    return {
        "w1": params["w1"].reshape(K * K, params["w1"].shape[3]),  # (25, 6)
        "b1": params["b1"],
        "w2": im2col_w(params["w2"], _round_up(K * K * 6, 128)),   # (256, 16)
        "b2": params["b2"],
        "w3": im2col_w(params["w3"], _round_up(K * K * 16, 128),
                       COUT3_PAD),                                 # (512, 128)
        "b3": b3p,
        "fw1": fw1.astype(jnp.bfloat16),
        "fb1": params["fb1"],
        "fw2": params["fw2"],
        "fb2": params["fb2"],
    }


# ------------------------------ full forward --------------------------------
def forward(prepped, x_nchw, *, nb=1):
    p = prepped
    N, _, H, W_ = x_nchw.shape
    x = x_nchw.astype(jnp.float32).reshape(N, H, W_)        # Cin == 1 squeeze
    x = conv1_stage(x, p["w1"], p["b1"], nb=nb)             # (N, 6, H/2, W/2)
    x = jnp.transpose(x, (0, 2, 3, 1))                      # tiny NCHW->NHWC
    x = conv_im2col_stage(x, p["w2"], p["b2"], pool=True, nb=nb)
    x = conv_im2col_stage(x, p["w3"], p["b3"], pool=False, nb=nb)
    # NHWC flatten is a free contiguous reshape; fw1 rows were permuted (and
    # channel-padded) at init to match PyTorch's NCHW `X.view(-1, 120*H*W)`.
    x = x.reshape(N, -1)
    return fc_head(x, p["fw1"], p["fb1"], p["fw2"], p["fb2"])


# ------------------------- pure-JAX reference (check) -----------------------
def reference_forward(params, x_nchw):
    x = jnp.transpose(x_nchw, (0, 2, 3, 1)).astype(jnp.float32)

    def conv(x, w, b):
        y = jax.lax.conv_general_dilated(
            x, w, window_strides=(1, 1), padding=((PAD, PAD), (PAD, PAD)),
            dimension_numbers=("NHWC", "HWIO", "NHWC"))
        return y + b[None, None, None, :]

    def pool_sig(x):
        y = jax.lax.reduce_window(x, -jnp.inf, jax.lax.max,
                                  (1, 2, 2, 1), (1, 2, 2, 1), "VALID")
        return jax.nn.sigmoid(y)

    x = pool_sig(conv(x, params["w1"], params["b1"]))
    x = pool_sig(conv(x, params["w2"], params["b2"]))
    x = conv(x, params["w3"], params["b3"])
    N = x.shape[0]
    x = jnp.transpose(x, (0, 3, 1, 2)).reshape(N, -1)   # NCHW flatten
    logits = x @ params["fw1"] + params["fb1"]
    logits = logits @ params["fw2"] + params["fb2"]
    return jax.nn.log_softmax(logits, axis=1)


if __name__ == "__main__":
    # Small shapes consistent with the module structure (module default is
    # image_dim=256; scaled down, fc1 in_features derived as 120*(dim//4)^2).
    image_dim = 16
    num_classes = 7
    N = 2

    key = jax.random.PRNGKey(0)
    ks = jax.random.split(key, 11)

    def nrm(k, shape, scale=0.05):
        return scale * jax.random.normal(k, shape, jnp.float32)

    fc1_in = 120 * (image_dim // 4) ** 2
    params = {
        "w1": nrm(ks[0], (K, K, 1, 6)),        # conv1: 1 -> 6    (HWIO)
        "b1": nrm(ks[1], (6,)),
        "w2": nrm(ks[2], (K, K, 6, 16)),       # conv2: 6 -> 16
        "b2": nrm(ks[3], (16,)),
        "w3": nrm(ks[4], (K, K, 16, 120)),     # conv3: 16 -> 120
        "b3": nrm(ks[5], (120,)),
        "fw1": nrm(ks[6], (fc1_in, 84), 0.01),      # fc1 (NCHW-flatten rows)
        "fb1": nrm(ks[7], (84,)),
        "fw2": nrm(ks[8], (84, num_classes), 0.1),  # fc2
        "fb2": nrm(ks[9], (num_classes,)),
    }
    x = jax.random.normal(ks[10], (N, 1, image_dim, image_dim), jnp.float32)

    prepped = prepare_params(params, image_dim)
    out = jax.block_until_ready(jax.jit(forward)(prepped, x))
    assert out.shape == (N, num_classes)

    # Tight check: kernel math vs a reference that uses the same bf16-rounded
    # fc1 weights (isolates kernel correctness from the intended quantization).
    params_q = dict(params)
    params_q["fw1"] = params["fw1"].astype(jnp.bfloat16).astype(jnp.float32)
    ref_q = reference_forward(params_q, x)
    assert bool(jnp.allclose(out, ref_q, atol=2e-3, rtol=2e-3)), (
        "max abs diff vs bf16-weight reference = %f"
        % float(jnp.max(jnp.abs(out - ref_q))))

    # Loose check vs the pure-f32 PyTorch-equivalent reference (difference is
    # only the intentional bf16 rounding of fc1's weight stream).
    ref = reference_forward(params, x)
    assert bool(jnp.allclose(out, ref, atol=2e-2, rtol=2e-2)), (
        "max abs diff vs f32 reference = %f"
        % float(jnp.max(jnp.abs(out - ref))))

    print("KERNEL_OK")
</pallas_src>

<mosaic_0001>
module attributes {stable_mosaic.version = 11 : i64} {
  func.func @_conv_im2col_kernel(%arg0: i32, %arg1: memref<1x4x4x16xf32, #tpu.memory_space<vmem>>, %arg2: memref<512x128xf32, #tpu.memory_space<vmem>>, %arg3: memref<1x128xf32, #tpu.memory_space<vmem>>, %arg4: memref<1x4x4x128xf32, #tpu.memory_space<vmem>>, %arg5: memref<1x8x8x16xf32, #tpu.memory_space<vmem>>, %arg6: memref<1x4x4x512xf32, #tpu.memory_space<vmem>>) attributes {dimension_semantics = [#tpu.dimension_semantics<parallel>], iteration_bounds = array<i64: 2>, scalar_prefetch = 0 : i64, scratch_operands = 2 : i64, tpu.core_type = #tpu.core_type<tc>, window_params = [{transform_indices = @transform_0, window_bounds = array<i64: 1, 4, 4, 16>}, {pipeline_mode = #tpu.pipeline_mode<synchronous>, transform_indices = @transform_1, window_bounds = array<i64: 512, 128>}, {pipeline_mode = #tpu.pipeline_mode<synchronous>, transform_indices = @transform_2, window_bounds = array<i64: 1, 128>}, {transform_indices = @transform_3, window_bounds = array<i64: 1, 4, 4, 128>}]} {
    %cst = arith.constant 0.000000e+00 : f32
    %0 = vector.broadcast %cst : f32 to vector<1x2x8x16xf32>
    %c0 = arith.constant 0 : index
    %c0_0 = arith.constant 0 : index
    %c0_1 = arith.constant 0 : index
    %c0_2 = arith.constant 0 : index
    %1 = vector.load %arg5[%c0, %c0_0, %c0_1, %c0_2] : memref<1x8x8x16xf32, #tpu.memory_space<vmem>>, vector<1x2x8x16xf32>
    tpu.vector_store %arg5[%c0, %c0_0, %c0_1, %c0_2], %0 {strides = array<i32>} : memref<1x8x8x16xf32, #tpu.memory_space<vmem>>, vector<1x2x8x16xf32>,
    %cst_3 = arith.constant 0.000000e+00 : f32
    %2 = vector.broadcast %cst_3 : f32 to vector<1x2x8x16xf32>
    %c0_4 = arith.constant 0 : index
    %c6 = arith.constant 6 : index
    %c0_5 = arith.constant 0 : index
    %c0_6 = arith.constant 0 : index
    %3 = vector.load %arg5[%c0_4, %c6, %c0_5, %c0_6] : memref<1x8x8x16xf32, #tpu.memory_space<vmem>>, vector<1x2x8x16xf32>
    tpu.vector_store %arg5[%c0_4, %c6, %c0_5, %c0_6], %2 {strides = array<i32>} : memref<1x8x8x16xf32, #tpu.memory_space<vmem>>, vector<1x2x8x16xf32>,
    %cst_7 = arith.constant 0.000000e+00 : f32
    %4 = vector.broadcast %cst_7 : f32 to vector<1x8x2x16xf32>
    %c0_8 = arith.constant 0 : index
    %c0_9 = arith.constant 0 : index
    %c0_10 = arith.constant 0 : index
    %c0_11 = arith.constant 0 : index
    %5 = vector.load %arg5[%c0_8, %c0_9, %c0_10, %c0_11] : memref<1x8x8x16xf32, #tpu.memory_space<vmem>>, vector<1x8x2x16xf32>
    tpu.vector_store %arg5[%c0_8, %c0_9, %c0_10, %c0_11], %4 {strides = array<i32>} : memref<1x8x8x16xf32, #tpu.memory_space<vmem>>, vector<1x8x2x16xf32>,
    %cst_12 = arith.constant 0.000000e+00 : f32
    %6 = vector.broadcast %cst_12 : f32 to vector<1x8x2x16xf32>
    %c0_13 = arith.constant 0 : index
    %c0_14 = arith.constant 0 : index
    %c6_15 = arith.constant 6 : index
    %c0_16 = arith.constant 0 : index
    %7 = vector.load %arg5[%c0_13, %c0_14, %c6_15, %c0_16] : memref<1x8x8x16xf32, #tpu.memory_space<vmem>>, vector<1x8x2x16xf32>
    tpu.vector_store %arg5[%c0_13, %c0_14, %c6_15, %c0_16], %6 {strides = array<i32>} : memref<1x8x8x16xf32, #tpu.memory_space<vmem>>, vector<1x8x2x16xf32>,
    %c0_17 = arith.constant 0 : index
    %c0_18 = arith.constant 0 : index
    %c0_19 = arith.constant 0 : index
    %c0_20 = arith.constant 0 : index
    %8 = vector.load %arg1[%c0_17, %c0_18, %c0_19, %c0_20] : memref<1x4x4x16xf32, #tpu.memory_space<vmem>>, vector<1x4x4x16xf32>
    %c0_21 = arith.constant 0 : index
    %c2 = arith.constant 2 : index
    %c2_22 = arith.constant 2 : index
    %c0_23 = arith.constant 0 : index
    %9 = vector.load %arg5[%c0_21, %c2, %c2_22, %c0_23] : memref<1x8x8x16xf32, #tpu.memory_space<vmem>>, vector<1x4x4x16xf32>
    tpu.vector_store %arg5[%c0_21, %c2, %c2_22, %c0_23], %8 {strides = array<i32>} : memref<1x8x8x16xf32, #tpu.memory_space<vmem>>, vector<1x4x4x16xf32>,
    %cst_24 = arith.constant 0.000000e+00 : f32
    %10 = vector.broadcast %cst_24 : f32 to vector<1x4x4x112xf32>
    %c0_25 = arith.constant 0 : index
    %c0_26 = arith.constant 0 : index
    %c0_27 = arith.constant 0 : index
    %c400 = arith.constant 400 : index
    %11 = vector.load %arg6[%c0_25, %c0_26, %c0_27, %c400] : memref<1x4x4x512xf32, #tpu.memory_space<vmem>>, vector<1x4x4x112xf32>
    tpu.vector_store %arg6[%c0_25, %c0_26, %c0_27, %c400], %10 {strides = array<i32>} : memref<1x4x4x512xf32, #tpu.memory_space<vmem>>, vector<1x4x4x112xf32>,
    %c0_28 = arith.constant 0 : index
    %c0_29 = arith.constant 0 : index
    %c0_30 = arith.constant 0 : index
    %c0_31 = arith.constant 0 : index
    %12 = vector.load %arg5[%c0_28, %c0_29, %c0_30, %c0_31] : memref<1x8x8x16xf32, #tpu.memory_space<vmem>>, vector<1x8x8x16xf32>
    %13 = vector.extract_strided_slice %12 {offsets = [0, 0, 0, 0], sizes = [1, 4, 4, 16], strides = [1, 1, 1, 1]} : vector<1x8x8x16xf32> to vector<1x4x4x16xf32>
    %c0_32 = arith.constant 0 : index
    %c0_33 = arith.constant 0 : index
    %c0_34 = arith.constant 0 : index
    %c0_35 = arith.constant 0 : index
    %14 = vector.load %arg6[%c0_32, %c0_33, %c0_34, %c0_35] : memref<1x4x4x512xf32, #tpu.memory_space<vmem>>, vector<1x4x4x16xf32>
    tpu.vector_store %arg6[%c0_32, %c0_33, %c0_34, %c0_35], %13 {strides = array<i32>} : memref<1x4x4x512xf32, #tpu.memory_space<vmem>>, vector<1x4x4x16xf32>,
    %15 = vector.extract_strided_slice %12 {offsets = [0, 0, 1, 0], sizes = [1, 4, 4, 16], strides = [1, 1, 1, 1]} : vector<1x8x8x16xf32> to vector<1x4x4x16xf32>
    %c0_36 = arith.constant 0 : index
    %c0_37 = arith.constant 0 : index
    %c0_38 = arith.constant 0 : index
    %c16 = arith.constant 16 : index
    %16 = vector.load %arg6[%c0_36, %c0_37, %c0_38, %c16] : memref<1x4x4x512xf32, #tpu.memory_space<vmem>>, vector<1x4x4x16xf32>
    tpu.vector_store %arg6[%c0_36, %c0_37, %c0_38, %c16], %15 {strides = array<i32>} : memref<1x4x4x512xf32, #tpu.memory_space<vmem>>, vector<1x4x4x16xf32>,
    %17 = vector.extract_strided_slice %12 {offsets = [0, 0, 2, 0], sizes = [1, 4, 4, 16], strides = [1, 1, 1, 1]} : vector<1x8x8x16xf32> to vector<1x4x4x16xf32>
    %c0_39 = arith.constant 0 : index
    %c0_40 = arith.constant 0 : index
    %c0_41 = arith.constant 0 : index
    %c32 = arith.constant 32 : index
    %18 = vector.load %arg6[%c0_39, %c0_40, %c0_41, %c32] : memref<1x4x4x512xf32, #tpu.memory_space<vmem>>, vector<1x4x4x16xf32>
    tpu.vector_store %arg6[%c0_39, %c0_40, %c0_41, %c32], %17 {strides = array<i32>} : memref<1x4x4x512xf32, #tpu.memory_space<vmem>>, vector<1x4x4x16xf32>,
    %19 = vector.extract_strided_slice %12 {offsets = [0, 0, 3, 0], sizes = [1, 4, 4, 16], strides = [1, 1, 1, 1]} : vector<1x8x8x16xf32> to vector<1x4x4x16xf32>
    %c0_42 = arith.constant 0 : index
    %c0_43 = arith.constant 0 : index
    %c0_44 = arith.constant 0 : index
    %c48 = arith.constant 48 : index
    %20 = vector.load %arg6[%c0_42, %c0_43, %c0_44, %c48] : memref<1x4x4x512xf32, #tpu.memory_space<vmem>>, vector<1x4x4x16xf32>
    tpu.vector_store %arg6[%c0_42, %c0_43, %c0_44, %c48], %19 {strides = array<i32>} : memref<1x4x4x512xf32, #tpu.memory_space<vmem>>, vector<1x4x4x16xf32>,
    %21 = vector.extract_strided_slice %12 {offsets = [0, 0, 4, 0], sizes = [1, 4, 4, 16], strides = [1, 1, 1, 1]} : vector<1x8x8x16xf32> to vector<1x4x4x16xf32>
    %c0_45 = arith.constant 0 : index
    %c0_46 = arith.constant 0 : index
    %c0_47 = arith.constant 0 : index
    %c64 = arith.constant 64 : index
    %22 = vector.load %arg6[%c0_45, %c0_46, %c0_47, %c64] : memref<1x4x4x512xf32, #tpu.memory_space<vmem>>, vector<1x4x4x16xf32>
    tpu.vector_store %arg6[%c0_45, %c0_46, %c0_47, %c64], %21 {strides = array<i32>} : memref<1x4x4x512xf32, #tpu.memory_space<vmem>>, vector<1x4x4x16xf32>,
    %23 = vector.extract_strided_slice %12 {offsets = [0, 1, 0, 0], sizes = [1, 4, 4, 16], strides = [1, 1, 1, 1]} : vector<1x8x8x16xf32> to vector<1x4x4x16xf32>
    %c0_48 = arith.constant 0 : index
    %c0_49 = arith.constant 0 : index
    %c0_50 = arith.constant 0 : index
    %c80 = arith.constant 80 : index
    %24 = vector.load %arg6[%c0_48, %c0_49, %c0_50, %c80] : memref<1x4x4x512xf32, #tpu.memory_space<vmem>>, vector<1x4x4x16xf32>
    tpu.vector_store %arg6[%c0_48, %c0_49, %c0_50, %c80], %23 {strides = array<i32>} : memref<1x4x4x512xf32, #tpu.memory_space<vmem>>, vector<1x4x4x16xf32>,
    %25 = vector.extract_strided_slice %12 {offsets = [0, 1, 1, 0], sizes = [1, 4, 4, 16], strides = [1, 1, 1, 1]} : vector<1x8x8x16xf32> to vector<1x4x4x16xf32>
    %c0_51 = arith.constant 0 : index
    %c0_52 = arith.constant 0 : index
    %c0_53 = arith.constant 0 : index
    %c96 = arith.constant 96 : index
    %26 = vector.load %arg6[%c0_51, %c0_52, %c0_53, %c96] : memref<1x4x4x512xf32, #tpu.memory_space<vmem>>, vector<1x4x4x16xf32>
    tpu.vector_store %arg6[%c0_51, %c0_52, %c0_53, %c96], %25 {strides = array<i32>} : memref<1x4x4x512xf32, #tpu.memory_space<vmem>>, vector<1x4x4x16xf32>,
    %27 = vector.extract_strided_slice %12 {offsets = [0, 1, 2, 0], sizes = [1, 4, 4, 16], strides = [1, 1, 1, 1]} : vector<1x8x8x16xf32> to vector<1x4x4x16xf32>
    %c0_54 = arith.constant 0 : index
    %c0_55 = arith.constant 0 : index
    %c0_56 = arith.constant 0 : index
    %c112 = arith.constant 112 : index
    %28 = vector.load %arg6[%c0_54, %c0_55, %c0_56, %c112] : memref<1x4x4x512xf32, #tpu.memory_space<vmem>>, vector<1x4x4x16xf32>
    tpu.vector_store %arg6[%c0_54, %c0_55, %c0_56, %c112], %27 {strides = array<i32>} : memref<1x4x4x512xf32, #tpu.memory_space<vmem>>, vector<1x4x4x16xf32>,
    %29 = vector.extract_strided_slice %12 {offsets = [0, 1, 3, 0], sizes = [1, 4, 4, 16], strides = [1, 1, 1, 1]} : vector<1x8x8x16xf32> to vector<1x4x4x16xf32>
    %c0_57 = arith.constant 0 : index
    %c0_58 = arith.constant 0 : index
    %c0_59 = arith.constant 0 : index
    %c128 = arith.constant 128 : index
    %30 = vector.load %arg6[%c0_57, %c0_58, %c0_59, %c128] : memref<1x4x4x512xf32, #tpu.memory_space<vmem>>, vector<1x4x4x16xf32>
    tpu.vector_store %arg6[%c0_57, %c0_58, %c0_59, %c128], %29 {strides = array<i32>} : memref<1x4x4x512xf32, #tpu.memory_space<vmem>>, vector<1x4x4x16xf32>,
    %31 = vector.extract_strided_slice %12 {offsets = [0, 1, 4, 0], sizes = [1, 4, 4, 16], strides = [1, 1, 1, 1]} : vector<1x8x8x16xf32> to vector<1x4x4x16xf32>
    %c0_60 = arith.constant 0 : index
    %c0_61 = arith.constant 0 : index
    %c0_62 = arith.constant 0 : index
    %c144 = arith.constant 144 : index
    %32 = vector.load %arg6[%c0_60, %c0_61, %c0_62, %c144] : memref<1x4x4x512xf32, #tpu.memory_space<vmem>>, vector<1x4x4x16xf32>
    tpu.vector_store %arg6[%c0_60, %c0_61, %c0_62, %c144], %31 {strides = array<i32>} : memref<1x4x4x512xf32, #tpu.memory_space<vmem>>, vector<1x4x4x16xf32>,
    %33 = vector.extract_strided_slice %12 {offsets = [0, 2, 0, 0], sizes = [1, 4, 4, 16], strides = [1, 1, 1, 1]} : vector<1x8x8x16xf32> to vector<1x4x4x16xf32>
    %c0_63 = arith.constant 0 : index
    %c0_64 = arith.constant 0 : index
    %c0_65 = arith.constant 0 : index
    %c160 = arith.constant 160 : index
    %34 = vector.load %arg6[%c0_63, %c0_64, %c0_65, %c160] : memref<1x4x4x512xf32, #tpu.memory_space<vmem>>, vector<1x4x4x16xf32>
    tpu.vector_store %arg6[%c0_63, %c0_64, %c0_65, %c160], %33 {strides = array<i32>} : memref<1x4x4x512xf32, #tpu.memory_space<vmem>>, vector<1x4x4x16xf32>,
    %35 = vector.extract_strided_slice %12 {offsets = [0, 2, 1, 0], sizes = [1, 4, 4, 16], strides = [1, 1, 1, 1]} : vector<1x8x8x16xf32> to vector<1x4x4x16xf32>
    %c0_66 = arith.constant 0 : index
    %c0_67 = arith.constant 0 : index
    %c0_68 = arith.constant 0 : index
    %c176 = arith.constant 176 : index
    %36 = vector.load %arg6[%c0_66, %c0_67, %c0_68, %c176] : memref<1x4x4x512xf32, #tpu.memory_space<vmem>>, vector<1x4x4x16xf32>
    tpu.vector_store %arg6[%c0_66, %c0_67, %c0_68, %c176], %35 {strides = array<i32>} : memref<1x4x4x512xf32, #tpu.memory_space<vmem>>, vector<1x4x4x16xf32>,
    %37 = vector.extract_strided_slice %12 {offsets = [0, 2, 2, 0], sizes = [1, 4, 4, 16], strides = [1, 1, 1, 1]} : vector<1x8x8x16xf32> to vector<1x4x4x16xf32>
    %c0_69 = arith.constant 0 : index
    %c0_70 = arith.constant 0 : index
    %c0_71 = arith.constant 0 : index
    %c192 = arith.constant 192 : index
    %38 = vector.load %arg6[%c0_69, %c0_70, %c0_71, %c192] : memref<1x4x4x512xf32, #tpu.memory_space<vmem>>, vector<1x4x4x16xf32>
    tpu.vector_store %arg6[%c0_69, %c0_70, %c0_71, %c192], %37 {strides = array<i32>} : memref<1x4x4x512xf32, #tpu.memory_space<vmem>>, vector<1x4x4x16xf32>,
    %39 = vector.extract_strided_slice %12 {offsets = [0, 2, 3, 0], sizes = [1, 4, 4, 16], strides = [1, 1, 1, 1]} : vector<1x8x8x16xf32> to vector<1x4x4x16xf32>
    %c0_72 = arith.constant 0 : index
    %c0_73 = arith.constant 0 : index
    %c0_74 = arith.constant 0 : index
    %c208 = arith.constant 208 : index
    %40 = vector.load %arg6[%c0_72, %c0_73, %c0_74, %c208] : memref<1x4x4x512xf32, #tpu.memory_space<vmem>>, vector<1x4x4x16xf32>
    tpu.vector_store %arg6[%c0_72, %c0_73, %c0_74, %c208], %39 {strides = array<i32>} : memref<1x4x4x512xf32, #tpu.memory_space<vmem>>, vector<1x4x4x16xf32>,
    %41 = vector.extract_strided_slice %12 {offsets = [0, 2, 4, 0], sizes = [1, 4, 4, 16], strides = [1, 1, 1, 1]} : vector<1x8x8x16xf32> to vector<1x4x4x16xf32>
    %c0_75 = arith.constant 0 : index
    %c0_76 = arith.constant 0 : index
    %c0_77 = arith.constant 0 : index
    %c224 = arith.constant 224 : index
    %42 = vector.load %arg6[%c0_75, %c0_76, %c0_77, %c224] : memref<1x4x4x512xf32, #tpu.memory_space<vmem>>, vector<1x4x4x16xf32>
    tpu.vector_store %arg6[%c0_75, %c0_76, %c0_77, %c224], %41 {strides = array<i32>} : memref<1x4x4x512xf32, #tpu.memory_space<vmem>>, vector<1x4x4x16xf32>,
    %43 = vector.extract_strided_slice %12 {offsets = [0, 3, 0, 0], sizes = [1, 4, 4, 16], strides = [1, 1, 1, 1]} : vector<1x8x8x16xf32> to vector<1x4x4x16xf32>
    %c0_78 = arith.constant 0 : index
    %c0_79 = arith.constant 0 : index
    %c0_80 = arith.constant 0 : index
    %c240 = arith.constant 240 : index
    %44 = vector.load %arg6[%c0_78, %c0_79, %c0_80, %c240] : memref<1x4x4x512xf32, #tpu.memory_space<vmem>>, vector<1x4x4x16xf32>
    tpu.vector_store %arg6[%c0_78, %c0_79, %c0_80, %c240], %43 {strides = array<i32>} : memref<1x4x4x512xf32, #tpu.memory_space<vmem>>, vector<1x4x4x16xf32>,
    %45 = vector.extract_strided_slice %12 {offsets = [0, 3, 1, 0], sizes = [1, 4, 4, 16], strides = [1, 1, 1, 1]} : vector<1x8x8x16xf32> to vector<1x4x4x16xf32>
    %c0_81 = arith.constant 0 : index
    %c0_82 = arith.constant 0 : index
    %c0_83 = arith.constant 0 : index
    %c256 = arith.constant 256 : index
    %46 = vector.load %arg6[%c0_81, %c0_82, %c0_83, %c256] : memref<1x4x4x512xf32, #tpu.memory_space<vmem>>, vector<1x4x4x16xf32>
    tpu.vector_store %arg6[%c0_81, %c0_82, %c0_83, %c256], %45 {strides = array<i32>} : memref<1x4x4x512xf32, #tpu.memory_space<vmem>>, vector<1x4x4x16xf32>,
    %47 = vector.extract_strided_slice %12 {offsets = [0, 3, 2, 0], sizes = [1, 4, 4, 16], strides = [1, 1, 1, 1]} : vector<1x8x8x16xf32> to vector<1x4x4x16xf32>
    %c0_84 = arith.constant 0 : index
    %c0_85 = arith.constant 0 : index
    %c0_86 = arith.constant 0 : index
    %c272 = arith.constant 272 : index
    %48 = vector.load %arg6[%c0_84, %c0_85, %c0_86, %c272] : memref<1x4x4x512xf32, #tpu.memory_space<vmem>>, vector<1x4x4x16xf32>
    tpu.vector_store %arg6[%c0_84, %c0_85, %c0_86, %c272], %47 {strides = array<i32>} : memref<1x4x4x512xf32, #tpu.memory_space<vmem>>, vector<1x4x4x16xf32>,
    %49 = vector.extract_strided_slice %12 {offsets = [0, 3, 3, 0], sizes = [1, 4, 4, 16], strides = [1, 1, 1, 1]} : vector<1x8x8x16xf32> to vector<1x4x4x16xf32>
    %c0_87 = arith.constant 0 : index
    %c0_88 = arith.constant 0 : index
    %c0_89 = arith.constant 0 : index
    %c288 = arith.constant 288 : index
    %50 = vector.load %arg6[%c0_87, %c0_88, %c0_89, %c288] : memref<1x4x4x512xf32, #tpu.memory_space<vmem>>, vector<1x4x4x16xf32>
    tpu.vector_store %arg6[%c0_87, %c0_88, %c0_89, %c288], %49 {strides = array<i32>} : memref<1x4x4x512xf32, #tpu.memory_space<vmem>>, vector<1x4x4x16xf32>,
    %51 = vector.extract_strided_slice %12 {offsets = [0, 3, 4, 0], sizes = [1, 4, 4, 16], strides = [1, 1, 1, 1]} : vector<1x8x8x16xf32> to vector<1x4x4x16xf32>
    %c0_90 = arith.constant 0 : index
    %c0_91 = arith.constant 0 : index
    %c0_92 = arith.constant 0 : index
    %c304 = arith.constant 304 : index
    %52 = vector.load %arg6[%c0_90, %c0_91, %c0_92, %c304] : memref<1x4x4x512xf32, #tpu.memory_space<vmem>>, vector<1x4x4x16xf32>
    tpu.vector_store %arg6[%c0_90, %c0_91, %c0_92, %c304], %51 {strides = array<i32>} : memref<1x4x4x512xf32, #tpu.memory_space<vmem>>, vector<1x4x4x16xf32>,
    %53 = vector.extract_strided_slice %12 {offsets = [0, 4, 0, 0], sizes = [1, 4, 4, 16], strides = [1, 1, 1, 1]} : vector<1x8x8x16xf32> to vector<1x4x4x16xf32>
    %c0_93 = arith.constant 0 : index
    %c0_94 = arith.constant 0 : index
    %c0_95 = arith.constant 0 : index
    %c320 = arith.constant 320 : index
    %54 = vector.load %arg6[%c0_93, %c0_94, %c0_95, %c320] : memref<1x4x4x512xf32, #tpu.memory_space<vmem>>, vector<1x4x4x16xf32>
    tpu.vector_store %arg6[%c0_93, %c0_94, %c0_95, %c320], %53 {strides = array<i32>} : memref<1x4x4x512xf32, #tpu.memory_space<vmem>>, vector<1x4x4x16xf32>,
    %55 = vector.extract_strided_slice %12 {offsets = [0, 4, 1, 0], sizes = [1, 4, 4, 16], strides = [1, 1, 1, 1]} : vector<1x8x8x16xf32> to vector<1x4x4x16xf32>
    %c0_96 = arith.constant 0 : index
    %c0_97 = arith.constant 0 : index
    %c0_98 = arith.constant 0 : index
    %c336 = arith.constant 336 : index
    %56 = vector.load %arg6[%c0_96, %c0_97, %c0_98, %c336] : memref<1x4x4x512xf32, #tpu.memory_space<vmem>>, vector<1x4x4x16xf32>
    tpu.vector_store %arg6[%c0_96, %c0_97, %c0_98, %c336], %55 {strides = array<i32>} : memref<1x4x4x512xf32, #tpu.memory_space<vmem>>, vector<1x4x4x16xf32>,
    %57 = vector.extract_strided_slice %12 {offsets = [0, 4, 2, 0], sizes = [1, 4, 4, 16], strides = [1, 1, 1, 1]} : vector<1x8x8x16xf32> to vector<1x4x4x16xf32>
    %c0_99 = arith.constant 0 : index
    %c0_100 = arith.constant 0 : index
    %c0_101 = arith.constant 0 : index
    %c352 = arith.constant 352 : index
    %58 = vector.load %arg6[%c0_99, %c0_100, %c0_101, %c352] : memref<1x4x4x512xf32, #tpu.memory_space<vmem>>, vector<1x4x4x16xf32>
    tpu.vector_store %arg6[%c0_99, %c0_100, %c0_101, %c352], %57 {strides = array<i32>} : memref<1x4x4x512xf32, #tpu.memory_space<vmem>>, vector<1x4x4x16xf32>,
    %59 = vector.extract_strided_slice %12 {offsets = [0, 4, 3, 0], sizes = [1, 4, 4, 16], strides = [1, 1, 1, 1]} : vector<1x8x8x16xf32> to vector<1x4x4x16xf32>
    %c0_102 = arith.constant 0 : index
    %c0_103 = arith.constant 0 : index
    %c0_104 = arith.constant 0 : index
    %c368 = arith.constant 368 : index
    %60 = vector.load %arg6[%c0_102, %c0_103, %c0_104, %c368] : memref<1x4x4x512xf32, #tpu.memory_space<vmem>>, vector<1x4x4x16xf32>
    tpu.vector_store %arg6[%c0_102, %c0_103, %c0_104, %c368], %59 {strides = array<i32>} : memref<1x4x4x512xf32, #tpu.memory_space<vmem>>, vector<1x4x4x16xf32>,
    %61 = vector.extract_strided_slice %12 {offsets = [0, 4, 4, 0], sizes = [1, 4, 4, 16], strides = [1, 1, 1, 1]} : vector<1x8x8x16xf32> to vector<1x4x4x16xf32>
    %c0_105 = arith.constant 0 : index
    %c0_106 = arith.constant 0 : index
    %c0_107 = arith.constant 0 : index
    %c384 = arith.constant 384 : index
    %62 = vector.load %arg6[%c0_105, %c0_106, %c0_107, %c384] : memref<1x4x4x512xf32, #tpu.memory_space<vmem>>, vector<1x4x4x16xf32>
    tpu.vector_store %arg6[%c0_105, %c0_106, %c0_107, %c384], %61 {strides = array<i32>} : memref<1x4x4x512xf32, #tpu.memory_space<vmem>>, vector<1x4x4x16xf32>,
    %c0_108 = arith.constant 0 : index
    %c0_109 = arith.constant 0 : index
    %c0_110 = arith.constant 0 : index
    %c0_111 = arith.constant 0 : index
    %63 = vector.load %arg6[%c0_108, %c0_109, %c0_110, %c0_111] : memref<1x4x4x512xf32, #tpu.memory_space<vmem>>, vector<1x4x4x512xf32>
    %64 = vector.shape_cast %63 : vector<1x4x4x512xf32> to vector<16x512xf32>
    %c0_112 = arith.constant 0 : index
    %c0_113 = arith.constant 0 : index
    %65 = vector.load %arg2[%c0_112, %c0_113] : memref<512x128xf32, #tpu.memory_space<vmem>>, vector<512x128xf32>
    %cst_114 = arith.constant dense<0.000000e+00> : vector<16x128xf32>
    %66 = tpu.matmul %64, %65, %cst_114 {dimension_numbers = #tpu.dot_dimension_numbers<[1], [0], [0], [1], [0, 0, 1, 1], [], []>} : vector<16x512xf32>, vector<512x128xf32>, vector<16x128xf32> -> vector<16x128xf32>
    %c0_115 = arith.constant 0 : index
    %c0_116 = arith.constant 0 : index
    %67 = vector.load %arg3[%c0_115, %c0_116] : memref<1x128xf32, #tpu.memory_space<vmem>>, vector<1x128xf32>
    %68 = vector.broadcast %67 : vector<1x128xf32> to vector<16x128xf32>
    %69 = arith.addf %66, %68 : vector<16x128xf32>
    %70 = vector.shape_cast %69 : vector<16x128xf32> to vector<1x4x4x128xf32>
    %c0_117 = arith.constant 0 : index
    %c0_118 = arith.constant 0 : index
    %c0_119 = arith.constant 0 : index
    %c0_120 = arith.constant 0 : index
    %71 = vector.load %arg4[%c0_117, %c0_118, %c0_119, %c0_120] : memref<1x4x4x128xf32, #tpu.memory_space<vmem>>, vector<1x4x4x128xf32>
    tpu.vector_store %arg4[%c0_117, %c0_118, %c0_119, %c0_120], %70 {strides = array<i32>} : memref<1x4x4x128xf32, #tpu.memory_space<vmem>>, vector<1x4x4x128xf32>,
    return
  }
  func.func @transform_0(%arg0: i32) -> (i32, i32, i32, i32) {
    %c0_i32 = arith.constant 0 : i32
    %c0_i32_0 = arith.constant 0 : i32
    %c0_i32_1 = arith.constant 0 : i32
    %c0_i32_2 = arith.constant 0 : i32
    return %arg0, %c0_i32, %c0_i32_0, %c0_i32_1 : i32, i32, i32, i32
  }
  func.func @transform_1(%arg0: i32) -> (i32, i32) {
    %c0_i32 = arith.constant 0 : i32
    %c0_i32_0 = arith.constant 0 : i32
    %c0_i32_1 = arith.constant 0 : i32
    return %c0_i32, %c0_i32_0 : i32, i32
  }
  func.func @transform_2(%arg0: i32) -> (i32, i32) {
    %c0_i32 = arith.constant 0 : i32
    %c0_i32_0 = arith.constant 0 : i32
    %c0_i32_1 = arith.constant 0 : i32
    return %c0_i32, %c0_i32_0 : i32, i32
  }
  func.func @transform_3(%arg0: i32) -> (i32, i32, i32, i32) {
    %c0_i32 = arith.constant 0 : i32
    %c0_i32_0 = arith.constant 0 : i32
    %c0_i32_1 = arith.constant 0 : i32
    %c0_i32_2 = arith.constant 0 : i32
    return %arg0, %c0_i32, %c0_i32_0, %c0_i32_1 : i32, i32, i32, i32
  }
}

module attributes {stable_mosaic.version = 11 : i64} {
  func.func @_conv1_vpu_kernel(%arg0: i32, %arg1: memref<1x16x16xf32, #tpu.memory_space<vmem>>, %arg2: memref<25x6xf32, #tpu.memory_space<smem>>, %arg3: memref<6xf32, #tpu.memory_space<smem>>, %arg4: memref<1x6x8x8xf32, #tpu.memory_space<vmem>>, %arg5: memref<1x20x20xf32, #tpu.memory_space<vmem>>) attributes {dimension_semantics = [#tpu.dimension_semantics<parallel>], iteration_bounds = array<i64: 2>, scalar_prefetch = 0 : i64, scratch_operands = 1 : i64, tpu.core_type = #tpu.core_type<tc>, window_params = [{transform_indices = @transform_0, window_bounds = array<i64: 1, 16, 16>}, {transform_indices = @transform_1, window_bounds = array<i64: 25, 6>}, {transform_indices = @transform_2, window_bounds = array<i64: 6>}, {transform_indices = @transform_3, window_bounds = array<i64: 1, 6, 8, 8>}]} {
    %cst = arith.constant 0.000000e+00 : f32
    %0 = vector.broadcast %cst : f32 to vector<1x2x20xf32>
    %c0 = arith.constant 0 : index
    %c0_0 = arith.constant 0 : index
    %c0_1 = arith.constant 0 : index
    %1 = vector.load %arg5[%c0, %c0_0, %c0_1] : memref<1x20x20xf32, #tpu.memory_space<vmem>>, vector<1x2x20xf32>
    tpu.vector_store %arg5[%c0, %c0_0, %c0_1], %0 {strides = array<i32>} : memref<1x20x20xf32, #tpu.memory_space<vmem>>, vector<1x2x20xf32>,
    %cst_2 = arith.constant 0.000000e+00 : f32
    %2 = vector.broadcast %cst_2 : f32 to vector<1x2x20xf32>
    %c0_3 = arith.constant 0 : index
    %c18 = arith.constant 18 : index
    %c0_4 = arith.constant 0 : index
    %3 = vector.load %arg5[%c0_3, %c18, %c0_4] : memref<1x20x20xf32, #tpu.memory_space<vmem>>, vector<1x2x20xf32>
    tpu.vector_store %arg5[%c0_3, %c18, %c0_4], %2 {strides = array<i32>} : memref<1x20x20xf32, #tpu.memory_space<vmem>>, vector<1x2x20xf32>,
    %cst_5 = arith.constant 0.000000e+00 : f32
    %4 = vector.broadcast %cst_5 : f32 to vector<1x20x2xf32>
    %c0_6 = arith.constant 0 : index
    %c0_7 = arith.constant 0 : index
    %c0_8 = arith.constant 0 : index
    %5 = vector.load %arg5[%c0_6, %c0_7, %c0_8] : memref<1x20x20xf32, #tpu.memory_space<vmem>>, vector<1x20x2xf32>
    tpu.vector_store %arg5[%c0_6, %c0_7, %c0_8], %4 {strides = array<i32>} : memref<1x20x20xf32, #tpu.memory_space<vmem>>, vector<1x20x2xf32>,
    %cst_9 = arith.constant 0.000000e+00 : f32
    %6 = vector.broadcast %cst_9 : f32 to vector<1x20x2xf32>
    %c0_10 = arith.constant 0 : index
    %c0_11 = arith.constant 0 : index
    %c18_12 = arith.constant 18 : index
    %7 = vector.load %arg5[%c0_10, %c0_11, %c18_12] : memref<1x20x20xf32, #tpu.memory_space<vmem>>, vector<1x20x2xf32>
    tpu.vector_store %arg5[%c0_10, %c0_11, %c18_12], %6 {strides = array<i32>} : memref<1x20x20xf32, #tpu.memory_space<vmem>>, vector<1x20x2xf32>,
    %c0_13 = arith.constant 0 : index
    %c0_14 = arith.constant 0 : index
    %c0_15 = arith.constant 0 : index
    %8 = vector.load %arg1[%c0_13, %c0_14, %c0_15] : memref<1x16x16xf32, #tpu.memory_space<vmem>>, vector<1x16x16xf32>
    %c0_16 = arith.constant 0 : index
    %c2 = arith.constant 2 : index
    %c2_17 = arith.constant 2 : index
    %9 = vector.load %arg5[%c0_16, %c2, %c2_17] : memref<1x20x20xf32, #tpu.memory_space<vmem>>, vector<1x16x16xf32>
    tpu.vector_store %arg5[%c0_16, %c2, %c2_17], %8 {strides = array<i32>} : memref<1x20x20xf32, #tpu.memory_space<vmem>>, vector<1x16x16xf32>,
    %c0_18 = arith.constant 0 : index
    %c0_19 = arith.constant 0 : index
    %c0_20 = arith.constant 0 : index
    %10 = vector.load %arg5[%c0_18, %c0_19, %c0_20] : memref<1x20x20xf32, #tpu.memory_space<vmem>>, vector<1x20x20xf32>
    %11 = vector.extract_strided_slice %10 {offsets = [0, 0, 0], sizes = [1, 16, 16], strides = [1, 1, 1]} : vector<1x20x20xf32> to vector<1x16x16xf32>
    %12 = vector.extract_strided_slice %10 {offsets = [0, 0, 1], sizes = [1, 16, 16], strides = [1, 1, 1]} : vector<1x20x20xf32> to vector<1x16x16xf32>
    %13 = vector.extract_strided_slice %10 {offsets = [0, 0, 2], sizes = [1, 16, 16], strides = [1, 1, 1]} : vector<1x20x20xf32> to vector<1x16x16xf32>
    %14 = vector.extract_strided_slice %10 {offsets = [0, 0, 3], sizes = [1, 16, 16], strides = [1, 1, 1]} : vector<1x20x20xf32> to vector<1x16x16xf32>
    %15 = vector.extract_strided_slice %10 {offsets = [0, 0, 4], sizes = [1, 16, 16], strides = [1, 1, 1]} : vector<1x20x20xf32> to vector<1x16x16xf32>
    %16 = vector.extract_strided_slice %10 {offsets = [0, 1, 0], sizes = [1, 16, 16], strides = [1, 1, 1]} : vector<1x20x20xf32> to vector<1x16x16xf32>
    %17 = vector.extract_strided_slice %10 {offsets = [0, 1, 1], sizes = [1, 16, 16], strides = [1, 1, 1]} : vector<1x20x20xf32> to vector<1x16x16xf32>
    %18 = vector.extract_strided_slice %10 {offsets = [0, 1, 2], sizes = [1, 16, 16], strides = [1, 1, 1]} : vector<1x20x20xf32> to vector<1x16x16xf32>
    %19 = vector.extract_strided_slice %10 {offsets = [0, 1, 3], sizes = [1, 16, 16], strides = [1, 1, 1]} : vector<1x20x20xf32> to vector<1x16x16xf32>
    %20 = vector.extract_strided_slice %10 {offsets = [0, 1, 4], sizes = [1, 16, 16], strides = [1, 1, 1]} : vector<1x20x20xf32> to vector<1x16x16xf32>
    %21 = vector.extract_strided_slice %10 {offsets = [0, 2, 0], sizes = [1, 16, 16], strides = [1, 1, 1]} : vector<1x20x20xf32> to vector<1x16x16xf32>
    %22 = vector.extract_strided_slice %10 {offsets = [0, 2, 1], sizes = [1, 16, 16], strides = [1, 1, 1]} : vector<1x20x20xf32> to vector<1x16x16xf32>
    %23 = vector.extract_strided_slice %10 {offsets = [0, 2, 2], sizes = [1, 16, 16], strides = [1, 1, 1]} : vector<1x20x20xf32> to vector<1x16x16xf32>
    %24 = vector.extract_strided_slice %10 {offsets = [0, 2, 3], sizes = [1, 16, 16], strides = [1, 1, 1]} : vector<1x20x20xf32> to vector<1x16x16xf32>
    %25 = vector.extract_strided_slice %10 {offsets = [0, 2, 4], sizes = [1, 16, 16], strides = [1, 1, 1]} : vector<1x20x20xf32> to vector<1x16x16xf32>
    %26 = vector.extract_strided_slice %10 {offsets = [0, 3, 0], sizes = [1, 16, 16], strides = [1, 1, 1]} : vector<1x20x20xf32> to vector<1x16x16xf32>
    %27 = vector.extract_strided_slice %10 {offsets = [0, 3, 1], sizes = [1, 16, 16], strides = [1, 1, 1]} : vector<1x20x20xf32> to vector<1x16x16xf32>
    %28 = vector.extract_strided_slice %10 {offsets = [0, 3, 2], sizes = [1, 16, 16], strides = [1, 1, 1]} : vector<1x20x20xf32> to vector<1x16x16xf32>
    %29 = vector.extract_strided_slice %10 {offsets = [0, 3, 3], sizes = [1, 16, 16], strides = [1, 1, 1]} : vector<1x20x20xf32> to vector<1x16x16xf32>
    %30 = vector.extract_strided_slice %10 {offsets = [0, 3, 4], sizes = [1, 16, 16], strides = [1, 1, 1]} : vector<1x20x20xf32> to vector<1x16x16xf32>
    %31 = vector.extract_strided_slice %10 {offsets = [0, 4, 0], sizes = [1, 16, 16], strides = [1, 1, 1]} : vector<1x20x20xf32> to vector<1x16x16xf32>
    %32 = vector.extract_strided_slice %10 {offsets = [0, 4, 1], sizes = [1, 16, 16], strides = [1, 1, 1]} : vector<1x20x20xf32> to vector<1x16x16xf32>
    %33 = vector.extract_strided_slice %10 {offsets = [0, 4, 2], sizes = [1, 16, 16], strides = [1, 1, 1]} : vector<1x20x20xf32> to vector<1x16x16xf32>
    %34 = vector.extract_strided_slice %10 {offsets = [0, 4, 3], sizes = [1, 16, 16], strides = [1, 1, 1]} : vector<1x20x20xf32> to vector<1x16x16xf32>
    %35 = vector.extract_strided_slice %10 {offsets = [0, 4, 4], sizes = [1, 16, 16], strides = [1, 1, 1]} : vector<1x20x20xf32> to vector<1x16x16xf32>
    %36 = tpu.iota {dimensions = array<i32: 0>} : vector<16x8xi32>
    %37 = tpu.iota {dimensions = array<i32: 1>} : vector<16x8xi32>
    %c2_i32 = arith.constant 2 : i32
    %38 = vector.broadcast %c2_i32 : i32 to vector<16x8xi32>
    %39 = arith.muli %38, %37 : vector<16x8xi32>
    %40 = arith.cmpi eq, %36, %39 : vector<16x8xi32>
    %41 = arith.extui %40 : vector<16x8xi1> to vector<16x8xi32>
    %42 = arith.sitofp %41 : vector<16x8xi32> to vector<16x8xf32>
    %c2_i32_21 = arith.constant 2 : i32
    %43 = vector.broadcast %c2_i32_21 : i32 to vector<16x8xi32>
    %44 = arith.muli %43, %37 : vector<16x8xi32>
    %c1_i32 = arith.constant 1 : i32
    %45 = vector.broadcast %c1_i32 : i32 to vector<16x8xi32>
    %46 = arith.addi %44, %45 : vector<16x8xi32>
    %47 = arith.cmpi eq, %36, %46 : vector<16x8xi32>
    %48 = arith.extui %47 : vector<16x8xi1> to vector<16x8xi32>
    %49 = arith.sitofp %48 : vector<16x8xi32> to vector<16x8xf32>
    %c0_22 = arith.constant 0 : index
    %c0_23 = arith.constant 0 : index
    %50 = memref.load %arg2[%c0_22, %c0_23] : memref<25x6xf32, #tpu.memory_space<smem>>
    %51 = vector.broadcast %50 : f32 to vector<1x16x16xf32>
    %52 = arith.mulf %51, %11 : vector<1x16x16xf32>
    %c1 = arith.constant 1 : index
    %c0_24 = arith.constant 0 : index
    %53 = memref.load %arg2[%c1, %c0_24] : memref<25x6xf32, #tpu.memory_space<smem>>
    %54 = vector.broadcast %53 : f32 to vector<1x16x16xf32>
    %55 = arith.mulf %54, %12 : vector<1x16x16xf32>
    %56 = arith.addf %52, %55 : vector<1x16x16xf32>
    %c2_25 = arith.constant 2 : index
    %c0_26 = arith.constant 0 : index
    %57 = memref.load %arg2[%c2_25, %c0_26] : memref<25x6xf32, #tpu.memory_space<smem>>
    %58 = vector.broadcast %57 : f32 to vector<1x16x16xf32>
    %59 = arith.mulf %58, %13 : vector<1x16x16xf32>
    %60 = arith.addf %56, %59 : vector<1x16x16xf32>
    %c3 = arith.constant 3 : index
    %c0_27 = arith.constant 0 : index
    %61 = memref.load %arg2[%c3, %c0_27] : memref<25x6xf32, #tpu.memory_space<smem>>
    %62 = vector.broadcast %61 : f32 to vector<1x16x16xf32>
    %63 = arith.mulf %62, %14 : vector<1x16x16xf32>
    %64 = arith.addf %60, %63 : vector<1x16x16xf32>
    %c4 = arith.constant 4 : index
    %c0_28 = arith.constant 0 : index
    %65 = memref.load %arg2[%c4, %c0_28] : memref<25x6xf32, #tpu.memory_space<smem>>
    %66 = vector.broadcast %65 : f32 to vector<1x16x16xf32>
    %67 = arith.mulf %66, %15 : vector<1x16x16xf32>
    %68 = arith.addf %64, %67 : vector<1x16x16xf32>
    %c5 = arith.constant 5 : index
    %c0_29 = arith.constant 0 : index
    %69 = memref.load %arg2[%c5, %c0_29] : memref<25x6xf32, #tpu.memory_space<smem>>
    %70 = vector.broadcast %69 : f32 to vector<1x16x16xf32>
    %71 = arith.mulf %70, %16 : vector<1x16x16xf32>
    %72 = arith.addf %68, %71 : vector<1x16x16xf32>
    %c6 = arith.constant 6 : index
    %c0_30 = arith.constant 0 : index
    %73 = memref.load %arg2[%c6, %c0_30] : memref<25x6xf32, #tpu.memory_space<smem>>
    %74 = vector.broadcast %73 : f32 to vector<1x16x16xf32>
    %75 = arith.mulf %74, %17 : vector<1x16x16xf32>
    %76 = arith.addf %72, %75 : vector<1x16x16xf32>
    %c7 = arith.constant 7 : index
    %c0_31 = arith.constant 0 : index
    %77 = memref.load %arg2[%c7, %c0_31] : memref<25x6xf32, #tpu.memory_space<smem>>
    %78 = vector.broadcast %77 : f32 to vector<1x16x16xf32>
    %79 = arith.mulf %78, %18 : vector<1x16x16xf32>
    %80 = arith.addf %76, %79 : vector<1x16x16xf32>
    %c8 = arith.constant 8 : index
    %c0_32 = arith.constant 0 : index
    %81 = memref.load %arg2[%c8, %c0_32] : memref<25x6xf32, #tpu.memory_space<smem>>
    %82 = vector.broadcast %81 : f32 to vector<1x16x16xf32>
    %83 = arith.mulf %82, %19 : vector<1x16x16xf32>
    %84 = arith.addf %80, %83 : vector<1x16x16xf32>
    %c9 = arith.constant 9 : index
    %c0_33 = arith.constant 0 : index
    %85 = memref.load %arg2[%c9, %c0_33] : memref<25x6xf32, #tpu.memory_space<smem>>
    %86 = vector.broadcast %85 : f32 to vector<1x16x16xf32>
    %87 = arith.mulf %86, %20 : vector<1x16x16xf32>
    %88 = arith.addf %84, %87 : vector<1x16x16xf32>
    %c10 = arith.constant 10 : index
    %c0_34 = arith.constant 0 : index
    %89 = memref.load %arg2[%c10, %c0_34] : memref<25x6xf32, #tpu.memory_space<smem>>
    %90 = vector.broadcast %89 : f32 to vector<1x16x16xf32>
    %91 = arith.mulf %90, %21 : vector<1x16x16xf32>
    %92 = arith.addf %88, %91 : vector<1x16x16xf32>
    %c11 = arith.constant 11 : index
    %c0_35 = arith.constant 0 : index
    %93 = memref.load %arg2[%c11, %c0_35] : memref<25x6xf32, #tpu.memory_space<smem>>
    %94 = vector.broadcast %93 : f32 to vector<1x16x16xf32>
    %95 = arith.mulf %94, %22 : vector<1x16x16xf32>
    %96 = arith.addf %92, %95 : vector<1x16x16xf32>
    %c12 = arith.constant 12 : index
    %c0_36 = arith.constant 0 : index
    %97 = memref.load %arg2[%c12, %c0_36] : memref<25x6xf32, #tpu.memory_space<smem>>
    %98 = vector.broadcast %97 : f32 to vector<1x16x16xf32>
    %99 = arith.mulf %98, %23 : vector<1x16x16xf32>
    %100 = arith.addf %96, %99 : vector<1x16x16xf32>
    %c13 = arith.constant 13 : index
    %c0_37 = arith.constant 0 : index
    %101 = memref.load %arg2[%c13, %c0_37] : memref<25x6xf32, #tpu.memory_space<smem>>
    %102 = vector.broadcast %101 : f32 to vector<1x16x16xf32>
    %103 = arith.mulf %102, %24 : vector<1x16x16xf32>
    %104 = arith.addf %100, %103 : vector<1x16x16xf32>
    %c14 = arith.constant 14 : index
    %c0_38 = arith.constant 0 : index
    %105 = memref.load %arg2[%c14, %c0_38] : memref<25x6xf32, #tpu.memory_space<smem>>
    %106 = vector.broadcast %105 : f32 to vector<1x16x16xf32>
    %107 = arith.mulf %106, %25 : vector<1x16x16xf32>
    %108 = arith.addf %104, %107 : vector<1x16x16xf32>
    %c15 = arith.constant 15 : index
    %c0_39 = arith.constant 0 : index
    %109 = memref.load %arg2[%c15, %c0_39] : memref<25x6xf32, #tpu.memory_space<smem>>
    %110 = vector.broadcast %109 : f32 to vector<1x16x16xf32>
    %111 = arith.mulf %110, %26 : vector<1x16x16xf32>
    %112 = arith.addf %108, %111 : vector<1x16x16xf32>
    %c16 = arith.constant 16 : index
    %c0_40 = arith.constant 0 : index
    %113 = memref.load %arg2[%c16, %c0_40] : memref<25x6xf32, #tpu.memory_space<smem>>
    %114 = vector.broadcast %113 : f32 to vector<1x16x16xf32>
    %115 = arith.mulf %114, %27 : vector<1x16x16xf32>
    %116 = arith.addf %112, %115 : vector<1x16x16xf32>
    %c17 = arith.constant 17 : index
    %c0_41 = arith.constant 0 : index
    %117 = memref.load %arg2[%c17, %c0_41] : memref<25x6xf32, #tpu.memory_space<smem>>
    %118 = vector.broadcast %117 : f32 to vector<1x16x16xf32>
    %119 = arith.mulf %118, %28 : vector<1x16x16xf32>
    %120 = arith.addf %116, %119 : vector<1x16x16xf32>
    %c18_42 = arith.constant 18 : index
    %c0_43 = arith.constant 0 : index
    %121 = memref.load %arg2[%c18_42, %c0_43] : memref<25x6xf32, #tpu.memory_space<smem>>
    %122 = vector.broadcast %121 : f32 to vector<1x16x16xf32>
    %123 = arith.mulf %122, %29 : vector<1x16x16xf32>
    %124 = arith.addf %120, %123 : vector<1x16x16xf32>
    %c19 = arith.constant 19 : index
    %c0_44 = arith.constant 0 : index
    %125 = memref.load %arg2[%c19, %c0_44] : memref<25x6xf32, #tpu.memory_space<smem>>
    %126 = vector.broadcast %125 : f32 to vector<1x16x16xf32>
    %127 = arith.mulf %126, %30 : vector<1x16x16xf32>
    %128 = arith.addf %124, %127 : vector<1x16x16xf32>
    %c20 = arith.constant 20 : index
    %c0_45 = arith.constant 0 : index
    %129 = memref.load %arg2[%c20, %c0_45] : memref<25x6xf32, #tpu.memory_space<smem>>
    %130 = vector.broadcast %129 : f32 to vector<1x16x16xf32>
    %131 = arith.mulf %130, %31 : vector<1x16x16xf32>
    %132 = arith.addf %128, %131 : vector<1x16x16xf32>
    %c21 = arith.constant 21 : index
    %c0_46 = arith.constant 0 : index
    %133 = memref.load %arg2[%c21, %c0_46] : memref<25x6xf32, #tpu.memory_space<smem>>
    %134 = vector.broadcast %133 : f32 to vector<1x16x16xf32>
    %135 = arith.mulf %134, %32 : vector<1x16x16xf32>
    %136 = arith.addf %132, %135 : vector<1x16x16xf32>
    %c22 = arith.constant 22 : index
    %c0_47 = arith.constant 0 : index
    %137 = memref.load %arg2[%c22, %c0_47] : memref<25x6xf32, #tpu.memory_space<smem>>
    %138 = vector.broadcast %137 : f32 to vector<1x16x16xf32>
    %139 = arith.mulf %138, %33 : vector<1x16x16xf32>
    %140 = arith.addf %136, %139 : vector<1x16x16xf32>
    %c23 = arith.constant 23 : index
    %c0_48 = arith.constant 0 : index
    %141 = memref.load %arg2[%c23, %c0_48] : memref<25x6xf32, #tpu.memory_space<smem>>
    %142 = vector.broadcast %141 : f32 to vector<1x16x16xf32>
    %143 = arith.mulf %142, %34 : vector<1x16x16xf32>
    %144 = arith.addf %140, %143 : vector<1x16x16xf32>
    %c24 = arith.constant 24 : index
    %c0_49 = arith.constant 0 : index
    %145 = memref.load %arg2[%c24, %c0_49] : memref<25x6xf32, #tpu.memory_space<smem>>
    %146 = vector.broadcast %145 : f32 to vector<1x16x16xf32>
    %147 = arith.mulf %146, %35 : vector<1x16x16xf32>
    %148 = arith.addf %144, %147 : vector<1x16x16xf32>
    %c0_50 = arith.constant 0 : index
    %149 = memref.load %arg3[%c0_50] : memref<6xf32, #tpu.memory_space<smem>>
    %150 = vector.broadcast %149 : f32 to vector<1x16x16xf32>
    %151 = arith.addf %148, %150 : vector<1x16x16xf32>
    %152 = vector.shape_cast %151 : vector<1x16x16xf32> to vector<1x8x2x16xf32>
    %153 = vector.extract_strided_slice %152 {offsets = [0, 0, 0, 0], sizes = [1, 8, 1, 16], strides = [1, 1, 1, 1]} : vector<1x8x2x16xf32> to vector<1x8x1x16xf32>
    %154 = vector.shape_cast %153 : vector<1x8x1x16xf32> to vector<1x8x16xf32>
    %155 = vector.extract_strided_slice %152 {offsets = [0, 0, 1, 0], sizes = [1, 8, 1, 16], strides = [1, 1, 1, 1]} : vector<1x8x2x16xf32> to vector<1x8x1x16xf32>
    %156 = vector.shape_cast %155 : vector<1x8x1x16xf32> to vector<1x8x16xf32>
    %157 = arith.maximumf %154, %156 : vector<1x8x16xf32>
    %158 = vector.shape_cast %157 : vector<1x8x16xf32> to vector<8x16xf32>
    %cst_51 = arith.constant dense<0.000000e+00> : vector<8x8xf32>
    %159 = tpu.matmul %158, %42, %cst_51 {dimension_numbers = #tpu.dot_dimension_numbers<[1], [0], [0], [1], [0, 0, 1, 1], [], []>} : vector<8x16xf32>, vector<16x8xf32>, vector<8x8xf32> -> vector<8x8xf32>
    %cst_52 = arith.constant dense<0.000000e+00> : vector<8x8xf32>
    %160 = tpu.matmul %158, %49, %cst_52 {dimension_numbers = #tpu.dot_dimension_numbers<[1], [0], [0], [1], [0, 0, 1, 1], [], []>} : vector<8x16xf32>, vector<16x8xf32>, vector<8x8xf32> -> vector<8x8xf32>
    %161 = arith.maximumf %159, %160 : vector<8x8xf32>
    %162 = arith.negf %161 : vector<8x8xf32>
    %163 = math.exp %162 : vector<8x8xf32>
    %cst_53 = arith.constant 1.000000e+00 : f32
    %164 = vector.broadcast %cst_53 : f32 to vector<8x8xf32>
    %165 = arith.addf %164, %163 : vector<8x8xf32>
    %166 = arith.divf %164, %165 : vector<8x8xf32>
    %167 = vector.shape_cast %166 : vector<8x8xf32> to vector<1x8x8xf32>
    %c0_54 = arith.constant 0 : index
    %c0_55 = arith.constant 0 : index
    %c0_56 = arith.constant 0 : index
    %c0_57 = arith.constant 0 : index
    %168 = vector.load %arg4[%c0_54, %c0_55, %c0_56, %c0_57] : memref<1x6x8x8xf32, #tpu.memory_space<vmem>>, vector<1x1x8x8xf32>
    %169 = vector.shape_cast %168 : vector<1x1x8x8xf32> to vector<1x8x8xf32>
    %170 = vector.shape_cast %167 : vector<1x8x8xf32> to vector<1x1x8x8xf32>
    tpu.vector_store %arg4[%c0_54, %c0_55, %c0_56, %c0_57], %170 {strides = array<i32>} : memref<1x6x8x8xf32, #tpu.memory_space<vmem>>, vector<1x1x8x8xf32>,
    %c0_58 = arith.constant 0 : index
    %c1_59 = arith.constant 1 : index
    %171 = memref.load %arg2[%c0_58, %c1_59] : memref<25x6xf32, #tpu.memory_space<smem>>
    %172 = vector.broadcast %171 : f32 to vector<1x16x16xf32>
    %173 = arith.mulf %172, %11 : vector<1x16x16xf32>
    %c1_60 = arith.constant 1 : index
    %c1_61 = arith.constant 1 : index
    %174 = memref.load %arg2[%c1_60, %c1_61] : memref<25x6xf32, #tpu.memory_space<smem>>
    %175 = vector.broadcast %174 : f32 to vector<1x16x16xf32>
    %176 = arith.mulf %175, %12 : vector<1x16x16xf32>
    %177 = arith.addf %173, %176 : vector<1x16x16xf32>
    %c2_62 = arith.constant 2 : index
    %c1_63 = arith.constant 1 : index
    %178 = memref.load %arg2[%c2_62, %c1_63] : memref<25x6xf32, #tpu.memory_space<smem>>
    %179 = vector.broadcast %178 : f32 to vector<1x16x16xf32>
    %180 = arith.mulf %179, %13 : vector<1x16x16xf32>
    %181 = arith.addf %177, %180 : vector<1x16x16xf32>
    %c3_64 = arith.constant 3 : index
    %c1_65 = arith.constant 1 : index
    %182 = memref.load %arg2[%c3_64, %c1_65] : memref<25x6xf32, #tpu.memory_space<smem>>
    %183 = vector.broadcast %182 : f32 to vector<1x16x16xf32>
    %184 = arith.mulf %183, %14 : vector<1x16x16xf32>
    %185 = arith.addf %181, %184 : vector<1x16x16xf32>
    %c4_66 = arith.constant 4 : index
    %c1_67 = arith.constant 1 : index
    %186 = memref.load %arg2[%c4_66, %c1_67] : memref<25x6xf32, #tpu.memory_space<smem>>
    %187 = vector.broadcast %186 : f32 to vector<1x16x16xf32>
    %188 = arith.mulf %187, %15 : vector<1x16x16xf32>
    %189 = arith.addf %185, %188 : vector<1x16x16xf32>
    %c5_68 = arith.constant 5 : index
    %c1_69 = arith.constant 1 : index
    %190 = memref.load %arg2[%c5_68, %c1_69] : memref<25x6xf32, #tpu.memory_space<smem>>
    %191 = vector.broadcast %190 : f32 to vector<1x16x16xf32>
    %192 = arith.mulf %191, %16 : vector<1x16x16xf32>
    %193 = arith.addf %189, %192 : vector<1x16x16xf32>
    %c6_70 = arith.constant 6 : index
    %c1_71 = arith.constant 1 : index
    %194 = memref.load %arg2[%c6_70, %c1_71] : memref<25x6xf32, #tpu.memory_space<smem>>
    %195 = vector.broadcast %194 : f32 to vector<1x16x16xf32>
    %196 = arith.mulf %195, %17 : vector<1x16x16xf32>
    %197 = arith.addf %193, %196 : vector<1x16x16xf32>
    %c7_72 = arith.constant 7 : index
    %c1_73 = arith.constant 1 : index
    %198 = memref.load %arg2[%c7_72, %c1_73] : memref<25x6xf32, #tpu.memory_space<smem>>
    %199 = vector.broadcast %198 : f32 to vector<1x16x16xf32>
    %200 = arith.mulf %199, %18 : vector<1x16x16xf32>
    %201 = arith.addf %197, %200 : vector<1x16x16xf32>
    %c8_74 = arith.constant 8 : index
    %c1_75 = arith.constant 1 : index
    %202 = memref.load %arg2[%c8_74, %c1_75] : memref<25x6xf32, #tpu.memory_space<smem>>
    %203 = vector.broadcast %202 : f32 to vector<1x16x16xf32>
    %204 = arith.mulf %203, %19 : vector<1x16x16xf32>
    %205 = arith.addf %201, %204 : vector<1x16x16xf32>
    %c9_76 = arith.constant 9 : index
    %c1_77 = arith.constant 1 : index
    %206 = memref.load %arg2[%c9_76, %c1_77] : memref<25x6xf32, #tpu.memory_space<smem>>
    %207 = vector.broadcast %206 : f32 to vector<1x16x16xf32>
    %208 = arith.mulf %207, %20 : vector<1x16x16xf32>
    %209 = arith.addf %205, %208 : vector<1x16x16xf32>
    %c10_78 = arith.constant 10 : index
    %c1_79 = arith.constant 1 : index
    %210 = memref.load %arg2[%c10_78, %c1_79] : memref<25x6xf32, #tpu.memory_space<smem>>
    %211 = vector.broadcast %210 : f32 to vector<1x16x16xf32>
    %212 = arith.mulf %211, %21 : vector<1x16x16xf32>
    %213 = arith.addf %209, %212 : vector<1x16x16xf32>
    %c11_80 = arith.constant 11 : index
    %c1_81 = arith.constant 1 : index
    %214 = memref.load %arg2[%c11_80, %c1_81] : memref<25x6xf32, #tpu.memory_space<smem>>
    %215 = vector.broadcast %214 : f32 to vector<1x16x16xf32>
    %216 = arith.mulf %215, %22 : vector<1x16x16xf32>
    %217 = arith.addf %213, %216 : vector<1x16x16xf32>
    %c12_82 = arith.constant 12 : index
    %c1_83 = arith.constant 1 : index
    %218 = memref.load %arg2[%c12_82, %c1_83] : memref<25x6xf32, #tpu.memory_space<smem>>
    %219 = vector.broadcast %218 : f32 to vector<1x16x16xf32>
    %220 = arith.mulf %219, %23 : vector<1x16x16xf32>
    %221 = arith.addf %217, %220 : vector<1x16x16xf32>
    %c13_84 = arith.constant 13 : index
    %c1_85 = arith.constant 1 : index
    %222 = memref.load %arg2[%c13_84, %c1_85] : memref<25x6xf32, #tpu.memory_space<smem>>
    %223 = vector.broadcast %222 : f32 to vector<1x16x16xf32>
    %224 = arith.mulf %223, %24 : vector<1x16x16xf32>
    %225 = arith.addf %221, %224 : vector<1x16x16xf32>
    %c14_86 = arith.constant 14 : index
    %c1_87 = arith.constant 1 : index
    %226 = memref.load %arg2[%c14_86, %c1_87] : memref<25x6xf32, #tpu.memory_space<smem>>
    %227 = vector.broadcast %226 : f32 to vector<1x16x16xf32>
    %228 = arith.mulf %227, %25 : vector<1x16x16xf32>
    %229 = arith.addf %225, %228 : vector<1x16x16xf32>
    %c15_88 = arith.constant 15 : index
    %c1_89 = arith.constant 1 : index
    %230 = memref.load %arg2[%c15_88, %c1_89] : memref<25x6xf32, #tpu.memory_space<smem>>
    %231 = vector.broadcast %230 : f32 to vector<1x16x16xf32>
    %232 = arith.mulf %231, %26 : vector<1x16x16xf32>
    %233 = arith.addf %229, %232 : vector<1x16x16xf32>
    %c16_90 = arith.constant 16 : index
    %c1_91 = arith.constant 1 : index
    %234 = memref.load %arg2[%c16_90, %c1_91] : memref<25x6xf32, #tpu.memory_space<smem>>
    %235 = vector.broadcast %234 : f32 to vector<1x16x16xf32>
    %236 = arith.mulf %235, %27 : vector<1x16x16xf32>
    %237 = arith.addf %233, %236 : vector<1x16x16xf32>
    %c17_92 = arith.constant 17 : index
    %c1_93 = arith.constant 1 : index
    %238 = memref.load %arg2[%c17_92, %c1_93] : memref<25x6xf32, #tpu.memory_space<smem>>
    %239 = vector.broadcast %238 : f32 to vector<1x16x16xf32>
    %240 = arith.mulf %239, %28 : vector<1x16x16xf32>
    %241 = arith.addf %237, %240 : vector<1x16x16xf32>
    %c18_94 = arith.constant 18 : index
    %c1_95 = arith.constant 1 : index
    %242 = memref.load %arg2[%c18_94, %c1_95] : memref<25x6xf32, #tpu.memory_space<smem>>
    %243 = vector.broadcast %242 : f32 to vector<1x16x16xf32>
    %244 = arith.mulf %243, %29 : vector<1x16x16xf32>
    %245 = arith.addf %241, %244 : vector<1x16x16xf32>
    %c19_96 = arith.constant 19 : index
    %c1_97 = arith.constant 1 : index
    %246 = memref.load %arg2[%c19_96, %c1_97] : memref<25x6xf32, #tpu.memory_space<smem>>
    %247 = vector.broadcast %246 : f32 to vector<1x16x16xf32>
    %248 = arith.mulf %247, %30 : vector<1x16x16xf32>
    %249 = arith.addf %245, %248 : vector<1x16x16xf32>
    %c20_98 = arith.constant 20 : index
    %c1_99 = arith.constant 1 : index
    %250 = memref.load %arg2[%c20_98, %c1_99] : memref<25x6xf32, #tpu.memory_space<smem>>
    %251 = vector.broadcast %250 : f32 to vector<1x16x16xf32>
    %252 = arith.mulf %251, %31 : vector<1x16x16xf32>
    %253 = arith.addf %249, %252 : vector<1x16x16xf32>
    %c21_100 = arith.constant 21 : index
    %c1_101 = arith.constant 1 : index
    %254 = memref.load %arg2[%c21_100, %c1_101] : memref<25x6xf32, #tpu.memory_space<smem>>
    %255 = vector.broadcast %254 : f32 to vector<1x16x16xf32>
    %256 = arith.mulf %255, %32 : vector<1x16x16xf32>
    %257 = arith.addf %253, %256 : vector<1x16x16xf32>
    %c22_102 = arith.constant 22 : index
    %c1_103 = arith.constant 1 : index
    %258 = memref.load %arg2[%c22_102, %c1_103] : memref<25x6xf32, #tpu.memory_space<smem>>
    %259 = vector.broadcast %258 : f32 to vector<1x16x16xf32>
    %260 = arith.mulf %259, %33 : vector<1x16x16xf32>
    %261 = arith.addf %257, %260 : vector<1x16x16xf32>
    %c23_104 = arith.constant 23 : index
    %c1_105 = arith.constant 1 : index
    %262 = memref.load %arg2[%c23_104, %c1_105] : memref<25x6xf32, #tpu.memory_space<smem>>
    %263 = vector.broadcast %262 : f32 to vector<1x16x16xf32>
    %264 = arith.mulf %263, %34 : vector<1x16x16xf32>
    %265 = arith.addf %261, %264 : vector<1x16x16xf32>
    %c24_106 = arith.constant 24 : index
    %c1_107 = arith.constant 1 : index
    %266 = memref.load %arg2[%c24_106, %c1_107] : memref<25x6xf32, #tpu.memory_space<smem>>
    %267 = vector.broadcast %266 : f32 to vector<1x16x16xf32>
    %268 = arith.mulf %267, %35 : vector<1x16x16xf32>
    %269 = arith.addf %265, %268 : vector<1x16x16xf32>
    %c1_108 = arith.constant 1 : index
    %270 = memref.load %arg3[%c1_108] : memref<6xf32, #tpu.memory_space<smem>>
    %271 = vector.broadcast %270 : f32 to vector<1x16x16xf32>
    %272 = arith.addf %269, %271 : vector<1x16x16xf32>
    %273 = vector.shape_cast %272 : vector<1x16x16xf32> to vector<1x8x2x16xf32>
    %274 = vector.extract_strided_slice %273 {offsets = [0, 0, 0, 0], sizes = [1, 8, 1, 16], strides = [1, 1, 1, 1]} : vector<1x8x2x16xf32> to vector<1x8x1x16xf32>
    %275 = vector.shape_cast %274 : vector<1x8x1x16xf32> to vector<1x8x16xf32>
    %276 = vector.extract_strided_slice %273 {offsets = [0, 0, 1, 0], sizes = [1, 8, 1, 16], strides = [1, 1, 1, 1]} : vector<1x8x2x16xf32> to vector<1x8x1x16xf32>
    %277 = vector.shape_cast %276 : vector<1x8x1x16xf32> to vector<1x8x16xf32>
    %278 = arith.maximumf %275, %277 : vector<1x8x16xf32>
    %279 = vector.shape_cast %278 : vector<1x8x16xf32> to vector<8x16xf32>
    %cst_109 = arith.constant dense<0.000000e+00> : vector<8x8xf32>
    %280 = tpu.matmul %279, %42, %cst_109 {dimension_numbers = #tpu.dot_dimension_numbers<[1], [0], [0], [1], [0, 0, 1, 1], [], []>} : vector<8x16xf32>, vector<16x8xf32>, vector<8x8xf32> -> vector<8x8xf32>
    %cst_110 = arith.constant dense<0.000000e+00> : vector<8x8xf32>
    %281 = tpu.matmul %279, %49, %cst_110 {dimension_numbers = #tpu.dot_dimension_numbers<[1], [0], [0], [1], [0, 0, 1, 1], [], []>} : vector<8x16xf32>, vector<16x8xf32>, vector<8x8xf32> -> vector<8x8xf32>
    %282 = arith.maximumf %280, %281 : vector<8x8xf32>
    %283 = arith.negf %282 : vector<8x8xf32>
    %284 = math.exp %283 : vector<8x8xf32>
    %cst_111 = arith.constant 1.000000e+00 : f32
    %285 = vector.broadcast %cst_111 : f32 to vector<8x8xf32>
    %286 = arith.addf %285, %284 : vector<8x8xf32>
    %287 = arith.divf %285, %286 : vector<8x8xf32>
    %288 = vector.shape_cast %287 : vector<8x8xf32> to vector<1x8x8xf32>
    %c0_112 = arith.constant 0 : index
    %c1_113 = arith.constant 1 : index
    %c0_114 = arith.constant 0 : index
    %c0_115 = arith.constant 0 : index
    %289 = vector.load %arg4[%c0_112, %c1_113, %c0_114, %c0_115] : memref<1x6x8x8xf32, #tpu.memory_space<vmem>>, vector<1x1x8x8xf32>
    %290 = vector.shape_cast %289 : vector<1x1x8x8xf32> to vector<1x8x8xf32>
    %291 = vector.shape_cast %288 : vector<1x8x8xf32> to vector<1x1x8x8xf32>
    tpu.vector_store %arg4[%c0_112, %c1_113, %c0_114, %c0_115], %291 {strides = array<i32>} : memref<1x6x8x8xf32, #tpu.memory_space<vmem>>, vector<1x1x8x8xf32>,
    %c0_116 = arith.constant 0 : index
    %c2_117 = arith.constant 2 : index
    %292 = memref.load %arg2[%c0_116, %c2_117] : memref<25x6xf32, #tpu.memory_space<smem>>
    %293 = vector.broadcast %292 : f32 to vector<1x16x16xf32>
    %294 = arith.mulf %293, %11 : vector<1x16x16xf32>
    %c1_118 = arith.constant 1 : index
    %c2_119 = arith.constant 2 : index
    %295 = memref.load %arg2[%c1_118, %c2_119] : memref<25x6xf32, #tpu.memory_space<smem>>
    %296 = vector.broadcast %295 : f32 to vector<1x16x16xf32>
    %297 = arith.mulf %296, %12 : vector<1x16x16xf32>
    %298 = arith.addf %294, %297 : vector<1x16x16xf32>
    %c2_120 = arith.constant 2 : index
    %c2_121 = arith.constant 2 : index
    %299 = memref.load %arg2[%c2_120, %c2_121] : memref<25x6xf32, #tpu.memory_space<smem>>
    %300 = vector.broadcast %299 : f32 to vector<1x16x16xf32>
    %301 = arith.mulf %300, %13 : vector<1x16x16xf32>
    %302 = arith.addf %298, %301 : vector<1x16x16xf32>
    %c3_122 = arith.constant 3 : index
    %c2_123 = arith.constant 2 : index
    %303 = memref.load %arg2[%c3_122, %c2_123] : memref<25x6xf32, #tpu.memory_space<smem>>
    %304 = vector.broadcast %303 : f32 to vector<1x16x16xf32>
    %305 = arith.mulf %304, %14 : vector<1x16x16xf32>
    %306 = arith.addf %302, %305 : vector<1x16x16xf32>
    %c4_124 = arith.constant 4 : index
    %c2_125 = arith.constant 2 : index
    %307 = memref.load %arg2[%c4_124, %c2_125] : memref<25x6xf32, #tpu.memory_space<smem>>
    %308 = vector.broadcast %307 : f32 to vector<1x16x16xf32>
    %309 = arith.mulf %308, %15 : vector<1x16x16xf32>
    %310 = arith.addf %306, %309 : vector<1x16x16xf32>
    %c5_126 = arith.constant 5 : index
    %c2_127 = arith.constant 2 : index
    %311 = memref.load %arg2[%c5_126, %c2_127] : memref<25x6xf32, #tpu.memory_space<smem>>
    %312 = vector.broadcast %311 : f32 to vector<1x16x16xf32>
    %313 = arith.mulf %312, %16 : vector<1x16x16xf32>
    %314 = arith.addf %310, %313 : vector<1x16x16xf32>
    %c6_128 = arith.constant 6 : index
    %c2_129 = arith.constant 2 : index
    %315 = memref.load %arg2[%c6_128, %c2_129] : memref<25x6xf32, #tpu.memory_space<smem>>
    %316 = vector.broadcast %315 : f32 to vector<1x16x16xf32>
    %317 = arith.mulf %316, %17 : vector<1x16x16xf32>
    %318 = arith.addf %314, %317 : vector<1x16x16xf32>
    %c7_130 = arith.constant 7 : index
    %c2_131 = arith.constant 2 : index
    %319 = memref.load %arg2[%c7_130, %c2_131] : memref<25x6xf32, #tpu.memory_space<smem>>
    %320 = vector.broadcast %319 : f32 to vector<1x16x16xf32>
    %321 = arith.mulf %320, %18 : vector<1x16x16xf32>
    %322 = arith.addf %318, %321 : vector<1x16x16xf32>
    %c8_132 = arith.constant 8 : index
    %c2_133 = arith.constant 2 : index
    %323 = memref.load %arg2[%c8_132, %c2_133] : memref<25x6xf32, #tpu.memory_space<smem>>
    %324 = vector.broadcast %323 : f32 to vector<1x16x16xf32>
    %325 = arith.mulf %324, %19 : vector<1x16x16xf32>
    %326 = arith.addf %322, %325 : vector<1x16x16xf32>
    %c9_134 = arith.constant 9 : index
    %c2_135 = arith.constant 2 : index
    %327 = memref.load %arg2[%c9_134, %c2_135] : memref<25x6xf32, #tpu.memory_space<smem>>
    %328 = vector.broadcast %327 : f32 to vector<1x16x16xf32>
    %329 = arith.mulf %328, %20 : vector<1x16x16xf32>
    %330 = arith.addf %326, %329 : vector<1x16x16xf32>
    %c10_136 = arith.constant 10 : index
    %c2_137 = arith.constant 2 : index
    %331 = memref.load %arg2[%c10_136, %c2_137] : memref<25x6xf32, #tpu.memory_space<smem>>
    %332 = vector.broadcast %331 : f32 to vector<1x16x16xf32>
    %333 = arith.mulf %332, %21 : vector<1x16x16xf32>
    %334 = arith.addf %330, %333 : vector<1x16x16xf32>
    %c11_138 = arith.constant 11 : index
    %c2_139 = arith.constant 2 : index
    %335 = memref.load %arg2[%c11_138, %c2_139] : memref<25x6xf32, #tpu.memory_space<smem>>
    %336 = vector.broadcast %335 : f32 to vector<1x16x16xf32>
    %337 = arith.mulf %336, %22 : vector<1x16x16xf32>
    %338 = arith.addf %334, %337 : vector<1x16x16xf32>
    %c12_140 = arith.constant 12 : index
    %c2_141 = arith.constant 2 : index
    %339 = memref.load %arg2[%c12_140, %c2_141] : memref<25x6xf32, #tpu.memory_space<smem>>
    %340 = vector.broadcast %339 : f32 to vector<1x16x16xf32>
    %341 = arith.mulf %340, %23 : vector<1x16x16xf32>
    %342 = arith.addf %338, %341 : vector<1x16x16xf32>
    %c13_142 = arith.constant 13 : index
    %c2_143 = arith.constant 2 : index
    %343 = memref.load %arg2[%c13_142, %c2_143] : memref<25x6xf32, #tpu.memory_space<smem>>
    %344 = vector.broadcast %343 : f32 to vector<1x16x16xf32>
    %345 = arith.mulf %344, %24 : vector<1x16x16xf32>
    %346 = arith.addf %342, %345 : vector<1x16x16xf32>
    %c14_144 = arith.constant 14 : index
    %c2_145 = arith.constant 2 : index
    %347 = memref.load %arg2[%c14_144, %c2_145] : memref<25x6xf32, #tpu.memory_space<smem>>
    %348 = vector.broadcast %347 : f32 to vector<1x16x16xf32>
    %349 = arith.mulf %348, %25 : vector<1x16x16xf32>
    %350 = arith.addf %346, %349 : vector<1x16x16xf32>
    %c15_146 = arith.constant 15 : index
    %c2_147 = arith.constant 2 : index
    %351 = memref.load %arg2[%c15_146, %c2_147] : memref<25x6xf32, #tpu.memory_space<smem>>
    %352 = vector.broadcast %351 : f32 to vector<1x16x16xf32>
    %353 = arith.mulf %352, %26 : vector<1x16x16xf32>
    %354 = arith.addf %350, %353 : vector<1x16x16xf32>
    %c16_148 = arith.constant 16 : index
    %c2_149 = arith.constant 2 : index
    %355 = memref.load %arg2[%c16_148, %c2_149] : memref<25x6xf32, #tpu.memory_space<smem>>
    %356 = vector.broadcast %355 : f32 to vector<1x16x16xf32>
    %357 = arith.mulf %356, %27 : vector<1x16x16xf32>
    %358 = arith.addf %354, %357 : vector<1x16x16xf32>
    %c17_150 = arith.constant 17 : index
    %c2_151 = arith.constant 2 : index
    %359 = memref.load %arg2[%c17_150, %c2_151] : memref<25x6xf32, #tpu.memory_space<smem>>
    %360 = vector.broadcast %359 : f32 to vector<1x16x16xf32>
    %361 = arith.mulf %360, %28 : vector<1x16x16xf32>
    %362 = arith.addf %358, %361 : vector<1x16x16xf32>
    %c18_152 = arith.constant 18 : index
    %c2_153 = arith.constant 2 : index
    %363 = memref.load %arg2[%c18_152, %c2_153] : memref<25x6xf32, #tpu.memory_space<smem>>
    %364 = vector.broadcast %363 : f32 to vector<1x16x16xf32>
    %365 = arith.mulf %364, %29 : vector<1x16x16xf32>
    %366 = arith.addf %362, %365 : vector<1x16x16xf32>
    %c19_154 = arith.constant 19 : index
    %c2_155 = arith.constant 2 : index
    %367 = memref.load %arg2[%c19_154, %c2_155] : memref<25x6xf32, #tpu.memory_space<smem>>
    %368 = vector.broadcast %367 : f32 to vector<1x16x16xf32>
    %369 = arith.mulf %368, %30 : vector<1x16x16xf32>
    %370 = arith.addf %366, %369 : vector<1x16x16xf32>
    %c20_156 = arith.constant 20 : index
    %c2_157 = arith.constant 2 : index
    %371 = memref.load %arg2[%c20_156, %c2_157] : memref<25x6xf32, #tpu.memory_space<smem>>
    %372 = vector.broadcast %371 : f32 to vector<1x16x16xf32>
    %373 = arith.mulf %372, %31 : vector<1x16x16xf32>
    %374 = arith.addf %370, %373 : vector<1x16x16xf32>
    %c21_158 = arith.constant 21 : index
    %c2_159 = arith.constant 2 : index
    %375 = memref.load %arg2[%c21_158, %c2_159] : memref<25x6xf32, #tpu.memory_space<smem>>
    %376 = vector.broadcast %375 : f32 to vector<1x16x16xf32>
    %377 = arith.mulf %376, %32 : vector<1x16x16xf32>
    %378 = arith.addf %374, %377 : vector<1x16x16xf32>
    %c22_160 = arith.constant 22 : index
    %c2_161 = arith.constant 2 : index
    %379 = memref.load %arg2[%c22_160, %c2_161] : memref<25x6xf32, #tpu.memory_space<smem>>
    %380 = vector.broadcast %379 : f32 to vector<1x16x16xf32>
    %381 = arith.mulf %380, %33 : vector<1x16x16xf32>
    %382 = arith.addf %378, %381 : vector<1x16x16xf32>
    %c23_162 = arith.constant 23 : index
    %c2_163 = arith.constant 2 : index
    %383 = memref.load %arg2[%c23_162, %c2_163] : memref<25x6xf32, #tpu.memory_space<smem>>
    %384 = vector.broadcast %383 : f32 to vector<1x16x16xf32>
    %385 = arith.mulf %384, %34 : vector<1x16x16xf32>
    %386 = arith.addf %382, %385 : vector<1x16x16xf32>
    %c24_164 = arith.constant 24 : index
    %c2_165 = arith.constant 2 : index
    %387 = memref.load %arg2[%c24_164, %c2_165] : memref<25x6xf32, #tpu.memory_space<smem>>
    %388 = vector.broadcast %387 : f32 to vector<1x16x16xf32>
    %389 = arith.mulf %388, %35 : vector<1x16x16xf32>
    %390 = arith.addf %386, %389 : vector<1x16x16xf32>
    %c2_166 = arith.constant 2 : index
    %391 = memref.load %arg3[%c2_166] : memref<6xf32, #tpu.memory_space<smem>>
    %392 = vector.broadcast %391 : f32 to vector<1x16x16xf32>
    %393 = arith.addf %390, %392 : vector<1x16x16xf32>
    %394 = vector.shape_cast %393 : vector<1x16x16xf32> to vector<1x8x2x16xf32>
    %395 = vector.extract_strided_slice %394 {offsets = [0, 0, 0, 0], sizes = [1, 8, 1, 16], strides = [1, 1, 1, 1]} : vector<1x8x2x16xf32> to vector<1x8x1x16xf32>
    %396 = vector.shape_cast %395 : vector<1x8x1x16xf32> to vector<1x8x16xf32>
    %397 = vector.extract_strided_slice %394 {offsets = [0, 0, 1, 0], sizes = [1, 8, 1, 16], strides = [1, 1, 1, 1]} : vector<1x8x2x16xf32> to vector<1x8x1x16xf32>
    %398 = vector.shape_cast %397 : vector<1x8x1x16xf32> to vector<1x8x16xf32>
    %399 = arith.maximumf %396, %398 : vector<1x8x16xf32>
    %400 = vector.shape_cast %399 : vector<1x8x16xf32> to vector<8x16xf32>
    %cst_167 = arith.constant dense<0.000000e+00> : vector<8x8xf32>
    %401 = tpu.matmul %400, %42, %cst_167 {dimension_numbers = #tpu.dot_dimension_numbers<[1], [0], [0], [1], [0, 0, 1, 1], [], []>} : vector<8x16xf32>, vector<16x8xf32>, vector<8x8xf32> -> vector<8x8xf32>
    %cst_168 = arith.constant dense<0.000000e+00> : vector<8x8xf32>
    %402 = tpu.matmul %400, %49, %cst_168 {dimension_numbers = #tpu.dot_dimension_numbers<[1], [0], [0], [1], [0, 0, 1, 1], [], []>} : vector<8x16xf32>, vector<16x8xf32>, vector<8x8xf32> -> vector<8x8xf32>
    %403 = arith.maximumf %401, %402 : vector<8x8xf32>
    %404 = arith.negf %403 : vector<8x8xf32>
    %405 = math.exp %404 : vector<8x8xf32>
    %cst_169 = arith.constant 1.000000e+00 : f32
    %406 = vector.broadcast %cst_169 : f32 to vector<8x8xf32>
    %407 = arith.addf %406, %405 : vector<8x8xf32>
    %408 = arith.divf %406, %407 : vector<8x8xf32>
    %409 = vector.shape_cast %408 : vector<8x8xf32> to vector<1x8x8xf32>
    %c0_170 = arith.constant 0 : index
    %c2_171 = arith.constant 2 : index
    %c0_172 = arith.constant 0 : index
    %c0_173 = arith.constant 0 : index
    %410 = vector.load %arg4[%c0_170, %c2_171, %c0_172, %c0_173] : memref<1x6x8x8xf32, #tpu.memory_space<vmem>>, vector<1x1x8x8xf32>
    %411 = vector.shape_cast %410 : vector<1x1x8x8xf32> to vector<1x8x8xf32>
    %412 = vector.shape_cast %409 : vector<1x8x8xf32> to vector<1x1x8x8xf32>
    tpu.vector_store %arg4[%c0_170, %c2_171, %c0_172, %c0_173], %412 {strides = array<i32>} : memref<1x6x8x8xf32, #tpu.memory_space<vmem>>, vector<1x1x8x8xf32>,
    %c0_174 = arith.constant 0 : index
    %c3_175 = arith.constant 3 : index
    %413 = memref.load %arg2[%c0_174, %c3_175] : memref<25x6xf32, #tpu.memory_space<smem>>
    %414 = vector.broadcast %413 : f32 to vector<1x16x16xf32>
    %415 = arith.mulf %414, %11 : vector<1x16x16xf32>
    %c1_176 = arith.constant 1 : index
    %c3_177 = arith.constant 3 : index
    %416 = memref.load %arg2[%c1_176, %c3_177] : memref<25x6xf32, #tpu.memory_space<smem>>
    %417 = vector.broadcast %416 : f32 to vector<1x16x16xf32>
    %418 = arith.mulf %417, %12 : vector<1x16x16xf32>
    %419 = arith.addf %415, %418 : vector<1x16x16xf32>
    %c2_178 = arith.constant 2 : index
    %c3_179 = arith.constant 3 : index
    %420 = memref.load %arg2[%c2_178, %c3_179] : memref<25x6xf32, #tpu.memory_space<smem>>
    %421 = vector.broadcast %420 : f32 to vector<1x16x16xf32>
    %422 = arith.mulf %421, %13 : vector<1x16x16xf32>
    %423 = arith.addf %419, %422 : vector<1x16x16xf32>
    %c3_180 = arith.constant 3 : index
    %c3_181 = arith.constant 3 : index
    %424 = memref.load %arg2[%c3_180, %c3_181] : memref<25x6xf32, #tpu.memory_space<smem>>
    %425 = vector.broadcast %424 : f32 to vector<1x16x16xf32>
    %426 = arith.mulf %425, %14 : vector<1x16x16xf32>
    %427 = arith.addf %423, %426 : vector<1x16x16xf32>
    %c4_182 = arith.constant 4 : index
    %c3_183 = arith.constant 3 : index
    %428 = memref.load %arg2[%c4_182, %c3_183] : memref<25x6xf32, #tpu.memory_space<smem>>
    %429 = vector.broadcast %428 : f32 to vector<1x16x16xf32>
    %430 = arith.mulf %429, %15 : vector<1x16x16xf32>
    %431 = arith.addf %427, %430 : vector<1x16x16xf32>
    %c5_184 = arith.constant 5 : index
    %c3_185 = arith.constant 3 : index
    %432 = memref.load %arg2[%c5_184, %c3_185] : memref<25x6xf32, #tpu.memory_space<smem>>
    %433 = vector.broadcast %432 : f32 to vector<1x16x16xf32>
    %434 = arith.mulf %433, %16 : vector<1x16x16xf32>
    %435 = arith.addf %431, %434 : vector<1x16x16xf32>
    %c6_186 = arith.constant 6 : index
    %c3_187 = arith.constant 3 : index
    %436 = memref.load %arg2[%c6_186, %c3_187] : memref<25x6xf32, #tpu.memory_space<smem>>
    %437 = vector.broadcast %436 : f32 to vector<1x16x16xf32>
    %438 = arith.mulf %437, %17 : vector<1x16x16xf32>
    %439 = arith.addf %435, %438 : vector<1x16x16xf32>
    %c7_188 = arith.constant 7 : index
    %c3_189 = arith.constant 3 : index
    %440 = memref.load %arg2[%c7_188, %c3_189] : memref<25x6xf32, #tpu.memory_space<smem>>
    %441 = vector.broadcast %440 : f32 to vector<1x16x16xf32>
    %442 = arith.mulf %441, %18 : vector<1x16x16xf32>
    %443 = arith.addf %439, %442 : vector<1x16x16xf32>
    %c8_190 = arith.constant 8 : index
    %c3_191 = arith.constant 3 : index
    %444 = memref.load %arg2[%c8_190, %c3_191] : memref<25x6xf32, #tpu.memory_space<smem>>
    %445 = vector.broadcast %444 : f32 to vector<1x16x16xf32>
    %446 = arith.mulf %445, %19 : vector<1x16x16xf32>
    %447 = arith.addf %443, %446 : vector<1x16x16xf32>
    %c9_192 = arith.constant 9 : index
    %c3_193 = arith.constant 3 : index
    %448 = memref.load %arg2[%c9_192, %c3_193] : memref<25x6xf32, #tpu.memory_space<smem>>
    %449 = vector.broadcast %448 : f32 to vector<1x16x16xf32>
    %450 = arith.mulf %449, %20 : vector<1x16x16xf32>
    %451 = arith.addf %447, %450 : vector<1x16x16xf32>
    %c10_194 = arith.constant 10 : index
    %c3_195 = arith.constant 3 : index
    %452 = memref.load %arg2[%c10_194, %c3_195] : memref<25x6xf32, #tpu.memory_space<smem>>
    %453 = vector.broadcast %452 : f32 to vector<1x16x16xf32>
    %454 = arith.mulf %453, %21 : vector<1x16x16xf32>
    %455 = arith.addf %451, %454 : vector<1x16x16xf32>
    %c11_196 = arith.constant 11 : index
    %c3_197 = arith.constant 3 : index
    %456 = memref.load %arg2[%c11_196, %c3_197] : memref<25x6xf32, #tpu.memory_space<smem>>
    %457 = vector.broadcast %456 : f32 to vector<1x16x16xf32>
    %458 = arith.mulf %457, %22 : vector<1x16x16xf32>
    %459 = arith.addf %455, %458 : vector<1x16x16xf32>
    %c12_198 = arith.constant 12 : index
    %c3_199 = arith.constant 3 : index
    %460 = memref.load %arg2[%c12_198, %c3_199] : memref<25x6xf32, #tpu.memory_space<smem>>
    %461 = vector.broadcast %460 : f32 to vector<1x16x16xf32>
    %462 = arith.mulf %461, %23 : vector<1x16x16xf32>
    %463 = arith.addf %459, %462 : vector<1x16x16xf32>
    %c13_200 = arith.constant 13 : index
    %c3_201 = arith.constant 3 : index
    %464 = memref.load %arg2[%c13_200, %c3_201] : memref<25x6xf32, #tpu.memory_space<smem>>
    %465 = vector.broadcast %464 : f32 to vector<1x16x16xf32>
    %466 = arith.mulf %465, %24 : vector<1x16x16xf32>
    %467 = arith.addf %463, %466 : vector<1x16x16xf32>
    %c14_202 = arith.constant 14 : index
    %c3_203 = arith.constant 3 : index
    %468 = memref.load %arg2[%c14_202, %c3_203] : memref<25x6xf32, #tpu.memory_space<smem>>
    %469 = vector.broadcast %468 : f32 to vector<1x16x16xf32>
    %470 = arith.mulf %469, %25 : vector<1x16x16xf32>
    %471 = arith.addf %467, %470 : vector<1x16x16xf32>
    %c15_204 = arith.constant 15 : index
    %c3_205 = arith.constant 3 : index
    %472 = memref.load %arg2[%c15_204, %c3_205] : memref<25x6xf32, #tpu.memory_space<smem>>
    %473 = vector.broadcast %472 : f32 to vector<1x16x16xf32>
    %474 = arith.mulf %473, %26 : vector<1x16x16xf32>
    %475 = arith.addf %471, %474 : vector<1x16x16xf32>
    %c16_206 = arith.constant 16 : index
    %c3_207 = arith.constant 3 : index
    %476 = memref.load %arg2[%c16_206, %c3_207] : memref<25x6xf32, #tpu.memory_space<smem>>
    %477 = vector.broadcast %476 : f32 to vector<1x16x16xf32>
    %478 = arith.mulf %477, %27 : vector<1x16x16xf32>
    %479 = arith.addf %475, %478 : vector<1x16x16xf32>
    %c17_208 = arith.constant 17 : index
    %c3_209 = arith.constant 3 : index
    %480 = memref.load %arg2[%c17_208, %c3_209] : memref<25x6xf32, #tpu.memory_space<smem>>
    %481 = vector.broadcast %480 : f32 to vector<1x16x16xf32>
    %482 = arith.mulf %481, %28 : vector<1x16x16xf32>
    %483 = arith.addf %479, %482 : vector<1x16x16xf32>
    %c18_210 = arith.constant 18 : index
    %c3_211 = arith.constant 3 : index
    %484 = memref.load %arg2[%c18_210, %c3_211] : memref<25x6xf32, #tpu.memory_space<smem>>
    %485 = vector.broadcast %484 : f32 to vector<1x16x16xf32>
    %486 = arith.mulf %485, %29 : vector<1x16x16xf32>
    %487 = arith.addf %483, %486 : vector<1x16x16xf32>
    %c19_212 = arith.constant 19 : index
    %c3_213 = arith.constant 3 : index
    %488 = memref.load %arg2[%c19_212, %c3_213] : memref<25x6xf32, #tpu.memory_space<smem>>
    %489 = vector.broadcast %488 : f32 to vector<1x16x16xf32>
    %490 = arith.mulf %489, %30 : vector<1x16x16xf32>
    %491 = arith.addf %487, %490 : vector<1x16x16xf32>
    %c20_214 = arith.constant 20 : index
    %c3_215 = arith.constant 3 : index
    %492 = memref.load %arg2[%c20_214, %c3_215] : memref<25x6xf32, #tpu.memory_space<smem>>
    %493 = vector.broadcast %492 : f32 to vector<1x16x16xf32>
    %494 = arith.mulf %493, %31 : vector<1x16x16xf32>
    %495 = arith.addf %491, %494 : vector<1x16x16xf32>
    %c21_216 = arith.constant 21 : index
    %c3_217 = arith.constant 3 : index
    %496 = memref.load %arg2[%c21_216, %c3_217] : memref<25x6xf32, #tpu.memory_space<smem>>
    %497 = vector.broadcast %496 : f32 to vector<1x16x16xf32>
    %498 = arith.mulf %497, %32 : vector<1x16x16xf32>
    %499 = arith.addf %495, %498 : vector<1x16x16xf32>
    %c22_218 = arith.constant 22 : index
    %c3_219 = arith.constant 3 : index
    %500 = memref.load %arg2[%c22_218, %c3_219] : memref<25x6xf32, #tpu.memory_space<smem>>
    %501 = vector.broadcast %500 : f32 to vector<1x16x16xf32>
    %502 = arith.mulf %501, %33 : vector<1x16x16xf32>
    %503 = arith.addf %499, %502 : vector<1x16x16xf32>
    %c23_220 = arith.constant 23 : index
    %c3_221 = arith.constant 3 : index
    %504 = memref.load %arg2[%c23_220, %c3_221] : memref<25x6xf32, #tpu.memory_space<smem>>
    %505 = vector.broadcast %504 : f32 to vector<1x16x16xf32>
    %506 = arith.mulf %505, %34 : vector<1x16x16xf32>
    %507 = arith.addf %503, %506 : vector<1x16x16xf32>
    %c24_222 = arith.constant 24 : index
    %c3_223 = arith.constant 3 : index
    %508 = memref.load %arg2[%c24_222, %c3_223] : memref<25x6xf32, #tpu.memory_space<smem>>
    %509 = vector.broadcast %508 : f32 to vector<1x16x16xf32>
    %510 = arith.mulf %509, %35 : vector<1x16x16xf32>
    %511 = arith.addf %507, %510 : vector<1x16x16xf32>
    %c3_224 = arith.constant 3 : index
    %512 = memref.load %arg3[%c3_224] : memref<6xf32, #tpu.memory_space<smem>>
    %513 = vector.broadcast %512 : f32 to vector<1x16x16xf32>
    %514 = arith.addf %511, %513 : vector<1x16x16xf32>
    %515 = vector.shape_cast %514 : vector<1x16x16xf32> to vector<1x8x2x16xf32>
    %516 = vector.extract_strided_slice %515 {offsets = [0, 0, 0, 0], sizes = [1, 8, 1, 16], strides = [1, 1, 1, 1]} : vector<1x8x2x16xf32> to vector<1x8x1x16xf32>
    %517 = vector.shape_cast %516 : vector<1x8x1x16xf32> to vector<1x8x16xf32>
    %518 = vector.extract_strided_slice %515 {offsets = [0, 0, 1, 0], sizes = [1, 8, 1, 16], strides = [1, 1, 1, 1]} : vector<1x8x2x16xf32> to vector<1x8x1x16xf32>
    %519 = vector.shape_cast %518 : vector<1x8x1x16xf32> to vector<1x8x16xf32>
    %520 = arith.maximumf %517, %519 : vector<1x8x16xf32>
    %521 = vector.shape_cast %520 : vector<1x8x16xf32> to vector<8x16xf32>
    %cst_225 = arith.constant dense<0.000000e+00> : vector<8x8xf32>
    %522 = tpu.matmul %521, %42, %cst_225 {dimension_numbers = #tpu.dot_dimension_numbers<[1], [0], [0], [1], [0, 0, 1, 1], [], []>} : vector<8x16xf32>, vector<16x8xf32>, vector<8x8xf32> -> vector<8x8xf32>
    %cst_226 = arith.constant dense<0.000000e+00> : vector<8x8xf32>
    %523 = tpu.matmul %521, %49, %cst_226 {dimension_numbers = #tpu.dot_dimension_numbers<[1], [0], [0], [1], [0, 0, 1, 1], [], []>} : vector<8x16xf32>, vector<16x8xf32>, vector<8x8xf32> -> vector<8x8xf32>
    %524 = arith.maximumf %522, %523 : vector<8x8xf32>
    %525 = arith.negf %524 : vector<8x8xf32>
    %526 = math.exp %525 : vector<8x8xf32>
    %cst_227 = arith.constant 1.000000e+00 : f32
    %527 = vector.broadcast %cst_227 : f32 to vector<8x8xf32>
    %528 = arith.addf %527, %526 : vector<8x8xf32>
    %529 = arith.divf %527, %528 : vector<8x8xf32>
    %530 = vector.shape_cast %529 : vector<8x8xf32> to vector<1x8x8xf32>
    %c0_228 = arith.constant 0 : index
    %c3_229 = arith.constant 3 : index
    %c0_230 = arith.constant 0 : index
    %c0_231 = arith.constant 0 : index
    %531 = vector.load %arg4[%c0_228, %c3_229, %c0_230, %c0_231] : memref<1x6x8x8xf32, #tpu.memory_space<vmem>>, vector<1x1x8x8xf32>
    %532 = vector.shape_cast %531 : vector<1x1x8x8xf32> to vector<1x8x8xf32>
    %533 = vector.shape_cast %530 : vector<1x8x8xf32> to vector<1x1x8x8xf32>
    tpu.vector_store %arg4[%c0_228, %c3_229, %c0_230, %c0_231], %533 {strides = array<i32>} : memref<1x6x8x8xf32, #tpu.memory_space<vmem>>, vector<1x1x8x8xf32>,
    %c0_232 = arith.constant 0 : index
    %c4_233 = arith.constant 4 : index
    %534 = memref.load %arg2[%c0_232, %c4_233] : memref<25x6xf32, #tpu.memory_space<smem>>
    %535 = vector.broadcast %534 : f32 to vector<1x16x16xf32>
    %536 = arith.mulf %535, %11 : vector<1x16x16xf32>
    %c1_234 = arith.constant 1 : index
    %c4_235 = arith.constant 4 : index
    %537 = memref.load %arg2[%c1_234, %c4_235] : memref<25x6xf32, #tpu.memory_space<smem>>
    %538 = vector.broadcast %537 : f32 to vector<1x16x16xf32>
    %539 = arith.mulf %538, %12 : vector<1x16x16xf32>
    %540 = arith.addf %536, %539 : vector<1x16x16xf32>
    %c2_236 = arith.constant 2 : index
    %c4_237 = arith.constant 4 : index
    %541 = memref.load %arg2[%c2_236, %c4_237] : memref<25x6xf32, #tpu.memory_space<smem>>
    %542 = vector.broadcast %541 : f32 to vector<1x16x16xf32>
    %543 = arith.mulf %542, %13 : vector<1x16x16xf32>
    %544 = arith.addf %540, %543 : vector<1x16x16xf32>
    %c3_238 = arith.constant 3 : index
    %c4_239 = arith.constant 4 : index
    %545 = memref.load %arg2[%c3_238, %c4_239] : memref<25x6xf32, #tpu.memory_space<smem>>
    %546 = vector.broadcast %545 : f32 to vector<1x16x16xf32>
    %547 = arith.mulf %546, %14 : vector<1x16x16xf32>
    %548 = arith.addf %544, %547 : vector<1x16x16xf32>
    %c4_240 = arith.constant 4 : index
    %c4_241 = arith.constant 4 : index
    %549 = memref.load %arg2[%c4_240, %c4_241] : memref<25x6xf32, #tpu.memory_space<smem>>
    %550 = vector.broadcast %549 : f32 to vector<1x16x16xf32>
    %551 = arith.mulf %550, %15 : vector<1x16x16xf32>
    %552 = arith.addf %548, %551 : vector<1x16x16xf32>
    %c5_242 = arith.constant 5 : index
    %c4_243 = arith.constant 4 : index
    %553 = memref.load %arg2[%c5_242, %c4_243] : memref<25x6xf32, #tpu.memory_space<smem>>
    %554 = vector.broadcast %553 : f32 to vector<1x16x16xf32>
    %555 = arith.mulf %554, %16 : vector<1x16x16xf32>
    %556 = arith.addf %552, %555 : vector<1x16x16xf32>
    %c6_244 = arith.constant 6 : index
    %c4_245 = arith.constant 4 : index
    %557 = memref.load %arg2[%c6_244, %c4_245] : memref<25x6xf32, #tpu.memory_space<smem>>
    %558 = vector.broadcast %557 : f32 to vector<1x16x16xf32>
    %559 = arith.mulf %558, %17 : vector<1x16x16xf32>
    %560 = arith.addf %556, %559 : vector<1x16x16xf32>
    %c7_246 = arith.constant 7 : index
    %c4_247 = arith.constant 4 : index
    %561 = memref.load %arg2[%c7_246, %c4_247] : memref<25x6xf32, #tpu.memory_space<smem>>
    %562 = vector.broadcast %561 : f32 to vector<1x16x16xf32>
    %563 = arith.mulf %562, %18 : vector<1x16x16xf32>
    %564 = arith.addf %560, %563 : vector<1x16x16xf32>
    %c8_248 = arith.constant 8 : index
    %c4_249 = arith.constant 4 : index
    %565 = memref.load %arg2[%c8_248, %c4_249] : memref<25x6xf32, #tpu.memory_space<smem>>
    %566 = vector.broadcast %565 : f32 to vector<1x16x16xf32>
    %567 = arith.mulf %566, %19 : vector<1x16x16xf32>
    %568 = arith.addf %564, %567 : vector<1x16x16xf32>
    %c9_250 = arith.constant 9 : index
    %c4_251 = arith.constant 4 : index
    %569 = memref.load %arg2[%c9_250, %c4_251] : memref<25x6xf32, #tpu.memory_space<smem>>
    %570 = vector.broadcast %569 : f32 to vector<1x16x16xf32>
    %571 = arith.mulf %570, %20 : vector<1x16x16xf32>
    %572 = arith.addf %568, %571 : vector<1x16x16xf32>
    %c10_252 = arith.constant 10 : index
    %c4_253 = arith.constant 4 : index
    %573 = memref.load %arg2[%c10_252, %c4_253] : memref<25x6xf32, #tpu.memory_space<smem>>
    %574 = vector.broadcast %573 : f32 to vector<1x16x16xf32>
    %575 = arith.mulf %574, %21 : vector<1x16x16xf32>
    %576 = arith.addf %572, %575 : vector<1x16x16xf32>
    %c11_254 = arith.constant 11 : index
    %c4_255 = arith.constant 4 : index
    %577 = memref.load %arg2[%c11_254, %c4_255] : memref<25x6xf32, #tpu.memory_space<smem>>
    %578 = vector.broadcast %577 : f32 to vector<1x16x16xf32>
    %579 = arith.mulf %578, %22 : vector<1x16x16xf32>
    %580 = arith.addf %576, %579 : vector<1x16x16xf32>
    %c12_256 = arith.constant 12 : index
    %c4_257 = arith.constant 4 : index
    %581 = memref.load %arg2[%c12_256, %c4_257] : memref<25x6xf32, #tpu.memory_space<smem>>
    %582 = vector.broadcast %581 : f32 to vector<1x16x16xf32>
    %583 = arith.mulf %582, %23 : vector<1x16x16xf32>
    %584 = arith.addf %580, %583 : vector<1x16x16xf32>
    %c13_258 = arith.constant 13 : index
    %c4_259 = arith.constant 4 : index
    %585 = memref.load %arg2[%c13_258, %c4_259] : memref<25x6xf32, #tpu.memory_space<smem>>
    %586 = vector.broadcast %585 : f32 to vector<1x16x16xf32>
    %587 = arith.mulf %586, %24 : vector<1x16x16xf32>
    %588 = arith.addf %584, %587 : vector<1x16x16xf32>
    %c14_260 = arith.constant 14 : index
    %c4_261 = arith.constant 4 : index
    %589 = memref.load %arg2[%c14_260, %c4_261] : memref<25x6xf32, #tpu.memory_space<smem>>
    %590 = vector.broadcast %589 : f32 to vector<1x16x16xf32>
    %591 = arith.mulf %590, %25 : vector<1x16x16xf32>
    %592 = arith.addf %588, %591 : vector<1x16x16xf32>
    %c15_262 = arith.constant 15 : index
    %c4_263 = arith.constant 4 : index
    %593 = memref.load %arg2[%c15_262, %c4_263] : memref<25x6xf32, #tpu.memory_space<smem>>
    %594 = vector.broadcast %593 : f32 to vector<1x16x16xf32>
    %595 = arith.mulf %594, %26 : vector<1x16x16xf32>
    %596 = arith.addf %592, %595 : vector<1x16x16xf32>
    %c16_264 = arith.constant 16 : index
    %c4_265 = arith.constant 4 : index
    %597 = memref.load %arg2[%c16_264, %c4_265] : memref<25x6xf32, #tpu.memory_space<smem>>
    %598 = vector.broadcast %597 : f32 to vector<1x16x16xf32>
    %599 = arith.mulf %598, %27 : vector<1x16x16xf32>
    %600 = arith.addf %596, %599 : vector<1x16x16xf32>
    %c17_266 = arith.constant 17 : index
    %c4_267 = arith.constant 4 : index
    %601 = memref.load %arg2[%c17_266, %c4_267] : memref<25x6xf32, #tpu.memory_space<smem>>
    %602 = vector.broadcast %601 : f32 to vector<1x16x16xf32>
    %603 = arith.mulf %602, %28 : vector<1x16x16xf32>
    %604 = arith.addf %600, %603 : vector<1x16x16xf32>
    %c18_268 = arith.constant 18 : index
    %c4_269 = arith.constant 4 : index
    %605 = memref.load %arg2[%c18_268, %c4_269] : memref<25x6xf32, #tpu.memory_space<smem>>
    %606 = vector.broadcast %605 : f32 to vector<1x16x16xf32>
    %607 = arith.mulf %606, %29 : vector<1x16x16xf32>
    %608 = arith.addf %604, %607 : vector<1x16x16xf32>
    %c19_270 = arith.constant 19 : index
    %c4_271 = arith.constant 4 : index
    %609 = memref.load %arg2[%c19_270, %c4_271] : memref<25x6xf32, #tpu.memory_space<smem>>
    %610 = vector.broadcast %609 : f32 to vector<1x16x16xf32>
    %611 = arith.mulf %610, %30 : vector<1x16x16xf32>
    %612 = arith.addf %608, %611 : vector<1x16x16xf32>
    %c20_272 = arith.constant 20 : index
    %c4_273 = arith.constant 4 : index
    %613 = memref.load %arg2[%c20_272, %c4_273] : memref<25x6xf32, #tpu.memory_space<smem>>
    %614 = vector.broadcast %613 : f32 to vector<1x16x16xf32>
    %615 = arith.mulf %614, %31 : vector<1x16x16xf32>
    %616 = arith.addf %612, %615 : vector<1x16x16xf32>
    %c21_274 = arith.constant 21 : index
    %c4_275 = arith.constant 4 : index
    %617 = memref.load %arg2[%c21_274, %c4_275] : memref<25x6xf32, #tpu.memory_space<smem>>
    %618 = vector.broadcast %617 : f32 to vector<1x16x16xf32>
    %619 = arith.mulf %618, %32 : vector<1x16x16xf32>
    %620 = arith.addf %616, %619 : vector<1x16x16xf32>
    %c22_276 = arith.constant 22 : index
    %c4_277 = arith.constant 4 : index
    %621 = memref.load %arg2[%c22_276, %c4_277] : memref<25x6xf32, #tpu.memory_space<smem>>
    %622 = vector.broadcast %621 : f32 to vector<1x16x16xf32>
    %623 = arith.mulf %622, %33 : vector<1x16x16xf32>
    %624 = arith.addf %620, %623 : vector<1x16x16xf32>
    %c23_278 = arith.constant 23 : index
    %c4_279 = arith.constant 4 : index
    %625 = memref.load %arg2[%c23_278, %c4_279] : memref<25x6xf32, #tpu.memory_space<smem>>
    %626 = vector.broadcast %625 : f32 to vector<1x16x16xf32>
    %627 = arith.mulf %626, %34 : vector<1x16x16xf32>
    %628 = arith.addf %624, %627 : vector<1x16x16xf32>
    %c24_280 = arith.constant 24 : index
    %c4_281 = arith.constant 4 : index
    %629 = memref.load %arg2[%c24_280, %c4_281] : memref<25x6xf32, #tpu.memory_space<smem>>
    %630 = vector.broadcast %629 : f32 to vector<1x16x16xf32>
    %631 = arith.mulf %630, %35 : vector<1x16x16xf32>
    %632 = arith.addf %628, %631 : vector<1x16x16xf32>
    %c4_282 = arith.constant 4 : index
    %633 = memref.load %arg3[%c4_282] : memref<6xf32, #tpu.memory_space<smem>>
    %634 = vector.broadcast %633 : f32 to vector<1x16x16xf32>
    %635 = arith.addf %632, %634 : vector<1x16x16xf32>
    %636 = vector.shape_cast %635 : vector<1x16x16xf32> to vector<1x8x2x16xf32>
    %637 = vector.extract_strided_slice %636 {offsets = [0, 0, 0, 0], sizes = [1, 8, 1, 16], strides = [1, 1, 1, 1]} : vector<1x8x2x16xf32> to vector<1x8x1x16xf32>
    %638 = vector.shape_cast %637 : vector<1x8x1x16xf32> to vector<1x8x16xf32>
    %639 = vector.extract_strided_slice %636 {offsets = [0, 0, 1, 0], sizes = [1, 8, 1, 16], strides = [1, 1, 1, 1]} : vector<1x8x2x16xf32> to vector<1x8x1x16xf32>
    %640 = vector.shape_cast %639 : vector<1x8x1x16xf32> to vector<1x8x16xf32>
    %641 = arith.maximumf %638, %640 : vector<1x8x16xf32>
    %642 = vector.shape_cast %641 : vector<1x8x16xf32> to vector<8x16xf32>
    %cst_283 = arith.constant dense<0.000000e+00> : vector<8x8xf32>
    %643 = tpu.matmul %642, %42, %cst_283 {dimension_numbers = #tpu.dot_dimension_numbers<[1], [0], [0], [1], [0, 0, 1, 1], [], []>} : vector<8x16xf32>, vector<16x8xf32>, vector<8x8xf32> -> vector<8x8xf32>
    %cst_284 = arith.constant dense<0.000000e+00> : vector<8x8xf32>
    %644 = tpu.matmul %642, %49, %cst_284 {dimension_numbers = #tpu.dot_dimension_numbers<[1], [0], [0], [1], [0, 0, 1, 1], [], []>} : vector<8x16xf32>, vector<16x8xf32>, vector<8x8xf32> -> vector<8x8xf32>
    %645 = arith.maximumf %643, %644 : vector<8x8xf32>
    %646 = arith.negf %645 : vector<8x8xf32>
    %647 = math.exp %646 : vector<8x8xf32>
    %cst_285 = arith.constant 1.000000e+00 : f32
    %648 = vector.broadcast %cst_285 : f32 to vector<8x8xf32>
    %649 = arith.addf %648, %647 : vector<8x8xf32>
    %650 = arith.divf %648, %649 : vector<8x8xf32>
    %651 = vector.shape_cast %650 : vector<8x8xf32> to vector<1x8x8xf32>
    %c0_286 = arith.constant 0 : index
    %c4_287 = arith.constant 4 : index
    %c0_288 = arith.constant 0 : index
    %c0_289 = arith.constant 0 : index
    %652 = vector.load %arg4[%c0_286, %c4_287, %c0_288, %c0_289] : memref<1x6x8x8xf32, #tpu.memory_space<vmem>>, vector<1x1x8x8xf32>
    %653 = vector.shape_cast %652 : vector<1x1x8x8xf32> to vector<1x8x8xf32>
    %654 = vector.shape_cast %651 : vector<1x8x8xf32> to vector<1x1x8x8xf32>
    tpu.vector_store %arg4[%c0_286, %c4_287, %c0_288, %c0_289], %654 {strides = array<i32>} : memref<1x6x8x8xf32, #tpu.memory_space<vmem>>, vector<1x1x8x8xf32>,
    %c0_290 = arith.constant 0 : index
    %c5_291 = arith.constant 5 : index
    %655 = memref.load %arg2[%c0_290, %c5_291] : memref<25x6xf32, #tpu.memory_space<smem>>
    %656 = vector.broadcast %655 : f32 to vector<1x16x16xf32>
    %657 = arith.mulf %656, %11 : vector<1x16x16xf32>
    %c1_292 = arith.constant 1 : index
    %c5_293 = arith.constant 5 : index
    %658 = memref.load %arg2[%c1_292, %c5_293] : memref<25x6xf32, #tpu.memory_space<smem>>
    %659 = vector.broadcast %658 : f32 to vector<1x16x16xf32>
    %660 = arith.mulf %659, %12 : vector<1x16x16xf32>
    %661 = arith.addf %657, %660 : vector<1x16x16xf32>
    %c2_294 = arith.constant 2 : index
    %c5_295 = arith.constant 5 : index
    %662 = memref.load %arg2[%c2_294, %c5_295] : memref<25x6xf32, #tpu.memory_space<smem>>
    %663 = vector.broadcast %662 : f32 to vector<1x16x16xf32>
    %664 = arith.mulf %663, %13 : vector<1x16x16xf32>
    %665 = arith.addf %661, %664 : vector<1x16x16xf32>
    %c3_296 = arith.constant 3 : index
    %c5_297 = arith.constant 5 : index
    %666 = memref.load %arg2[%c3_296, %c5_297] : memref<25x6xf32, #tpu.memory_space<smem>>
    %667 = vector.broadcast %666 : f32 to vector<1x16x16xf32>
    %668 = arith.mulf %667, %14 : vector<1x16x16xf32>
    %669 = arith.addf %665, %668 : vector<1x16x16xf32>
    %c4_298 = arith.constant 4 : index
    %c5_299 = arith.constant 5 : index
    %670 = memref.load %arg2[%c4_298, %c5_299] : memref<25x6xf32, #tpu.memory_space<smem>>
    %671 = vector.broadcast %670 : f32 to vector<1x16x16xf32>
    %672 = arith.mulf %671, %15 : vector<1x16x16xf32>
    %673 = arith.addf %669, %672 : vector<1x16x16xf32>
    %c5_300 = arith.constant 5 : index
    %c5_301 = arith.constant 5 : index
    %674 = memref.load %arg2[%c5_300, %c5_301] : memref<25x6xf32, #tpu.memory_space<smem>>
    %675 = vector.broadcast %674 : f32 to vector<1x16x16xf32>
    %676 = arith.mulf %675, %16 : vector<1x16x16xf32>
    %677 = arith.addf %673, %676 : vector<1x16x16xf32>
    %c6_302 = arith.constant 6 : index
    %c5_303 = arith.constant 5 : index
    %678 = memref.load %arg2[%c6_302, %c5_303] : memref<25x6xf32, #tpu.memory_space<smem>>
    %679 = vector.broadcast %678 : f32 to vector<1x16x16xf32>
    %680 = arith.mulf %679, %17 : vector<1x16x16xf32>
    %681 = arith.addf %677, %680 : vector<1x16x16xf32>
    %c7_304 = arith.constant 7 : index
    %c5_305 = arith.constant 5 : index
    %682 = memref.load %arg2[%c7_304, %c5_305] : memref<25x6xf32, #tpu.memory_space<smem>>
    %683 = vector.broadcast %682 : f32 to vector<1x16x16xf32>
    %684 = arith.mulf %683, %18 : vector<1x16x16xf32>
    %685 = arith.addf %681, %684 : vector<1x16x16xf32>
    %c8_306 = arith.constant 8 : index
    %c5_307 = arith.constant 5 : index
    %686 = memref.load %arg2[%c8_306, %c5_307] : memref<25x6xf32, #tpu.memory_space<smem>>
    %687 = vector.broadcast %686 : f32 to vector<1x16x16xf32>
    %688 = arith.mulf %687, %19 : vector<1x16x16xf32>
    %689 = arith.addf %685, %688 : vector<1x16x16xf32>
    %c9_308 = arith.constant 9 : index
    %c5_309 = arith.constant 5 : index
    %690 = memref.load %arg2[%c9_308, %c5_309] : memref<25x6xf32, #tpu.memory_space<smem>>
    %691 = vector.broadcast %690 : f32 to vector<1x16x16xf32>
    %692 = arith.mulf %691, %20 : vector<1x16x16xf32>
    %693 = arith.addf %689, %692 : vector<1x16x16xf32>
    %c10_310 = arith.constant 10 : index
    %c5_311 = arith.constant 5 : index
    %694 = memref.load %arg2[%c10_310, %c5_311] : memref<25x6xf32, #tpu.memory_space<smem>>
    %695 = vector.broadcast %694 : f32 to vector<1x16x16xf32>
    %696 = arith.mulf %695, %21 : vector<1x16x16xf32>
    %697 = arith.addf %693, %696 : vector<1x16x16xf32>
    %c11_312 = arith.constant 11 : index
    %c5_313 = arith.constant 5 : index
    %698 = memref.load %arg2[%c11_312, %c5_313] : memref<25x6xf32, #tpu.memory_space<smem>>
    %699 = vector.broadcast %698 : f32 to vector<1x16x16xf32>
    %700 = arith.mulf %699, %22 : vector<1x16x16xf32>
    %701 = arith.addf %697, %700 : vector<1x16x16xf32>
    %c12_314 = arith.constant 12 : index
    %c5_315 = arith.constant 5 : index
    %702 = memref.load %arg2[%c12_314, %c5_315] : memref<25x6xf32, #tpu.memory_space<smem>>
    %703 = vector.broadcast %702 : f32 to vector<1x16x16xf32>
    %704 = arith.mulf %703, %23 : vector<1x16x16xf32>
    %705 = arith.addf %701, %704 : vector<1x16x16xf32>
    %c13_316 = arith.constant 13 : index
    %c5_317 = arith.constant 5 : index
    %706 = memref.load %arg2[%c13_316, %c5_317] : memref<25x6xf32, #tpu.memory_space<smem>>
    %707 = vector.broadcast %706 : f32 to vector<1x16x16xf32>
    %708 = arith.mulf %707, %24 : vector<1x16x16xf32>
    %709 = arith.addf %705, %708 : vector<1x16x16xf32>
    %c14_318 = arith.constant 14 : index
    %c5_319 = arith.constant 5 : index
    %710 = memref.load %arg2[%c14_318, %c5_319] : memref<25x6xf32, #tpu.memory_space<smem>>
    %711 = vector.broadcast %710 : f32 to vector<1x16x16xf32>
    %712 = arith.mulf %711, %25 : vector<1x16x16xf32>
    %713 = arith.addf %709, %712 : vector<1x16x16xf32>
    %c15_320 = arith.constant 15 : index
    %c5_321 = arith.constant 5 : index
    %714 = memref.load %arg2[%c15_320, %c5_321] : memref<25x6xf32, #tpu.memory_space<smem>>
    %715 = vector.broadcast %714 : f32 to vector<1x16x16xf32>
    %716 = arith.mulf %715, %26 : vector<1x16x16xf32>
    %717 = arith.addf %713, %716 : vector<1x16x16xf32>
    %c16_322 = arith.constant 16 : index
    %c5_323 = arith.constant 5 : index
    %718 = memref.load %arg2[%c16_322, %c5_323] : memref<25x6xf32, #tpu.memory_space<smem>>
    %719 = vector.broadcast %718 : f32 to vector<1x16x16xf32>
    %720 = arith.mulf %719, %27 : vector<1x16x16xf32>
    %721 = arith.addf %717, %720 : vector<1x16x16xf32>
    %c17_324 = arith.constant 17 : index
    %c5_325 = arith.constant 5 : index
    %722 = memref.load %arg2[%c17_324, %c5_325] : memref<25x6xf32, #tpu.memory_space<smem>>
    %723 = vector.broadcast %722 : f32 to vector<1x16x16xf32>
    %724 = arith.mulf %723, %28 : vector<1x16x16xf32>
    %725 = arith.addf %721, %724 : vector<1x16x16xf32>
    %c18_326 = arith.constant 18 : index
    %c5_327 = arith.constant 5 : index
    %726 = memref.load %arg2[%c18_326, %c5_327] : memref<25x6xf32, #tpu.memory_space<smem>>
    %727 = vector.broadcast %726 : f32 to vector<1x16x16xf32>
    %728 = arith.mulf %727, %29 : vector<1x16x16xf32>
    %729 = arith.addf %725, %728 : vector<1x16x16xf32>
    %c19_328 = arith.constant 19 : index
    %c5_329 = arith.constant 5 : index
    %730 = memref.load %arg2[%c19_328, %c5_329] : memref<25x6xf32, #tpu.memory_space<smem>>
    %731 = vector.broadcast %730 : f32 to vector<1x16x16xf32>
    %732 = arith.mulf %731, %30 : vector<1x16x16xf32>
    %733 = arith.addf %729, %732 : vector<1x16x16xf32>
    %c20_330 = arith.constant 20 : index
    %c5_331 = arith.constant 5 : index
    %734 = memref.load %arg2[%c20_330, %c5_331] : memref<25x6xf32, #tpu.memory_space<smem>>
    %735 = vector.broadcast %734 : f32 to vector<1x16x16xf32>
    %736 = arith.mulf %735, %31 : vector<1x16x16xf32>
    %737 = arith.addf %733, %736 : vector<1x16x16xf32>
    %c21_332 = arith.constant 21 : index
    %c5_333 = arith.constant 5 : index
    %738 = memref.load %arg2[%c21_332, %c5_333] : memref<25x6xf32, #tpu.memory_space<smem>>
    %739 = vector.broadcast %738 : f32 to vector<1x16x16xf32>
    %740 = arith.mulf %739, %32 : vector<1x16x16xf32>
    %741 = arith.addf %737, %740 : vector<1x16x16xf32>
    %c22_334 = arith.constant 22 : index
    %c5_335 = arith.constant 5 : index
    %742 = memref.load %arg2[%c22_334, %c5_335] : memref<25x6xf32, #tpu.memory_space<smem>>
    %743 = vector.broadcast %742 : f32 to vector<1x16x16xf32>
    %744 = arith.mulf %743, %33 : vector<1x16x16xf32>
    %745 = arith.addf %741, %744 : vector<1x16x16xf32>
    %c23_336 = arith.constant 23 : index
    %c5_337 = arith.constant 5 : index
    %746 = memref.load %arg2[%c23_336, %c5_337] : memref<25x6xf32, #tpu.memory_space<smem>>
    %747 = vector.broadcast %746 : f32 to vector<1x16x16xf32>
    %748 = arith.mulf %747, %34 : vector<1x16x16xf32>
    %749 = arith.addf %745, %748 : vector<1x16x16xf32>
    %c24_338 = arith.constant 24 : index
    %c5_339 = arith.constant 5 : index
    %750 = memref.load %arg2[%c24_338, %c5_339] : memref<25x6xf32, #tpu.memory_space<smem>>
    %751 = vector.broadcast %750 : f32 to vector<1x16x16xf32>
    %752 = arith.mulf %751, %35 : vector<1x16x16xf32>
    %753 = arith.addf %749, %752 : vector<1x16x16xf32>
    %c5_340 = arith.constant 5 : index
    %754 = memref.load %arg3[%c5_340] : memref<6xf32, #tpu.memory_space<smem>>
    %755 = vector.broadcast %754 : f32 to vector<1x16x16xf32>
    %756 = arith.addf %753, %755 : vector<1x16x16xf32>
    %757 = vector.shape_cast %756 : vector<1x16x16xf32> to vector<1x8x2x16xf32>
    %758 = vector.extract_strided_slice %757 {offsets = [0, 0, 0, 0], sizes = [1, 8, 1, 16], strides = [1, 1, 1, 1]} : vector<1x8x2x16xf32> to vector<1x8x1x16xf32>
    %759 = vector.shape_cast %758 : vector<1x8x1x16xf32> to vector<1x8x16xf32>
    %760 = vector.extract_strided_slice %757 {offsets = [0, 0, 1, 0], sizes = [1, 8, 1, 16], strides = [1, 1, 1, 1]} : vector<1x8x2x16xf32> to vector<1x8x1x16xf32>
    %761 = vector.shape_cast %760 : vector<1x8x1x16xf32> to vector<1x8x16xf32>
    %762 = arith.maximumf %759, %761 : vector<1x8x16xf32>
    %763 = vector.shape_cast %762 : vector<1x8x16xf32> to vector<8x16xf32>
    %cst_341 = arith.constant dense<0.000000e+00> : vector<8x8xf32>
    %764 = tpu.matmul %763, %42, %cst_341 {dimension_numbers = #tpu.dot_dimension_numbers<[1], [0], [0], [1], [0, 0, 1, 1], [], []>} : vector<8x16xf32>, vector<16x8xf32>, vector<8x8xf32> -> vector<8x8xf32>
    %cst_342 = arith.constant dense<0.000000e+00> : vector<8x8xf32>
    %765 = tpu.matmul %763, %49, %cst_342 {dimension_numbers = #tpu.dot_dimension_numbers<[1], [0], [0], [1], [0, 0, 1, 1], [], []>} : vector<8x16xf32>, vector<16x8xf32>, vector<8x8xf32> -> vector<8x8xf32>
    %766 = arith.maximumf %764, %765 : vector<8x8xf32>
    %767 = arith.negf %766 : vector<8x8xf32>
    %768 = math.exp %767 : vector<8x8xf32>
    %cst_343 = arith.constant 1.000000e+00 : f32
    %769 = vector.broadcast %cst_343 : f32 to vector<8x8xf32>
    %770 = arith.addf %769, %768 : vector<8x8xf32>
    %771 = arith.divf %769, %770 : vector<8x8xf32>
    %772 = vector.shape_cast %771 : vector<8x8xf32> to vector<1x8x8xf32>
    %c0_344 = arith.constant 0 : index
    %c5_345 = arith.constant 5 : index
    %c0_346 = arith.constant 0 : index
    %c0_347 = arith.constant 0 : index
    %773 = vector.load %arg4[%c0_344, %c5_345, %c0_346, %c0_347] : memref<1x6x8x8xf32, #tpu.memory_space<vmem>>, vector<1x1x8x8xf32>
    %774 = vector.shape_cast %773 : vector<1x1x8x8xf32> to vector<1x8x8xf32>
    %775 = vector.shape_cast %772 : vector<1x8x8xf32> to vector<1x1x8x8xf32>
    tpu.vector_store %arg4[%c0_344, %c5_345, %c0_346, %c0_347], %775 {strides = array<i32>} : memref<1x6x8x8xf32, #tpu.memory_space<vmem>>, vector<1x1x8x8xf32>,
    return
  }
  func.func @transform_0(%arg0: i32) -> (i32, i32, i32) {
    %c0_i32 = arith.constant 0 : i32
    %c0_i32_0 = arith.constant 0 : i32
    %c0_i32_1 = arith.constant 0 : i32
    return %arg0, %c0_i32, %c0_i32_0 : i32, i32, i32
  }
  func.func @transform_1(%arg0: i32) -> (i32, i32) {
    %c0_i32 = arith.constant 0 : i32
    %c0_i32_0 = arith.constant 0 : i32
    %c0_i32_1 = arith.constant 0 : i32
    return %c0_i32, %c0_i32_0 : i32, i32
  }
  func.func @transform_2(%arg0: i32) -> i32 {
    %c0_i32 = arith.constant 0 : i32
    %c0_i32_0 = arith.constant 0 : i32
    return %c0_i32 : i32
  }
  func.func @transform_3(%arg0: i32) -> (i32, i32, i32, i32) {
    %c0_i32 = arith.constant 0 : i32
    %c0_i32_0 = arith.constant 0 : i32
    %c0_i32_1 = arith.constant 0 : i32
    %c0_i32_2 = arith.constant 0 : i32
    return %arg0, %c0_i32, %c0_i32_0, %c0_i32_1 : i32, i32, i32, i32
  }
}

module attributes {stable_mosaic.version = 11 : i64} {
  func.func @_conv_im2col_kernel(%arg0: i32, %arg1: memref<1x8x8x6xf32, #tpu.memory_space<vmem>>, %arg2: memref<256x16xf32, #tpu.memory_space<vmem>>, %arg3: memref<1x16xf32, #tpu.memory_space<vmem>>, %arg4: memref<1x4x4x16xf32, #tpu.memory_space<vmem>>, %arg5: memref<1x12x12x6xf32, #tpu.memory_space<vmem>>, %arg6: memref<1x8x8x256xf32, #tpu.memory_space<vmem>>) attributes {dimension_semantics = [#tpu.dimension_semantics<parallel>], iteration_bounds = array<i64: 2>, scalar_prefetch = 0 : i64, scratch_operands = 2 : i64, tpu.core_type = #tpu.core_type<tc>, window_params = [{transform_indices = @transform_0, window_bounds = array<i64: 1, 8, 8, 6>}, {pipeline_mode = #tpu.pipeline_mode<synchronous>, transform_indices = @transform_1, window_bounds = array<i64: 256, 16>}, {pipeline_mode = #tpu.pipeline_mode<synchronous>, transform_indices = @transform_2, window_bounds = array<i64: 1, 16>}, {transform_indices = @transform_3, window_bounds = array<i64: 1, 4, 4, 16>}]} {
    %cst = arith.constant 0.000000e+00 : f32
    %0 = vector.broadcast %cst : f32 to vector<1x2x12x6xf32>
    %c0 = arith.constant 0 : index
    %c0_0 = arith.constant 0 : index
    %c0_1 = arith.constant 0 : index
    %c0_2 = arith.constant 0 : index
    %1 = vector.load %arg5[%c0, %c0_0, %c0_1, %c0_2] : memref<1x12x12x6xf32, #tpu.memory_space<vmem>>, vector<1x2x12x6xf32>
    tpu.vector_store %arg5[%c0, %c0_0, %c0_1, %c0_2], %0 {strides = array<i32>} : memref<1x12x12x6xf32, #tpu.memory_space<vmem>>, vector<1x2x12x6xf32>,
    %cst_3 = arith.constant 0.000000e+00 : f32
    %2 = vector.broadcast %cst_3 : f32 to vector<1x2x12x6xf32>
    %c0_4 = arith.constant 0 : index
    %c10 = arith.constant 10 : index
    %c0_5 = arith.constant 0 : index
    %c0_6 = arith.constant 0 : index
    %3 = vector.load %arg5[%c0_4, %c10, %c0_5, %c0_6] : memref<1x12x12x6xf32, #tpu.memory_space<vmem>>, vector<1x2x12x6xf32>
    tpu.vector_store %arg5[%c0_4, %c10, %c0_5, %c0_6], %2 {strides = array<i32>} : memref<1x12x12x6xf32, #tpu.memory_space<vmem>>, vector<1x2x12x6xf32>,
    %cst_7 = arith.constant 0.000000e+00 : f32
    %4 = vector.broadcast %cst_7 : f32 to vector<1x12x2x6xf32>
    %c0_8 = arith.constant 0 : index
    %c0_9 = arith.constant 0 : index
    %c0_10 = arith.constant 0 : index
    %c0_11 = arith.constant 0 : index
    %5 = vector.load %arg5[%c0_8, %c0_9, %c0_10, %c0_11] : memref<1x12x12x6xf32, #tpu.memory_space<vmem>>, vector<1x12x2x6xf32>
    tpu.vector_store %arg5[%c0_8, %c0_9, %c0_10, %c0_11], %4 {strides = array<i32>} : memref<1x12x12x6xf32, #tpu.memory_space<vmem>>, vector<1x12x2x6xf32>,
    %cst_12 = arith.constant 0.000000e+00 : f32
    %6 = vector.broadcast %cst_12 : f32 to vector<1x12x2x6xf32>
    %c0_13 = arith.constant 0 : index
    %c0_14 = arith.constant 0 : index
    %c10_15 = arith.constant 10 : index
    %c0_16 = arith.constant 0 : index
    %7 = vector.load %arg5[%c0_13, %c0_14, %c10_15, %c0_16] : memref<1x12x12x6xf32, #tpu.memory_space<vmem>>, vector<1x12x2x6xf32>
    tpu.vector_store %arg5[%c0_13, %c0_14, %c10_15, %c0_16], %6 {strides = array<i32>} : memref<1x12x12x6xf32, #tpu.memory_space<vmem>>, vector<1x12x2x6xf32>,
    %c0_17 = arith.constant 0 : index
    %c0_18 = arith.constant 0 : index
    %c0_19 = arith.constant 0 : index
    %c0_20 = arith.constant 0 : index
    %8 = vector.load %arg1[%c0_17, %c0_18, %c0_19, %c0_20] : memref<1x8x8x6xf32, #tpu.memory_space<vmem>>, vector<1x8x8x6xf32>
    %c0_21 = arith.constant 0 : index
    %c2 = arith.constant 2 : index
    %c2_22 = arith.constant 2 : index
    %c0_23 = arith.constant 0 : index
    %9 = vector.load %arg5[%c0_21, %c2, %c2_22, %c0_23] : memref<1x12x12x6xf32, #tpu.memory_space<vmem>>, vector<1x8x8x6xf32>
    tpu.vector_store %arg5[%c0_21, %c2, %c2_22, %c0_23], %8 {strides = array<i32>} : memref<1x12x12x6xf32, #tpu.memory_space<vmem>>, vector<1x8x8x6xf32>,
    %cst_24 = arith.constant 0.000000e+00 : f32
    %10 = vector.broadcast %cst_24 : f32 to vector<1x8x8x106xf32>
    %c0_25 = arith.constant 0 : index
    %c0_26 = arith.constant 0 : index
    %c0_27 = arith.constant 0 : index
    %c150 = arith.constant 150 : index
    %11 = vector.load %arg6[%c0_25, %c0_26, %c0_27, %c150] : memref<1x8x8x256xf32, #tpu.memory_space<vmem>>, vector<1x8x8x106xf32>
    tpu.vector_store %arg6[%c0_25, %c0_26, %c0_27, %c150], %10 {strides = array<i32>} : memref<1x8x8x256xf32, #tpu.memory_space<vmem>>, vector<1x8x8x106xf32>,
    %c0_28 = arith.constant 0 : index
    %c0_29 = arith.constant 0 : index
    %c0_30 = arith.constant 0 : index
    %c0_31 = arith.constant 0 : index
    %12 = vector.load %arg5[%c0_28, %c0_29, %c0_30, %c0_31] : memref<1x12x12x6xf32, #tpu.memory_space<vmem>>, vector<1x12x12x6xf32>
    %13 = vector.extract_strided_slice %12 {offsets = [0, 0, 0, 0], sizes = [1, 8, 8, 6], strides = [1, 1, 1, 1]} : vector<1x12x12x6xf32> to vector<1x8x8x6xf32>
    %c0_32 = arith.constant 0 : index
    %c0_33 = arith.constant 0 : index
    %c0_34 = arith.constant 0 : index
    %c0_35 = arith.constant 0 : index
    %14 = vector.load %arg6[%c0_32, %c0_33, %c0_34, %c0_35] : memref<1x8x8x256xf32, #tpu.memory_space<vmem>>, vector<1x8x8x6xf32>
    tpu.vector_store %arg6[%c0_32, %c0_33, %c0_34, %c0_35], %13 {strides = array<i32>} : memref<1x8x8x256xf32, #tpu.memory_space<vmem>>, vector<1x8x8x6xf32>,
    %15 = vector.extract_strided_slice %12 {offsets = [0, 0, 1, 0], sizes = [1, 8, 8, 6], strides = [1, 1, 1, 1]} : vector<1x12x12x6xf32> to vector<1x8x8x6xf32>
    %c0_36 = arith.constant 0 : index
    %c0_37 = arith.constant 0 : index
    %c0_38 = arith.constant 0 : index
    %c6 = arith.constant 6 : index
    %16 = vector.load %arg6[%c0_36, %c0_37, %c0_38, %c6] : memref<1x8x8x256xf32, #tpu.memory_space<vmem>>, vector<1x8x8x6xf32>
    tpu.vector_store %arg6[%c0_36, %c0_37, %c0_38, %c6], %15 {strides = array<i32>} : memref<1x8x8x256xf32, #tpu.memory_space<vmem>>, vector<1x8x8x6xf32>,
    %17 = vector.extract_strided_slice %12 {offsets = [0, 0, 2, 0], sizes = [1, 8, 8, 6], strides = [1, 1, 1, 1]} : vector<1x12x12x6xf32> to vector<1x8x8x6xf32>
    %c0_39 = arith.constant 0 : index
    %c0_40 = arith.constant 0 : index
    %c0_41 = arith.constant 0 : index
    %c12 = arith.constant 12 : index
    %18 = vector.load %arg6[%c0_39, %c0_40, %c0_41, %c12] : memref<1x8x8x256xf32, #tpu.memory_space<vmem>>, vector<1x8x8x6xf32>
    tpu.vector_store %arg6[%c0_39, %c0_40, %c0_41, %c12], %17 {strides = array<i32>} : memref<1x8x8x256xf32, #tpu.memory_space<vmem>>, vector<1x8x8x6xf32>,
    %19 = vector.extract_strided_slice %12 {offsets = [0, 0, 3, 0], sizes = [1, 8, 8, 6], strides = [1, 1, 1, 1]} : vector<1x12x12x6xf32> to vector<1x8x8x6xf32>
    %c0_42 = arith.constant 0 : index
    %c0_43 = arith.constant 0 : index
    %c0_44 = arith.constant 0 : index
    %c18 = arith.constant 18 : index
    %20 = vector.load %arg6[%c0_42, %c0_43, %c0_44, %c18] : memref<1x8x8x256xf32, #tpu.memory_space<vmem>>, vector<1x8x8x6xf32>
    tpu.vector_store %arg6[%c0_42, %c0_43, %c0_44, %c18], %19 {strides = array<i32>} : memref<1x8x8x256xf32, #tpu.memory_space<vmem>>, vector<1x8x8x6xf32>,
    %21 = vector.extract_strided_slice %12 {offsets = [0, 0, 4, 0], sizes = [1, 8, 8, 6], strides = [1, 1, 1, 1]} : vector<1x12x12x6xf32> to vector<1x8x8x6xf32>
    %c0_45 = arith.constant 0 : index
    %c0_46 = arith.constant 0 : index
    %c0_47 = arith.constant 0 : index
    %c24 = arith.constant 24 : index
    %22 = vector.load %arg6[%c0_45, %c0_46, %c0_47, %c24] : memref<1x8x8x256xf32, #tpu.memory_space<vmem>>, vector<1x8x8x6xf32>
    tpu.vector_store %arg6[%c0_45, %c0_46, %c0_47, %c24], %21 {strides = array<i32>} : memref<1x8x8x256xf32, #tpu.memory_space<vmem>>, vector<1x8x8x6xf32>,
    %23 = vector.extract_strided_slice %12 {offsets = [0, 1, 0, 0], sizes = [1, 8, 8, 6], strides = [1, 1, 1, 1]} : vector<1x12x12x6xf32> to vector<1x8x8x6xf32>
    %c0_48 = arith.constant 0 : index
    %c0_49 = arith.constant 0 : index
    %c0_50 = arith.constant 0 : index
    %c30 = arith.constant 30 : index
    %24 = vector.load %arg6[%c0_48, %c0_49, %c0_50, %c30] : memref<1x8x8x256xf32, #tpu.memory_space<vmem>>, vector<1x8x8x6xf32>
    tpu.vector_store %arg6[%c0_48, %c0_49, %c0_50, %c30], %23 {strides = array<i32>} : memref<1x8x8x256xf32, #tpu.memory_space<vmem>>, vector<1x8x8x6xf32>,
    %25 = vector.extract_strided_slice %12 {offsets = [0, 1, 1, 0], sizes = [1, 8, 8, 6], strides = [1, 1, 1, 1]} : vector<1x12x12x6xf32> to vector<1x8x8x6xf32>
    %c0_51 = arith.constant 0 : index
    %c0_52 = arith.constant 0 : index
    %c0_53 = arith.constant 0 : index
    %c36 = arith.constant 36 : index
    %26 = vector.load %arg6[%c0_51, %c0_52, %c0_53, %c36] : memref<1x8x8x256xf32, #tpu.memory_space<vmem>>, vector<1x8x8x6xf32>
    tpu.vector_store %arg6[%c0_51, %c0_52, %c0_53, %c36], %25 {strides = array<i32>} : memref<1x8x8x256xf32, #tpu.memory_space<vmem>>, vector<1x8x8x6xf32>,
    %27 = vector.extract_strided_slice %12 {offsets = [0, 1, 2, 0], sizes = [1, 8, 8, 6], strides = [1, 1, 1, 1]} : vector<1x12x12x6xf32> to vector<1x8x8x6xf32>
    %c0_54 = arith.constant 0 : index
    %c0_55 = arith.constant 0 : index
    %c0_56 = arith.constant 0 : index
    %c42 = arith.constant 42 : index
    %28 = vector.load %arg6[%c0_54, %c0_55, %c0_56, %c42] : memref<1x8x8x256xf32, #tpu.memory_space<vmem>>, vector<1x8x8x6xf32>
    tpu.vector_store %arg6[%c0_54, %c0_55, %c0_56, %c42], %27 {strides = array<i32>} : memref<1x8x8x256xf32, #tpu.memory_space<vmem>>, vector<1x8x8x6xf32>,
    %29 = vector.extract_strided_slice %12 {offsets = [0, 1, 3, 0], sizes = [1, 8, 8, 6], strides = [1, 1, 1, 1]} : vector<1x12x12x6xf32> to vector<1x8x8x6xf32>
    %c0_57 = arith.constant 0 : index
    %c0_58 = arith.constant 0 : index
    %c0_59 = arith.constant 0 : index
    %c48 = arith.constant 48 : index
    %30 = vector.load %arg6[%c0_57, %c0_58, %c0_59, %c48] : memref<1x8x8x256xf32, #tpu.memory_space<vmem>>, vector<1x8x8x6xf32>
    tpu.vector_store %arg6[%c0_57, %c0_58, %c0_59, %c48], %29 {strides = array<i32>} : memref<1x8x8x256xf32, #tpu.memory_space<vmem>>, vector<1x8x8x6xf32>,
    %31 = vector.extract_strided_slice %12 {offsets = [0, 1, 4, 0], sizes = [1, 8, 8, 6], strides = [1, 1, 1, 1]} : vector<1x12x12x6xf32> to vector<1x8x8x6xf32>
    %c0_60 = arith.constant 0 : index
    %c0_61 = arith.constant 0 : index
    %c0_62 = arith.constant 0 : index
    %c54 = arith.constant 54 : index
    %32 = vector.load %arg6[%c0_60, %c0_61, %c0_62, %c54] : memref<1x8x8x256xf32, #tpu.memory_space<vmem>>, vector<1x8x8x6xf32>
    tpu.vector_store %arg6[%c0_60, %c0_61, %c0_62, %c54], %31 {strides = array<i32>} : memref<1x8x8x256xf32, #tpu.memory_space<vmem>>, vector<1x8x8x6xf32>,
    %33 = vector.extract_strided_slice %12 {offsets = [0, 2, 0, 0], sizes = [1, 8, 8, 6], strides = [1, 1, 1, 1]} : vector<1x12x12x6xf32> to vector<1x8x8x6xf32>
    %c0_63 = arith.constant 0 : index
    %c0_64 = arith.constant 0 : index
    %c0_65 = arith.constant 0 : index
    %c60 = arith.constant 60 : index
    %34 = vector.load %arg6[%c0_63, %c0_64, %c0_65, %c60] : memref<1x8x8x256xf32, #tpu.memory_space<vmem>>, vector<1x8x8x6xf32>
    tpu.vector_store %arg6[%c0_63, %c0_64, %c0_65, %c60], %33 {strides = array<i32>} : memref<1x8x8x256xf32, #tpu.memory_space<vmem>>, vector<1x8x8x6xf32>,
    %35 = vector.extract_strided_slice %12 {offsets = [0, 2, 1, 0], sizes = [1, 8, 8, 6], strides = [1, 1, 1, 1]} : vector<1x12x12x6xf32> to vector<1x8x8x6xf32>
    %c0_66 = arith.constant 0 : index
    %c0_67 = arith.constant 0 : index
    %c0_68 = arith.constant 0 : index
    %c66 = arith.constant 66 : index
    %36 = vector.load %arg6[%c0_66, %c0_67, %c0_68, %c66] : memref<1x8x8x256xf32, #tpu.memory_space<vmem>>, vector<1x8x8x6xf32>
    tpu.vector_store %arg6[%c0_66, %c0_67, %c0_68, %c66], %35 {strides = array<i32>} : memref<1x8x8x256xf32, #tpu.memory_space<vmem>>, vector<1x8x8x6xf32>,
    %37 = vector.extract_strided_slice %12 {offsets = [0, 2, 2, 0], sizes = [1, 8, 8, 6], strides = [1, 1, 1, 1]} : vector<1x12x12x6xf32> to vector<1x8x8x6xf32>
    %c0_69 = arith.constant 0 : index
    %c0_70 = arith.constant 0 : index
    %c0_71 = arith.constant 0 : index
    %c72 = arith.constant 72 : index
    %38 = vector.load %arg6[%c0_69, %c0_70, %c0_71, %c72] : memref<1x8x8x256xf32, #tpu.memory_space<vmem>>, vector<1x8x8x6xf32>
    tpu.vector_store %arg6[%c0_69, %c0_70, %c0_71, %c72], %37 {strides = array<i32>} : memref<1x8x8x256xf32, #tpu.memory_space<vmem>>, vector<1x8x8x6xf32>,
    %39 = vector.extract_strided_slice %12 {offsets = [0, 2, 3, 0], sizes = [1, 8, 8, 6], strides = [1, 1, 1, 1]} : vector<1x12x12x6xf32> to vector<1x8x8x6xf32>
    %c0_72 = arith.constant 0 : index
    %c0_73 = arith.constant 0 : index
    %c0_74 = arith.constant 0 : index
    %c78 = arith.constant 78 : index
    %40 = vector.load %arg6[%c0_72, %c0_73, %c0_74, %c78] : memref<1x8x8x256xf32, #tpu.memory_space<vmem>>, vector<1x8x8x6xf32>
    tpu.vector_store %arg6[%c0_72, %c0_73, %c0_74, %c78], %39 {strides = array<i32>} : memref<1x8x8x256xf32, #tpu.memory_space<vmem>>, vector<1x8x8x6xf32>,
    %41 = vector.extract_strided_slice %12 {offsets = [0, 2, 4, 0], sizes = [1, 8, 8, 6], strides = [1, 1, 1, 1]} : vector<1x12x12x6xf32> to vector<1x8x8x6xf32>
    %c0_75 = arith.constant 0 : index
    %c0_76 = arith.constant 0 : index
    %c0_77 = arith.constant 0 : index
    %c84 = arith.constant 84 : index
    %42 = vector.load %arg6[%c0_75, %c0_76, %c0_77, %c84] : memref<1x8x8x256xf32, #tpu.memory_space<vmem>>, vector<1x8x8x6xf32>
    tpu.vector_store %arg6[%c0_75, %c0_76, %c0_77, %c84], %41 {strides = array<i32>} : memref<1x8x8x256xf32, #tpu.memory_space<vmem>>, vector<1x8x8x6xf32>,
    %43 = vector.extract_strided_slice %12 {offsets = [0, 3, 0, 0], sizes = [1, 8, 8, 6], strides = [1, 1, 1, 1]} : vector<1x12x12x6xf32> to vector<1x8x8x6xf32>
    %c0_78 = arith.constant 0 : index
    %c0_79 = arith.constant 0 : index
    %c0_80 = arith.constant 0 : index
    %c90 = arith.constant 90 : index
    %44 = vector.load %arg6[%c0_78, %c0_79, %c0_80, %c90] : memref<1x8x8x256xf32, #tpu.memory_space<vmem>>, vector<1x8x8x6xf32>
    tpu.vector_store %arg6[%c0_78, %c0_79, %c0_80, %c90], %43 {strides = array<i32>} : memref<1x8x8x256xf32, #tpu.memory_space<vmem>>, vector<1x8x8x6xf32>,
    %45 = vector.extract_strided_slice %12 {offsets = [0, 3, 1, 0], sizes = [1, 8, 8, 6], strides = [1, 1, 1, 1]} : vector<1x12x12x6xf32> to vector<1x8x8x6xf32>
    %c0_81 = arith.constant 0 : index
    %c0_82 = arith.constant 0 : index
    %c0_83 = arith.constant 0 : index
    %c96 = arith.constant 96 : index
    %46 = vector.load %arg6[%c0_81, %c0_82, %c0_83, %c96] : memref<1x8x8x256xf32, #tpu.memory_space<vmem>>, vector<1x8x8x6xf32>
    tpu.vector_store %arg6[%c0_81, %c0_82, %c0_83, %c96], %45 {strides = array<i32>} : memref<1x8x8x256xf32, #tpu.memory_space<vmem>>, vector<1x8x8x6xf32>,
    %47 = vector.extract_strided_slice %12 {offsets = [0, 3, 2, 0], sizes = [1, 8, 8, 6], strides = [1, 1, 1, 1]} : vector<1x12x12x6xf32> to vector<1x8x8x6xf32>
    %c0_84 = arith.constant 0 : index
    %c0_85 = arith.constant 0 : index
    %c0_86 = arith.constant 0 : index
    %c102 = arith.constant 102 : index
    %48 = vector.load %arg6[%c0_84, %c0_85, %c0_86, %c102] : memref<1x8x8x256xf32, #tpu.memory_space<vmem>>, vector<1x8x8x6xf32>
    tpu.vector_store %arg6[%c0_84, %c0_85, %c0_86, %c102], %47 {strides = array<i32>} : memref<1x8x8x256xf32, #tpu.memory_space<vmem>>, vector<1x8x8x6xf32>,
    %49 = vector.extract_strided_slice %12 {offsets = [0, 3, 3, 0], sizes = [1, 8, 8, 6], strides = [1, 1, 1, 1]} : vector<1x12x12x6xf32> to vector<1x8x8x6xf32>
    %c0_87 = arith.constant 0 : index
    %c0_88 = arith.constant 0 : index
    %c0_89 = arith.constant 0 : index
    %c108 = arith.constant 108 : index
    %50 = vector.load %arg6[%c0_87, %c0_88, %c0_89, %c108] : memref<1x8x8x256xf32, #tpu.memory_space<vmem>>, vector<1x8x8x6xf32>
    tpu.vector_store %arg6[%c0_87, %c0_88, %c0_89, %c108], %49 {strides = array<i32>} : memref<1x8x8x256xf32, #tpu.memory_space<vmem>>, vector<1x8x8x6xf32>,
    %51 = vector.extract_strided_slice %12 {offsets = [0, 3, 4, 0], sizes = [1, 8, 8, 6], strides = [1, 1, 1, 1]} : vector<1x12x12x6xf32> to vector<1x8x8x6xf32>
    %c0_90 = arith.constant 0 : index
    %c0_91 = arith.constant 0 : index
    %c0_92 = arith.constant 0 : index
    %c114 = arith.constant 114 : index
    %52 = vector.load %arg6[%c0_90, %c0_91, %c0_92, %c114] : memref<1x8x8x256xf32, #tpu.memory_space<vmem>>, vector<1x8x8x6xf32>
    tpu.vector_store %arg6[%c0_90, %c0_91, %c0_92, %c114], %51 {strides = array<i32>} : memref<1x8x8x256xf32, #tpu.memory_space<vmem>>, vector<1x8x8x6xf32>,
    %53 = vector.extract_strided_slice %12 {offsets = [0, 4, 0, 0], sizes = [1, 8, 8, 6], strides = [1, 1, 1, 1]} : vector<1x12x12x6xf32> to vector<1x8x8x6xf32>
    %c0_93 = arith.constant 0 : index
    %c0_94 = arith.constant 0 : index
    %c0_95 = arith.constant 0 : index
    %c120 = arith.constant 120 : index
    %54 = vector.load %arg6[%c0_93, %c0_94, %c0_95, %c120] : memref<1x8x8x256xf32, #tpu.memory_space<vmem>>, vector<1x8x8x6xf32>
    tpu.vector_store %arg6[%c0_93, %c0_94, %c0_95, %c120], %53 {strides = array<i32>} : memref<1x8x8x256xf32, #tpu.memory_space<vmem>>, vector<1x8x8x6xf32>,
    %55 = vector.extract_strided_slice %12 {offsets = [0, 4, 1, 0], sizes = [1, 8, 8, 6], strides = [1, 1, 1, 1]} : vector<1x12x12x6xf32> to vector<1x8x8x6xf32>
    %c0_96 = arith.constant 0 : index
    %c0_97 = arith.constant 0 : index
    %c0_98 = arith.constant 0 : index
    %c126 = arith.constant 126 : index
    %56 = vector.load %arg6[%c0_96, %c0_97, %c0_98, %c126] : memref<1x8x8x256xf32, #tpu.memory_space<vmem>>, vector<1x8x8x6xf32>
    tpu.vector_store %arg6[%c0_96, %c0_97, %c0_98, %c126], %55 {strides = array<i32>} : memref<1x8x8x256xf32, #tpu.memory_space<vmem>>, vector<1x8x8x6xf32>,
    %57 = vector.extract_strided_slice %12 {offsets = [0, 4, 2, 0], sizes = [1, 8, 8, 6], strides = [1, 1, 1, 1]} : vector<1x12x12x6xf32> to vector<1x8x8x6xf32>
    %c0_99 = arith.constant 0 : index
    %c0_100 = arith.constant 0 : index
    %c0_101 = arith.constant 0 : index
    %c132 = arith.constant 132 : index
    %58 = vector.load %arg6[%c0_99, %c0_100, %c0_101, %c132] : memref<1x8x8x256xf32, #tpu.memory_space<vmem>>, vector<1x8x8x6xf32>
    tpu.vector_store %arg6[%c0_99, %c0_100, %c0_101, %c132], %57 {strides = array<i32>} : memref<1x8x8x256xf32, #tpu.memory_space<vmem>>, vector<1x8x8x6xf32>,
    %59 = vector.extract_strided_slice %12 {offsets = [0, 4, 3, 0], sizes = [1, 8, 8, 6], strides = [1, 1, 1, 1]} : vector<1x12x12x6xf32> to vector<1x8x8x6xf32>
    %c0_102 = arith.constant 0 : index
    %c0_103 = arith.constant 0 : index
    %c0_104 = arith.constant 0 : index
    %c138 = arith.constant 138 : index
    %60 = vector.load %arg6[%c0_102, %c0_103, %c0_104, %c138] : memref<1x8x8x256xf32, #tpu.memory_space<vmem>>, vector<1x8x8x6xf32>
    tpu.vector_store %arg6[%c0_102, %c0_103, %c0_104, %c138], %59 {strides = array<i32>} : memref<1x8x8x256xf32, #tpu.memory_space<vmem>>, vector<1x8x8x6xf32>,
    %61 = vector.extract_strided_slice %12 {offsets = [0, 4, 4, 0], sizes = [1, 8, 8, 6], strides = [1, 1, 1, 1]} : vector<1x12x12x6xf32> to vector<1x8x8x6xf32>
    %c0_105 = arith.constant 0 : index
    %c0_106 = arith.constant 0 : index
    %c0_107 = arith.constant 0 : index
    %c144 = arith.constant 144 : index
    %62 = vector.load %arg6[%c0_105, %c0_106, %c0_107, %c144] : memref<1x8x8x256xf32, #tpu.memory_space<vmem>>, vector<1x8x8x6xf32>
    tpu.vector_store %arg6[%c0_105, %c0_106, %c0_107, %c144], %61 {strides = array<i32>} : memref<1x8x8x256xf32, #tpu.memory_space<vmem>>, vector<1x8x8x6xf32>,
    %c0_108 = arith.constant 0 : index
    %c0_109 = arith.constant 0 : index
    %c0_110 = arith.constant 0 : index
    %c0_111 = arith.constant 0 : index
    %63 = vector.load %arg6[%c0_108, %c0_109, %c0_110, %c0_111] : memref<1x8x8x256xf32, #tpu.memory_space<vmem>>, vector<1x8x8x256xf32>
    %64 = vector.shape_cast %63 : vector<1x8x8x256xf32> to vector<64x256xf32>
    %c0_112 = arith.constant 0 : index
    %c0_113 = arith.constant 0 : index
    %65 = vector.load %arg2[%c0_112, %c0_113] : memref<256x16xf32, #tpu.memory_space<vmem>>, vector<256x16xf32>
    %cst_114 = arith.constant dense<0.000000e+00> : vector<64x16xf32>
    %66 = tpu.matmul %64, %65, %cst_114 {dimension_numbers = #tpu.dot_dimension_numbers<[1], [0], [0], [1], [0, 0, 1, 1], [], []>} : vector<64x256xf32>, vector<256x16xf32>, vector<64x16xf32> -> vector<64x16xf32>
    %c0_115 = arith.constant 0 : index
    %c0_116 = arith.constant 0 : index
    %67 = vector.load %arg3[%c0_115, %c0_116] : memref<1x16xf32, #tpu.memory_space<vmem>>, vector<1x16xf32>
    %68 = vector.broadcast %67 : vector<1x16xf32> to vector<64x16xf32>
    %69 = arith.addf %66, %68 : vector<64x16xf32>
    %70 = vector.shape_cast %69 : vector<64x16xf32> to vector<1x8x8x16xf32>
    %71 = vector.shape_cast %70 : vector<1x8x8x16xf32> to vector<1x4x2x8x16xf32>
    %72 = vector.extract_strided_slice %71 {offsets = [0, 0, 0, 0, 0], sizes = [1, 4, 1, 8, 16], strides = [1, 1, 1, 1, 1]} : vector<1x4x2x8x16xf32> to vector<1x4x1x8x16xf32>
    %73 = vector.shape_cast %72 : vector<1x4x1x8x16xf32> to vector<1x4x8x16xf32>
    %74 = vector.extract_strided_slice %71 {offsets = [0, 0, 1, 0, 0], sizes = [1, 4, 1, 8, 16], strides = [1, 1, 1, 1, 1]} : vector<1x4x2x8x16xf32> to vector<1x4x1x8x16xf32>
    %75 = vector.shape_cast %74 : vector<1x4x1x8x16xf32> to vector<1x4x8x16xf32>
    %76 = arith.maximumf %73, %75 : vector<1x4x8x16xf32>
    %77 = vector.shape_cast %76 : vector<1x4x8x16xf32> to vector<1x4x4x2x16xf32>
    %78 = vector.extract_strided_slice %77 {offsets = [0, 0, 0, 0, 0], sizes = [1, 4, 4, 1, 16], strides = [1, 1, 1, 1, 1]} : vector<1x4x4x2x16xf32> to vector<1x4x4x1x16xf32>
    %79 = vector.shape_cast %78 : vector<1x4x4x1x16xf32> to vector<1x4x4x16xf32>
    %80 = vector.extract_strided_slice %77 {offsets = [0, 0, 0, 1, 0], sizes = [1, 4, 4, 1, 16], strides = [1, 1, 1, 1, 1]} : vector<1x4x4x2x16xf32> to vector<1x4x4x1x16xf32>
    %81 = vector.shape_cast %80 : vector<1x4x4x1x16xf32> to vector<1x4x4x16xf32>
    %82 = arith.maximumf %79, %81 : vector<1x4x4x16xf32>
    %83 = arith.negf %82 : vector<1x4x4x16xf32>
    %84 = math.exp %83 : vector<1x4x4x16xf32>
    %cst_117 = arith.constant 1.000000e+00 : f32
    %85 = vector.broadcast %cst_117 : f32 to vector<1x4x4x16xf32>
    %86 = arith.addf %85, %84 : vector<1x4x4x16xf32>
    %87 = arith.divf %85, %86 : vector<1x4x4x16xf32>
    %c0_118 = arith.constant 0 : index
    %c0_119 = arith.constant 0 : index
    %c0_120 = arith.constant 0 : index
    %c0_121 = arith.constant 0 : index
    %88 = vector.load %arg4[%c0_118, %c0_119, %c0_120, %c0_121] : memref<1x4x4x16xf32, #tpu.memory_space<vmem>>, vector<1x4x4x16xf32>
    tpu.vector_store %arg4[%c0_118, %c0_119, %c0_120, %c0_121], %87 {strides = array<i32>} : memref<1x4x4x16xf32, #tpu.memory_space<vmem>>, vector<1x4x4x16xf32>,
    return
  }
  func.func @transform_0(%arg0: i32) -> (i32, i32, i32, i32) {
    %c0_i32 = arith.constant 0 : i32
    %c0_i32_0 = arith.constant 0 : i32
    %c0_i32_1 = arith.constant 0 : i32
    %c0_i32_2 = arith.constant 0 : i32
    return %arg0, %c0_i32, %c0_i32_0, %c0_i32_1 : i32, i32, i32, i32
  }
  func.func @transform_1(%arg0: i32) -> (i32, i32) {
    %c0_i32 = arith.constant 0 : i32
    %c0_i32_0 = arith.constant 0 : i32
    %c0_i32_1 = arith.constant 0 : i32
    return %c0_i32, %c0_i32_0 : i32, i32
  }
  func.func @transform_2(%arg0: i32) -> (i32, i32) {
    %c0_i32 = arith.constant 0 : i32
    %c0_i32_0 = arith.constant 0 : i32
    %c0_i32_1 = arith.constant 0 : i32
    return %c0_i32, %c0_i32_0 : i32, i32
  }
  func.func @transform_3(%arg0: i32) -> (i32, i32, i32, i32) {
    %c0_i32 = arith.constant 0 : i32
    %c0_i32_0 = arith.constant 0 : i32
    %c0_i32_1 = arith.constant 0 : i32
    %c0_i32_2 = arith.constant 0 : i32
    return %arg0, %c0_i32, %c0_i32_0, %c0_i32_1 : i32, i32, i32, i32
  }
}

module attributes {stable_mosaic.version = 11 : i64} {
  func.func @_fc1_partial_kernel(%arg0: i32, %arg1: i32, %arg2: memref<2x1024xf32, #tpu.memory_space<vmem>>, %arg3: memref<1024x84xbf16, #tpu.memory_space<vmem>>, %arg4: memref<1x2x84xf32, #tpu.memory_space<vmem>>) attributes {dimension_semantics = [#tpu.dimension_semantics<parallel>, #tpu.dimension_semantics<arbitrary>], iteration_bounds = array<i64: 2, 1>, scalar_prefetch = 0 : i64, scratch_operands = 0 : i64, tpu.core_type = #tpu.core_type<tc>, window_params = [{transform_indices = @transform_0, window_bounds = array<i64: 2, 1024>}, {transform_indices = @transform_1, window_bounds = array<i64: 1024, 84>}, {transform_indices = @transform_2, window_bounds = array<i64: 1, 2, 84>}]} {
    %c0_i32 = arith.constant 0 : i32
    %0 = arith.cmpi eq, %arg1, %c0_i32 : i32
    %1 = arith.extui %0 : i1 to i32
    %c0_i32_0 = arith.constant 0 : i32
    %2 = arith.cmpi ne, %1, %c0_i32_0 : i32
    scf.if %2 {
      %cst_10 = arith.constant 0.000000e+00 : f32
      %11 = vector.broadcast %cst_10 : f32 to vector<1x2x84xf32>
      %c0_11 = arith.constant 0 : index
      %c0_12 = arith.constant 0 : index
      %c0_13 = arith.constant 0 : index
      %12 = vector.load %arg4[%c0_11, %c0_12, %c0_13] : memref<1x2x84xf32, #tpu.memory_space<vmem>>, vector<1x2x84xf32>
      tpu.vector_store %arg4[%c0_11, %c0_12, %c0_13], %11 {strides = array<i32>} : memref<1x2x84xf32, #tpu.memory_space<vmem>>, vector<1x2x84xf32>,
    } else {
    }
    %c0 = arith.constant 0 : index
    %c0_1 = arith.constant 0 : index
    %c0_2 = arith.constant 0 : index
    %3 = vector.load %arg4[%c0, %c0_1, %c0_2] : memref<1x2x84xf32, #tpu.memory_space<vmem>>, vector<1x2x84xf32>
    %c0_3 = arith.constant 0 : index
    %c0_4 = arith.constant 0 : index
    %4 = vector.load %arg2[%c0_3, %c0_4] : memref<2x1024xf32, #tpu.memory_space<vmem>>, vector<2x1024xf32>
    %c0_5 = arith.constant 0 : index
    %c0_6 = arith.constant 0 : index
    %5 = vector.load %arg3[%c0_5, %c0_6] : memref<1024x84xbf16, #tpu.memory_space<vmem>>, vector<1024x84xbf16>
    %6 = arith.extf %5 : vector<1024x84xbf16> to vector<1024x84xf32>
    %cst = arith.constant dense<0.000000e+00> : vector<2x84xf32>
    %7 = tpu.matmul %4, %6, %cst {dimension_numbers = #tpu.dot_dimension_numbers<[1], [0], [0], [1], [0, 0, 1, 1], [], []>} : vector<2x1024xf32>, vector<1024x84xf32>, vector<2x84xf32> -> vector<2x84xf32>
    %8 = vector.shape_cast %7 : vector<2x84xf32> to vector<1x2x84xf32>
    %9 = arith.addf %3, %8 : vector<1x2x84xf32>
    %c0_7 = arith.constant 0 : index
    %c0_8 = arith.constant 0 : index
    %c0_9 = arith.constant 0 : index
    %10 = vector.load %arg4[%c0_7, %c0_8, %c0_9] : memref<1x2x84xf32, #tpu.memory_space<vmem>>, vector<1x2x84xf32>
    tpu.vector_store %arg4[%c0_7, %c0_8, %c0_9], %9 {strides = array<i32>} : memref<1x2x84xf32, #tpu.memory_space<vmem>>, vector<1x2x84xf32>,
    return
  }
  func.func @transform_0(%arg0: i32, %arg1: i32) -> (i32, i32) {
    %c1_i32 = arith.constant 1 : i32
    %0 = arith.muli %arg0, %c1_i32 : i32
    %1 = arith.addi %0, %arg1 : i32
    %c0_i32 = arith.constant 0 : i32
    %c0_i32_0 = arith.constant 0 : i32
    return %c0_i32, %1 : i32, i32
  }
  func.func @transform_1(%arg0: i32, %arg1: i32) -> (i32, i32) {
    %c1_i32 = arith.constant 1 : i32
    %0 = arith.muli %arg0, %c1_i32 : i32
    %1 = arith.addi %0, %arg1 : i32
    %c0_i32 = arith.constant 0 : i32
    %c0_i32_0 = arith.constant 0 : i32
    return %1, %c0_i32 : i32, i32
  }
  func.func @transform_2(%arg0: i32, %arg1: i32) -> (i32, i32, i32) {
    %c0_i32 = arith.constant 0 : i32
    %c0_i32_0 = arith.constant 0 : i32
    %c0_i32_1 = arith.constant 0 : i32
    return %arg0, %c0_i32, %c0_i32_0 : i32, i32, i32
  }
}

module attributes {stable_mosaic.version = 11 : i64} {
  func.func @_fc_combine_kernel(%arg0: memref<2x2x84xf32, #tpu.memory_space<vmem>>, %arg1: memref<1x84xf32, #tpu.memory_space<vmem>>, %arg2: memref<84x7xf32, #tpu.memory_space<vmem>>, %arg3: memref<1x7xf32, #tpu.memory_space<vmem>>, %arg4: memref<2x7xf32, #tpu.memory_space<vmem>>) attributes {dimension_semantics = [], scalar_prefetch = 0 : i64, scratch_operands = 0 : i64, tpu.core_type = #tpu.core_type<tc>} {
    %c0 = arith.constant 0 : index
    %c0_0 = arith.constant 0 : index
    %c0_1 = arith.constant 0 : index
    %0 = vector.load %arg0[%c0, %c0_0, %c0_1] : memref<2x2x84xf32, #tpu.memory_space<vmem>>, vector<2x2x84xf32>
    %cst = arith.constant dense<0.000000e+00> : vector<2x84xf32>
    %1 = vector.multi_reduction <add>, %0, %cst [0] : vector<2x2x84xf32> to vector<2x84xf32>
    %c0_2 = arith.constant 0 : index
    %c0_3 = arith.constant 0 : index
    %2 = vector.load %arg1[%c0_2, %c0_3] : memref<1x84xf32, #tpu.memory_space<vmem>>, vector<1x84xf32>
    %3 = vector.broadcast %2 : vector<1x84xf32> to vector<2x84xf32>
    %4 = arith.addf %1, %3 : vector<2x84xf32>
    %c0_4 = arith.constant 0 : index
    %c0_5 = arith.constant 0 : index
    %5 = vector.load %arg2[%c0_4, %c0_5] : memref<84x7xf32, #tpu.memory_space<vmem>>, vector<84x7xf32>
    %cst_6 = arith.constant dense<0.000000e+00> : vector<2x7xf32>
    %6 = tpu.matmul %4, %5, %cst_6 {dimension_numbers = #tpu.dot_dimension_numbers<[1], [0], [0], [1], [0, 0, 1, 1], [], []>} : vector<2x84xf32>, vector<84x7xf32>, vector<2x7xf32> -> vector<2x7xf32>
    %c0_7 = arith.constant 0 : index
    %c0_8 = arith.constant 0 : index
    %7 = vector.load %arg3[%c0_7, %c0_8] : memref<1x7xf32, #tpu.memory_space<vmem>>, vector<1x7xf32>
    %8 = vector.broadcast %7 : vector<1x7xf32> to vector<2x7xf32>
    %9 = arith.addf %6, %8 : vector<2x7xf32>
    %cst_9 = arith.constant dense<0xFF800000> : vector<2xf32>
    %10 = vector.multi_reduction <maximumf>, %9, %cst_9 [1] : vector<2x7xf32> to vector<2xf32>
    %11 = vector.shape_cast %10 : vector<2xf32> to vector<2x1xf32>
    %12 = vector.broadcast %11 : vector<2x1xf32> to vector<2x7xf32>
    %13 = arith.subf %9, %12 : vector<2x7xf32>
    %14 = math.exp %13 : vector<2x7xf32>
    %cst_10 = arith.constant dense<0.000000e+00> : vector<2xf32>
    %15 = vector.multi_reduction <add>, %14, %cst_10 [1] : vector<2x7xf32> to vector<2xf32>
    %16 = vector.shape_cast %15 : vector<2xf32> to vector<2x1xf32>
    %17 = math.log %16 : vector<2x1xf32>
    %18 = vector.broadcast %17 : vector<2x1xf32> to vector<2x7xf32>
    %19 = arith.subf %13, %18 : vector<2x7xf32>
    %c0_11 = arith.constant 0 : index
    %c0_12 = arith.constant 0 : index
    %20 = vector.load %arg4[%c0_11, %c0_12] : memref<2x7xf32, #tpu.memory_space<vmem>>, vector<2x7xf32>
    tpu.vector_store %arg4[%c0_11, %c0_12], %19 {strides = array<i32>} : memref<2x7xf32, #tpu.memory_space<vmem>>, vector<2x7xf32>,
    return
  }
}

</mosaic_0001>

<llo_original>
// kernel: forward.7
$region0: #{forward.7}
  #allocation0 [shape = 'u32[]', space=smem, size = 0x4, offset = 0x4, fixed_abs, tag = 'smem constant byte address 0x4 - core index']
  #allocation1 [shape = 'u32[144,128]{1,0:T(1,128)}', space=vmem, size = 0x12000, scoped, tag = 'internal scratch']
  #allocation2 [shape = 'f32[1,8,8,16]{3,2,1,0:T(8,128)}', space=vmem, size = 0x8000, scoped, tag = 'scratch operand']
  #allocation3 [shape = 'f32[1,4,4,512]{3,2,1,0:T(4,128)}', space=vmem, size = 0x8000, scoped, tag = 'scratch operand']
  %s0 = inlined_call_operand.vmem [shape: f32[2,4,4,16], index: 0, kind: input, shape index: {}]
  %s1 = inlined_call_operand.vmem [shape: f32[512,128], index: 1, kind: input, shape index: {}]
  %s2 = inlined_call_operand.vmem [shape: f32[1,128], index: 2, kind: input, shape index: {}]
  %s3 = inlined_call_operand.vmem [shape: f32[2,4,4,128], index: 3, kind: output, shape index: {}]
  %s4 = sld [smem:[#allocation0]]
  $region45: #{forward.7} parent=0
    _
  %s6 = ssub.s32 1, %s4
  %s7 = scalar_select 0, %s6, %s4
  loop: start=0, step=1, limit=4
  $region2: #{forward.7} parent=0 // loop_pre_header
    _
  $region3: #{forward.7} parent=0 // loop_header
    %s9 = sphi 0, %s13
    %p10 = scmp.ge.s32.totalorder %s9, 4
    %s19 = sphi 0, %s21
    %s22 = sphi 0, %s19
    %s23 = sphi 0, %s22
    %s39 = sphi 0, %s23
    %s43 = sphi 0, %s43
    %s45 = sphi 0, %s43
    %s46 = sphi 0, %s45
    %s60 = sphi 0, %s46
    %s64 = sphi 0, %s64
    %s66 = sphi 0, %s64
    %s67 = sphi 0, %s66
    %s81 = sphi 0, %s67
    %s87 = sphi 0, %s89
    %s90 = sphi 0, %s87
    %s91 = sphi 0, %s90
    %s107 = sphi 0, %s91
  $region4: #{forward.7} parent=0 // loop_header_branch
    %12 = sbr.rel (%p10) target = $region8
  $region5: #{forward.7} parent=0 // loop_body
    %s14 = ssub.s32 %s9, 1
    %s15 = ssub.s32 %s9, 2
    %s16 = sadd.s32 %s9, 1
    %s17 = ssub.s32 %s9, %s16
    %p18 = scmp.eq.s32.totalorder %s17, 0
    %s20 = sadd.s32 %s19, 1
    %s21 = scalar_select %p18, %s19, %s20
    %p24 = pneg %p18
    %p25 = scmp.eq.s32.totalorder %s9, 1
    %p26 = por %p24, %p25
    %p27 = scmp.ne.s32.totalorder %s19, %s22
    %p28 = scmp.eq.s32.totalorder %s9, 0
    %p29 = por %p27, %p28
    %p30 = scmp.ne.s32.totalorder %s19, %s22
    %p31 = scmp.eq.s32.totalorder %s14, 1
    %p32 = por %p30, %p31
    %p33 = scmp.ne.s32.totalorder %s22, %s23
    %p34 = scmp.eq.s32.totalorder %s14, 0
    %p35 = por %p33, %p34
    %p36 = scmp.ne.s32.totalorder %s22, %s23
    %p37 = scmp.eq.s32.totalorder %s15, 1
    %p38 = por %p36, %p37
    %p40 = scmp.ne.s32.totalorder %s23, %s39
    %p41 = scmp.eq.s32.totalorder %s15, 0
    %p42 = por %p40, %p41
    %s44 = sadd.s32 %s43, 1
    %p47 = scmp.eq.s32.totalorder %s9, 1
    %p48 = scmp.ne.s32.totalorder %s43, %s45
    %p49 = scmp.eq.s32.totalorder %s9, 0
    %p50 = por %p48, %p49
    %p51 = scmp.ne.s32.totalorder %s43, %s45
    %p52 = scmp.eq.s32.totalorder %s14, 1
    %p53 = por %p51, %p52
    %p54 = scmp.ne.s32.totalorder %s45, %s46
    %p55 = scmp.eq.s32.totalorder %s14, 0
    %p56 = por %p54, %p55
    %p57 = scmp.ne.s32.totalorder %s45, %s46
    %p58 = scmp.eq.s32.totalorder %s15, 1
    %p59 = por %p57, %p58
    %p61 = scmp.ne.s32.totalorder %s46, %s60
    %p62 = scmp.eq.s32.totalorder %s15, 0
    %p63 = por %p61, %p62
    %s65 = sadd.s32 %s64, 1
    %p68 = scmp.eq.s32.totalorder %s9, 1
    %p69 = scmp.ne.s32.totalorder %s64, %s66
    %p70 = scmp.eq.s32.totalorder %s9, 0
    %p71 = por %p69, %p70
    %p72 = scmp.ne.s32.totalorder %s64, %s66
    %p73 = scmp.eq.s32.totalorder %s14, 1
    %p74 = por %p72, %p73
    %p75 = scmp.ne.s32.totalorder %s66, %s67
    %p76 = scmp.eq.s32.totalorder %s14, 0
    %p77 = por %p75, %p76
    %p78 = scmp.ne.s32.totalorder %s66, %s67
    %p79 = scmp.eq.s32.totalorder %s15, 1
    %p80 = por %p78, %p79
    %p82 = scmp.ne.s32.totalorder %s67, %s81
    %p83 = scmp.eq.s32.totalorder %s15, 0
    %p84 = por %p82, %p83
    %s85 = ssub.s32 %s9, %s16
    %p86 = scmp.eq.s32.totalorder %s85, 0
    %s88 = sadd.s32 %s87, 1
    %s89 = scalar_select %p86, %s87, %s88
    %p92 = pneg %p86
    %p93 = scmp.eq.s32.totalorder %s9, 1
    %p94 = por %p92, %p93
    %p95 = scmp.ne.s32.totalorder %s87, %s90
    %p96 = scmp.eq.s32.totalorder %s9, 0
    %p97 = por %p95, %p96
    %p98 = scmp.ne.s32.totalorder %s87, %s90
    %p99 = scmp.eq.s32.totalorder %s14, 1
    %p100 = por %p98, %p99
    %p101 = scmp.ne.s32.totalorder %s90, %s91
    %p102 = scmp.eq.s32.totalorder %s14, 0
    %p103 = por %p101, %p102
    %p104 = scmp.ne.s32.totalorder %s90, %s91
    %p105 = scmp.eq.s32.totalorder %s15, 1
    %p106 = por %p104, %p105
    %p108 = scmp.ne.s32.totalorder %s91, %s107
    %p109 = scmp.eq.s32.totalorder %s15, 0
    %p110 = por %p108, %p109
    %p111 = scmp.le.s32.totalorder 1, %s9
    %p112 = scmp.lt.s32.totalorder %s9, 3
    %p113 = pnand %p111, %p112
    %p114 = pneg %p113
    // Predicated region
    $region9: #{forward.7} parent=5 // pred_check
      _
    $region10: #{forward.7} parent=5 // pred_check_branch
      %116 = sbr.rel (%p113) target = $region12
    $region11: #{forward.7} parent=5 // pred_region
      %s117 = ssub.s32 %s9, 1
      // Predicated region
      $region13: #{forward.7} parent=11 // pred_check
        %p118 = pneg %p56
      $region14: #{forward.7} parent=11 // pred_check_branch
        %120 = sbr.rel (%p118) target = $region16
      $region15: #{forward.7} parent=11 // pred_region
        _
      $region16: #{forward.7} parent=11 // pred_fallthru
        _
      // Predicated region
      $region17: #{forward.7} parent=11 // pred_check
        %p121 = pneg %p77
      $region18: #{forward.7} parent=11 // pred_check_branch
        %123 = sbr.rel (%p121) target = $region20
      $region19: #{forward.7} parent=11 // pred_region
        _
      $region20: #{forward.7} parent=11 // pred_fallthru
        _
    $region12: #{forward.7} parent=5 // pred_fallthru
      _
    %p124 = scmp.lt.s32.totalorder %s9, 2
    // Predicated region
    $region21: #{forward.7} parent=5 // pred_check
      %p125 = pneg %p124
    $region22: #{forward.7} parent=5 // pred_check_branch
      %127 = sbr.rel (%p125) target = $region24
    $region23: #{forward.7} parent=5 // pred_region
      // Predicated region
      $region25: #{forward.7} parent=23 // pred_check
        %p128 = pneg %p29
      $region26: #{forward.7} parent=23 // pred_check_branch
        %130 = sbr.rel (%p128) target = $region28
      $region27: #{forward.7} parent=23 // pred_region
        %p131 = scmp.lt.s32.totalorder %s9, 1
        %s132 = scalar_select %p131, %s9, 1
        %s133 = smul.addr %s132, 4
        %s134 = smul.addr %s133, 4
        %s135 = scalar_lea.vmem %s0, %s134
      $region28: #{forward.7} parent=23 // pred_fallthru
        _
    $region24: #{forward.7} parent=5 // pred_fallthru
      _
    %p136 = scmp.le.s32.totalorder 1, %s9
    %p137 = scmp.lt.s32.totalorder %s9, 3
    %p138 = pnand %p136, %p137
    %p139 = pneg %p138
    // Predicated region
    $region29: #{forward.7} parent=5 // pred_check
      _
    $region30: #{forward.7} parent=5 // pred_check_branch
      %141 = sbr.rel (%p138) target = $region32
    $region31: #{forward.7} parent=5 // pred_region
      %s142 = ssub.s32 %s9, 1
      %p143 = scmp.lt.s32.totalorder %s14, 1
      %s144 = scalar_select %p143, %s14, 1
      %s145 = smul.addr %s144, 4
      %s146 = smul.addr %s145, 4
      %s147 = scalar_lea.vmem %s0, %s146
      %p148 = pneg %p35
      %p149 = pneg %p32
      %p150 = pneg %p56
      %p151 = pneg %p53
      %p152 = pneg %p77
      %p153 = pneg %p74
      %p154 = pneg %p103
      %p155 = pneg %p100
      %p156 = scmp.lt.s32.totalorder %s14, 1
      %s157 = scalar_select %p156, %s14, 1
      %s158 = smul.addr %s157, 4
      %s159 = smul.addr %s158, 4
      %s160 = scalar_lea.vmem %s3, %s159
      %p161 = scmp.lt.s32.totalorder %s14, 1
      %s162 = scalar_select %p161, %s14, 1
      %s163 = smul.addr %s162, 4
      %s164 = smul.addr %s163, 4
      %s165 = scalar_lea.vmem %s0, %s164
      %p166 = scmp.lt.s32.totalorder %s14, 1
      %s167 = scalar_select %p166, %s14, 1
      %s168 = smul.addr %s167, 4
      %s169 = smul.addr %s168, 4
      %s170 = scalar_lea.vmem %s3, %s169
      %vm171 = vcmask 130048
      %172 = vst.msk [vmem:[#allocation2] sm:$0xff] %vm171, 0.0
      %173 = vst.msk [vmem:[#allocation2 + $0x8] sm:$0xff] %vm171, 0.0
      %s174 = scalar_lea.vmem [#allocation2], 48
      %175 = vst.msk [vmem:[%s174] sm:$0xff] %vm171, 0.0
      %176 = vst.msk [vmem:[%s174 + $0x8] sm:$0xff] %vm171, 0.0
      %vm177 = vcmask 123904
      %178 = vst.msk [vmem:[#allocation2] sm:$0x3] %vm177, 0.0
      %179 = vst.msk [vmem:[#allocation2 + $0x8] sm:$0x3] %vm177, 0.0
      %180 = vst.msk [vmem:[#allocation2 + $0x10] sm:$0x3] %vm177, 0.0
      %181 = vst.msk [vmem:[#allocation2 + $0x18] sm:$0x3] %vm177, 0.0
      %182 = vst.msk [vmem:[#allocation2 + $0x20] sm:$0x3] %vm177, 0.0
      %183 = vst.msk [vmem:[#allocation2 + $0x28] sm:$0x3] %vm177, 0.0
      %184 = vst.msk [vmem:[#allocation2 + $0x30] sm:$0x3] %vm177, 0.0
      %185 = vst.msk [vmem:[#allocation2 + $0x38] sm:$0x3] %vm177, 0.0
      %186 = vst.msk [vmem:[#allocation2 + $0x6] sm:$0x3] %vm177, 0.0
      %187 = vst.msk [vmem:[#allocation2 + $0xe] sm:$0x3] %vm177, 0.0
      %188 = vst.msk [vmem:[#allocation2 + $0x16] sm:$0x3] %vm177, 0.0
      %189 = vst.msk [vmem:[#allocation2 + $0x1e] sm:$0x3] %vm177, 0.0
      %190 = vst.msk [vmem:[#allocation2 + $0x26] sm:$0x3] %vm177, 0.0
      %191 = vst.msk [vmem:[#allocation2 + $0x2e] sm:$0x3] %vm177, 0.0
      %192 = vst.msk [vmem:[#allocation2 + $0x36] sm:$0x3] %vm177, 0.0
      %193 = vst.msk [vmem:[#allocation2 + $0x3e] sm:$0x3] %vm177, 0.0
      %v194 = vld [vmem:[%s165] sm:$0xf]
      %v195 = vld [vmem:[%s165 + $0x4] sm:$0xf]
      %v196 = vld [vmem:[%s165 + $0x8] sm:$0xf]
      %v197 = vld [vmem:[%s165 + $0xc] sm:$0xf]
      %s198 = scalar_lea.vmem [#allocation2], 16
      %vm199 = vcmask 125952
      %200 = vst.msk [vmem:[%s198 + $0x2] sm:$0xf] %vm199, %v194
      %201 = vst.msk [vmem:[%s198 + $0xa] sm:$0xf] %vm199, %v195
      %202 = vst.msk [vmem:[%s198 + $0x12] sm:$0xf] %vm199, %v196
      %203 = vst.msk [vmem:[%s198 + $0x1a] sm:$0xf] %vm199, %v197
      %vm204 = vcmask 1043584
      %205 = vst.msk [vmem:[#allocation3 + $0xc] sm:$0xf] %vm204, 0.0
      %206 = vst.msk [vmem:[#allocation3 + $0x1c] sm:$0xf] %vm204, 0.0
      %207 = vst.msk [vmem:[#allocation3 + $0x2c] sm:$0xf] %vm204, 0.0
      %208 = vst.msk [vmem:[#allocation3 + $0x3c] sm:$0xf] %vm204, 0.0
      %v209 = vld [vmem:[#allocation2] sm:$0xff]
      %v210 = vld [vmem:[#allocation2 + $0x8] sm:$0xff]
      %v211 = vld [vmem:[#allocation2 + $0x10] sm:$0xff]
      %v212 = vld [vmem:[#allocation2 + $0x18] sm:$0xff]
      %v213 = vld [vmem:[#allocation2 + $0x20] sm:$0xff]
      %v214 = vld [vmem:[#allocation2 + $0x28] sm:$0xff]
      %v215 = vld [vmem:[#allocation2 + $0x30] sm:$0xff]
      %v216 = vld [vmem:[#allocation2 + $0x38] sm:$0xff]
      %217 = vst.msk [vmem:[#allocation3] sm:$0xf] %vm199, %v209
      %218 = vst.msk [vmem:[#allocation3 + $0x10] sm:$0xf] %vm199, %v210
      %219 = vst.msk [vmem:[#allocation3 + $0x20] sm:$0xf] %vm199, %v211
      %220 = vst.msk [vmem:[#allocation3 + $0x30] sm:$0xf] %vm199, %v212
      %v225 = vcombine.high %v209, %v209
      %v226 = vcombine.high %v210, %v210
      %v227 = vcombine.high %v211, %v211
      %v228 = vcombine.high %v212, %v212
      %vm229 = vcmask 1042432
      %vm230 = vcmask 1046532
      %vm231 = vmor %vm229, %vm230
      %v232 = vrot.slane %v209, 5
      %v233 = vrot.slane %v232, 4
      %v234 = vrot.slane %v225, 5
      %v235 = vsel %vm231, %v233, %v234
      %v236 = vrot.slane %v210, 5
      %v237 = vrot.slane %v236, 4
      %v238 = vrot.slane %v226, 5
      %v239 = vsel %vm231, %v237, %v238
      %v240 = vrot.slane %v211, 5
      %v241 = vrot.slane %v240, 4
      %v242 = vrot.slane %v227, 5
      %v243 = vsel %vm231, %v241, %v242
      %v244 = vrot.slane %v212, 5
      %v245 = vrot.slane %v244, 4
      %v246 = vrot.slane %v228, 5
      %v247 = vsel %vm231, %v245, %v246
      %248 = vrot.lane.b32.xlu0 %v235, 16
      %v249 = vpop.permute.xlu0 %248
      %250 = vrot.lane.b32.xlu0 %v239, 16
      %v251 = vpop.permute.xlu0 %250
      %252 = vrot.lane.b32.xlu0 %v243, 16
      %v253 = vpop.permute.xlu0 %252
      %254 = vrot.lane.b32.xlu0 %v247, 16
      %v255 = vpop.permute.xlu0 %254
      %vm260 = vcmask 257152
      %261 = vst.msk [vmem:[#allocation3] sm:$0xf] %vm260, %v249
      %262 = vst.msk [vmem:[#allocation3 + $0x10] sm:$0xf] %vm260, %v251
      %263 = vst.msk [vmem:[#allocation3 + $0x20] sm:$0xf] %vm260, %v253
      %264 = vst.msk [vmem:[#allocation3 + $0x30] sm:$0xf] %vm260, %v255
      %vm265 = vcmask 1041408
      %vm266 = vcmask 1045508
      %vm267 = vmor %vm265, %vm266
      %v268 = vrot.slane %v209, 6
      %v269 = vrot.slane %v268, 4
      %v270 = vrot.slane %v225, 6
      %v271 = vsel %vm267, %v269, %v270
      %v272 = vrot.slane %v210, 6
      %v273 = vrot.slane %v272, 4
      %v274 = vrot.slane %v226, 6
      %v275 = vsel %vm267, %v273, %v274
      %v276 = vrot.slane %v211, 6
      %v277 = vrot.slane %v276, 4
      %v278 = vrot.slane %v227, 6
      %v279 = vsel %vm267, %v277, %v278
      %v280 = vrot.slane %v212, 6
      %v281 = vrot.slane %v280, 4
      %v282 = vrot.slane %v228, 6
      %v283 = vsel %vm267, %v281, %v282
      %284 = vrot.lane.b32.xlu0 %v271, 32
      %v285 = vpop.permute.xlu0 %284
      %286 = vrot.lane.b32.xlu0 %v275, 32
      %v287 = vpop.permute.xlu0 %286
      %288 = vrot.lane.b32.xlu0 %v279, 32
      %v289 = vpop.permute.xlu0 %288
      %290 = vrot.lane.b32.xlu0 %v283, 32
      %v291 = vpop.permute.xlu0 %290
      %vm296 = vcmask 388352
      %297 = vst.msk [vmem:[#allocation3] sm:$0xf] %vm296, %v285
      %298 = vst.msk [vmem:[#allocation3 + $0x10] sm:$0xf] %vm296, %v287
      %299 = vst.msk [vmem:[#allocation3 + $0x20] sm:$0xf] %vm296, %v289
      %300 = vst.msk [vmem:[#allocation3 + $0x30] sm:$0xf] %vm296, %v291
      %vm301 = vcmask 1040384
      %vm302 = vcmask 1044484
      %vm303 = vmor %vm301, %vm302
      %v304 = vrot.slane %v209, 7
      %v305 = vrot.slane %v304, 4
      %v306 = vrot.slane %v225, 7
      %v307 = vsel %vm303, %v305, %v306
      %v308 = vrot.slane %v210, 7
      %v309 = vrot.slane %v308, 4
      %v310 = vrot.slane %v226, 7
      %v311 = vsel %vm303, %v309, %v310
      %v312 = vrot.slane %v211, 7
      %v313 = vrot.slane %v312, 4
      %v314 = vrot.slane %v227, 7
      %v315 = vsel %vm303, %v313, %v314
      %v316 = vrot.slane %v212, 7
      %v317 = vrot.slane %v316, 4
      %v318 = vrot.slane %v228, 7
      %v319 = vsel %vm303, %v317, %v318
      %320 = vrot.lane.b32.xlu0 %v307, 48
      %v321 = vpop.permute.xlu0 %320
      %322 = vrot.lane.b32.xlu0 %v311, 48
      %v323 = vpop.permute.xlu0 %322
      %324 = vrot.lane.b32.xlu0 %v315, 48
      %v325 = vpop.permute.xlu0 %324
      %326 = vrot.lane.b32.xlu0 %v319, 48
      %v327 = vpop.permute.xlu0 %326
      %vm332 = vcmask 519552
      %333 = vst.msk [vmem:[#allocation3] sm:$0xf] %vm332, %v321
      %334 = vst.msk [vmem:[#allocation3 + $0x10] sm:$0xf] %vm332, %v323
      %335 = vst.msk [vmem:[#allocation3 + $0x20] sm:$0xf] %vm332, %v325
      %336 = vst.msk [vmem:[#allocation3 + $0x30] sm:$0xf] %vm332, %v327
      %337 = vrot.lane.b32.xlu0 %v225, 64
      %v338 = vpop.permute.xlu0 %337
      %339 = vrot.lane.b32.xlu0 %v226, 64
      %v340 = vpop.permute.xlu0 %339
      %341 = vrot.lane.b32.xlu0 %v227, 64
      %v342 = vpop.permute.xlu0 %341
      %343 = vrot.lane.b32.xlu0 %v228, 64
      %v344 = vpop.permute.xlu0 %343
      %vm349 = vcmask 650752
      %350 = vst.msk [vmem:[#allocation3] sm:$0xf] %vm349, %v338
      %351 = vst.msk [vmem:[#allocation3 + $0x10] sm:$0xf] %vm349, %v340
      %352 = vst.msk [vmem:[#allocation3 + $0x20] sm:$0xf] %vm349, %v342
      %353 = vst.msk [vmem:[#allocation3 + $0x30] sm:$0xf] %vm349, %v344
      %355 = vrot.lane.b32.xlu0 %v210, 80
      %v356 = vpop.permute.xlu0 %355
      %357 = vrot.lane.b32.xlu0 %v211, 80
      %v358 = vpop.permute.xlu0 %357
      %359 = vrot.lane.b32.xlu0 %v212, 80
      %v360 = vpop.permute.xlu0 %359
      %361 = vrot.lane.b32.xlu0 %v213, 80
      %v362 = vpop.permute.xlu0 %361
      %vm367 = vcmask 781952
      %368 = vst.msk [vmem:[#allocation3] sm:$0xf] %vm367, %v356
      %369 = vst.msk [vmem:[#allocation3 + $0x10] sm:$0xf] %vm367, %v358
      %370 = vst.msk [vmem:[#allocation3 + $0x20] sm:$0xf] %vm367, %v360
      %371 = vst.msk [vmem:[#allocation3 + $0x30] sm:$0xf] %vm367, %v362
      %v372 = vcombine.high %v213, %v213
      %v373 = vrot.slane %v213, 5
      %v374 = vrot.slane %v373, 4
      %v375 = vrot.slane %v372, 5
      %v376 = vsel %vm231, %v374, %v375
      %377 = vrot.lane.b32.xlu0 %v239, 96
      %v378 = vpop.permute.xlu0 %377
      %379 = vrot.lane.b32.xlu0 %v243, 96
      %v380 = vpop.permute.xlu0 %379
      %381 = vrot.lane.b32.xlu0 %v247, 96
      %v382 = vpop.permute.xlu0 %381
      %383 = vrot.lane.b32.xlu0 %v376, 96
      %v384 = vpop.permute.xlu0 %383
      %vm389 = vcmask 913152
      %390 = vst.msk [vmem:[#allocation3] sm:$0xf] %vm389, %v378
      %391 = vst.msk [vmem:[#allocation3 + $0x10] sm:$0xf] %vm389, %v380
      %392 = vst.msk [vmem:[#allocation3 + $0x20] sm:$0xf] %vm389, %v382
      %393 = vst.msk [vmem:[#allocation3 + $0x30] sm:$0xf] %vm389, %v384
      %v394 = vrot.slane %v213, 6
      %v395 = vrot.slane %v394, 4
      %v396 = vrot.slane %v372, 6
      %v397 = vsel %vm267, %v395, %v396
      %398 = vrot.lane.b32.xlu0 %v275, 112
      %v399 = vpop.permute.xlu0 %398
      %400 = vrot.lane.b32.xlu0 %v279, 112
      %v401 = vpop.permute.xlu0 %400
      %402 = vrot.lane.b32.xlu0 %v283, 112
      %v403 = vpop.permute.xlu0 %402
      %404 = vrot.lane.b32.xlu0 %v397, 112
      %v405 = vpop.permute.xlu0 %404
      %vm410 = vcmask 1044352
      %411 = vst.msk [vmem:[#allocation3] sm:$0xf] %vm410, %v399
      %412 = vst.msk [vmem:[#allocation3 + $0x10] sm:$0xf] %vm410, %v401
      %413 = vst.msk [vmem:[#allocation3 + $0x20] sm:$0xf] %vm410, %v403
      %414 = vst.msk [vmem:[#allocation3 + $0x30] sm:$0xf] %vm410, %v405
      %v415 = vrot.slane %v213, 7
      %v416 = vrot.slane %v415, 4
      %v417 = vrot.slane %v372, 7
      %v418 = vsel %vm303, %v416, %v417
      %423 = vst.msk [vmem:[#allocation3 + $0x4] sm:$0xf] %vm199, %v311
      %424 = vst.msk [vmem:[#allocation3 + $0x14] sm:$0xf] %vm199, %v315
      %425 = vst.msk [vmem:[#allocation3 + $0x24] sm:$0xf] %vm199, %v319
      %426 = vst.msk [vmem:[#allocation3 + $0x34] sm:$0xf] %vm199, %v418
      %427 = vrot.lane.b32.xlu0 %v226, 16
      %v428 = vpop.permute.xlu0 %427
      %429 = vrot.lane.b32.xlu0 %v227, 16
      %v430 = vpop.permute.xlu0 %429
      %431 = vrot.lane.b32.xlu0 %v228, 16
      %v432 = vpop.permute.xlu0 %431
      %433 = vrot.lane.b32.xlu0 %v372, 16
      %v434 = vpop.permute.xlu0 %433
      %439 = vst.msk [vmem:[#allocation3 + $0x4] sm:$0xf] %vm260, %v428
      %440 = vst.msk [vmem:[#allocation3 + $0x14] sm:$0xf] %vm260, %v430
      %441 = vst.msk [vmem:[#allocation3 + $0x24] sm:$0xf] %vm260, %v432
      %442 = vst.msk [vmem:[#allocation3 + $0x34] sm:$0xf] %vm260, %v434
      %444 = vrot.lane.b32.xlu0 %v211, 32
      %v445 = vpop.permute.xlu0 %444
      %446 = vrot.lane.b32.xlu0 %v212, 32
      %v447 = vpop.permute.xlu0 %446
      %448 = vrot.lane.b32.xlu0 %v213, 32
      %v449 = vpop.permute.xlu0 %448
      %450 = vrot.lane.b32.xlu0 %v214, 32
      %v451 = vpop.permute.xlu0 %450
      %456 = vst.msk [vmem:[#allocation3 + $0x4] sm:$0xf] %vm296, %v445
      %457 = vst.msk [vmem:[#allocation3 + $0x14] sm:$0xf] %vm296, %v447
      %458 = vst.msk [vmem:[#allocation3 + $0x24] sm:$0xf] %vm296, %v449
      %459 = vst.msk [vmem:[#allocation3 + $0x34] sm:$0xf] %vm296, %v451
      %v460 = vcombine.high %v214, %v214
      %v461 = vrot.slane %v214, 5
      %v462 = vrot.slane %v461, 4
      %v463 = vrot.slane %v460, 5
      %v464 = vsel %vm231, %v462, %v463
      %465 = vrot.lane.b32.xlu0 %v243, 48
      %v466 = vpop.permute.xlu0 %465
      %467 = vrot.lane.b32.xlu0 %v247, 48
      %v468 = vpop.permute.xlu0 %467
      %469 = vrot.lane.b32.xlu0 %v376, 48
      %v470 = vpop.permute.xlu0 %469
      %471 = vrot.lane.b32.xlu0 %v464, 48
      %v472 = vpop.permute.xlu0 %471
      %477 = vst.msk [vmem:[#allocation3 + $0x4] sm:$0xf] %vm332, %v466
      %478 = vst.msk [vmem:[#allocation3 + $0x14] sm:$0xf] %vm332, %v468
      %479 = vst.msk [vmem:[#allocation3 + $0x24] sm:$0xf] %vm332, %v470
      %480 = vst.msk [vmem:[#allocation3 + $0x34] sm:$0xf] %vm332, %v472
      %v481 = vrot.slane %v214, 6
      %v482 = vrot.slane %v481, 4
      %v483 = vrot.slane %v460, 6
      %v484 = vsel %vm267, %v482, %v483
      %485 = vrot.lane.b32.xlu0 %v279, 64
      %v486 = vpop.permute.xlu0 %485
      %487 = vrot.lane.b32.xlu0 %v283, 64
      %v488 = vpop.permute.xlu0 %487
      %489 = vrot.lane.b32.xlu0 %v397, 64
      %v490 = vpop.permute.xlu0 %489
      %491 = vrot.lane.b32.xlu0 %v484, 64
      %v492 = vpop.permute.xlu0 %491
      %497 = vst.msk [vmem:[#allocation3 + $0x4] sm:$0xf] %vm349, %v486
      %498 = vst.msk [vmem:[#allocation3 + $0x14] sm:$0xf] %vm349, %v488
      %499 = vst.msk [vmem:[#allocation3 + $0x24] sm:$0xf] %vm349, %v490
      %500 = vst.msk [vmem:[#allocation3 + $0x34] sm:$0xf] %vm349, %v492
      %v501 = vrot.slane %v214, 7
      %v502 = vrot.slane %v501, 4
      %v503 = vrot.slane %v460, 7
      %v504 = vsel %vm303, %v502, %v503
      %505 = vrot.lane.b32.xlu0 %v315, 80
      %v506 = vpop.permute.xlu0 %505
      %507 = vrot.lane.b32.xlu0 %v319, 80
      %v508 = vpop.permute.xlu0 %507
      %509 = vrot.lane.b32.xlu0 %v418, 80
      %v510 = vpop.permute.xlu0 %509
      %511 = vrot.lane.b32.xlu0 %v504, 80
      %v512 = vpop.permute.xlu0 %511
      %517 = vst.msk [vmem:[#allocation3 + $0x4] sm:$0xf] %vm367, %v506
      %518 = vst.msk [vmem:[#allocation3 + $0x14] sm:$0xf] %vm367, %v508
      %519 = vst.msk [vmem:[#allocation3 + $0x24] sm:$0xf] %vm367, %v510
      %520 = vst.msk [vmem:[#allocation3 + $0x34] sm:$0xf] %vm367, %v512
      %521 = vrot.lane.b32.xlu0 %v227, 96
      %v522 = vpop.permute.xlu0 %521
      %523 = vrot.lane.b32.xlu0 %v228, 96
      %v524 = vpop.permute.xlu0 %523
      %525 = vrot.lane.b32.xlu0 %v372, 96
      %v526 = vpop.permute.xlu0 %525
      %527 = vrot.lane.b32.xlu0 %v460, 96
      %v528 = vpop.permute.xlu0 %527
      %533 = vst.msk [vmem:[#allocation3 + $0x4] sm:$0xf] %vm389, %v522
      %534 = vst.msk [vmem:[#allocation3 + $0x14] sm:$0xf] %vm389, %v524
      %535 = vst.msk [vmem:[#allocation3 + $0x24] sm:$0xf] %vm389, %v526
      %536 = vst.msk [vmem:[#allocation3 + $0x34] sm:$0xf] %vm389, %v528
      %538 = vrot.lane.b32.xlu0 %v212, 112
      %v539 = vpop.permute.xlu0 %538
      %540 = vrot.lane.b32.xlu0 %v213, 112
      %v541 = vpop.permute.xlu0 %540
      %542 = vrot.lane.b32.xlu0 %v214, 112
      %v543 = vpop.permute.xlu0 %542
      %544 = vrot.lane.b32.xlu0 %v215, 112
      %v545 = vpop.permute.xlu0 %544
      %550 = vst.msk [vmem:[#allocation3 + $0x4] sm:$0xf] %vm410, %v539
      %551 = vst.msk [vmem:[#allocation3 + $0x14] sm:$0xf] %vm410, %v541
      %552 = vst.msk [vmem:[#allocation3 + $0x24] sm:$0xf] %vm410, %v543
      %553 = vst.msk [vmem:[#allocation3 + $0x34] sm:$0xf] %vm410, %v545
      %v554 = vcombine.high %v215, %v215
      %v555 = vrot.slane %v215, 5
      %v556 = vrot.slane %v555, 4
      %v557 = vrot.slane %v554, 5
      %v558 = vsel %vm231, %v556, %v557
      %563 = vst.msk [vmem:[#allocation3 + $0x8] sm:$0xf] %vm199, %v247
      %564 = vst.msk [vmem:[#allocation3 + $0x18] sm:$0xf] %vm199, %v376
      %565 = vst.msk [vmem:[#allocation3 + $0x28] sm:$0xf] %vm199, %v464
      %566 = vst.msk [vmem:[#allocation3 + $0x38] sm:$0xf] %vm199, %v558
      %v567 = vrot.slane %v215, 6
      %v568 = vrot.slane %v567, 4
      %v569 = vrot.slane %v554, 6
      %v570 = vsel %vm267, %v568, %v569
      %571 = vrot.lane.b32.xlu0 %v283, 16
      %v572 = vpop.permute.xlu0 %571
      %573 = vrot.lane.b32.xlu0 %v397, 16
      %v574 = vpop.permute.xlu0 %573
      %575 = vrot.lane.b32.xlu0 %v484, 16
      %v576 = vpop.permute.xlu0 %575
      %577 = vrot.lane.b32.xlu0 %v570, 16
      %v578 = vpop.permute.xlu0 %577
      %583 = vst.msk [vmem:[#allocation3 + $0x8] sm:$0xf] %vm260, %v572
      %584 = vst.msk [vmem:[#allocation3 + $0x18] sm:$0xf] %vm260, %v574
      %585 = vst.msk [vmem:[#allocation3 + $0x28] sm:$0xf] %vm260, %v576
      %586 = vst.msk [vmem:[#allocation3 + $0x38] sm:$0xf] %vm260, %v578
      %v587 = vrot.slane %v215, 7
      %v588 = vrot.slane %v587, 4
      %v589 = vrot.slane %v554, 7
      %v590 = vsel %vm303, %v588, %v589
      %591 = vrot.lane.b32.xlu0 %v319, 32
      %v592 = vpop.permute.xlu0 %591
      %593 = vrot.lane.b32.xlu0 %v418, 32
      %v594 = vpop.permute.xlu0 %593
      %595 = vrot.lane.b32.xlu0 %v504, 32
      %v596 = vpop.permute.xlu0 %595
      %597 = vrot.lane.b32.xlu0 %v590, 32
      %v598 = vpop.permute.xlu0 %597
      %603 = vst.msk [vmem:[#allocation3 + $0x8] sm:$0xf] %vm296, %v592
      %604 = vst.msk [vmem:[#allocation3 + $0x18] sm:$0xf] %vm296, %v594
      %605 = vst.msk [vmem:[#allocation3 + $0x28] sm:$0xf] %vm296, %v596
      %606 = vst.msk [vmem:[#allocation3 + $0x38] sm:$0xf] %vm296, %v598
      %607 = vrot.lane.b32.xlu0 %v228, 48
      %v608 = vpop.permute.xlu0 %607
      %609 = vrot.lane.b32.xlu0 %v372, 48
      %v610 = vpop.permute.xlu0 %609
      %611 = vrot.lane.b32.xlu0 %v460, 48
      %v612 = vpop.permute.xlu0 %611
      %613 = vrot.lane.b32.xlu0 %v554, 48
      %v614 = vpop.permute.xlu0 %613
      %619 = vst.msk [vmem:[#allocation3 + $0x8] sm:$0xf] %vm332, %v608
      %620 = vst.msk [vmem:[#allocation3 + $0x18] sm:$0xf] %vm332, %v610
      %621 = vst.msk [vmem:[#allocation3 + $0x28] sm:$0xf] %vm332, %v612
      %622 = vst.msk [vmem:[#allocation3 + $0x38] sm:$0xf] %vm332, %v614
      %624 = vrot.lane.b32.xlu0 %v213, 64
      %v625 = vpop.permute.xlu0 %624
      %626 = vrot.lane.b32.xlu0 %v214, 64
      %v627 = vpop.permute.xlu0 %626
      %628 = vrot.lane.b32.xlu0 %v215, 64
      %v629 = vpop.permute.xlu0 %628
      %630 = vrot.lane.b32.xlu0 %v216, 64
      %v631 = vpop.permute.xlu0 %630
      %636 = vst.msk [vmem:[#allocation3 + $0x8] sm:$0xf] %vm349, %v625
      %637 = vst.msk [vmem:[#allocation3 + $0x18] sm:$0xf] %vm349, %v627
      %638 = vst.msk [vmem:[#allocation3 + $0x28] sm:$0xf] %vm349, %v629
      %639 = vst.msk [vmem:[#allocation3 + $0x38] sm:$0xf] %vm349, %v631
      %v640 = vcombine.high %v216, %v216
      %v641 = vrot.slane %v216, 5
      %v642 = vrot.slane %v641, 4
      %v643 = vrot.slane %v640, 5
      %v644 = vsel %vm231, %v642, %v643
      %645 = vrot.lane.b32.xlu0 %v376, 80
      %v646 = vpop.permute.xlu0 %645
      %647 = vrot.lane.b32.xlu0 %v464, 80
      %v648 = vpop.permute.xlu0 %647
      %649 = vrot.lane.b32.xlu0 %v558, 80
      %v650 = vpop.permute.xlu0 %649
      %651 = vrot.lane.b32.xlu0 %v644, 80
      %v652 = vpop.permute.xlu0 %651
      %657 = vst.msk [vmem:[#allocation3 + $0x8] sm:$0xf] %vm367, %v646
      %658 = vst.msk [vmem:[#allocation3 + $0x18] sm:$0xf] %vm367, %v648
      %659 = vst.msk [vmem:[#allocation3 + $0x28] sm:$0xf] %vm367, %v650
      %660 = vst.msk [vmem:[#allocation3 + $0x38] sm:$0xf] %vm367, %v652
      %v661 = vrot.slane %v216, 6
      %v662 = vrot.slane %v661, 4
      %v663 = vrot.slane %v640, 6
      %v664 = vsel %vm267, %v662, %v663
      %665 = vrot.lane.b32.xlu0 %v397, 96
      %v666 = vpop.permute.xlu0 %665
      %667 = vrot.lane.b32.xlu0 %v484, 96
      %v668 = vpop.permute.xlu0 %667
      %669 = vrot.lane.b32.xlu0 %v570, 96
      %v670 = vpop.permute.xlu0 %669
      %671 = vrot.lane.b32.xlu0 %v664, 96
      %v672 = vpop.permute.xlu0 %671
      %677 = vst.msk [vmem:[#allocation3 + $0x8] sm:$0xf] %vm389, %v666
      %678 = vst.msk [vmem:[#allocation3 + $0x18] sm:$0xf] %vm389, %v668
      %679 = vst.msk [vmem:[#allocation3 + $0x28] sm:$0xf] %vm389, %v670
      %680 = vst.msk [vmem:[#allocation3 + $0x38] sm:$0xf] %vm389, %v672
      %v681 = vrot.slane %v216, 7
      %v682 = vrot.slane %v681, 4
      %v683 = vrot.slane %v640, 7
      %v684 = vsel %vm303, %v682, %v683
      %685 = vrot.lane.b32.xlu0 %v418, 112
      %v686 = vpop.permute.xlu0 %685
      %687 = vrot.lane.b32.xlu0 %v504, 112
      %v688 = vpop.permute.xlu0 %687
      %689 = vrot.lane.b32.xlu0 %v590, 112
      %v690 = vpop.permute.xlu0 %689
      %691 = vrot.lane.b32.xlu0 %v684, 112
      %v692 = vpop.permute.xlu0 %691
      %697 = vst.msk [vmem:[#allocation3 + $0x8] sm:$0xf] %vm410, %v686
      %698 = vst.msk [vmem:[#allocation3 + $0x18] sm:$0xf] %vm410, %v688
      %699 = vst.msk [vmem:[#allocation3 + $0x28] sm:$0xf] %vm410, %v690
      %700 = vst.msk [vmem:[#allocation3 + $0x38] sm:$0xf] %vm410, %v692
      %705 = vst.msk [vmem:[#allocation3 + $0xc] sm:$0xf] %vm199, %v372
      %706 = vst.msk [vmem:[#allocation3 + $0x1c] sm:$0xf] %vm199, %v460
      %707 = vst.msk [vmem:[#allocation3 + $0x2c] sm:$0xf] %vm199, %v554
      %708 = vst.msk [vmem:[#allocation3 + $0x3c] sm:$0xf] %vm199, %v640
      %v709 = vld [vmem:[#allocation3] sm:$0xff]
      %v710 = vld [vmem:[#allocation3 + $0x8] sm:$0xff]
      %v711 = vld [vmem:[#allocation3 + $0x10] sm:$0xff]
      %v712 = vld [vmem:[#allocation3 + $0x18] sm:$0xff]
      %v713 = vld [vmem:[#allocation3 + $0x20] sm:$0xff]
      %v714 = vld [vmem:[#allocation3 + $0x28] sm:$0xff]
      %v715 = vld [vmem:[#allocation3 + $0x30] sm:$0xff]
      %v716 = vld [vmem:[#allocation3 + $0x38] sm:$0xff]
      %v717 = vld [vmem:[%s1] sm:$0xff]
      %v718 = vld [vmem:[%s1 + $0x8] sm:$0xff]
      %v719 = vld [vmem:[%s1 + $0x10] sm:$0xff]
      %v720 = vld [vmem:[%s1 + $0x18] sm:$0xff]
      %v721 = vld [vmem:[%s1 + $0x20] sm:$0xff]
      %v722 = vld [vmem:[%s1 + $0x28] sm:$0xff]
      %v723 = vld [vmem:[%s1 + $0x30] sm:$0xff]
      %v724 = vld [vmem:[%s1 + $0x38] sm:$0xff]
      %v725 = vld [vmem:[%s1 + $0x40] sm:$0xff]
      %v726 = vld [vmem:[%s1 + $0x48] sm:$0xff]
      %v727 = vld [vmem:[%s1 + $0x50] sm:$0xff]
      %v728 = vld [vmem:[%s1 + $0x58] sm:$0xff]
      %v729 = vld [vmem:[%s1 + $0x60] sm:$0xff]
      %v730 = vld [vmem:[%s1 + $0x68] sm:$0xff]
      %v731 = vld [vmem:[%s1 + $0x70] sm:$0xff]
      %v732 = vld [vmem:[%s1 + $0x78] sm:$0xff]
      %v733 = vld [vmem:[%s1 + $0x80] sm:$0xff]
      %v734 = vld [vmem:[%s1 + $0x88] sm:$0xff]
      %v735 = vld [vmem:[%s1 + $0x90] sm:$0xff]
      %v736 = vld [vmem:[%s1 + $0x98] sm:$0xff]
      %v737 = vld [vmem:[%s1 + $0xa0] sm:$0xff]
      %v738 = vld [vmem:[%s1 + $0xa8] sm:$0xff]
      %v739 = vld [vmem:[%s1 + $0xb0] sm:$0xff]
      %v740 = vld [vmem:[%s1 + $0xb8] sm:$0xff]
      %v741 = vld [vmem:[%s1 + $0xc0] sm:$0xff]
      %v742 = vld [vmem:[%s1 + $0xc8] sm:$0xff]
      %v743 = vld [vmem:[%s1 + $0xd0] sm:$0xff]
      %v744 = vld [vmem:[%s1 + $0xd8] sm:$0xff]
      %v745 = vld [vmem:[%s1 + $0xe0] sm:$0xff]
      %v746 = vld [vmem:[%s1 + $0xe8] sm:$0xff]
      %v747 = vld [vmem:[%s1 + $0xf0] sm:$0xff]
      %v748 = vld [vmem:[%s1 + $0xf8] sm:$0xff]
      %v749 = vld [vmem:[%s1 + $0x100] sm:$0xff]
      %v750 = vld [vmem:[%s1 + $0x108] sm:$0xff]
      %v751 = vld [vmem:[%s1 + $0x110] sm:$0xff]
      %v752 = vld [vmem:[%s1 + $0x118] sm:$0xff]
      %v753 = vld [vmem:[%s1 + $0x120] sm:$0xff]
      %v754 = vld [vmem:[%s1 + $0x128] sm:$0xff]
      %v755 = vld [vmem:[%s1 + $0x130] sm:$0xff]
      %v756 = vld [vmem:[%s1 + $0x138] sm:$0xff]
      %v757 = vld [vmem:[%s1 + $0x140] sm:$0xff]
      %v758 = vld [vmem:[%s1 + $0x148] sm:$0xff]
      %v759 = vld [vmem:[%s1 + $0x150] sm:$0xff]
      %v760 = vld [vmem:[%s1 + $0x158] sm:$0xff]
      %v761 = vld [vmem:[%s1 + $0x160] sm:$0xff]
      %v762 = vld [vmem:[%s1 + $0x168] sm:$0xff]
      %v763 = vld [vmem:[%s1 + $0x170] sm:$0xff]
      %v764 = vld [vmem:[%s1 + $0x178] sm:$0xff]
      %v765 = vld [vmem:[%s1 + $0x180] sm:$0xff]
      %v766 = vld [vmem:[%s1 + $0x188] sm:$0xff]
      %v767 = vld [vmem:[%s1 + $0x190] sm:$0xff]
      %v768 = vld [vmem:[%s1 + $0x198] sm:$0xff]
      %v769 = vld [vmem:[%s1 + $0x1a0] sm:$0xff]
      %v770 = vld [vmem:[%s1 + $0x1a8] sm:$0xff]
      %v771 = vld [vmem:[%s1 + $0x1b0] sm:$0xff]
      %v772 = vld [vmem:[%s1 + $0x1b8] sm:$0xff]
      %v773 = vld [vmem:[%s1 + $0x1c0] sm:$0xff]
      %v774 = vld [vmem:[%s1 + $0x1c8] sm:$0xff]
      %v775 = vld [vmem:[%s1 + $0x1d0] sm:$0xff]
      %v776 = vld [vmem:[%s1 + $0x1d8] sm:$0xff]
      %v777 = vld [vmem:[%s1 + $0x1e0] sm:$0xff]
      %v778 = vld [vmem:[%s1 + $0x1e8] sm:$0xff]
      %v779 = vld [vmem:[%s1 + $0x1f0] sm:$0xff]
      %v780 = vld [vmem:[%s1 + $0x1f8] sm:$0xff]
      %v781 = vld [vmem:[%s2] sm:$0x1]
      %v783 = vlaneseq
      %v784 = vshrl.u32 %v783, 7
      %v785 = vsub.s32 0, %v784
      %v786 = vrot.slane %v781, %v785
      %v796 = vcombine.low %v709, %v711
      %v797 = vcombine.high %v709, %v711
      %v798 = vcombine.low %v710, %v712
      %v799 = vcombine.high %v710, %v712
      %v800 = vcombine.low %v713, %v715
      %v801 = vcombine.high %v713, %v715
      %v802 = vcombine.low %v714, %v716
      %v803 = vcombine.high %v714, %v716
      %812 = vmatprep.subr.mxu0 0.0
      %813 = vmatpush1.msra.mxu0 %v732
      %814 = vmatprep.subr.mxu0 0.0
      %815 = vmatpush1.msra.mxu0 %v731
      %816 = vmatprep.subr.mxu0 0.0
      %817 = vmatpush1.msra.mxu0 %v730
      %818 = vmatprep.subr.mxu0 0.0
      %819 = vmatpush1.msra.mxu0 %v729
      %820 = vmatprep.subr.mxu0 0.0
      %821 = vmatpush1.msra.mxu0 %v728
      %822 = vmatprep.subr.mxu0 0.0
      %823 = vmatpush1.msra.mxu0 %v727
      %824 = vmatprep.subr.mxu0 0.0
      %825 = vmatpush1.msra.mxu0 %v726
      %826 = vmatprep.subr.mxu0 0.0
      %827 = vmatpush1.msra.mxu0 %v725
      %828 = vmatprep.subr.mxu0 0.0
      %829 = vmatpush1.msra.mxu0 %v724
      %830 = vmatprep.subr.mxu0 0.0
      %831 = vmatpush1.msra.mxu0 %v723
      %832 = vmatprep.subr.mxu0 0.0
      %833 = vmatpush1.msra.mxu0 %v722
      %834 = vmatprep.subr.mxu0 0.0
      %835 = vmatpush1.msra.mxu0 %v721
      %836 = vmatprep.subr.mxu0 0.0
      %837 = vmatpush1.msra.mxu0 %v720
      %838 = vmatprep.subr.mxu0 0.0
      %839 = vmatpush1.msra.mxu0 %v719
      %840 = vmatprep.subr.mxu0 0.0
      %841 = vmatpush1.msra.mxu0 %v718
      %842 = vmatprep.subr.mxu0 0.0
      %843 = vmatpush1.msra.mxu0 %v717
      %844 = vmatprep.subr.mxu0 0.0
      %845 = vmatpush2.msra.mxu0 %v748
      %846 = vmatprep.subr.mxu0 0.0
      %847 = vmatpush2.msra.mxu0 %v747
      %848 = vmatprep.subr.mxu0 0.0
      %849 = vmatpush2.msra.mxu0 %v746
      %850 = vmatprep.subr.mxu0 0.0
      %851 = vmatpush2.msra.mxu0 %v745
      %852 = vmatprep.subr.mxu0 0.0
      %853 = vmatpush2.msra.mxu0 %v744
      %854 = vmatprep.subr.mxu0 0.0
      %855 = vmatpush2.msra.mxu0 %v743
      %856 = vmatprep.subr.mxu0 0.0
      %857 = vmatpush2.msra.mxu0 %v742
      %858 = vmatprep.subr.mxu0 0.0
      %859 = vmatpush2.msra.mxu0 %v741
      %860 = vmatprep.subr.mxu0 0.0
      %861 = vmatpush2.msra.mxu0 %v740
      %862 = vmatprep.subr.mxu0 0.0
      %863 = vmatpush2.msra.mxu0 %v739
      %864 = vmatprep.subr.mxu0 0.0
      %865 = vmatpush2.msra.mxu0 %v738
      %866 = vmatprep.subr.mxu0 0.0
      %867 = vmatpush2.msra.mxu0 %v737
      %868 = vmatprep.subr.mxu0 0.0
      %869 = vmatpush2.msra.mxu0 %v736
      %870 = vmatprep.subr.mxu0 0.0
      %871 = vmatpush2.msra.mxu0 %v735
      %872 = vmatprep.subr.mxu0 0.0
      %873 = vmatpush2.msra.mxu0 %v734
      %874 = vmatprep.subr.mxu0 0.0
      %875 = vmatpush2.msra.mxu0 %v733
      %876 = vmatprep.mubr.f32.mxu0 %v797
      %877 = vmatmul.mubr.f32.gmra.mxu0 %v796
      %v878 = vpop.f32.mrf.mxu0
      %v879 = vadd.f32 %v786, %v878
      %v880 = vpop.f32.mrf.mxu0
      %881 = vmatprep.mubr.f32.mxu0 %v801
      %882 = vmatmul.mubr.f32.gmra.mxu0 %v800
      %v883 = vpop.f32.mrf.mxu0
      %v884 = vadd.f32 %v786, %v883
      %v885 = vpop.f32.mrf.mxu0
      %886 = vdwg.mxu0
      %887 = vmatprep.subr.mxu0 0.0
      %888 = vmatpush1.msra.mxu0 %v764
      %889 = vmatprep.subr.mxu0 0.0
      %890 = vmatpush1.msra.mxu0 %v763
      %891 = vmatprep.subr.mxu0 0.0
      %892 = vmatpush1.msra.mxu0 %v762
      %893 = vmatprep.subr.mxu0 0.0
      %894 = vmatpush1.msra.mxu0 %v761
      %895 = vmatprep.subr.mxu0 0.0
      %896 = vmatpush1.msra.mxu0 %v760
      %897 = vmatprep.subr.mxu0 0.0
      %898 = vmatpush1.msra.mxu0 %v759
      %899 = vmatprep.subr.mxu0 0.0
      %900 = vmatpush1.msra.mxu0 %v758
      %901 = vmatprep.subr.mxu0 0.0
      %902 = vmatpush1.msra.mxu0 %v757
      %903 = vmatprep.subr.mxu0 0.0
      %904 = vmatpush1.msra.mxu0 %v756
      %905 = vmatprep.subr.mxu0 0.0
      %906 = vmatpush1.msra.mxu0 %v755
      %907 = vmatprep.subr.mxu0 0.0
      %908 = vmatpush1.msra.mxu0 %v754
      %909 = vmatprep.subr.mxu0 0.0
      %910 = vmatpush1.msra.mxu0 %v753
      %911 = vmatprep.subr.mxu0 0.0
      %912 = vmatpush1.msra.mxu0 %v752
      %913 = vmatprep.subr.mxu0 0.0
      %914 = vmatpush1.msra.mxu0 %v751
      %915 = vmatprep.subr.mxu0 0.0
      %916 = vmatpush1.msra.mxu0 %v750
      %917 = vmatprep.subr.mxu0 0.0
      %918 = vmatpush1.msra.mxu0 %v749
      %919 = vmatprep.subr.mxu0 0.0
      %920 = vmatpush2.msra.mxu0 %v780
      %921 = vmatprep.subr.mxu0 0.0
      %922 = vmatpush2.msra.mxu0 %v779
      %923 = vmatprep.subr.mxu0 0.0
      %924 = vmatpush2.msra.mxu0 %v778
      %925 = vmatprep.subr.mxu0 0.0
      %926 = vmatpush2.msra.mxu0 %v777
      %927 = vmatprep.subr.mxu0 0.0
      %928 = vmatpush2.msra.mxu0 %v776
      %929 = vmatprep.subr.mxu0 0.0
      %930 = vmatpush2.msra.mxu0 %v775
      %931 = vmatprep.subr.mxu0 0.0
      %932 = vmatpush2.msra.mxu0 %v774
      %933 = vmatprep.subr.mxu0 0.0
      %934 = vmatpush2.msra.mxu0 %v773
      %935 = vmatprep.subr.mxu0 0.0
      %936 = vmatpush2.msra.mxu0 %v772
      %937 = vmatprep.subr.mxu0 0.0
      %938 = vmatpush2.msra.mxu0 %v771
      %939 = vmatprep.subr.mxu0 0.0
      %940 = vmatpush2.msra.mxu0 %v770
      %941 = vmatprep.subr.mxu0 0.0
      %942 = vmatpush2.msra.mxu0 %v769
      %943 = vmatprep.subr.mxu0 0.0
      %944 = vmatpush2.msra.mxu0 %v768
      %945 = vmatprep.subr.mxu0 0.0
      %946 = vmatpush2.msra.mxu0 %v767
      %947 = vmatprep.subr.mxu0 0.0
      %948 = vmatpush2.msra.mxu0 %v766
      %949 = vmatprep.subr.mxu0 0.0
      %950 = vmatpush2.msra.mxu0 %v765
      %951 = vmatprep.mubr.f32.mxu0 %v799
      %952 = vmatmul.mubr.f32.gmra.mxu0 %v798
      %v953 = vpop.f32.mrf.mxu0
      %v954 = vadd.f32 %v879, %v953
      %v955 = vpop.f32.mrf.mxu0
      %956 = vmatprep.mubr.f32.mxu0 %v803
      %957 = vmatmul.mubr.f32.gmra.mxu0 %v802
      %v958 = vpop.f32.mrf.mxu0
      %v959 = vadd.f32 %v884, %v958
      %v960 = vpop.f32.mrf.mxu0
      %961 = vdwg.mxu0
      %v964 = vcombine.high %v954, %v954
      %v965 = vcombine.high %v959, %v959
      %968 = vst [vmem:[%s170] sm:$0xf] %v954
      %969 = vst [vmem:[%s170 + $0x4] sm:$0xf] %v964
      %970 = vst [vmem:[%s170 + $0x8] sm:$0xf] %v959
      %971 = vst [vmem:[%s170 + $0xc] sm:$0xf] %v965
      %p972 = scmp.lt.s32.totalorder %s14, 1
      %s973 = scalar_select %p972, %s14, 1
      %s974 = smul.addr %s973, 4
      %s975 = smul.addr %s974, 4
      %s976 = scalar_lea.vmem %s3, %s975
      // Predicated region
      $region33: #{forward.7} parent=31 // pred_check
        %p977 = pneg %p100
      $region34: #{forward.7} parent=31 // pred_check_branch
        %979 = sbr.rel (%p977) target = $region36
      $region35: #{forward.7} parent=31 // pred_region
        _
      $region36: #{forward.7} parent=31 // pred_fallthru
        _
    $region32: #{forward.7} parent=5 // pred_fallthru
      _
    %p980 = scmp.le.s32.totalorder 2, %s9
    // Predicated region
    $region37: #{forward.7} parent=5 // pred_check
      %p981 = pneg %p980
    $region38: #{forward.7} parent=5 // pred_check_branch
      %983 = sbr.rel (%p981) target = $region40
    $region39: #{forward.7} parent=5 // pred_region
      %s984 = ssub.s32 %s9, 2
      // Predicated region
      $region41: #{forward.7} parent=39 // pred_check
        %p985 = pneg %p106
      $region42: #{forward.7} parent=39 // pred_check_branch
        %987 = sbr.rel (%p985) target = $region44
      $region43: #{forward.7} parent=39 // pred_region
        %p988 = scmp.lt.s32.totalorder %s15, 1
        %s989 = scalar_select %p988, %s15, 1
        %s990 = smul.addr %s989, 4
        %s991 = smul.addr %s990, 4
        %s992 = scalar_lea.vmem %s3, %s991
      $region44: #{forward.7} parent=39 // pred_fallthru
        _
    $region40: #{forward.7} parent=5 // pred_fallthru
      _
  $region6: #{forward.7} parent=0 // loop_footer
    %s13 = sadd.s32 1, %s9
  $region7: #{forward.7} parent=0 // loop_footer_branch
    %8 = sbr.rel target = $region3
  $region8: #{forward.7} parent=0 // loop_exit
    _

// kernel: forward.6
$region0: #{forward.6}
  #allocation0 [shape = 'u32[]', space=smem, size = 0x4, offset = 0x4, fixed_abs, tag = 'smem constant byte address 0x4 - core index']
  #allocation1 [shape = 'u32[144,128]{1,0:T(1,128)}', space=vmem, size = 0x12000, scoped, tag = 'internal scratch']
  #allocation2 [shape = 'f32[1,12,12,6]{3,2,1,0:T(8,128)}', space=vmem, size = 0x18000, scoped, tag = 'scratch operand']
  #allocation3 [shape = 'f32[1,8,8,256]{3,2,1,0:T(8,128)}', space=vmem, size = 0x10000, scoped, tag = 'scratch operand']
  %s0 = inlined_call_operand.vmem [shape: f32[2,8,8,6], index: 0, kind: input, shape index: {}]
  %s1 = inlined_call_operand.vmem [shape: f32[256,16], index: 1, kind: input, shape index: {}]
  %s2 = inlined_call_operand.vmem [shape: f32[1,16], index: 2, kind: input, shape index: {}]
  %s3 = inlined_call_operand.vmem [shape: f32[2,4,4,16], index: 3, kind: output, shape index: {}]
  %s4 = sld [smem:[#allocation0]]
  $region45: #{forward.6} parent=0
    _
  %s6 = ssub.s32 1, %s4
  %s7 = scalar_select 0, %s6, %s4
  loop: start=0, step=1, limit=4
  $region2: #{forward.6} parent=0 // loop_pre_header
    _
  $region3: #{forward.6} parent=0 // loop_header
    %s9 = sphi 0, %s13
    %p10 = scmp.ge.s32.totalorder %s9, 4
    %s19 = sphi 0, %s21
    %s22 = sphi 0, %s19
    %s23 = sphi 0, %s22
    %s39 = sphi 0, %s23
    %s43 = sphi 0, %s43
    %s45 = sphi 0, %s43
    %s46 = sphi 0, %s45
    %s60 = sphi 0, %s46
    %s64 = sphi 0, %s64
    %s66 = sphi 0, %s64
    %s67 = sphi 0, %s66
    %s81 = sphi 0, %s67
    %s87 = sphi 0, %s89
    %s90 = sphi 0, %s87
    %s91 = sphi 0, %s90
    %s107 = sphi 0, %s91
  $region4: #{forward.6} parent=0 // loop_header_branch
    %12 = sbr.rel (%p10) target = $region8
  $region5: #{forward.6} parent=0 // loop_body
    %s14 = ssub.s32 %s9, 1
    %s15 = ssub.s32 %s9, 2
    %s16 = sadd.s32 %s9, 1
    %s17 = ssub.s32 %s9, %s16
    %p18 = scmp.eq.s32.totalorder %s17, 0
    %s20 = sadd.s32 %s19, 1
    %s21 = scalar_select %p18, %s19, %s20
    %p24 = pneg %p18
    %p25 = scmp.eq.s32.totalorder %s9, 1
    %p26 = por %p24, %p25
    %p27 = scmp.ne.s32.totalorder %s19, %s22
    %p28 = scmp.eq.s32.totalorder %s9, 0
    %p29 = por %p27, %p28
    %p30 = scmp.ne.s32.totalorder %s19, %s22
    %p31 = scmp.eq.s32.totalorder %s14, 1
    %p32 = por %p30, %p31
    %p33 = scmp.ne.s32.totalorder %s22, %s23
    %p34 = scmp.eq.s32.totalorder %s14, 0
    %p35 = por %p33, %p34
    %p36 = scmp.ne.s32.totalorder %s22, %s23
    %p37 = scmp.eq.s32.totalorder %s15, 1
    %p38 = por %p36, %p37
    %p40 = scmp.ne.s32.totalorder %s23, %s39
    %p41 = scmp.eq.s32.totalorder %s15, 0
    %p42 = por %p40, %p41
    %s44 = sadd.s32 %s43, 1
    %p47 = scmp.eq.s32.totalorder %s9, 1
    %p48 = scmp.ne.s32.totalorder %s43, %s45
    %p49 = scmp.eq.s32.totalorder %s9, 0
    %p50 = por %p48, %p49
    %p51 = scmp.ne.s32.totalorder %s43, %s45
    %p52 = scmp.eq.s32.totalorder %s14, 1
    %p53 = por %p51, %p52
    %p54 = scmp.ne.s32.totalorder %s45, %s46
    %p55 = scmp.eq.s32.totalorder %s14, 0
    %p56 = por %p54, %p55
    %p57 = scmp.ne.s32.totalorder %s45, %s46
    %p58 = scmp.eq.s32.totalorder %s15, 1
    %p59 = por %p57, %p58
    %p61 = scmp.ne.s32.totalorder %s46, %s60
    %p62 = scmp.eq.s32.totalorder %s15, 0
    %p63 = por %p61, %p62
    %s65 = sadd.s32 %s64, 1
    %p68 = scmp.eq.s32.totalorder %s9, 1
    %p69 = scmp.ne.s32.totalorder %s64, %s66
    %p70 = scmp.eq.s32.totalorder %s9, 0
    %p71 = por %p69, %p70
    %p72 = scmp.ne.s32.totalorder %s64, %s66
    %p73 = scmp.eq.s32.totalorder %s14, 1
    %p74 = por %p72, %p73
    %p75 = scmp.ne.s32.totalorder %s66, %s67
    %p76 = scmp.eq.s32.totalorder %s14, 0
    %p77 = por %p75, %p76
    %p78 = scmp.ne.s32.totalorder %s66, %s67
    %p79 = scmp.eq.s32.totalorder %s15, 1
    %p80 = por %p78, %p79
    %p82 = scmp.ne.s32.totalorder %s67, %s81
    %p83 = scmp.eq.s32.totalorder %s15, 0
    %p84 = por %p82, %p83
    %s85 = ssub.s32 %s9, %s16
    %p86 = scmp.eq.s32.totalorder %s85, 0
    %s88 = sadd.s32 %s87, 1
    %s89 = scalar_select %p86, %s87, %s88
    %p92 = pneg %p86
    %p93 = scmp.eq.s32.totalorder %s9, 1
    %p94 = por %p92, %p93
    %p95 = scmp.ne.s32.totalorder %s87, %s90
    %p96 = scmp.eq.s32.totalorder %s9, 0
    %p97 = por %p95, %p96
    %p98 = scmp.ne.s32.totalorder %s87, %s90
    %p99 = scmp.eq.s32.totalorder %s14, 1
    %p100 = por %p98, %p99
    %p101 = scmp.ne.s32.totalorder %s90, %s91
    %p102 = scmp.eq.s32.totalorder %s14, 0
    %p103 = por %p101, %p102
    %p104 = scmp.ne.s32.totalorder %s90, %s91
    %p105 = scmp.eq.s32.totalorder %s15, 1
    %p106 = por %p104, %p105
    %p108 = scmp.ne.s32.totalorder %s91, %s107
    %p109 = scmp.eq.s32.totalorder %s15, 0
    %p110 = por %p108, %p109
    %p111 = scmp.le.s32.totalorder 1, %s9
    %p112 = scmp.lt.s32.totalorder %s9, 3
    %p113 = pnand %p111, %p112
    %p114 = pneg %p113
    // Predicated region
    $region9: #{forward.6} parent=5 // pred_check
      _
    $region10: #{forward.6} parent=5 // pred_check_branch
      %116 = sbr.rel (%p113) target = $region12
    $region11: #{forward.6} parent=5 // pred_region
      %s117 = ssub.s32 %s9, 1
      // Predicated region
      $region13: #{forward.6} parent=11 // pred_check
        %p118 = pneg %p56
      $region14: #{forward.6} parent=11 // pred_check_branch
        %120 = sbr.rel (%p118) target = $region16
      $region15: #{forward.6} parent=11 // pred_region
        _
      $region16: #{forward.6} parent=11 // pred_fallthru
        _
      // Predicated region
      $region17: #{forward.6} parent=11 // pred_check
        %p121 = pneg %p77
      $region18: #{forward.6} parent=11 // pred_check_branch
        %123 = sbr.rel (%p121) target = $region20
      $region19: #{forward.6} parent=11 // pred_region
        _
      $region20: #{forward.6} parent=11 // pred_fallthru
        _
    $region12: #{forward.6} parent=5 // pred_fallthru
      _
    %p124 = scmp.lt.s32.totalorder %s9, 2
    // Predicated region
    $region21: #{forward.6} parent=5 // pred_check
      %p125 = pneg %p124
    $region22: #{forward.6} parent=5 // pred_check_branch
      %127 = sbr.rel (%p125) target = $region24
    $region23: #{forward.6} parent=5 // pred_region
      // Predicated region
      $region25: #{forward.6} parent=23 // pred_check
        %p128 = pneg %p29
      $region26: #{forward.6} parent=23 // pred_check_branch
        %130 = sbr.rel (%p128) target = $region28
      $region27: #{forward.6} parent=23 // pred_region
        %p131 = scmp.lt.s32.totalorder %s9, 1
        %s132 = scalar_select %p131, %s9, 1
        %s133 = smul.addr %s132, 8
        %s134 = smul.addr %s133, 8
        %s135 = scalar_lea.vmem %s0, %s134
      $region28: #{forward.6} parent=23 // pred_fallthru
        _
    $region24: #{forward.6} parent=5 // pred_fallthru
      _
    %p136 = scmp.le.s32.totalorder 1, %s9
    %p137 = scmp.lt.s32.totalorder %s9, 3
    %p138 = pnand %p136, %p137
    %p139 = pneg %p138
    // Predicated region
    $region29: #{forward.6} parent=5 // pred_check
      _
    $region30: #{forward.6} parent=5 // pred_check_branch
      %141 = sbr.rel (%p138) target = $region32
    $region31: #{forward.6} parent=5 // pred_region
      %s142 = ssub.s32 %s9, 1
      %p143 = scmp.lt.s32.totalorder %s14, 1
      %s144 = scalar_select %p143, %s14, 1
      %s145 = smul.addr %s144, 8
      %s146 = smul.addr %s145, 8
      %s147 = scalar_lea.vmem %s0, %s146
      %p148 = pneg %p35
      %p149 = pneg %p32
      %p150 = pneg %p56
      %p151 = pneg %p53
      %p152 = pneg %p77
      %p153 = pneg %p74
      %p154 = pneg %p103
      %p155 = pneg %p100
      %p156 = scmp.lt.s32.totalorder %s14, 1
      %s157 = scalar_select %p156, %s14, 1
      %s158 = smul.addr %s157, 4
      %s159 = smul.addr %s158, 4
      %s160 = scalar_lea.vmem %s3, %s159
      %p161 = scmp.lt.s32.totalorder %s14, 1
      %s162 = scalar_select %p161, %s14, 1
      %s163 = smul.addr %s162, 8
      %s164 = smul.addr %s163, 8
      %s165 = scalar_lea.vmem %s0, %s164
      %p166 = scmp.lt.s32.totalorder %s14, 1
      %s167 = scalar_select %p166, %s14, 1
      %s168 = smul.addr %s167, 4
      %s169 = smul.addr %s168, 4
      %s170 = scalar_lea.vmem %s3, %s169
      %vm171 = vcmask 48128
      %172 = vst.msk [vmem:[#allocation2] sm:$0xff] %vm171, 0.0
      %vm173 = vcmask 44032
      %174 = vst.msk [vmem:[#allocation2 + $0x8] sm:$0xf] %vm173, 0.0
      %175 = vst.msk [vmem:[#allocation2 + $0x10] sm:$0xff] %vm171, 0.0
      %176 = vst.msk [vmem:[#allocation2 + $0x18] sm:$0xf] %vm173, 0.0
      %s177 = scalar_lea.vmem [#allocation2], 160
      %178 = vst.msk [vmem:[%s177] sm:$0xff] %vm171, 0.0
      %179 = vst.msk [vmem:[%s177 + $0x8] sm:$0xf] %vm173, 0.0
      %180 = vst.msk [vmem:[%s177 + $0x10] sm:$0xff] %vm171, 0.0
      %181 = vst.msk [vmem:[%s177 + $0x18] sm:$0xf] %vm173, 0.0
      %vm182 = vcmask 41984
      %183 = vst.msk [vmem:[#allocation2] sm:$0x3] %vm182, 0.0
      %184 = vst.msk [vmem:[#allocation2 + $0x10] sm:$0x3] %vm182, 0.0
      %185 = vst.msk [vmem:[#allocation2 + $0x20] sm:$0x3] %vm182, 0.0
      %186 = vst.msk [vmem:[#allocation2 + $0x30] sm:$0x3] %vm182, 0.0
      %187 = vst.msk [vmem:[#allocation2 + $0x40] sm:$0x3] %vm182, 0.0
      %188 = vst.msk [vmem:[#allocation2 + $0x50] sm:$0x3] %vm182, 0.0
      %189 = vst.msk [vmem:[#allocation2 + $0x60] sm:$0x3] %vm182, 0.0
      %190 = vst.msk [vmem:[#allocation2 + $0x70] sm:$0x3] %vm182, 0.0
      %191 = vst.msk [vmem:[#allocation2 + $0x80] sm:$0x3] %vm182, 0.0
      %192 = vst.msk [vmem:[#allocation2 + $0x90] sm:$0x3] %vm182, 0.0
      %193 = vst.msk [vmem:[#allocation2 + $0xa0] sm:$0x3] %vm182, 0.0
      %194 = vst.msk [vmem:[#allocation2 + $0xb0] sm:$0x3] %vm182, 0.0
      %195 = vst.msk [vmem:[#allocation2 + $0xa] sm:$0x3] %vm182, 0.0
      %196 = vst.msk [vmem:[#allocation2 + $0x1a] sm:$0x3] %vm182, 0.0
      %197 = vst.msk [vmem:[#allocation2 + $0x2a] sm:$0x3] %vm182, 0.0
      %198 = vst.msk [vmem:[#allocation2 + $0x3a] sm:$0x3] %vm182, 0.0
      %199 = vst.msk [vmem:[#allocation2 + $0x4a] sm:$0x3] %vm182, 0.0
      %200 = vst.msk [vmem:[#allocation2 + $0x5a] sm:$0x3] %vm182, 0.0
      %201 = vst.msk [vmem:[#allocation2 + $0x6a] sm:$0x3] %vm182, 0.0
      %202 = vst.msk [vmem:[#allocation2 + $0x7a] sm:$0x3] %vm182, 0.0
      %203 = vst.msk [vmem:[#allocation2 + $0x8a] sm:$0x3] %vm182, 0.0
      %204 = vst.msk [vmem:[#allocation2 + $0x9a] sm:$0x3] %vm182, 0.0
      %205 = vst.msk [vmem:[#allocation2 + $0xaa] sm:$0x3] %vm182, 0.0
      %206 = vst.msk [vmem:[#allocation2 + $0xba] sm:$0x3] %vm182, 0.0
      %v207 = vld [vmem:[%s165] sm:$0xff]
      %v208 = vld [vmem:[%s165 + $0x8] sm:$0xff]
      %v209 = vld [vmem:[%s165 + $0x10] sm:$0xff]
      %v210 = vld [vmem:[%s165 + $0x18] sm:$0xff]
      %v211 = vld [vmem:[%s165 + $0x20] sm:$0xff]
      %v212 = vld [vmem:[%s165 + $0x28] sm:$0xff]
      %v213 = vld [vmem:[%s165 + $0x30] sm:$0xff]
      %v214 = vld [vmem:[%s165 + $0x38] sm:$0xff]
      %s215 = scalar_lea.vmem [#allocation2], 32
      %216 = vst.msk [vmem:[%s215 + $0x2] sm:$0xff] %vm171, %v207
      %217 = vst.msk [vmem:[%s215 + $0x12] sm:$0xff] %vm171, %v208
      %218 = vst.msk [vmem:[%s215 + $0x22] sm:$0xff] %vm171, %v209
      %219 = vst.msk [vmem:[%s215 + $0x32] sm:$0xff] %vm171, %v210
      %220 = vst.msk [vmem:[%s215 + $0x42] sm:$0xff] %vm171, %v211
      %221 = vst.msk [vmem:[%s215 + $0x52] sm:$0xff] %vm171, %v212
      %222 = vst.msk [vmem:[%s215 + $0x62] sm:$0xff] %vm171, %v213
      %223 = vst.msk [vmem:[%s215 + $0x72] sm:$0xff] %vm171, %v214
      %vm224 = vcmask 1047728
      %225 = vst.msk [vmem:[#allocation3 + $0x8] sm:$0xff] %vm224, 0.0
      %226 = vst.msk [vmem:[#allocation3 + $0x18] sm:$0xff] %vm224, 0.0
      %227 = vst.msk [vmem:[#allocation3 + $0x28] sm:$0xff] %vm224, 0.0
      %228 = vst.msk [vmem:[#allocation3 + $0x38] sm:$0xff] %vm224, 0.0
      %229 = vst.msk [vmem:[#allocation3 + $0x48] sm:$0xff] %vm224, 0.0
      %230 = vst.msk [vmem:[#allocation3 + $0x58] sm:$0xff] %vm224, 0.0
      %231 = vst.msk [vmem:[#allocation3 + $0x68] sm:$0xff] %vm224, 0.0
      %232 = vst.msk [vmem:[#allocation3 + $0x78] sm:$0xff] %vm224, 0.0
      %v233 = vld [vmem:[#allocation2] sm:$0xff]
      %v234 = vld [vmem:[#allocation2 + $0x8] sm:$0xf]
      %v235 = vld [vmem:[#allocation2 + $0x10] sm:$0xff]
      %v236 = vld [vmem:[#allocation2 + $0x18] sm:$0xf]
      %v237 = vld [vmem:[#allocation2 + $0x20] sm:$0xff]
      %v238 = vld [vmem:[#allocation2 + $0x28] sm:$0xf]
      %v239 = vld [vmem:[#allocation2 + $0x30] sm:$0xff]
      %v240 = vld [vmem:[#allocation2 + $0x38] sm:$0xf]
      %v241 = vld [vmem:[#allocation2 + $0x40] sm:$0xff]
      %v242 = vld [vmem:[#allocation2 + $0x48] sm:$0xf]
      %v243 = vld [vmem:[#allocation2 + $0x50] sm:$0xff]
      %v244 = vld [vmem:[#allocation2 + $0x58] sm:$0xf]
      %v245 = vld [vmem:[#allocation2 + $0x60] sm:$0xff]
      %v246 = vld [vmem:[#allocation2 + $0x68] sm:$0xf]
      %v247 = vld [vmem:[#allocation2 + $0x70] sm:$0xff]
      %v248 = vld [vmem:[#allocation2 + $0x78] sm:$0xf]
      %v249 = vld [vmem:[#allocation2 + $0x80] sm:$0xff]
      %v250 = vld [vmem:[#allocation2 + $0x88] sm:$0xf]
      %v251 = vld [vmem:[#allocation2 + $0x90] sm:$0xff]
      %v252 = vld [vmem:[#allocation2 + $0x98] sm:$0xf]
      %v253 = vld [vmem:[#allocation2 + $0xa0] sm:$0xff]
      %v254 = vld [vmem:[#allocation2 + $0xa8] sm:$0xf]
      %v255 = vld [vmem:[#allocation2 + $0xb0] sm:$0xff]
      %v256 = vld [vmem:[#allocation2 + $0xb8] sm:$0xf]
      %257 = vst.msk [vmem:[#allocation3] sm:$0xff] %vm171, %v233
      %258 = vst.msk [vmem:[#allocation3 + $0x10] sm:$0xff] %vm171, %v235
      %259 = vst.msk [vmem:[#allocation3 + $0x20] sm:$0xff] %vm171, %v237
      %260 = vst.msk [vmem:[#allocation3 + $0x30] sm:$0xff] %vm171, %v239
      %261 = vst.msk [vmem:[#allocation3 + $0x40] sm:$0xff] %vm171, %v241
      %262 = vst.msk [vmem:[#allocation3 + $0x50] sm:$0xff] %vm171, %v243
      %263 = vst.msk [vmem:[#allocation3 + $0x60] sm:$0xff] %vm171, %v245
      %264 = vst.msk [vmem:[#allocation3 + $0x70] sm:$0xff] %vm171, %v247
      %vm281 = vcmask 1046528
      %v282 = vrot.slane %v233, 1
      %v283 = vrot.slane %v234, 1
      %v284 = vsel %vm281, %v282, %v283
      %v285 = vrot.slane %v235, 1
      %v286 = vrot.slane %v236, 1
      %v287 = vsel %vm281, %v285, %v286
      %v288 = vrot.slane %v237, 1
      %v289 = vrot.slane %v238, 1
      %v290 = vsel %vm281, %v288, %v289
      %v291 = vrot.slane %v239, 1
      %v292 = vrot.slane %v240, 1
      %v293 = vsel %vm281, %v291, %v292
      %v294 = vrot.slane %v241, 1
      %v295 = vrot.slane %v242, 1
      %v296 = vsel %vm281, %v294, %v295
      %v297 = vrot.slane %v243, 1
      %v298 = vrot.slane %v244, 1
      %v299 = vsel %vm281, %v297, %v298
      %v300 = vrot.slane %v245, 1
      %v301 = vrot.slane %v246, 1
      %v302 = vsel %vm281, %v300, %v301
      %v303 = vrot.slane %v247, 1
      %v304 = vrot.slane %v248, 1
      %v305 = vsel %vm281, %v303, %v304
      %306 = vrot.lane.b32.xlu0 %v284, 6
      %v307 = vpop.permute.xlu0 %306
      %308 = vrot.lane.b32.xlu0 %v287, 6
      %v309 = vpop.permute.xlu0 %308
      %310 = vrot.lane.b32.xlu0 %v290, 6
      %v311 = vpop.permute.xlu0 %310
      %312 = vrot.lane.b32.xlu0 %v293, 6
      %v313 = vpop.permute.xlu0 %312
      %314 = vrot.lane.b32.xlu0 %v296, 6
      %v315 = vpop.permute.xlu0 %314
      %316 = vrot.lane.b32.xlu0 %v299, 6
      %v317 = vpop.permute.xlu0 %316
      %318 = vrot.lane.b32.xlu0 %v302, 6
      %v319 = vpop.permute.xlu0 %318
      %320 = vrot.lane.b32.xlu0 %v305, 6
      %v321 = vpop.permute.xlu0 %320
      %vm330 = vcmask 97328
      %331 = vst.msk [vmem:[#allocation3] sm:$0xff] %vm330, %v307
      %332 = vst.msk [vmem:[#allocation3 + $0x10] sm:$0xff] %vm330, %v309
      %333 = vst.msk [vmem:[#allocation3 + $0x20] sm:$0xff] %vm330, %v311
      %334 = vst.msk [vmem:[#allocation3 + $0x30] sm:$0xff] %vm330, %v313
      %335 = vst.msk [vmem:[#allocation3 + $0x40] sm:$0xff] %vm330, %v315
      %336 = vst.msk [vmem:[#allocation3 + $0x50] sm:$0xff] %vm330, %v317
      %337 = vst.msk [vmem:[#allocation3 + $0x60] sm:$0xff] %vm330, %v319
      %338 = vst.msk [vmem:[#allocation3 + $0x70] sm:$0xff] %vm330, %v321
      %vm339 = vcmask 1045504
      %v340 = vrot.slane %v233, 2
      %v341 = vrot.slane %v234, 2
      %v342 = vsel %vm339, %v340, %v341
      %v343 = vrot.slane %v235, 2
      %v344 = vrot.slane %v236, 2
      %v345 = vsel %vm339, %v343, %v344
      %v346 = vrot.slane %v237, 2
      %v347 = vrot.slane %v238, 2
      %v348 = vsel %vm339, %v346, %v347
      %v349 = vrot.slane %v239, 2
      %v350 = vrot.slane %v240, 2
      %v351 = vsel %vm339, %v349, %v350
      %v352 = vrot.slane %v241, 2
      %v353 = vrot.slane %v242, 2
      %v354 = vsel %vm339, %v352, %v353
      %v355 = vrot.slane %v243, 2
      %v356 = vrot.slane %v244, 2
      %v357 = vsel %vm339, %v355, %v356
      %v358 = vrot.slane %v245, 2
      %v359 = vrot.slane %v246, 2
      %v360 = vsel %vm339, %v358, %v359
      %v361 = vrot.slane %v247, 2
      %v362 = vrot.slane %v248, 2
      %v363 = vsel %vm339, %v361, %v362
      %364 = vrot.lane.b32.xlu0 %v342, 12
      %v365 = vpop.permute.xlu0 %364
      %366 = vrot.lane.b32.xlu0 %v345, 12
      %v367 = vpop.permute.xlu0 %366
      %368 = vrot.lane.b32.xlu0 %v348, 12
      %v369 = vpop.permute.xlu0 %368
      %370 = vrot.lane.b32.xlu0 %v351, 12
      %v371 = vpop.permute.xlu0 %370
      %372 = vrot.lane.b32.xlu0 %v354, 12
      %v373 = vpop.permute.xlu0 %372
      %374 = vrot.lane.b32.xlu0 %v357, 12
      %v375 = vpop.permute.xlu0 %374
      %376 = vrot.lane.b32.xlu0 %v360, 12
      %v377 = vpop.permute.xlu0 %376
      %378 = vrot.lane.b32.xlu0 %v363, 12
      %v379 = vpop.permute.xlu0 %378
      %vm388 = vcmask 146528
      %389 = vst.msk [vmem:[#allocation3] sm:$0xff] %vm388, %v365
      %390 = vst.msk [vmem:[#allocation3 + $0x10] sm:$0xff] %vm388, %v367
      %391 = vst.msk [vmem:[#allocation3 + $0x20] sm:$0xff] %vm388, %v369
      %392 = vst.msk [vmem:[#allocation3 + $0x30] sm:$0xff] %vm388, %v371
      %393 = vst.msk [vmem:[#allocation3 + $0x40] sm:$0xff] %vm388, %v373
      %394 = vst.msk [vmem:[#allocation3 + $0x50] sm:$0xff] %vm388, %v375
      %395 = vst.msk [vmem:[#allocation3 + $0x60] sm:$0xff] %vm388, %v377
      %396 = vst.msk [vmem:[#allocation3 + $0x70] sm:$0xff] %vm388, %v379
      %vm397 = vcmask 1044480
      %v398 = vrot.slane %v233, 3
      %v399 = vrot.slane %v234, 3
      %v400 = vsel %vm397, %v398, %v399
      %v401 = vrot.slane %v235, 3
      %v402 = vrot.slane %v236, 3
      %v403 = vsel %vm397, %v401, %v402
      %v404 = vrot.slane %v237, 3
      %v405 = vrot.slane %v238, 3
      %v406 = vsel %vm397, %v404, %v405
      %v407 = vrot.slane %v239, 3
      %v408 = vrot.slane %v240, 3
      %v409 = vsel %vm397, %v407, %v408
      %v410 = vrot.slane %v241, 3
      %v411 = vrot.slane %v242, 3
      %v412 = vsel %vm397, %v410, %v411
      %v413 = vrot.slane %v243, 3
      %v414 = vrot.slane %v244, 3
      %v415 = vsel %vm397, %v413, %v414
      %v416 = vrot.slane %v245, 3
      %v417 = vrot.slane %v246, 3
      %v418 = vsel %vm397, %v416, %v417
      %v419 = vrot.slane %v247, 3
      %v420 = vrot.slane %v248, 3
      %v421 = vsel %vm397, %v419, %v420
      %422 = vrot.lane.b32.xlu0 %v400, 18
      %v423 = vpop.permute.xlu0 %422
      %424 = vrot.lane.b32.xlu0 %v403, 18
      %v425 = vpop.permute.xlu0 %424
      %426 = vrot.lane.b32.xlu0 %v406, 18
      %v427 = vpop.permute.xlu0 %426
      %428 = vrot.lane.b32.xlu0 %v409, 18
      %v429 = vpop.permute.xlu0 %428
      %430 = vrot.lane.b32.xlu0 %v412, 18
      %v431 = vpop.permute.xlu0 %430
      %432 = vrot.lane.b32.xlu0 %v415, 18
      %v433 = vpop.permute.xlu0 %432
      %434 = vrot.lane.b32.xlu0 %v418, 18
      %v435 = vpop.permute.xlu0 %434
      %436 = vrot.lane.b32.xlu0 %v421, 18
      %v437 = vpop.permute.xlu0 %436
      %vm446 = vcmask 195728
      %447 = vst.msk [vmem:[#allocation3] sm:$0xff] %vm446, %v423
      %448 = vst.msk [vmem:[#allocation3 + $0x10] sm:$0xff] %vm446, %v425
      %449 = vst.msk [vmem:[#allocation3 + $0x20] sm:$0xff] %vm446, %v427
      %450 = vst.msk [vmem:[#allocation3 + $0x30] sm:$0xff] %vm446, %v429
      %451 = vst.msk [vmem:[#allocation3 + $0x40] sm:$0xff] %vm446, %v431
      %452 = vst.msk [vmem:[#allocation3 + $0x50] sm:$0xff] %vm446, %v433
      %453 = vst.msk [vmem:[#allocation3 + $0x60] sm:$0xff] %vm446, %v435
      %454 = vst.msk [vmem:[#allocation3 + $0x70] sm:$0xff] %vm446, %v437
      %vm455 = vcmask 1043456
      %v456 = vrot.slane %v233, 4
      %v457 = vrot.slane %v234, 4
      %v458 = vsel %vm455, %v456, %v457
      %v459 = vrot.slane %v235, 4
      %v460 = vrot.slane %v236, 4
      %v461 = vsel %vm455, %v459, %v460
      %v462 = vrot.slane %v237, 4
      %v463 = vrot.slane %v238, 4
      %v464 = vsel %vm455, %v462, %v463
      %v465 = vrot.slane %v239, 4
      %v466 = vrot.slane %v240, 4
      %v467 = vsel %vm455, %v465, %v466
      %v468 = vrot.slane %v241, 4
      %v469 = vrot.slane %v242, 4
      %v470 = vsel %vm455, %v468, %v469
      %v471 = vrot.slane %v243, 4
      %v472 = vrot.slane %v244, 4
      %v473 = vsel %vm455, %v471, %v472
      %v474 = vrot.slane %v245, 4
      %v475 = vrot.slane %v246, 4
      %v476 = vsel %vm455, %v474, %v475
      %v477 = vrot.slane %v247, 4
      %v478 = vrot.slane %v248, 4
      %v479 = vsel %vm455, %v477, %v478
      %480 = vrot.lane.b32.xlu0 %v458, 24
      %v481 = vpop.permute.xlu0 %480
      %482 = vrot.lane.b32.xlu0 %v461, 24
      %v483 = vpop.permute.xlu0 %482
      %484 = vrot.lane.b32.xlu0 %v464, 24
      %v485 = vpop.permute.xlu0 %484
      %486 = vrot.lane.b32.xlu0 %v467, 24
      %v487 = vpop.permute.xlu0 %486
      %488 = vrot.lane.b32.xlu0 %v470, 24
      %v489 = vpop.permute.xlu0 %488
      %490 = vrot.lane.b32.xlu0 %v473, 24
      %v491 = vpop.permute.xlu0 %490
      %492 = vrot.lane.b32.xlu0 %v476, 24
      %v493 = vpop.permute.xlu0 %492
      %494 = vrot.lane.b32.xlu0 %v479, 24
      %v495 = vpop.permute.xlu0 %494
      %vm504 = vcmask 244928
      %505 = vst.msk [vmem:[#allocation3] sm:$0xff] %vm504, %v481
      %506 = vst.msk [vmem:[#allocation3 + $0x10] sm:$0xff] %vm504, %v483
      %507 = vst.msk [vmem:[#allocation3 + $0x20] sm:$0xff] %vm504, %v485
      %508 = vst.msk [vmem:[#allocation3 + $0x30] sm:$0xff] %vm504, %v487
      %509 = vst.msk [vmem:[#allocation3 + $0x40] sm:$0xff] %vm504, %v489
      %510 = vst.msk [vmem:[#allocation3 + $0x50] sm:$0xff] %vm504, %v491
      %511 = vst.msk [vmem:[#allocation3 + $0x60] sm:$0xff] %vm504, %v493
      %512 = vst.msk [vmem:[#allocation3 + $0x70] sm:$0xff] %vm504, %v495
      %514 = vrot.lane.b32.xlu0 %v235, 30
      %v515 = vpop.permute.xlu0 %514
      %516 = vrot.lane.b32.xlu0 %v237, 30
      %v517 = vpop.permute.xlu0 %516
      %518 = vrot.lane.b32.xlu0 %v239, 30
      %v519 = vpop.permute.xlu0 %518
      %520 = vrot.lane.b32.xlu0 %v241, 30
      %v521 = vpop.permute.xlu0 %520
      %522 = vrot.lane.b32.xlu0 %v243, 30
      %v523 = vpop.permute.xlu0 %522
      %524 = vrot.lane.b32.xlu0 %v245, 30
      %v525 = vpop.permute.xlu0 %524
      %526 = vrot.lane.b32.xlu0 %v247, 30
      %v527 = vpop.permute.xlu0 %526
      %528 = vrot.lane.b32.xlu0 %v249, 30
      %v529 = vpop.permute.xlu0 %528
      %vm538 = vcmask 294128
      %539 = vst.msk [vmem:[#allocation3] sm:$0xff] %vm538, %v515
      %540 = vst.msk [vmem:[#allocation3 + $0x10] sm:$0xff] %vm538, %v517
      %541 = vst.msk [vmem:[#allocation3 + $0x20] sm:$0xff] %vm538, %v519
      %542 = vst.msk [vmem:[#allocation3 + $0x30] sm:$0xff] %vm538, %v521
      %543 = vst.msk [vmem:[#allocation3 + $0x40] sm:$0xff] %vm538, %v523
      %544 = vst.msk [vmem:[#allocation3 + $0x50] sm:$0xff] %vm538, %v525
      %545 = vst.msk [vmem:[#allocation3 + $0x60] sm:$0xff] %vm538, %v527
      %546 = vst.msk [vmem:[#allocation3 + $0x70] sm:$0xff] %vm538, %v529
      %v548 = vrot.slane %v249, 1
      %v549 = vrot.slane %v250, 1
      %v550 = vsel %vm281, %v548, %v549
      %551 = vrot.lane.b32.xlu0 %v287, 36
      %v552 = vpop.permute.xlu0 %551
      %553 = vrot.lane.b32.xlu0 %v290, 36
      %v554 = vpop.permute.xlu0 %553
      %555 = vrot.lane.b32.xlu0 %v293, 36
      %v556 = vpop.permute.xlu0 %555
      %557 = vrot.lane.b32.xlu0 %v296, 36
      %v558 = vpop.permute.xlu0 %557
      %559 = vrot.lane.b32.xlu0 %v299, 36
      %v560 = vpop.permute.xlu0 %559
      %561 = vrot.lane.b32.xlu0 %v302, 36
      %v562 = vpop.permute.xlu0 %561
      %563 = vrot.lane.b32.xlu0 %v305, 36
      %v564 = vpop.permute.xlu0 %563
      %565 = vrot.lane.b32.xlu0 %v550, 36
      %v566 = vpop.permute.xlu0 %565
      %vm575 = vcmask 343328
      %576 = vst.msk [vmem:[#allocation3] sm:$0xff] %vm575, %v552
      %577 = vst.msk [vmem:[#allocation3 + $0x10] sm:$0xff] %vm575, %v554
      %578 = vst.msk [vmem:[#allocation3 + $0x20] sm:$0xff] %vm575, %v556
      %579 = vst.msk [vmem:[#allocation3 + $0x30] sm:$0xff] %vm575, %v558
      %580 = vst.msk [vmem:[#allocation3 + $0x40] sm:$0xff] %vm575, %v560
      %581 = vst.msk [vmem:[#allocation3 + $0x50] sm:$0xff] %vm575, %v562
      %582 = vst.msk [vmem:[#allocation3 + $0x60] sm:$0xff] %vm575, %v564
      %583 = vst.msk [vmem:[#allocation3 + $0x70] sm:$0xff] %vm575, %v566
      %v584 = vrot.slane %v249, 2
      %v585 = vrot.slane %v250, 2
      %v586 = vsel %vm339, %v584, %v585
      %587 = vrot.lane.b32.xlu0 %v345, 42
      %v588 = vpop.permute.xlu0 %587
      %589 = vrot.lane.b32.xlu0 %v348, 42
      %v590 = vpop.permute.xlu0 %589
      %591 = vrot.lane.b32.xlu0 %v351, 42
      %v592 = vpop.permute.xlu0 %591
      %593 = vrot.lane.b32.xlu0 %v354, 42
      %v594 = vpop.permute.xlu0 %593
      %595 = vrot.lane.b32.xlu0 %v357, 42
      %v596 = vpop.permute.xlu0 %595
      %597 = vrot.lane.b32.xlu0 %v360, 42
      %v598 = vpop.permute.xlu0 %597
      %599 = vrot.lane.b32.xlu0 %v363, 42
      %v600 = vpop.permute.xlu0 %599
      %601 = vrot.lane.b32.xlu0 %v586, 42
      %v602 = vpop.permute.xlu0 %601
      %vm611 = vcmask 392528
      %612 = vst.msk [vmem:[#allocation3] sm:$0xff] %vm611, %v588
      %613 = vst.msk [vmem:[#allocation3 + $0x10] sm:$0xff] %vm611, %v590
      %614 = vst.msk [vmem:[#allocation3 + $0x20] sm:$0xff] %vm611, %v592
      %615 = vst.msk [vmem:[#allocation3 + $0x30] sm:$0xff] %vm611, %v594
      %616 = vst.msk [vmem:[#allocation3 + $0x40] sm:$0xff] %vm611, %v596
      %617 = vst.msk [vmem:[#allocation3 + $0x50] sm:$0xff] %vm611, %v598
      %618 = vst.msk [vmem:[#allocation3 + $0x60] sm:$0xff] %vm611, %v600
      %619 = vst.msk [vmem:[#allocation3 + $0x70] sm:$0xff] %vm611, %v602
      %v620 = vrot.slane %v249, 3
      %v621 = vrot.slane %v250, 3
      %v622 = vsel %vm397, %v620, %v621
      %623 = vrot.lane.b32.xlu0 %v403, 48
      %v624 = vpop.permute.xlu0 %623
      %625 = vrot.lane.b32.xlu0 %v406, 48
      %v626 = vpop.permute.xlu0 %625
      %627 = vrot.lane.b32.xlu0 %v409, 48
      %v628 = vpop.permute.xlu0 %627
      %629 = vrot.lane.b32.xlu0 %v412, 48
      %v630 = vpop.permute.xlu0 %629
      %631 = vrot.lane.b32.xlu0 %v415, 48
      %v632 = vpop.permute.xlu0 %631
      %633 = vrot.lane.b32.xlu0 %v418, 48
      %v634 = vpop.permute.xlu0 %633
      %635 = vrot.lane.b32.xlu0 %v421, 48
      %v636 = vpop.permute.xlu0 %635
      %637 = vrot.lane.b32.xlu0 %v622, 48
      %v638 = vpop.permute.xlu0 %637
      %vm647 = vcmask 441728
      %648 = vst.msk [vmem:[#allocation3] sm:$0xff] %vm647, %v624
      %649 = vst.msk [vmem:[#allocation3 + $0x10] sm:$0xff] %vm647, %v626
      %650 = vst.msk [vmem:[#allocation3 + $0x20] sm:$0xff] %vm647, %v628
      %651 = vst.msk [vmem:[#allocation3 + $0x30] sm:$0xff] %vm647, %v630
      %652 = vst.msk [vmem:[#allocation3 + $0x40] sm:$0xff] %vm647, %v632
      %653 = vst.msk [vmem:[#allocation3 + $0x50] sm:$0xff] %vm647, %v634
      %654 = vst.msk [vmem:[#allocation3 + $0x60] sm:$0xff] %vm647, %v636
      %655 = vst.msk [vmem:[#allocation3 + $0x70] sm:$0xff] %vm647, %v638
      %v656 = vrot.slane %v249, 4
      %v657 = vrot.slane %v250, 4
      %v658 = vsel %vm455, %v656, %v657
      %659 = vrot.lane.b32.xlu0 %v461, 54
      %v660 = vpop.permute.xlu0 %659
      %661 = vrot.lane.b32.xlu0 %v464, 54
      %v662 = vpop.permute.xlu0 %661
      %663 = vrot.lane.b32.xlu0 %v467, 54
      %v664 = vpop.permute.xlu0 %663
      %665 = vrot.lane.b32.xlu0 %v470, 54
      %v666 = vpop.permute.xlu0 %665
      %667 = vrot.lane.b32.xlu0 %v473, 54
      %v668 = vpop.permute.xlu0 %667
      %669 = vrot.lane.b32.xlu0 %v476, 54
      %v670 = vpop.permute.xlu0 %669
      %671 = vrot.lane.b32.xlu0 %v479, 54
      %v672 = vpop.permute.xlu0 %671
      %673 = vrot.lane.b32.xlu0 %v658, 54
      %v674 = vpop.permute.xlu0 %673
      %vm683 = vcmask 490928
      %684 = vst.msk [vmem:[#allocation3] sm:$0xff] %vm683, %v660
      %685 = vst.msk [vmem:[#allocation3 + $0x10] sm:$0xff] %vm683, %v662
      %686 = vst.msk [vmem:[#allocation3 + $0x20] sm:$0xff] %vm683, %v664
      %687 = vst.msk [vmem:[#allocation3 + $0x30] sm:$0xff] %vm683, %v666
      %688 = vst.msk [vmem:[#allocation3 + $0x40] sm:$0xff] %vm683, %v668
      %689 = vst.msk [vmem:[#allocation3 + $0x50] sm:$0xff] %vm683, %v670
      %690 = vst.msk [vmem:[#allocation3 + $0x60] sm:$0xff] %vm683, %v672
      %691 = vst.msk [vmem:[#allocation3 + $0x70] sm:$0xff] %vm683, %v674
      %693 = vrot.lane.b32.xlu0 %v237, 60
      %v694 = vpop.permute.xlu0 %693
      %695 = vrot.lane.b32.xlu0 %v239, 60
      %v696 = vpop.permute.xlu0 %695
      %697 = vrot.lane.b32.xlu0 %v241, 60
      %v698 = vpop.permute.xlu0 %697
      %699 = vrot.lane.b32.xlu0 %v243, 60
      %v700 = vpop.permute.xlu0 %699
      %701 = vrot.lane.b32.xlu0 %v245, 60
      %v702 = vpop.permute.xlu0 %701
      %703 = vrot.lane.b32.xlu0 %v247, 60
      %v704 = vpop.permute.xlu0 %703
      %705 = vrot.lane.b32.xlu0 %v249, 60
      %v706 = vpop.permute.xlu0 %705
      %707 = vrot.lane.b32.xlu0 %v251, 60
      %v708 = vpop.permute.xlu0 %707
      %vm717 = vcmask 540128
      %718 = vst.msk [vmem:[#allocation3] sm:$0xff] %vm717, %v694
      %719 = vst.msk [vmem:[#allocation3 + $0x10] sm:$0xff] %vm717, %v696
      %720 = vst.msk [vmem:[#allocation3 + $0x20] sm:$0xff] %vm717, %v698
      %721 = vst.msk [vmem:[#allocation3 + $0x30] sm:$0xff] %vm717, %v700
      %722 = vst.msk [vmem:[#allocation3 + $0x40] sm:$0xff] %vm717, %v702
      %723 = vst.msk [vmem:[#allocation3 + $0x50] sm:$0xff] %vm717, %v704
      %724 = vst.msk [vmem:[#allocation3 + $0x60] sm:$0xff] %vm717, %v706
      %725 = vst.msk [vmem:[#allocation3 + $0x70] sm:$0xff] %vm717, %v708
      %v727 = vrot.slane %v251, 1
      %v728 = vrot.slane %v252, 1
      %v729 = vsel %vm281, %v727, %v728
      %730 = vrot.lane.b32.xlu0 %v290, 66
      %v731 = vpop.permute.xlu0 %730
      %732 = vrot.lane.b32.xlu0 %v293, 66
      %v733 = vpop.permute.xlu0 %732
      %734 = vrot.lane.b32.xlu0 %v296, 66
      %v735 = vpop.permute.xlu0 %734
      %736 = vrot.lane.b32.xlu0 %v299, 66
      %v737 = vpop.permute.xlu0 %736
      %738 = vrot.lane.b32.xlu0 %v302, 66
      %v739 = vpop.permute.xlu0 %738
      %740 = vrot.lane.b32.xlu0 %v305, 66
      %v741 = vpop.permute.xlu0 %740
      %742 = vrot.lane.b32.xlu0 %v550, 66
      %v743 = vpop.permute.xlu0 %742
      %744 = vrot.lane.b32.xlu0 %v729, 66
      %v745 = vpop.permute.xlu0 %744
      %vm754 = vcmask 589328
      %755 = vst.msk [vmem:[#allocation3] sm:$0xff] %vm754, %v731
      %756 = vst.msk [vmem:[#allocation3 + $0x10] sm:$0xff] %vm754, %v733
      %757 = vst.msk [vmem:[#allocation3 + $0x20] sm:$0xff] %vm754, %v735
      %758 = vst.msk [vmem:[#allocation3 + $0x30] sm:$0xff] %vm754, %v737
      %759 = vst.msk [vmem:[#allocation3 + $0x40] sm:$0xff] %vm754, %v739
      %760 = vst.msk [vmem:[#allocation3 + $0x50] sm:$0xff] %vm754, %v741
      %761 = vst.msk [vmem:[#allocation3 + $0x60] sm:$0xff] %vm754, %v743
      %762 = vst.msk [vmem:[#allocation3 + $0x70] sm:$0xff] %vm754, %v745
      %v763 = vrot.slane %v251, 2
      %v764 = vrot.slane %v252, 2
      %v765 = vsel %vm339, %v763, %v764
      %766 = vrot.lane.b32.xlu0 %v348, 72
      %v767 = vpop.permute.xlu0 %766
      %768 = vrot.lane.b32.xlu0 %v351, 72
      %v769 = vpop.permute.xlu0 %768
      %770 = vrot.lane.b32.xlu0 %v354, 72
      %v771 = vpop.permute.xlu0 %770
      %772 = vrot.lane.b32.xlu0 %v357, 72
      %v773 = vpop.permute.xlu0 %772
      %774 = vrot.lane.b32.xlu0 %v360, 72
      %v775 = vpop.permute.xlu0 %774
      %776 = vrot.lane.b32.xlu0 %v363, 72
      %v777 = vpop.permute.xlu0 %776
      %778 = vrot.lane.b32.xlu0 %v586, 72
      %v779 = vpop.permute.xlu0 %778
      %780 = vrot.lane.b32.xlu0 %v765, 72
      %v781 = vpop.permute.xlu0 %780
      %vm790 = vcmask 638528
      %791 = vst.msk [vmem:[#allocation3] sm:$0xff] %vm790, %v767
      %792 = vst.msk [vmem:[#allocation3 + $0x10] sm:$0xff] %vm790, %v769
      %793 = vst.msk [vmem:[#allocation3 + $0x20] sm:$0xff] %vm790, %v771
      %794 = vst.msk [vmem:[#allocation3 + $0x30] sm:$0xff] %vm790, %v773
      %795 = vst.msk [vmem:[#allocation3 + $0x40] sm:$0xff] %vm790, %v775
      %796 = vst.msk [vmem:[#allocation3 + $0x50] sm:$0xff] %vm790, %v777
      %797 = vst.msk [vmem:[#allocation3 + $0x60] sm:$0xff] %vm790, %v779
      %798 = vst.msk [vmem:[#allocation3 + $0x70] sm:$0xff] %vm790, %v781
      %v799 = vrot.slane %v251, 3
      %v800 = vrot.slane %v252, 3
      %v801 = vsel %vm397, %v799, %v800
      %802 = vrot.lane.b32.xlu0 %v406, 78
      %v803 = vpop.permute.xlu0 %802
      %804 = vrot.lane.b32.xlu0 %v409, 78
      %v805 = vpop.permute.xlu0 %804
      %806 = vrot.lane.b32.xlu0 %v412, 78
      %v807 = vpop.permute.xlu0 %806
      %808 = vrot.lane.b32.xlu0 %v415, 78
      %v809 = vpop.permute.xlu0 %808
      %810 = vrot.lane.b32.xlu0 %v418, 78
      %v811 = vpop.permute.xlu0 %810
      %812 = vrot.lane.b32.xlu0 %v421, 78
      %v813 = vpop.permute.xlu0 %812
      %814 = vrot.lane.b32.xlu0 %v622, 78
      %v815 = vpop.permute.xlu0 %814
      %816 = vrot.lane.b32.xlu0 %v801, 78
      %v817 = vpop.permute.xlu0 %816
      %vm826 = vcmask 687728
      %827 = vst.msk [vmem:[#allocation3] sm:$0xff] %vm826, %v803
      %828 = vst.msk [vmem:[#allocation3 + $0x10] sm:$0xff] %vm826, %v805
      %829 = vst.msk [vmem:[#allocation3 + $0x20] sm:$0xff] %vm826, %v807
      %830 = vst.msk [vmem:[#allocation3 + $0x30] sm:$0xff] %vm826, %v809
      %831 = vst.msk [vmem:[#allocation3 + $0x40] sm:$0xff] %vm826, %v811
      %832 = vst.msk [vmem:[#allocation3 + $0x50] sm:$0xff] %vm826, %v813
      %833 = vst.msk [vmem:[#allocation3 + $0x60] sm:$0xff] %vm826, %v815
      %834 = vst.msk [vmem:[#allocation3 + $0x70] sm:$0xff] %vm826, %v817
      %v835 = vrot.slane %v251, 4
      %v836 = vrot.slane %v252, 4
      %v837 = vsel %vm455, %v835, %v836
      %838 = vrot.lane.b32.xlu0 %v464, 84
      %v839 = vpop.permute.xlu0 %838
      %840 = vrot.lane.b32.xlu0 %v467, 84
      %v841 = vpop.permute.xlu0 %840
      %842 = vrot.lane.b32.xlu0 %v470, 84
      %v843 = vpop.permute.xlu0 %842
      %844 = vrot.lane.b32.xlu0 %v473, 84
      %v845 = vpop.permute.xlu0 %844
      %846 = vrot.lane.b32.xlu0 %v476, 84
      %v847 = vpop.permute.xlu0 %846
      %848 = vrot.lane.b32.xlu0 %v479, 84
      %v849 = vpop.permute.xlu0 %848
      %850 = vrot.lane.b32.xlu0 %v658, 84
      %v851 = vpop.permute.xlu0 %850
      %852 = vrot.lane.b32.xlu0 %v837, 84
      %v853 = vpop.permute.xlu0 %852
      %vm862 = vcmask 736928
      %863 = vst.msk [vmem:[#allocation3] sm:$0xff] %vm862, %v839
      %864 = vst.msk [vmem:[#allocation3 + $0x10] sm:$0xff] %vm862, %v841
      %865 = vst.msk [vmem:[#allocation3 + $0x20] sm:$0xff] %vm862, %v843
      %866 = vst.msk [vmem:[#allocation3 + $0x30] sm:$0xff] %vm862, %v845
      %867 = vst.msk [vmem:[#allocation3 + $0x40] sm:$0xff] %vm862, %v847
      %868 = vst.msk [vmem:[#allocation3 + $0x50] sm:$0xff] %vm862, %v849
      %869 = vst.msk [vmem:[#allocation3 + $0x60] sm:$0xff] %vm862, %v851
      %870 = vst.msk [vmem:[#allocation3 + $0x70] sm:$0xff] %vm862, %v853
      %872 = vrot.lane.b32.xlu0 %v239, 90
      %v873 = vpop.permute.xlu0 %872
      %874 = vrot.lane.b32.xlu0 %v241, 90
      %v875 = vpop.permute.xlu0 %874
      %876 = vrot.lane.b32.xlu0 %v243, 90
      %v877 = vpop.permute.xlu0 %876
      %878 = vrot.lane.b32.xlu0 %v245, 90
      %v879 = vpop.permute.xlu0 %878
      %880 = vrot.lane.b32.xlu0 %v247, 90
      %v881 = vpop.permute.xlu0 %880
      %882 = vrot.lane.b32.xlu0 %v249, 90
      %v883 = vpop.permute.xlu0 %882
      %884 = vrot.lane.b32.xlu0 %v251, 90
      %v885 = vpop.permute.xlu0 %884
      %886 = vrot.lane.b32.xlu0 %v253, 90
      %v887 = vpop.permute.xlu0 %886
      %vm896 = vcmask 786128
      %897 = vst.msk [vmem:[#allocation3] sm:$0xff] %vm896, %v873
      %898 = vst.msk [vmem:[#allocation3 + $0x10] sm:$0xff] %vm896, %v875
      %899 = vst.msk [vmem:[#allocation3 + $0x20] sm:$0xff] %vm896, %v877
      %900 = vst.msk [vmem:[#allocation3 + $0x30] sm:$0xff] %vm896, %v879
      %901 = vst.msk [vmem:[#allocation3 + $0x40] sm:$0xff] %vm896, %v881
      %902 = vst.msk [vmem:[#allocation3 + $0x50] sm:$0xff] %vm896, %v883
      %903 = vst.msk [vmem:[#allocation3 + $0x60] sm:$0xff] %vm896, %v885
      %904 = vst.msk [vmem:[#allocation3 + $0x70] sm:$0xff] %vm896, %v887
      %v906 = vrot.slane %v253, 1
      %v907 = vrot.slane %v254, 1
      %v908 = vsel %vm281, %v906, %v907
      %909 = vrot.lane.b32.xlu0 %v293, 96
      %v910 = vpop.permute.xlu0 %909
      %911 = vrot.lane.b32.xlu0 %v296, 96
      %v912 = vpop.permute.xlu0 %911
      %913 = vrot.lane.b32.xlu0 %v299, 96
      %v914 = vpop.permute.xlu0 %913
      %915 = vrot.lane.b32.xlu0 %v302, 96
      %v916 = vpop.permute.xlu0 %915
      %917 = vrot.lane.b32.xlu0 %v305, 96
      %v918 = vpop.permute.xlu0 %917
      %919 = vrot.lane.b32.xlu0 %v550, 96
      %v920 = vpop.permute.xlu0 %919
      %921 = vrot.lane.b32.xlu0 %v729, 96
      %v922 = vpop.permute.xlu0 %921
      %923 = vrot.lane.b32.xlu0 %v908, 96
      %v924 = vpop.permute.xlu0 %923
      %vm933 = vcmask 835328
      %934 = vst.msk [vmem:[#allocation3] sm:$0xff] %vm933, %v910
      %935 = vst.msk [vmem:[#allocation3 + $0x10] sm:$0xff] %vm933, %v912
      %936 = vst.msk [vmem:[#allocation3 + $0x20] sm:$0xff] %vm933, %v914
      %937 = vst.msk [vmem:[#allocation3 + $0x30] sm:$0xff] %vm933, %v916
      %938 = vst.msk [vmem:[#allocation3 + $0x40] sm:$0xff] %vm933, %v918
      %939 = vst.msk [vmem:[#allocation3 + $0x50] sm:$0xff] %vm933, %v920
      %940 = vst.msk [vmem:[#allocation3 + $0x60] sm:$0xff] %vm933, %v922
      %941 = vst.msk [vmem:[#allocation3 + $0x70] sm:$0xff] %vm933, %v924
      %v942 = vrot.slane %v253, 2
      %v943 = vrot.slane %v254, 2
      %v944 = vsel %vm339, %v942, %v943
      %945 = vrot.lane.b32.xlu0 %v351, 102
      %v946 = vpop.permute.xlu0 %945
      %947 = vrot.lane.b32.xlu0 %v354, 102
      %v948 = vpop.permute.xlu0 %947
      %949 = vrot.lane.b32.xlu0 %v357, 102
      %v950 = vpop.permute.xlu0 %949
      %951 = vrot.lane.b32.xlu0 %v360, 102
      %v952 = vpop.permute.xlu0 %951
      %953 = vrot.lane.b32.xlu0 %v363, 102
      %v954 = vpop.permute.xlu0 %953
      %955 = vrot.lane.b32.xlu0 %v586, 102
      %v956 = vpop.permute.xlu0 %955
      %957 = vrot.lane.b32.xlu0 %v765, 102
      %v958 = vpop.permute.xlu0 %957
      %959 = vrot.lane.b32.xlu0 %v944, 102
      %v960 = vpop.permute.xlu0 %959
      %vm969 = vcmask 884528
      %970 = vst.msk [vmem:[#allocation3] sm:$0xff] %vm969, %v946
      %971 = vst.msk [vmem:[#allocation3 + $0x10] sm:$0xff] %vm969, %v948
      %972 = vst.msk [vmem:[#allocation3 + $0x20] sm:$0xff] %vm969, %v950
      %973 = vst.msk [vmem:[#allocation3 + $0x30] sm:$0xff] %vm969, %v952
      %974 = vst.msk [vmem:[#allocation3 + $0x40] sm:$0xff] %vm969, %v954
      %975 = vst.msk [vmem:[#allocation3 + $0x50] sm:$0xff] %vm969, %v956
      %976 = vst.msk [vmem:[#allocation3 + $0x60] sm:$0xff] %vm969, %v958
      %977 = vst.msk [vmem:[#allocation3 + $0x70] sm:$0xff] %vm969, %v960
      %v978 = vrot.slane %v253, 3
      %v979 = vrot.slane %v254, 3
      %v980 = vsel %vm397, %v978, %v979
      %981 = vrot.lane.b32.xlu0 %v409, 108
      %v982 = vpop.permute.xlu0 %981
      %983 = vrot.lane.b32.xlu0 %v412, 108
      %v984 = vpop.permute.xlu0 %983
      %985 = vrot.lane.b32.xlu0 %v415, 108
      %v986 = vpop.permute.xlu0 %985
      %987 = vrot.lane.b32.xlu0 %v418, 108
      %v988 = vpop.permute.xlu0 %987
      %989 = vrot.lane.b32.xlu0 %v421, 108
      %v990 = vpop.permute.xlu0 %989
      %991 = vrot.lane.b32.xlu0 %v622, 108
      %v992 = vpop.permute.xlu0 %991
      %993 = vrot.lane.b32.xlu0 %v801, 108
      %v994 = vpop.permute.xlu0 %993
      %995 = vrot.lane.b32.xlu0 %v980, 108
      %v996 = vpop.permute.xlu0 %995
      %vm1005 = vcmask 933728
      %1006 = vst.msk [vmem:[#allocation3] sm:$0xff] %vm1005, %v982
      %1007 = vst.msk [vmem:[#allocation3 + $0x10] sm:$0xff] %vm1005, %v984
      %1008 = vst.msk [vmem:[#allocation3 + $0x20] sm:$0xff] %vm1005, %v986
      %1009 = vst.msk [vmem:[#allocation3 + $0x30] sm:$0xff] %vm1005, %v988
      %1010 = vst.msk [vmem:[#allocation3 + $0x40] sm:$0xff] %vm1005, %v990
      %1011 = vst.msk [vmem:[#allocation3 + $0x50] sm:$0xff] %vm1005, %v992
      %1012 = vst.msk [vmem:[#allocation3 + $0x60] sm:$0xff] %vm1005, %v994
      %1013 = vst.msk [vmem:[#allocation3 + $0x70] sm:$0xff] %vm1005, %v996
      %v1014 = vrot.slane %v253, 4
      %v1015 = vrot.slane %v254, 4
      %v1016 = vsel %vm455, %v1014, %v1015
      %1017 = vrot.lane.b32.xlu0 %v467, 114
      %v1018 = vpop.permute.xlu0 %1017
      %1019 = vrot.lane.b32.xlu0 %v470, 114
      %v1020 = vpop.permute.xlu0 %1019
      %1021 = vrot.lane.b32.xlu0 %v473, 114
      %v1022 = vpop.permute.xlu0 %1021
      %1023 = vrot.lane.b32.xlu0 %v476, 114
      %v1024 = vpop.permute.xlu0 %1023
      %1025 = vrot.lane.b32.xlu0 %v479, 114
      %v1026 = vpop.permute.xlu0 %1025
      %1027 = vrot.lane.b32.xlu0 %v658, 114
      %v1028 = vpop.permute.xlu0 %1027
      %1029 = vrot.lane.b32.xlu0 %v837, 114
      %v1030 = vpop.permute.xlu0 %1029
      %1031 = vrot.lane.b32.xlu0 %v1016, 114
      %v1032 = vpop.permute.xlu0 %1031
      %vm1041 = vcmask 982928
      %1042 = vst.msk [vmem:[#allocation3] sm:$0xff] %vm1041, %v1018
      %1043 = vst.msk [vmem:[#allocation3 + $0x10] sm:$0xff] %vm1041, %v1020
      %1044 = vst.msk [vmem:[#allocation3 + $0x20] sm:$0xff] %vm1041, %v1022
      %1045 = vst.msk [vmem:[#allocation3 + $0x30] sm:$0xff] %vm1041, %v1024
      %1046 = vst.msk [vmem:[#allocation3 + $0x40] sm:$0xff] %vm1041, %v1026
      %1047 = vst.msk [vmem:[#allocation3 + $0x50] sm:$0xff] %vm1041, %v1028
      %1048 = vst.msk [vmem:[#allocation3 + $0x60] sm:$0xff] %vm1041, %v1030
      %1049 = vst.msk [vmem:[#allocation3 + $0x70] sm:$0xff] %vm1041, %v1032
      %1051 = vrot.lane.b32.xlu0 %v241, 120
      %v1052 = vpop.permute.xlu0 %1051
      %1053 = vrot.lane.b32.xlu0 %v243, 120
      %v1054 = vpop.permute.xlu0 %1053
      %1055 = vrot.lane.b32.xlu0 %v245, 120
      %v1056 = vpop.permute.xlu0 %1055
      %1057 = vrot.lane.b32.xlu0 %v247, 120
      %v1058 = vpop.permute.xlu0 %1057
      %1059 = vrot.lane.b32.xlu0 %v249, 120
      %v1060 = vpop.permute.xlu0 %1059
      %1061 = vrot.lane.b32.xlu0 %v251, 120
      %v1062 = vpop.permute.xlu0 %1061
      %1063 = vrot.lane.b32.xlu0 %v253, 120
      %v1064 = vpop.permute.xlu0 %1063
      %1065 = vrot.lane.b32.xlu0 %v255, 120
      %v1066 = vpop.permute.xlu0 %1065
      %vm1075 = vcmask 1032128
      %1076 = vst.msk [vmem:[#allocation3] sm:$0xff] %vm1075, %v1052
      %1077 = vst.msk [vmem:[#allocation3 + $0x10] sm:$0xff] %vm1075, %v1054
      %1078 = vst.msk [vmem:[#allocation3 + $0x20] sm:$0xff] %vm1075, %v1056
      %1079 = vst.msk [vmem:[#allocation3 + $0x30] sm:$0xff] %vm1075, %v1058
      %1080 = vst.msk [vmem:[#allocation3 + $0x40] sm:$0xff] %vm1075, %v1060
      %1081 = vst.msk [vmem:[#allocation3 + $0x50] sm:$0xff] %vm1075, %v1062
      %1082 = vst.msk [vmem:[#allocation3 + $0x60] sm:$0xff] %vm1075, %v1064
      %1083 = vst.msk [vmem:[#allocation3 + $0x70] sm:$0xff] %vm1075, %v1066
      %v1085 = vrot.slane %v255, 1
      %v1086 = vrot.slane %v256, 1
      %v1087 = vsel %vm281, %v1085, %v1086
      %1088 = vrot.lane.b32.xlu0 %v296, 126
      %v1089 = vpop.permute.xlu0 %1088
      %1090 = vrot.lane.b32.xlu0 %v299, 126
      %v1091 = vpop.permute.xlu0 %1090
      %1092 = vrot.lane.b32.xlu0 %v302, 126
      %v1093 = vpop.permute.xlu0 %1092
      %1094 = vrot.lane.b32.xlu0 %v305, 126
      %v1095 = vpop.permute.xlu0 %1094
      %1096 = vrot.lane.b32.xlu0 %v550, 126
      %v1097 = vpop.permute.xlu0 %1096
      %1098 = vrot.lane.b32.xlu0 %v729, 126
      %v1099 = vpop.permute.xlu0 %1098
      %1100 = vrot.lane.b32.xlu0 %v908, 126
      %v1101 = vpop.permute.xlu0 %1100
      %1102 = vrot.lane.b32.xlu0 %v1087, 126
      %v1103 = vpop.permute.xlu0 %1102
      %vm1112 = vcmask 1048560
      %1113 = vst.msk [vmem:[#allocation3] sm:$0xff] %vm1112, %v1089
      %vm1114 = vcmask 31744
      %1115 = vst.msk [vmem:[#allocation3 + $0x8] sm:$0xff] %vm1114, %v1089
      %1116 = vst.msk [vmem:[#allocation3 + $0x10] sm:$0xff] %vm1112, %v1091
      %1117 = vst.msk [vmem:[#allocation3 + $0x18] sm:$0xff] %vm1114, %v1091
      %1118 = vst.msk [vmem:[#allocation3 + $0x20] sm:$0xff] %vm1112, %v1093
      %1119 = vst.msk [vmem:[#allocation3 + $0x28] sm:$0xff] %vm1114, %v1093
      %1120 = vst.msk [vmem:[#allocation3 + $0x30] sm:$0xff] %vm1112, %v1095
      %1121 = vst.msk [vmem:[#allocation3 + $0x38] sm:$0xff] %vm1114, %v1095
      %1122 = vst.msk [vmem:[#allocation3 + $0x40] sm:$0xff] %vm1112, %v1097
      %1123 = vst.msk [vmem:[#allocation3 + $0x48] sm:$0xff] %vm1114, %v1097
      %1124 = vst.msk [vmem:[#allocation3 + $0x50] sm:$0xff] %vm1112, %v1099
      %1125 = vst.msk [vmem:[#allocation3 + $0x58] sm:$0xff] %vm1114, %v1099
      %1126 = vst.msk [vmem:[#allocation3 + $0x60] sm:$0xff] %vm1112, %v1101
      %1127 = vst.msk [vmem:[#allocation3 + $0x68] sm:$0xff] %vm1114, %v1101
      %1128 = vst.msk [vmem:[#allocation3 + $0x70] sm:$0xff] %vm1112, %v1103
      %1129 = vst.msk [vmem:[#allocation3 + $0x78] sm:$0xff] %vm1114, %v1103
      %v1130 = vrot.slane %v255, 2
      %v1131 = vrot.slane %v256, 2
      %v1132 = vsel %vm339, %v1130, %v1131
      %1133 = vrot.lane.b32.xlu0 %v354, 4
      %v1134 = vpop.permute.xlu0 %1133
      %1135 = vrot.lane.b32.xlu0 %v357, 4
      %v1136 = vpop.permute.xlu0 %1135
      %1137 = vrot.lane.b32.xlu0 %v360, 4
      %v1138 = vpop.permute.xlu0 %1137
      %1139 = vrot.lane.b32.xlu0 %v363, 4
      %v1140 = vpop.permute.xlu0 %1139
      %1141 = vrot.lane.b32.xlu0 %v586, 4
      %v1142 = vpop.permute.xlu0 %1141
      %1143 = vrot.lane.b32.xlu0 %v765, 4
      %v1144 = vpop.permute.xlu0 %1143
      %1145 = vrot.lane.b32.xlu0 %v944, 4
      %v1146 = vpop.permute.xlu0 %1145
      %1147 = vrot.lane.b32.xlu0 %v1132, 4
      %v1148 = vpop.permute.xlu0 %1147
      %vm1157 = vcmask 80928
      %1158 = vst.msk [vmem:[#allocation3 + $0x8] sm:$0xff] %vm1157, %v1134
      %1159 = vst.msk [vmem:[#allocation3 + $0x18] sm:$0xff] %vm1157, %v1136
      %1160 = vst.msk [vmem:[#allocation3 + $0x28] sm:$0xff] %vm1157, %v1138
      %1161 = vst.msk [vmem:[#allocation3 + $0x38] sm:$0xff] %vm1157, %v1140
      %1162 = vst.msk [vmem:[#allocation3 + $0x48] sm:$0xff] %vm1157, %v1142
      %1163 = vst.msk [vmem:[#allocation3 + $0x58] sm:$0xff] %vm1157, %v1144
      %1164 = vst.msk [vmem:[#allocation3 + $0x68] sm:$0xff] %vm1157, %v1146
      %1165 = vst.msk [vmem:[#allocation3 + $0x78] sm:$0xff] %vm1157, %v1148
      %v1166 = vrot.slane %v255, 3
      %v1167 = vrot.slane %v256, 3
      %v1168 = vsel %vm397, %v1166, %v1167
      %1169 = vrot.lane.b32.xlu0 %v412, 10
      %v1170 = vpop.permute.xlu0 %1169
      %1171 = vrot.lane.b32.xlu0 %v415, 10
      %v1172 = vpop.permute.xlu0 %1171
      %1173 = vrot.lane.b32.xlu0 %v418, 10
      %v1174 = vpop.permute.xlu0 %1173
      %1175 = vrot.lane.b32.xlu0 %v421, 10
      %v1176 = vpop.permute.xlu0 %1175
      %1177 = vrot.lane.b32.xlu0 %v622, 10
      %v1178 = vpop.permute.xlu0 %1177
      %1179 = vrot.lane.b32.xlu0 %v801, 10
      %v1180 = vpop.permute.xlu0 %1179
      %1181 = vrot.lane.b32.xlu0 %v980, 10
      %v1182 = vpop.permute.xlu0 %1181
      %1183 = vrot.lane.b32.xlu0 %v1168, 10
      %v1184 = vpop.permute.xlu0 %1183
      %vm1193 = vcmask 130128
      %1194 = vst.msk [vmem:[#allocation3 + $0x8] sm:$0xff] %vm1193, %v1170
      %1195 = vst.msk [vmem:[#allocation3 + $0x18] sm:$0xff] %vm1193, %v1172
      %1196 = vst.msk [vmem:[#allocation3 + $0x28] sm:$0xff] %vm1193, %v1174
      %1197 = vst.msk [vmem:[#allocation3 + $0x38] sm:$0xff] %vm1193, %v1176
      %1198 = vst.msk [vmem:[#allocation3 + $0x48] sm:$0xff] %vm1193, %v1178
      %1199 = vst.msk [vmem:[#allocation3 + $0x58] sm:$0xff] %vm1193, %v1180
      %1200 = vst.msk [vmem:[#allocation3 + $0x68] sm:$0xff] %vm1193, %v1182
      %1201 = vst.msk [vmem:[#allocation3 + $0x78] sm:$0xff] %vm1193, %v1184
      %v1202 = vrot.slane %v255, 4
      %v1203 = vrot.slane %v256, 4
      %v1204 = vsel %vm455, %v1202, %v1203
      %1205 = vrot.lane.b32.xlu0 %v470, 16
      %v1206 = vpop.permute.xlu0 %1205
      %1207 = vrot.lane.b32.xlu0 %v473, 16
      %v1208 = vpop.permute.xlu0 %1207
      %1209 = vrot.lane.b32.xlu0 %v476, 16
      %v1210 = vpop.permute.xlu0 %1209
      %1211 = vrot.lane.b32.xlu0 %v479, 16
      %v1212 = vpop.permute.xlu0 %1211
      %1213 = vrot.lane.b32.xlu0 %v658, 16
      %v1214 = vpop.permute.xlu0 %1213
      %1215 = vrot.lane.b32.xlu0 %v837, 16
      %v1216 = vpop.permute.xlu0 %1215
      %1217 = vrot.lane.b32.xlu0 %v1016, 16
      %v1218 = vpop.permute.xlu0 %1217
      %1219 = vrot.lane.b32.xlu0 %v1204, 16
      %v1220 = vpop.permute.xlu0 %1219
      %vm1229 = vcmask 179328
      %1230 = vst.msk [vmem:[#allocation3 + $0x8] sm:$0xff] %vm1229, %v1206
      %1231 = vst.msk [vmem:[#allocation3 + $0x18] sm:$0xff] %vm1229, %v1208
      %1232 = vst.msk [vmem:[#allocation3 + $0x28] sm:$0xff] %vm1229, %v1210
      %1233 = vst.msk [vmem:[#allocation3 + $0x38] sm:$0xff] %vm1229, %v1212
      %1234 = vst.msk [vmem:[#allocation3 + $0x48] sm:$0xff] %vm1229, %v1214
      %1235 = vst.msk [vmem:[#allocation3 + $0x58] sm:$0xff] %vm1229, %v1216
      %1236 = vst.msk [vmem:[#allocation3 + $0x68] sm:$0xff] %vm1229, %v1218
      %1237 = vst.msk [vmem:[#allocation3 + $0x78] sm:$0xff] %vm1229, %v1220
      %v1238 = vld [vmem:[#allocation3] sm:$0xff]
      %v1239 = vld [vmem:[#allocation3 + $0x8] sm:$0xff]
      %v1240 = vld [vmem:[#allocation3 + $0x10] sm:$0xff]
      %v1241 = vld [vmem:[#allocation3 + $0x18] sm:$0xff]
      %v1242 = vld [vmem:[#allocation3 + $0x20] sm:$0xff]
      %v1243 = vld [vmem:[#allocation3 + $0x28] sm:$0xff]
      %v1244 = vld [vmem:[#allocation3 + $0x30] sm:$0xff]
      %v1245 = vld [vmem:[#allocation3 + $0x38] sm:$0xff]
      %v1246 = vld [vmem:[#allocation3 + $0x40] sm:$0xff]
      %v1247 = vld [vmem:[#allocation3 + $0x48] sm:$0xff]
      %v1248 = vld [vmem:[#allocation3 + $0x50] sm:$0xff]
      %v1249 = vld [vmem:[#allocation3 + $0x58] sm:$0xff]
      %v1250 = vld [vmem:[#allocation3 + $0x60] sm:$0xff]
      %v1251 = vld [vmem:[#allocation3 + $0x68] sm:$0xff]
      %v1252 = vld [vmem:[#allocation3 + $0x70] sm:$0xff]
      %v1253 = vld [vmem:[#allocation3 + $0x78] sm:$0xff]
      %v1254 = vld [vmem:[%s1] sm:$0xff]
      %v1255 = vld [vmem:[%s1 + $0x8] sm:$0xff]
      %v1256 = vld [vmem:[%s1 + $0x10] sm:$0xff]
      %v1257 = vld [vmem:[%s1 + $0x18] sm:$0xff]
      %v1258 = vld [vmem:[%s1 + $0x20] sm:$0xff]
      %v1259 = vld [vmem:[%s1 + $0x28] sm:$0xff]
      %v1260 = vld [vmem:[%s1 + $0x30] sm:$0xff]
      %v1261 = vld [vmem:[%s1 + $0x38] sm:$0xff]
      %v1262 = vld [vmem:[%s1 + $0x40] sm:$0xff]
      %v1263 = vld [vmem:[%s1 + $0x48] sm:$0xff]
      %v1264 = vld [vmem:[%s1 + $0x50] sm:$0xff]
      %v1265 = vld [vmem:[%s1 + $0x58] sm:$0xff]
      %v1266 = vld [vmem:[%s1 + $0x60] sm:$0xff]
      %v1267 = vld [vmem:[%s1 + $0x68] sm:$0xff]
      %v1268 = vld [vmem:[%s1 + $0x70] sm:$0xff]
      %v1269 = vld [vmem:[%s1 + $0x78] sm:$0xff]
      %v1270 = vld [vmem:[%s1 + $0x80] sm:$0xff]
      %v1271 = vld [vmem:[%s1 + $0x88] sm:$0xff]
      %v1272 = vld [vmem:[%s1 + $0x90] sm:$0xff]
      %v1273 = vld [vmem:[%s1 + $0x98] sm:$0xff]
      %v1274 = vld [vmem:[%s1 + $0xa0] sm:$0xff]
      %v1275 = vld [vmem:[%s1 + $0xa8] sm:$0xff]
      %v1276 = vld [vmem:[%s1 + $0xb0] sm:$0xff]
      %v1277 = vld [vmem:[%s1 + $0xb8] sm:$0xff]
      %v1278 = vld [vmem:[%s1 + $0xc0] sm:$0xff]
      %v1279 = vld [vmem:[%s1 + $0xc8] sm:$0xff]
      %v1280 = vld [vmem:[%s1 + $0xd0] sm:$0xff]
      %v1281 = vld [vmem:[%s1 + $0xd8] sm:$0xff]
      %v1282 = vld [vmem:[%s1 + $0xe0] sm:$0xff]
      %v1283 = vld [vmem:[%s1 + $0xe8] sm:$0xff]
      %v1284 = vld [vmem:[%s1 + $0xf0] sm:$0xff]
      %v1285 = vld [vmem:[%s1 + $0xf8] sm:$0xff]
      %v1286 = vld [vmem:[%s2] sm:$0x1]
      %v1288 = vlaneseq
      %v1289 = vshrl.u32 %v1288, 7
      %v1290 = vsub.s32 0, %v1289
      %v1291 = vrot.slane %v1286, %v1290
      %1293 = vmatprep.subr.mxu0 0.0
      %1294 = vmatpush1.msra.mxu0 %v1269
      %1295 = vmatprep.subr.mxu0 0.0
      %1296 = vmatpush1.msra.mxu0 %v1268
      %1297 = vmatprep.subr.mxu0 0.0
      %1298 = vmatpush1.msra.mxu0 %v1267
      %1299 = vmatprep.subr.mxu0 0.0
      %1300 = vmatpush1.msra.mxu0 %v1266
      %1301 = vmatprep.subr.mxu0 0.0
      %1302 = vmatpush1.msra.mxu0 %v1265
      %1303 = vmatprep.subr.mxu0 0.0
      %1304 = vmatpush1.msra.mxu0 %v1264
      %1305 = vmatprep.subr.mxu0 0.0
      %1306 = vmatpush1.msra.mxu0 %v1263
      %1307 = vmatprep.subr.mxu0 0.0
      %1308 = vmatpush1.msra.mxu0 %v1262
      %1309 = vmatprep.subr.mxu0 0.0
      %1310 = vmatpush1.msra.mxu0 %v1261
      %1311 = vmatprep.subr.mxu0 0.0
      %1312 = vmatpush1.msra.mxu0 %v1260
      %1313 = vmatprep.subr.mxu0 0.0
      %1314 = vmatpush1.msra.mxu0 %v1259
      %1315 = vmatprep.subr.mxu0 0.0
      %1316 = vmatpush1.msra.mxu0 %v1258
      %1317 = vmatprep.subr.mxu0 0.0
      %1318 = vmatpush1.msra.mxu0 %v1257
      %1319 = vmatprep.subr.mxu0 0.0
      %1320 = vmatpush1.msra.mxu0 %v1256
      %1321 = vmatprep.subr.mxu0 0.0
      %1322 = vmatpush1.msra.mxu0 %v1255
      %1323 = vmatprep.subr.mxu0 0.0
      %1324 = vmatpush1.msra.mxu0 %v1254
      %1325 = vmatprep.subr.mxu0 0.0
      %1326 = vmatpush2.msra.mxu0 %v1285
      %1327 = vmatprep.subr.mxu0 0.0
      %1328 = vmatpush2.msra.mxu0 %v1284
      %1329 = vmatprep.subr.mxu0 0.0
      %1330 = vmatpush2.msra.mxu0 %v1283
      %1331 = vmatprep.subr.mxu0 0.0
      %1332 = vmatpush2.msra.mxu0 %v1282
      %1333 = vmatprep.subr.mxu0 0.0
      %1334 = vmatpush2.msra.mxu0 %v1281
      %1335 = vmatprep.subr.mxu0 0.0
      %1336 = vmatpush2.msra.mxu0 %v1280
      %1337 = vmatprep.subr.mxu0 0.0
      %1338 = vmatpush2.msra.mxu0 %v1279
      %1339 = vmatprep.subr.mxu0 0.0
      %1340 = vmatpush2.msra.mxu0 %v1278
      %1341 = vmatprep.subr.mxu0 0.0
      %1342 = vmatpush2.msra.mxu0 %v1277
      %1343 = vmatprep.subr.mxu0 0.0
      %1344 = vmatpush2.msra.mxu0 %v1276
      %1345 = vmatprep.subr.mxu0 0.0
      %1346 = vmatpush2.msra.mxu0 %v1275
      %1347 = vmatprep.subr.mxu0 0.0
      %1348 = vmatpush2.msra.mxu0 %v1274
      %1349 = vmatprep.subr.mxu0 0.0
      %1350 = vmatpush2.msra.mxu0 %v1273
      %1351 = vmatprep.subr.mxu0 0.0
      %1352 = vmatpush2.msra.mxu0 %v1272
      %1353 = vmatprep.subr.mxu0 0.0
      %1354 = vmatpush2.msra.mxu0 %v1271
      %1355 = vmatprep.subr.mxu0 0.0
      %1356 = vmatpush2.msra.mxu0 %v1270
      %1357 = vmatprep.mubr.f32.mxu0 %v1239
      %1358 = vmatmul.mubr.f32.gmra.mxu0 %v1238
      %v1359 = vpop.f32.mrf.mxu0
      %v1360 = vadd.f32 %v1291, %v1359
      %v1361 = vpop.f32.mrf.mxu0
      %1362 = vmatprep.mubr.f32.mxu0 %v1241
      %1363 = vmatmul.mubr.f32.gmra.mxu0 %v1240
      %v1364 = vpop.f32.mrf.mxu0
      %v1365 = vadd.f32 %v1291, %v1364
      %v1366 = vpop.f32.mrf.mxu0
      %1367 = vmatprep.mubr.f32.mxu0 %v1243
      %1368 = vmatmul.mubr.f32.gmra.mxu0 %v1242
      %v1369 = vpop.f32.mrf.mxu0
      %v1370 = vadd.f32 %v1291, %v1369
      %v1371 = vpop.f32.mrf.mxu0
      %1372 = vmatprep.mubr.f32.mxu0 %v1245
      %1373 = vmatmul.mubr.f32.gmra.mxu0 %v1244
      %v1374 = vpop.f32.mrf.mxu0
      %v1375 = vadd.f32 %v1291, %v1374
      %v1376 = vpop.f32.mrf.mxu0
      %1377 = vmatprep.mubr.f32.mxu0 %v1247
      %1378 = vmatmul.mubr.f32.gmra.mxu0 %v1246
      %v1379 = vpop.f32.mrf.mxu0
      %v1380 = vadd.f32 %v1291, %v1379
      %v1381 = vpop.f32.mrf.mxu0
      %1382 = vmatprep.mubr.f32.mxu0 %v1249
      %1383 = vmatmul.mubr.f32.gmra.mxu0 %v1248
      %v1384 = vpop.f32.mrf.mxu0
      %v1385 = vadd.f32 %v1291, %v1384
      %v1386 = vpop.f32.mrf.mxu0
      %1387 = vmatprep.mubr.f32.mxu0 %v1251
      %1388 = vmatmul.mubr.f32.gmra.mxu0 %v1250
      %v1389 = vpop.f32.mrf.mxu0
      %v1390 = vadd.f32 %v1291, %v1389
      %v1391 = vpop.f32.mrf.mxu0
      %1392 = vmatprep.mubr.f32.mxu0 %v1253
      %1393 = vmatmul.mubr.f32.gmra.mxu0 %v1252
      %v1394 = vpop.f32.mrf.mxu0
      %v1395 = vadd.f32 %v1291, %v1394
      %v1396 = vpop.f32.mrf.mxu0
      %1397 = vdwg.mxu0
      %v1398 = vmax.f32 %v1360, %v1365
      %v1399 = vmax.f32 %v1370, %v1375
      %v1400 = vmax.f32 %v1380, %v1385
      %v1401 = vmax.f32 %v1390, %v1395
      %v1406 = vcombine.high %v1398, %v1398
      %v1408 = vunpack.c.l.s4 1983009808
      %v1409 = vunpack.c.0.s8 %v1408
      %v1410 = vlaneseq
      %v1411 = vshrl.u32 %v1410, 7
      %v1412 = vsub.s32 %v1409, %v1411
      %v1413 = vrot.slane %v1398, %v1412
      %v1415 = vunpack.c.l.s4 1983009808
      %v1416 = vunpack.c.0.s8 %v1415
      %v1417 = vlaneseq
      %v1418 = vshrl.u32 %v1417, 7
      %v1419 = vsub.s32 %v1416, %v1418
      %v1420 = vrot.slane %v1406, %v1419
      %v1421 = vcombine.high %v1413, %v1413
      %v1422 = vcombine.high %v1420, %v1420
      %v1423 = vcombine.high %v1399, %v1399
      %v1425 = vunpack.c.l.s4 1983009808
      %v1426 = vunpack.c.0.s8 %v1425
      %v1427 = vlaneseq
      %v1428 = vshrl.u32 %v1427, 7
      %v1429 = vsub.s32 %v1426, %v1428
      %v1430 = vrot.slane %v1399, %v1429
      %v1432 = vunpack.c.l.s4 1983009808
      %v1433 = vunpack.c.0.s8 %v1432
      %v1434 = vlaneseq
      %v1435 = vshrl.u32 %v1434, 7
      %v1436 = vsub.s32 %v1433, %v1435
      %v1437 = vrot.slane %v1423, %v1436
      %v1438 = vcombine.high %v1430, %v1430
      %v1439 = vcombine.high %v1437, %v1437
      %v1440 = vcombine.high %v1400, %v1400
      %v1442 = vunpack.c.l.s4 1983009808
      %v1443 = vunpack.c.0.s8 %v1442
      %v1444 = vlaneseq
      %v1445 = vshrl.u32 %v1444, 7
      %v1446 = vsub.s32 %v1443, %v1445
      %v1447 = vrot.slane %v1400, %v1446
      %v1449 = vunpack.c.l.s4 1983009808
      %v1450 = vunpack.c.0.s8 %v1449
      %v1451 = vlaneseq
      %v1452 = vshrl.u32 %v1451, 7
      %v1453 = vsub.s32 %v1450, %v1452
      %v1454 = vrot.slane %v1440, %v1453
      %v1455 = vcombine.high %v1447, %v1447
      %v1456 = vcombine.high %v1454, %v1454
      %v1457 = vcombine.high %v1401, %v1401
      %v1459 = vunpack.c.l.s4 1983009808
      %v1460 = vunpack.c.0.s8 %v1459
      %v1461 = vlaneseq
      %v1462 = vshrl.u32 %v1461, 7
      %v1463 = vsub.s32 %v1460, %v1462
      %v1464 = vrot.slane %v1401, %v1463
      %v1466 = vunpack.c.l.s4 1983009808
      %v1467 = vunpack.c.0.s8 %v1466
      %v1468 = vlaneseq
      %v1469 = vshrl.u32 %v1468, 7
      %v1470 = vsub.s32 %v1467, %v1469
      %v1471 = vrot.slane %v1457, %v1470
      %v1472 = vcombine.high %v1464, %v1464
      %v1473 = vcombine.high %v1471, %v1471
      %v1490 = vrot.slane %v1413, 7
      %v1491 = vrot.slane %v1490, 2
      %v1492 = vrot.slane %v1421, 7
      %v1493 = vrot.slane %v1492, 2
      %v1494 = vrot.slane %v1420, 7
      %v1495 = vrot.slane %v1494, 2
      %v1496 = vrot.slane %v1422, 7
      %v1497 = vrot.slane %v1496, 2
      %v1498 = vrot.slane %v1430, 7
      %v1499 = vrot.slane %v1498, 2
      %v1500 = vrot.slane %v1438, 7
      %v1501 = vrot.slane %v1500, 2
      %v1502 = vrot.slane %v1437, 7
      %v1503 = vrot.slane %v1502, 2
      %v1504 = vrot.slane %v1439, 7
      %v1505 = vrot.slane %v1504, 2
      %v1506 = vrot.slane %v1447, 7
      %v1507 = vrot.slane %v1506, 2
      %v1508 = vrot.slane %v1455, 7
      %v1509 = vrot.slane %v1508, 2
      %v1510 = vrot.slane %v1454, 7
      %v1511 = vrot.slane %v1510, 2
      %v1512 = vrot.slane %v1456, 7
      %v1513 = vrot.slane %v1512, 2
      %v1514 = vrot.slane %v1464, 7
      %v1515 = vrot.slane %v1514, 2
      %v1516 = vrot.slane %v1472, 7
      %v1517 = vrot.slane %v1516, 2
      %v1518 = vrot.slane %v1471, 7
      %v1519 = vrot.slane %v1518, 2
      %v1520 = vrot.slane %v1473, 7
      %v1521 = vrot.slane %v1520, 2
      %v1538 = vmax.f32 %v1413, %v1491
      %v1539 = vmax.f32 %v1421, %v1493
      %v1540 = vmax.f32 %v1420, %v1495
      %v1541 = vmax.f32 %v1422, %v1497
      %v1542 = vmax.f32 %v1430, %v1499
      %v1543 = vmax.f32 %v1438, %v1501
      %v1544 = vmax.f32 %v1437, %v1503
      %v1545 = vmax.f32 %v1439, %v1505
      %v1546 = vmax.f32 %v1447, %v1507
      %v1547 = vmax.f32 %v1455, %v1509
      %v1548 = vmax.f32 %v1454, %v1511
      %v1549 = vmax.f32 %v1456, %v1513
      %v1550 = vmax.f32 %v1464, %v1515
      %v1551 = vmax.f32 %v1472, %v1517
      %v1552 = vmax.f32 %v1471, %v1519
      %v1553 = vmax.f32 %v1473, %v1521
      %v1554 = vxor.u32 %v1538, 2147483648
      %v1555 = vxor.u32 %v1539, 2147483648
      %v1556 = vxor.u32 %v1540, 2147483648
      %v1557 = vxor.u32 %v1541, 2147483648
      %v1558 = vxor.u32 %v1542, 2147483648
      %v1559 = vxor.u32 %v1543, 2147483648
      %v1560 = vxor.u32 %v1544, 2147483648
      %v1561 = vxor.u32 %v1545, 2147483648
      %v1562 = vxor.u32 %v1546, 2147483648
      %v1563 = vxor.u32 %v1547, 2147483648
      %v1564 = vxor.u32 %v1548, 2147483648
      %v1565 = vxor.u32 %v1549, 2147483648
      %v1566 = vxor.u32 %v1550, 2147483648
      %v1567 = vxor.u32 %v1551, 2147483648
      %v1568 = vxor.u32 %v1552, 2147483648
      %v1569 = vxor.u32 %v1553, 2147483648
      %v1570 = vmul.f32 %v1554, 1.442695
      %v1571 = vpow.pop %v1570
      %v1572 = vmul.f32 %v1555, 1.442695
      %v1573 = vpow.pop %v1572
      %v1574 = vmul.f32 %v1556, 1.442695
      %v1575 = vpow.pop %v1574
      %v1576 = vmul.f32 %v1557, 1.442695
      %v1577 = vpow.pop %v1576
      %v1578 = vmul.f32 %v1558, 1.442695
      %v1579 = vpow.pop %v1578
      %v1580 = vmul.f32 %v1559, 1.442695
      %v1581 = vpow.pop %v1580
      %v1582 = vmul.f32 %v1560, 1.442695
      %v1583 = vpow.pop %v1582
      %v1584 = vmul.f32 %v1561, 1.442695
      %v1585 = vpow.pop %v1584
      %v1586 = vmul.f32 %v1562, 1.442695
      %v1587 = vpow.pop %v1586
      %v1588 = vmul.f32 %v1563, 1.442695
      %v1589 = vpow.pop %v1588
      %v1590 = vmul.f32 %v1564, 1.442695
      %v1591 = vpow.pop %v1590
      %v1592 = vmul.f32 %v1565, 1.442695
      %v1593 = vpow.pop %v1592
      %v1594 = vmul.f32 %v1566, 1.442695
      %v1595 = vpow.pop %v1594
      %v1596 = vmul.f32 %v1567, 1.442695
      %v1597 = vpow.pop %v1596
      %v1598 = vmul.f32 %v1568, 1.442695
      %v1599 = vpow.pop %v1598
      %v1600 = vmul.f32 %v1569, 1.442695
      %v1601 = vpow.pop %v1600
      %v1602 = vadd.f32 %v1571, 1.0
      %v1603 = vadd.f32 %v1573, 1.0
      %v1604 = vadd.f32 %v1575, 1.0
      %v1605 = vadd.f32 %v1577, 1.0
      %v1606 = vadd.f32 %v1579, 1.0
      %v1607 = vadd.f32 %v1581, 1.0
      %v1608 = vadd.f32 %v1583, 1.0
      %v1609 = vadd.f32 %v1585, 1.0
      %v1610 = vadd.f32 %v1587, 1.0
      %v1611 = vadd.f32 %v1589, 1.0
      %v1612 = vadd.f32 %v1591, 1.0
      %v1613 = vadd.f32 %v1593, 1.0
      %v1614 = vadd.f32 %v1595, 1.0
      %v1615 = vadd.f32 %v1597, 1.0
      %v1616 = vadd.f32 %v1599, 1.0
      %v1617 = vadd.f32 %v1601, 1.0
      %v1618 = vrcp.pop %v1602
      %v1619 = vmul.f32 1.0, %v1618
      %v1620 = vrcp.pop %v1603
      %v1621 = vmul.f32 1.0, %v1620
      %v1622 = vrcp.pop %v1604
      %v1623 = vmul.f32 1.0, %v1622
      %v1624 = vrcp.pop %v1605
      %v1625 = vmul.f32 1.0, %v1624
      %v1626 = vrcp.pop %v1606
      %v1627 = vmul.f32 1.0, %v1626
      %v1628 = vrcp.pop %v1607
      %v1629 = vmul.f32 1.0, %v1628
      %v1630 = vrcp.pop %v1608
      %v1631 = vmul.f32 1.0, %v1630
      %v1632 = vrcp.pop %v1609
      %v1633 = vmul.f32 1.0, %v1632
      %v1634 = vrcp.pop %v1610
      %v1635 = vmul.f32 1.0, %v1634
      %v1636 = vrcp.pop %v1611
      %v1637 = vmul.f32 1.0, %v1636
      %v1638 = vrcp.pop %v1612
      %v1639 = vmul.f32 1.0, %v1638
      %v1640 = vrcp.pop %v1613
      %v1641 = vmul.f32 1.0, %v1640
      %v1642 = vrcp.pop %v1614
      %v1643 = vmul.f32 1.0, %v1642
      %v1644 = vrcp.pop %v1615
      %v1645 = vmul.f32 1.0, %v1644
      %v1646 = vrcp.pop %v1616
      %v1647 = vmul.f32 1.0, %v1646
      %v1648 = vrcp.pop %v1617
      %v1649 = vmul.f32 1.0, %v1648
      %v1666 = vlaneseq
      %v1667 = vshrl.u32 %v1666, 7
      %v1668 = vsub.s32 0, %v1667
      %v1669 = vrot.slane %v1619, %v1668
      %v1670 = vlaneseq
      %v1671 = vshrl.u32 %v1670, 7
      %v1672 = vsub.s32 0, %v1671
      %v1673 = vrot.slane %v1621, %v1672
      %v1674 = vlaneseq
      %v1675 = vshrl.u32 %v1674, 7
      %v1676 = vsub.s32 0, %v1675
      %v1677 = vrot.slane %v1623, %v1676
      %v1678 = vlaneseq
      %v1679 = vshrl.u32 %v1678, 7
      %v1680 = vsub.s32 0, %v1679
      %v1681 = vrot.slane %v1625, %v1680
      %v1682 = vlaneseq
      %v1683 = vshrl.u32 %v1682, 7
      %v1684 = vsub.s32 0, %v1683
      %v1685 = vrot.slane %v1627, %v1684
      %v1686 = vlaneseq
      %v1687 = vshrl.u32 %v1686, 7
      %v1688 = vsub.s32 0, %v1687
      %v1689 = vrot.slane %v1629, %v1688
      %v1690 = vlaneseq
      %v1691 = vshrl.u32 %v1690, 7
      %v1692 = vsub.s32 0, %v1691
      %v1693 = vrot.slane %v1631, %v1692
      %v1694 = vlaneseq
      %v1695 = vshrl.u32 %v1694, 7
      %v1696 = vsub.s32 0, %v1695
      %v1697 = vrot.slane %v1633, %v1696
      %v1698 = vlaneseq
      %v1699 = vshrl.u32 %v1698, 7
      %v1700 = vsub.s32 0, %v1699
      %v1701 = vrot.slane %v1635, %v1700
      %v1702 = vlaneseq
      %v1703 = vshrl.u32 %v1702, 7
      %v1704 = vsub.s32 0, %v1703
      %v1705 = vrot.slane %v1637, %v1704
      %v1706 = vlaneseq
      %v1707 = vshrl.u32 %v1706, 7
      %v1708 = vsub.s32 0, %v1707
      %v1709 = vrot.slane %v1639, %v1708
      %v1710 = vlaneseq
      %v1711 = vshrl.u32 %v1710, 7
      %v1712 = vsub.s32 0, %v1711
      %v1713 = vrot.slane %v1641, %v1712
      %v1714 = vlaneseq
      %v1715 = vshrl.u32 %v1714, 7
      %v1716 = vsub.s32 0, %v1715
      %v1717 = vrot.slane %v1643, %v1716
      %v1718 = vlaneseq
      %v1719 = vshrl.u32 %v1718, 7
      %v1720 = vsub.s32 0, %v1719
      %v1721 = vrot.slane %v1645, %v1720
      %v1722 = vlaneseq
      %v1723 = vshrl.u32 %v1722, 7
      %v1724 = vsub.s32 0, %v1723
      %v1725 = vrot.slane %v1647, %v1724
      %v1726 = vlaneseq
      %v1727 = vshrl.u32 %v1726, 7
      %v1728 = vsub.s32 0, %v1727
      %v1729 = vrot.slane %v1649, %v1728
      %vm1730 = vcmask 1041409
      %v1731 = vsel %vm1730, %v1673, %v1669
      %vm1732 = vcmask 1042434
      %v1733 = vsel %vm1732, %v1677, %v1731
      %vm1734 = vcmask 1043459
      %v1735 = vsel %vm1734, %v1681, %v1733
      %v1736 = vsel %vm1730, %v1689, %v1685
      %v1737 = vsel %vm1732, %v1693, %v1736
      %v1738 = vsel %vm1734, %v1697, %v1737
      %v1739 = vsel %vm1730, %v1705, %v1701
      %v1740 = vsel %vm1732, %v1709, %v1739
      %v1741 = vsel %vm1734, %v1713, %v1740
      %v1742 = vsel %vm1730, %v1721, %v1717
      %v1743 = vsel %vm1732, %v1725, %v1742
      %v1744 = vsel %vm1734, %v1729, %v1743
      %vm1749 = vcmask 125952
      %1750 = vst.msk [vmem:[%s170] sm:$0xf] %vm1749, %v1735
      %1751 = vst.msk [vmem:[%s170 + $0x4] sm:$0xf] %vm1749, %v1738
      %1752 = vst.msk [vmem:[%s170 + $0x8] sm:$0xf] %vm1749, %v1741
      %1753 = vst.msk [vmem:[%s170 + $0xc] sm:$0xf] %vm1749, %v1744
      %p1754 = scmp.lt.s32.totalorder %s14, 1
      %s1755 = scalar_select %p1754, %s14, 1
      %s1756 = smul.addr %s1755, 4
      %s1757 = smul.addr %s1756, 4
      %s1758 = scalar_lea.vmem %s3, %s1757
      // Predicated region
      $region33: #{forward.6} parent=31 // pred_check
        %p1759 = pneg %p100
      $region34: #{forward.6} parent=31 // pred_check_branch
        %1761 = sbr.rel (%p1759) target = $region36
      $region35: #{forward.6} parent=31 // pred_region
        _
      $region36: #{forward.6} parent=31 // pred_fallthru
        _
    $region32: #{forward.6} parent=5 // pred_fallthru
      _
    %p1762 = scmp.le.s32.totalorder 2, %s9
    // Predicated region
    $region37: #{forward.6} parent=5 // pred_check
      %p1763 = pneg %p1762
    $region38: #{forward.6} parent=5 // pred_check_branch
      %1765 = sbr.rel (%p1763) target = $region40
    $region39: #{forward.6} parent=5 // pred_region
      %s1766 = ssub.s32 %s9, 2
      // Predicated region
      $region41: #{forward.6} parent=39 // pred_check
        %p1767 = pneg %p106
      $region42: #{forward.6} parent=39 // pred_check_branch
        %1769 = sbr.rel (%p1767) target = $region44
      $region43: #{forward.6} parent=39 // pred_region
        %p1770 = scmp.lt.s32.totalorder %s15, 1
        %s1771 = scalar_select %p1770, %s15, 1
        %s1772 = smul.addr %s1771, 4
        %s1773 = smul.addr %s1772, 4
        %s1774 = scalar_lea.vmem %s3, %s1773
      $region44: #{forward.6} parent=39 // pred_fallthru
        _
    $region40: #{forward.6} parent=5 // pred_fallthru
      _
  $region6: #{forward.6} parent=0 // loop_footer
    %s13 = sadd.s32 1, %s9
  $region7: #{forward.6} parent=0 // loop_footer_branch
    %8 = sbr.rel target = $region3
  $region8: #{forward.6} parent=0 // loop_exit
    _

// kernel: forward.9
$region0: #{forward.9}
  #allocation0 [shape = 'u32[]', space=smem, size = 0x4, offset = 0x4, fixed_abs, tag = 'smem constant byte address 0x4 - core index']
  #allocation1 [shape = 'u32[144,128]{1,0:T(1,128)}', space=vmem, size = 0x12000, scoped, tag = 'internal scratch']
  %s0 = inlined_call_operand.vmem [shape: f32[2,2,84], index: 0, kind: input, shape index: {}]
  %s1 = inlined_call_operand.vmem [shape: f32[1,84], index: 1, kind: input, shape index: {}]
  %s2 = inlined_call_operand.vmem [shape: f32[84,7], index: 2, kind: input, shape index: {}]
  %s3 = inlined_call_operand.vmem [shape: f32[1,7], index: 3, kind: input, shape index: {}]
  %s4 = inlined_call_operand.hbm [shape: f32[2,7], index: 4, kind: output, shape index: {}]
  %s5 = sld [smem:[#allocation0]]
  $region26: #{forward.9} parent=0
    _
  %s7 = ssub.s32 1, %s5
  %s8 = scalar_select 0, %s7, %s5
  $region1: #{forward.9} parent=0
    #allocation2 [shape = 'u8[1024]{0}', space=vmem, size = 0x400, scoped, tag = 'output window, operand 0, single buffered']
    #allocation3 [shape = 's32[1]{0}', space=sflag, size = 0x4, scoped, tag = 'scoped memory for forward.9']
    %9 = vsyncpa [#allocation3], 0
    // Predicated region
    $region2: #{forward.9} parent=1 // pred_check
      _
    $region3: #{forward.9} parent=1 // pred_check_branch
      %11 = sbr.rel (0) target = $region5
    $region4: #{forward.9} parent=1 // pred_region
      _
    $region5: #{forward.9} parent=1 // pred_fallthru
      _
    // Predicated region
    $region6: #{forward.9} parent=1 // pred_check
      _
    $region7: #{forward.9} parent=1 // pred_check_branch
      %13 = sbr.rel (0) target = $region9
    $region8: #{forward.9} parent=1 // pred_region
      _
    $region9: #{forward.9} parent=1 // pred_fallthru
      _
    // Predicated region
    $region10: #{forward.9} parent=1 // pred_check
      _
    $region11: #{forward.9} parent=1 // pred_check_branch
      %15 = sbr.rel (0) target = $region13
    $region12: #{forward.9} parent=1 // pred_region
      _
    $region13: #{forward.9} parent=1 // pred_fallthru
      _
    // Predicated region
    $region14: #{forward.9} parent=1 // pred_check
      _
    $region15: #{forward.9} parent=1 // pred_check_branch
      %17 = sbr.rel (0) target = $region17
    $region16: #{forward.9} parent=1 // pred_region
      _
    $region17: #{forward.9} parent=1 // pred_fallthru
      _
    %v18 = vld [vmem:[%s0] sm:$0x3]
    %v19 = vld [vmem:[%s0 + $0x2] sm:$0x3]
    %vm20 = vcmask 680960
    %v21 = vsel %vm20, %v18, 0.0
    %v22 = vsel %vm20, %v19, 0.0
    %v23 = vadd.f32 %v21, %v22
    %v24 = vld [vmem:[%s1] sm:$0x1]
    %v26 = vlaneseq
    %v27 = vshrl.u32 %v26, 7
    %v28 = vsub.s32 0, %v27
    %v29 = vrot.slane %v24, %v28
    %v31 = vadd.f32 %v23, %v29
    %v32 = vld [vmem:[%s2] sm:$0xff]
    %v33 = vld [vmem:[%s2 + $0x8] sm:$0xff]
    %v34 = vld [vmem:[%s2 + $0x10] sm:$0xff]
    %v35 = vld [vmem:[%s2 + $0x18] sm:$0xff]
    %v36 = vld [vmem:[%s2 + $0x20] sm:$0xff]
    %v37 = vld [vmem:[%s2 + $0x28] sm:$0xff]
    %v38 = vld [vmem:[%s2 + $0x30] sm:$0xff]
    %v39 = vld [vmem:[%s2 + $0x38] sm:$0xff]
    %v40 = vld [vmem:[%s2 + $0x40] sm:$0xff]
    %v41 = vld [vmem:[%s2 + $0x48] sm:$0xff]
    %v42 = vld [vmem:[%s2 + $0x50] sm:$0xf]
    %v43 = vld [vmem:[%s3] sm:$0x1]
    %v45 = vlaneseq
    %v46 = vshrl.u32 %v45, 7
    %v47 = vsub.s32 0, %v46
    %v48 = vrot.slane %v43, %v47
    %vm50 = vcmask 687104
    %v52 = vsel %vm50, %v31, 0
    %vm54 = vcmask 1043456
    %v56 = vsel %vm54, %v42, 0
    %58 = vmatprep.subr.mxu0 0.0
    %59 = vmatpush1.msra.mxu0 0.0
    %60 = vmatprep.subr.mxu0 0.0
    %61 = vmatpush1.msra.mxu0 0.0
    %62 = vmatprep.subr.mxu0 0.0
    %63 = vmatpush1.msra.mxu0 0.0
    %64 = vmatprep.subr.mxu0 0.0
    %65 = vmatpush1.msra.mxu0 0.0
    %66 = vmatprep.subr.mxu0 0.0
    %67 = vmatpush1.msra.mxu0 0.0
    %68 = vmatprep.subr.mxu0 0.0
    %69 = vmatpush1.msra.mxu0 %v56
    %70 = vmatprep.subr.mxu0 0.0
    %71 = vmatpush1.msra.mxu0 %v41
    %72 = vmatprep.subr.mxu0 0.0
    %73 = vmatpush1.msra.mxu0 %v40
    %74 = vmatprep.subr.mxu0 0.0
    %75 = vmatpush1.msra.mxu0 %v39
    %76 = vmatprep.subr.mxu0 0.0
    %77 = vmatpush1.msra.mxu0 %v38
    %78 = vmatprep.subr.mxu0 0.0
    %79 = vmatpush1.msra.mxu0 %v37
    %80 = vmatprep.subr.mxu0 0.0
    %81 = vmatpush1.msra.mxu0 %v36
    %82 = vmatprep.subr.mxu0 0.0
    %83 = vmatpush1.msra.mxu0 %v35
    %84 = vmatprep.subr.mxu0 0.0
    %85 = vmatpush1.msra.mxu0 %v34
    %86 = vmatprep.subr.mxu0 0.0
    %87 = vmatpush1.msra.mxu0 %v33
    %88 = vmatprep.subr.mxu0 0.0
    %89 = vmatpush1.msra.mxu0 %v32
    %90 = vmatprep.subr.mxu0 0.0
    %91 = vmatpush2.msra.mxu0 0.0
    %92 = vmatprep.subr.mxu0 0.0
    %93 = vmatpush2.msra.mxu0 0.0
    %94 = vmatprep.subr.mxu0 0.0
    %95 = vmatpush2.msra.mxu0 0.0
    %96 = vmatprep.subr.mxu0 0.0
    %97 = vmatpush2.msra.mxu0 0.0
    %98 = vmatprep.subr.mxu0 0.0
    %99 = vmatpush2.msra.mxu0 0.0
    %100 = vmatprep.subr.mxu0 0.0
    %101 = vmatpush2.msra.mxu0 0.0
    %102 = vmatprep.subr.mxu0 0.0
    %103 = vmatpush2.msra.mxu0 0.0
    %104 = vmatprep.subr.mxu0 0.0
    %105 = vmatpush2.msra.mxu0 0.0
    %106 = vmatprep.subr.mxu0 0.0
    %107 = vmatpush2.msra.mxu0 0.0
    %108 = vmatprep.subr.mxu0 0.0
    %109 = vmatpush2.msra.mxu0 0.0
    %110 = vmatprep.subr.mxu0 0.0
    %111 = vmatpush2.msra.mxu0 0.0
    %112 = vmatprep.subr.mxu0 0.0
    %113 = vmatpush2.msra.mxu0 0.0
    %114 = vmatprep.subr.mxu0 0.0
    %115 = vmatpush2.msra.mxu0 0.0
    %116 = vmatprep.subr.mxu0 0.0
    %117 = vmatpush2.msra.mxu0 0.0
    %118 = vmatprep.subr.mxu0 0.0
    %119 = vmatpush2.msra.mxu0 0.0
    %120 = vmatprep.subr.mxu0 0.0
    %121 = vmatpush2.msra.mxu0 0.0
    %122 = vmatprep.mubr.f32.mxu0 0.0
    %123 = vmatmul.mubr.f32.gmra.mxu0 %v52
    %v124 = vpop.f32.mrf.mxu0
    %v125 = vadd.f32 %v48, %v124
    %v126 = vpop.f32.mrf.mxu0
    %127 = vdwg.mxu0
    %vm128 = vcmask 50176
    %v129 = vsel %vm128, %v125, -inf
    %130 = vmax.xlane.f32.xlu0 %v129
    %v131 = vpop.xlane.xlu0 %130
    %v132 = vsub.f32 %v125, %v131
    %v133 = vmul.f32 %v132, 1.442695
    %v134 = vpow.pop %v133
    %v135 = vsel %vm128, %v134, 0.0
    %136 = vadd.xlane.f32.xlu0 %v135
    %v137 = vpop.xlane.xlu0 %136
    %v138 = vlog2.pop %v137
    %v139 = vmul.f32 %v138, 0.6931472
    %v140 = vsub.f32 %v132, %v139
    %141 = vst.msk [vmem:[#allocation2] sm:$0x3] %vm128, %v140
    // Predicated region
    $region18: #{forward.9} parent=1 // pred_check
      _
    $region19: #{forward.9} parent=1 // pred_check_branch
      %143 = sbr.rel (0) target = $region21
    $region20: #{forward.9} parent=1 // pred_region
      %s145 = ssub.s32 32, 32
      %146 = vsyncadd [#allocation3], %s145
      %s148 = sshll.u32 [#allocation2], 4
      %s149 = int_to_ptr.vmem [resolvable:$true] %s148
      %151 = dma.vmem_to_hbm [thread:$0]  %s149, 32, %s4, [#allocation3]
    $region21: #{forward.9} parent=1 // pred_fallthru
      _
    // Predicated region
    $region22: #{forward.9} parent=1 // pred_check
      _
    $region23: #{forward.9} parent=1 // pred_check_branch
      %153 = sbr.rel (0) target = $region25
    $region24: #{forward.9} parent=1 // pred_region
      %154 = dma.done [#allocation3], 32
    $region25: #{forward.9} parent=1 // pred_fallthru
      _
    %155 = vsyncpa [#allocation3], 1

// kernel: forward.8
$region0: #{forward.8}
  #allocation0 [shape = 'u32[]', space=smem, size = 0x4, offset = 0x4, fixed_abs, tag = 'smem constant byte address 0x4 - core index']
  #allocation1 [shape = 'u32[144,128]{1,0:T(1,128)}', space=vmem, size = 0x12000, scoped, tag = 'internal scratch']
  %s0 = inlined_call_operand.vmem [shape: f32[2,2048], index: 0, kind: input, shape index: {}]
  %s1 = inlined_call_operand.vmem [shape: bf16[2048,84], index: 1, kind: input, shape index: {}]
  %s2 = inlined_call_operand.vmem [shape: f32[2,2,84], index: 2, kind: output, shape index: {}]
  %s3 = sld [smem:[#allocation0]]
  $region45: #{forward.8} parent=0
    _
  %s5 = ssub.s32 1, %s3
  %s6 = scalar_select 0, %s5, %s3
  loop: start=0, step=1, limit=4
  $region2: #{forward.8} parent=0 // loop_pre_header
    _
  $region3: #{forward.8} parent=0 // loop_header
    %s8 = sphi 0, %s12
    %p9 = scmp.ge.s32.totalorder %s8, 4
    %s15 = sphi 0, %s27
    %s16 = sphi 0, %s23
    %s17 = sphi 0, %s15
    %s18 = sphi 0, %s16
    %s19 = sphi 0, %s17
    %s20 = sphi 0, %s18
    %s32 = sphi 0, %s34
    %s35 = sphi 0, %s32
    %s36 = sphi 0, %s35
    %s52 = sphi 0, %s36
    %s60 = sphi 0, %s62
    %s63 = sphi 0, %s60
    %s64 = sphi 0, %s63
    %s80 = sphi 0, %s64
    %s86 = sphi 0, %s88
    %s89 = sphi 0, %s86
    %s90 = sphi 0, %s89
    %s106 = sphi 0, %s90
  $region4: #{forward.8} parent=0 // loop_header_branch
    %11 = sbr.rel (%p9) target = $region8
  $region5: #{forward.8} parent=0 // loop_body
    %s13 = ssub.s32 %s8, 1
    %s14 = ssub.s32 %s8, 2
    %s21 = sadd.s32 1, %s16
    %p22 = scmp.ge.s32.totalorder %s21, 1
    %s23 = scalar_select %p22, 0, %s21
    %s24 = sadd.s32 1, %s15
    %s25 = scalar_select %p22, %s24, %s15
    %p26 = scmp.ge.s32.totalorder %s25, 2
    %s27 = scalar_select %p26, 0, %s25
    %s28 = sadd.s32 %s15, %s16
    %s29 = sadd.s32 %s27, %s23
    %s30 = ssub.s32 %s28, %s29
    %p31 = scmp.eq.s32.totalorder %s30, 0
    %s33 = sadd.s32 %s32, 1
    %s34 = scalar_select %p31, %s32, %s33
    %p37 = pneg %p31
    %p38 = scmp.eq.s32.totalorder %s8, 1
    %p39 = por %p37, %p38
    %p40 = scmp.ne.s32.totalorder %s32, %s35
    %p41 = scmp.eq.s32.totalorder %s8, 0
    %p42 = por %p40, %p41
    %p43 = scmp.ne.s32.totalorder %s32, %s35
    %p44 = scmp.eq.s32.totalorder %s13, 1
    %p45 = por %p43, %p44
    %p46 = scmp.ne.s32.totalorder %s35, %s36
    %p47 = scmp.eq.s32.totalorder %s13, 0
    %p48 = por %p46, %p47
    %p49 = scmp.ne.s32.totalorder %s35, %s36
    %p50 = scmp.eq.s32.totalorder %s14, 1
    %p51 = por %p49, %p50
    %p53 = scmp.ne.s32.totalorder %s36, %s52
    %p54 = scmp.eq.s32.totalorder %s14, 0
    %p55 = por %p53, %p54
    %s56 = sadd.s32 %s15, %s16
    %s57 = sadd.s32 %s27, %s23
    %s58 = ssub.s32 %s56, %s57
    %p59 = scmp.eq.s32.totalorder %s58, 0
    %s61 = sadd.s32 %s60, 1
    %s62 = scalar_select %p59, %s60, %s61
    %p65 = pneg %p59
    %p66 = scmp.eq.s32.totalorder %s8, 1
    %p67 = por %p65, %p66
    %p68 = scmp.ne.s32.totalorder %s60, %s63
    %p69 = scmp.eq.s32.totalorder %s8, 0
    %p70 = por %p68, %p69
    %p71 = scmp.ne.s32.totalorder %s60, %s63
    %p72 = scmp.eq.s32.totalorder %s13, 1
    %p73 = por %p71, %p72
    %p74 = scmp.ne.s32.totalorder %s63, %s64
    %p75 = scmp.eq.s32.totalorder %s13, 0
    %p76 = por %p74, %p75
    %p77 = scmp.ne.s32.totalorder %s63, %s64
    %p78 = scmp.eq.s32.totalorder %s14, 1
    %p79 = por %p77, %p78
    %p81 = scmp.ne.s32.totalorder %s64, %s80
    %p82 = scmp.eq.s32.totalorder %s14, 0
    %p83 = por %p81, %p82
    %s84 = ssub.s32 %s15, %s27
    %p85 = scmp.eq.s32.totalorder %s84, 0
    %s87 = sadd.s32 %s86, 1
    %s88 = scalar_select %p85, %s86, %s87
    %p91 = pneg %p85
    %p92 = scmp.eq.s32.totalorder %s8, 1
    %p93 = por %p91, %p92
    %p94 = scmp.ne.s32.totalorder %s86, %s89
    %p95 = scmp.eq.s32.totalorder %s8, 0
    %p96 = por %p94, %p95
    %p97 = scmp.ne.s32.totalorder %s86, %s89
    %p98 = scmp.eq.s32.totalorder %s13, 1
    %p99 = por %p97, %p98
    %p100 = scmp.ne.s32.totalorder %s89, %s90
    %p101 = scmp.eq.s32.totalorder %s13, 0
    %p102 = por %p100, %p101
    %p103 = scmp.ne.s32.totalorder %s89, %s90
    %p104 = scmp.eq.s32.totalorder %s14, 1
    %p105 = por %p103, %p104
    %p107 = scmp.ne.s32.totalorder %s90, %s106
    %p108 = scmp.eq.s32.totalorder %s14, 0
    %p109 = por %p107, %p108
    %p110 = scmp.le.s32.totalorder 1, %s8
    %p111 = scmp.lt.s32.totalorder %s8, 3
    %p112 = pnand %p110, %p111
    %p113 = pneg %p112
    // Predicated region
    $region9: #{forward.8} parent=5 // pred_check
      _
    $region10: #{forward.8} parent=5 // pred_check_branch
      %115 = sbr.rel (%p112) target = $region12
    $region11: #{forward.8} parent=5 // pred_region
      %s116 = ssub.s32 %s8, 1
    $region12: #{forward.8} parent=5 // pred_fallthru
      _
    %p117 = scmp.lt.s32.totalorder %s8, 2
    // Predicated region
    $region13: #{forward.8} parent=5 // pred_check
      %p118 = pneg %p117
    $region14: #{forward.8} parent=5 // pred_check_branch
      %120 = sbr.rel (%p118) target = $region16
    $region15: #{forward.8} parent=5 // pred_region
      // Predicated region
      $region17: #{forward.8} parent=15 // pred_check
        %p121 = pneg %p42
      $region18: #{forward.8} parent=15 // pred_check_branch
        %123 = sbr.rel (%p121) target = $region20
      $region19: #{forward.8} parent=15 // pred_region
        %s124 = sadd.s32 %s15, %s16
        %s125 = smul.u32 8, %s124
        %p126 = scmp.lt.s32.totalorder %s125, 15
        %s127 = scalar_select %p126, %s125, 15
        %s128 = smul.addr %s127, 2
        %s129 = scalar_lea.vmem %s0, %s128
        %s130 = sadd.s32 %s15, %s16
        %s131 = smul.u32 8, %s130
      $region20: #{forward.8} parent=15 // pred_fallthru
        _
      // Predicated region
      $region21: #{forward.8} parent=15 // pred_check
        %p132 = pneg %p70
      $region22: #{forward.8} parent=15 // pred_check_branch
        %134 = sbr.rel (%p132) target = $region24
      $region23: #{forward.8} parent=15 // pred_region
        %s135 = sadd.s32 %s15, %s16
        %s136 = smul.u32 128, %s135
        %p137 = scmp.lt.s32.totalorder %s136, 255
        %s138 = scalar_select %p137, %s136, 255
        %s139 = smul.addr %s138, 4
        %s140 = scalar_lea.vmem %s1, %s139
        %s141 = sadd.s32 %s15, %s16
        %s142 = smul.u32 128, %s141
      $region24: #{forward.8} parent=15 // pred_fallthru
        _
    $region16: #{forward.8} parent=5 // pred_fallthru
      _
    %p143 = scmp.le.s32.totalorder 1, %s8
    %p144 = scmp.lt.s32.totalorder %s8, 3
    %p145 = pnand %p143, %p144
    %p146 = pneg %p145
    // Predicated region
    $region25: #{forward.8} parent=5 // pred_check
      _
    $region26: #{forward.8} parent=5 // pred_check_branch
      %148 = sbr.rel (%p145) target = $region28
    $region27: #{forward.8} parent=5 // pred_region
      %s149 = ssub.s32 %s8, 1
      %s150 = sadd.s32 %s17, %s18
      %s151 = smul.u32 8, %s150
      %p152 = scmp.lt.s32.totalorder %s151, 15
      %s153 = scalar_select %p152, %s151, 15
      %s154 = smul.addr %s153, 2
      %s155 = scalar_lea.vmem %s0, %s154
      %p156 = pneg %p48
      %p157 = pneg %p45
      %s158 = sadd.s32 %s17, %s18
      %s159 = smul.u32 128, %s158
      %p160 = scmp.lt.s32.totalorder %s159, 255
      %s161 = scalar_select %p160, %s159, 255
      %s162 = smul.addr %s161, 4
      %s163 = scalar_lea.vmem %s1, %s162
      %p164 = pneg %p76
      %p165 = pneg %p73
      %p166 = pneg %p102
      %p167 = pneg %p99
      %p168 = scmp.lt.s32.totalorder %s17, 1
      %s169 = scalar_select %p168, %s17, 1
      %s170 = smul.addr %s169, 2
      %s171 = scalar_lea.vmem %s2, %s170
      %s172 = sadd.s32 %s17, %s18
      %s173 = smul.u32 8, %s172
      %p174 = scmp.lt.s32.totalorder %s173, 15
      %s175 = scalar_select %p174, %s173, 15
      %s176 = smul.addr %s175, 2
      %s177 = scalar_lea.vmem %s0, %s176
      %s178 = sadd.s32 %s17, %s18
      %s179 = smul.u32 8, %s178
      %s180 = sadd.s32 %s17, %s18
      %s181 = smul.u32 128, %s180
      %p182 = scmp.lt.s32.totalorder %s181, 255
      %s183 = scalar_select %p182, %s181, 255
      %s184 = smul.addr %s183, 4
      %s185 = scalar_lea.vmem %s1, %s184
      %s186 = sadd.s32 %s17, %s18
      %s187 = smul.u32 128, %s186
      %p188 = scmp.lt.s32.totalorder %s17, 1
      %s189 = scalar_select %p188, %s17, 1
      %s190 = smul.addr %s189, 2
      %s191 = scalar_lea.vmem %s2, %s190
      %p192 = scmp.eq.s32.totalorder %s18, 0
      // Predicated region
      $region29: #{forward.8} parent=27 // pred_check
        %p193 = pneg %p192
      $region30: #{forward.8} parent=27 // pred_check_branch
        %195 = sbr.rel (%p193) target = $region32
      $region31: #{forward.8} parent=27 // pred_region
        %vm196 = vcmask 680960
        %197 = vst.msk [vmem:[%s191] sm:$0x3] %vm196, 0.0
      $region32: #{forward.8} parent=27 // pred_fallthru
        _
      %v198 = vld [vmem:[%s191] sm:$0x3]
      %v199 = vld [vmem:[%s177] sm:$0xff]
      %v200 = vld [vmem:[%s177 + $0x8] sm:$0xff]
      %v201 = vld [vmem:[%s185] sm:$0xf]
      %v202 = vld [vmem:[%s185 + $0x4] sm:$0xf]
      %v203 = vld [vmem:[%s185 + $0x8] sm:$0xf]
      %v204 = vld [vmem:[%s185 + $0xc] sm:$0xf]
      %v205 = vld [vmem:[%s185 + $0x10] sm:$0xf]
      %v206 = vld [vmem:[%s185 + $0x14] sm:$0xf]
      %v207 = vld [vmem:[%s185 + $0x18] sm:$0xf]
      %v208 = vld [vmem:[%s185 + $0x1c] sm:$0xf]
      %v209 = vld [vmem:[%s185 + $0x20] sm:$0xf]
      %v210 = vld [vmem:[%s185 + $0x24] sm:$0xf]
      %v211 = vld [vmem:[%s185 + $0x28] sm:$0xf]
      %v212 = vld [vmem:[%s185 + $0x2c] sm:$0xf]
      %v213 = vld [vmem:[%s185 + $0x30] sm:$0xf]
      %v214 = vld [vmem:[%s185 + $0x34] sm:$0xf]
      %v215 = vld [vmem:[%s185 + $0x38] sm:$0xf]
      %v216 = vld [vmem:[%s185 + $0x3c] sm:$0xf]
      %v217 = vld [vmem:[%s185 + $0x40] sm:$0xf]
      %v218 = vld [vmem:[%s185 + $0x44] sm:$0xf]
      %v219 = vld [vmem:[%s185 + $0x48] sm:$0xf]
      %v220 = vld [vmem:[%s185 + $0x4c] sm:$0xf]
      %v221 = vld [vmem:[%s185 + $0x50] sm:$0xf]
      %v222 = vld [vmem:[%s185 + $0x54] sm:$0xf]
      %v223 = vld [vmem:[%s185 + $0x58] sm:$0xf]
      %v224 = vld [vmem:[%s185 + $0x5c] sm:$0xf]
      %v225 = vld [vmem:[%s185 + $0x60] sm:$0xf]
      %v226 = vld [vmem:[%s185 + $0x64] sm:$0xf]
      %v227 = vld [vmem:[%s185 + $0x68] sm:$0xf]
      %v228 = vld [vmem:[%s185 + $0x6c] sm:$0xf]
      %v229 = vld [vmem:[%s185 + $0x70] sm:$0xf]
      %v230 = vld [vmem:[%s185 + $0x74] sm:$0xf]
      %v231 = vld [vmem:[%s185 + $0x78] sm:$0xf]
      %v232 = vld [vmem:[%s185 + $0x7c] sm:$0xf]
      %v233 = vld [vmem:[%s185 + $0x80] sm:$0xf]
      %v234 = vld [vmem:[%s185 + $0x84] sm:$0xf]
      %v235 = vld [vmem:[%s185 + $0x88] sm:$0xf]
      %v236 = vld [vmem:[%s185 + $0x8c] sm:$0xf]
      %v237 = vld [vmem:[%s185 + $0x90] sm:$0xf]
      %v238 = vld [vmem:[%s185 + $0x94] sm:$0xf]
      %v239 = vld [vmem:[%s185 + $0x98] sm:$0xf]
      %v240 = vld [vmem:[%s185 + $0x9c] sm:$0xf]
      %v241 = vld [vmem:[%s185 + $0xa0] sm:$0xf]
      %v242 = vld [vmem:[%s185 + $0xa4] sm:$0xf]
      %v243 = vld [vmem:[%s185 + $0xa8] sm:$0xf]
      %v244 = vld [vmem:[%s185 + $0xac] sm:$0xf]
      %v245 = vld [vmem:[%s185 + $0xb0] sm:$0xf]
      %v246 = vld [vmem:[%s185 + $0xb4] sm:$0xf]
      %v247 = vld [vmem:[%s185 + $0xb8] sm:$0xf]
      %v248 = vld [vmem:[%s185 + $0xbc] sm:$0xf]
      %v249 = vld [vmem:[%s185 + $0xc0] sm:$0xf]
      %v250 = vld [vmem:[%s185 + $0xc4] sm:$0xf]
      %v251 = vld [vmem:[%s185 + $0xc8] sm:$0xf]
      %v252 = vld [vmem:[%s185 + $0xcc] sm:$0xf]
      %v253 = vld [vmem:[%s185 + $0xd0] sm:$0xf]
      %v254 = vld [vmem:[%s185 + $0xd4] sm:$0xf]
      %v255 = vld [vmem:[%s185 + $0xd8] sm:$0xf]
      %v256 = vld [vmem:[%s185 + $0xdc] sm:$0xf]
      %v257 = vld [vmem:[%s185 + $0xe0] sm:$0xf]
      %v258 = vld [vmem:[%s185 + $0xe4] sm:$0xf]
      %v259 = vld [vmem:[%s185 + $0xe8] sm:$0xf]
      %v260 = vld [vmem:[%s185 + $0xec] sm:$0xf]
      %v261 = vld [vmem:[%s185 + $0xf0] sm:$0xf]
      %v262 = vld [vmem:[%s185 + $0xf4] sm:$0xf]
      %v263 = vld [vmem:[%s185 + $0xf8] sm:$0xf]
      %v264 = vld [vmem:[%s185 + $0xfc] sm:$0xf]
      %v265 = vld [vmem:[%s185 + $0x100] sm:$0xf]
      %v266 = vld [vmem:[%s185 + $0x104] sm:$0xf]
      %v267 = vld [vmem:[%s185 + $0x108] sm:$0xf]
      %v268 = vld [vmem:[%s185 + $0x10c] sm:$0xf]
      %v269 = vld [vmem:[%s185 + $0x110] sm:$0xf]
      %v270 = vld [vmem:[%s185 + $0x114] sm:$0xf]
      %v271 = vld [vmem:[%s185 + $0x118] sm:$0xf]
      %v272 = vld [vmem:[%s185 + $0x11c] sm:$0xf]
      %v273 = vld [vmem:[%s185 + $0x120] sm:$0xf]
      %v274 = vld [vmem:[%s185 + $0x124] sm:$0xf]
      %v275 = vld [vmem:[%s185 + $0x128] sm:$0xf]
      %v276 = vld [vmem:[%s185 + $0x12c] sm:$0xf]
      %v277 = vld [vmem:[%s185 + $0x130] sm:$0xf]
      %v278 = vld [vmem:[%s185 + $0x134] sm:$0xf]
      %v279 = vld [vmem:[%s185 + $0x138] sm:$0xf]
      %v280 = vld [vmem:[%s185 + $0x13c] sm:$0xf]
      %v281 = vld [vmem:[%s185 + $0x140] sm:$0xf]
      %v282 = vld [vmem:[%s185 + $0x144] sm:$0xf]
      %v283 = vld [vmem:[%s185 + $0x148] sm:$0xf]
      %v284 = vld [vmem:[%s185 + $0x14c] sm:$0xf]
      %v285 = vld [vmem:[%s185 + $0x150] sm:$0xf]
      %v286 = vld [vmem:[%s185 + $0x154] sm:$0xf]
      %v287 = vld [vmem:[%s185 + $0x158] sm:$0xf]
      %v288 = vld [vmem:[%s185 + $0x15c] sm:$0xf]
      %v289 = vld [vmem:[%s185 + $0x160] sm:$0xf]
      %v290 = vld [vmem:[%s185 + $0x164] sm:$0xf]
      %v291 = vld [vmem:[%s185 + $0x168] sm:$0xf]
      %v292 = vld [vmem:[%s185 + $0x16c] sm:$0xf]
      %v293 = vld [vmem:[%s185 + $0x170] sm:$0xf]
      %v294 = vld [vmem:[%s185 + $0x174] sm:$0xf]
      %v295 = vld [vmem:[%s185 + $0x178] sm:$0xf]
      %v296 = vld [vmem:[%s185 + $0x17c] sm:$0xf]
      %v297 = vld [vmem:[%s185 + $0x180] sm:$0xf]
      %v298 = vld [vmem:[%s185 + $0x184] sm:$0xf]
      %v299 = vld [vmem:[%s185 + $0x188] sm:$0xf]
      %v300 = vld [vmem:[%s185 + $0x18c] sm:$0xf]
      %v301 = vld [vmem:[%s185 + $0x190] sm:$0xf]
      %v302 = vld [vmem:[%s185 + $0x194] sm:$0xf]
      %v303 = vld [vmem:[%s185 + $0x198] sm:$0xf]
      %v304 = vld [vmem:[%s185 + $0x19c] sm:$0xf]
      %v305 = vld [vmem:[%s185 + $0x1a0] sm:$0xf]
      %v306 = vld [vmem:[%s185 + $0x1a4] sm:$0xf]
      %v307 = vld [vmem:[%s185 + $0x1a8] sm:$0xf]
      %v308 = vld [vmem:[%s185 + $0x1ac] sm:$0xf]
      %v309 = vld [vmem:[%s185 + $0x1b0] sm:$0xf]
      %v310 = vld [vmem:[%s185 + $0x1b4] sm:$0xf]
      %v311 = vld [vmem:[%s185 + $0x1b8] sm:$0xf]
      %v312 = vld [vmem:[%s185 + $0x1bc] sm:$0xf]
      %v313 = vld [vmem:[%s185 + $0x1c0] sm:$0xf]
      %v314 = vld [vmem:[%s185 + $0x1c4] sm:$0xf]
      %v315 = vld [vmem:[%s185 + $0x1c8] sm:$0xf]
      %v316 = vld [vmem:[%s185 + $0x1cc] sm:$0xf]
      %v317 = vld [vmem:[%s185 + $0x1d0] sm:$0xf]
      %v318 = vld [vmem:[%s185 + $0x1d4] sm:$0xf]
      %v319 = vld [vmem:[%s185 + $0x1d8] sm:$0xf]
      %v320 = vld [vmem:[%s185 + $0x1dc] sm:$0xf]
      %v321 = vld [vmem:[%s185 + $0x1e0] sm:$0xf]
      %v322 = vld [vmem:[%s185 + $0x1e4] sm:$0xf]
      %v323 = vld [vmem:[%s185 + $0x1e8] sm:$0xf]
      %v324 = vld [vmem:[%s185 + $0x1ec] sm:$0xf]
      %v325 = vld [vmem:[%s185 + $0x1f0] sm:$0xf]
      %v326 = vld [vmem:[%s185 + $0x1f4] sm:$0xf]
      %v327 = vld [vmem:[%s185 + $0x1f8] sm:$0xf]
      %v328 = vld [vmem:[%s185 + $0x1fc] sm:$0xf]
      %v329 = vunpack.c.l.bf16 %v201
      %v330 = vunpack.c.l.bf16 %v202
      %v331 = vunpack.c.l.bf16 %v203
      %v332 = vunpack.c.l.bf16 %v204
      %v333 = vunpack.c.l.bf16 %v205
      %v334 = vunpack.c.l.bf16 %v206
      %v335 = vunpack.c.l.bf16 %v207
      %v336 = vunpack.c.l.bf16 %v208
      %v337 = vunpack.c.l.bf16 %v209
      %v338 = vunpack.c.l.bf16 %v210
      %v339 = vunpack.c.l.bf16 %v211
      %v340 = vunpack.c.l.bf16 %v212
      %v341 = vunpack.c.l.bf16 %v213
      %v342 = vunpack.c.l.bf16 %v214
      %v343 = vunpack.c.l.bf16 %v215
      %v344 = vunpack.c.l.bf16 %v216
      %v345 = vunpack.c.l.bf16 %v217
      %v346 = vunpack.c.l.bf16 %v218
      %v347 = vunpack.c.l.bf16 %v219
      %v348 = vunpack.c.l.bf16 %v220
      %v349 = vunpack.c.l.bf16 %v221
      %v350 = vunpack.c.l.bf16 %v222
      %v351 = vunpack.c.l.bf16 %v223
      %v352 = vunpack.c.l.bf16 %v224
      %v353 = vunpack.c.l.bf16 %v225
      %v354 = vunpack.c.l.bf16 %v226
      %v355 = vunpack.c.l.bf16 %v227
      %v356 = vunpack.c.l.bf16 %v228
      %v357 = vunpack.c.l.bf16 %v229
      %v358 = vunpack.c.l.bf16 %v230
      %v359 = vunpack.c.l.bf16 %v231
      %v360 = vunpack.c.l.bf16 %v232
      %v361 = vunpack.c.l.bf16 %v233
      %v362 = vunpack.c.l.bf16 %v234
      %v363 = vunpack.c.l.bf16 %v235
      %v364 = vunpack.c.l.bf16 %v236
      %v365 = vunpack.c.l.bf16 %v237
      %v366 = vunpack.c.l.bf16 %v238
      %v367 = vunpack.c.l.bf16 %v239
      %v368 = vunpack.c.l.bf16 %v240
      %v369 = vunpack.c.l.bf16 %v241
      %v370 = vunpack.c.l.bf16 %v242
      %v371 = vunpack.c.l.bf16 %v243
      %v372 = vunpack.c.l.bf16 %v244
      %v373 = vunpack.c.l.bf16 %v245
      %v374 = vunpack.c.l.bf16 %v246
      %v375 = vunpack.c.l.bf16 %v247
      %v376 = vunpack.c.l.bf16 %v248
      %v377 = vunpack.c.l.bf16 %v249
      %v378 = vunpack.c.l.bf16 %v250
      %v379 = vunpack.c.l.bf16 %v251
      %v380 = vunpack.c.l.bf16 %v252
      %v381 = vunpack.c.l.bf16 %v253
      %v382 = vunpack.c.l.bf16 %v254
      %v383 = vunpack.c.l.bf16 %v255
      %v384 = vunpack.c.l.bf16 %v256
      %v385 = vunpack.c.l.bf16 %v257
      %v386 = vunpack.c.l.bf16 %v258
      %v387 = vunpack.c.l.bf16 %v259
      %v388 = vunpack.c.l.bf16 %v260
      %v389 = vunpack.c.l.bf16 %v261
      %v390 = vunpack.c.l.bf16 %v262
      %v391 = vunpack.c.l.bf16 %v263
      %v392 = vunpack.c.l.bf16 %v264
      %v393 = vunpack.c.l.bf16 %v265
      %v394 = vunpack.c.l.bf16 %v266
      %v395 = vunpack.c.l.bf16 %v267
      %v396 = vunpack.c.l.bf16 %v268
      %v397 = vunpack.c.l.bf16 %v269
      %v398 = vunpack.c.l.bf16 %v270
      %v399 = vunpack.c.l.bf16 %v271
      %v400 = vunpack.c.l.bf16 %v272
      %v401 = vunpack.c.l.bf16 %v273
      %v402 = vunpack.c.l.bf16 %v274
      %v403 = vunpack.c.l.bf16 %v275
      %v404 = vunpack.c.l.bf16 %v276
      %v405 = vunpack.c.l.bf16 %v277
      %v406 = vunpack.c.l.bf16 %v278
      %v407 = vunpack.c.l.bf16 %v279
      %v408 = vunpack.c.l.bf16 %v280
      %v409 = vunpack.c.l.bf16 %v281
      %v410 = vunpack.c.l.bf16 %v282
      %v411 = vunpack.c.l.bf16 %v283
      %v412 = vunpack.c.l.bf16 %v284
      %v413 = vunpack.c.l.bf16 %v285
      %v414 = vunpack.c.l.bf16 %v286
      %v415 = vunpack.c.l.bf16 %v287
      %v416 = vunpack.c.l.bf16 %v288
      %v417 = vunpack.c.l.bf16 %v289
      %v418 = vunpack.c.l.bf16 %v290
      %v419 = vunpack.c.l.bf16 %v291
      %v420 = vunpack.c.l.bf16 %v292
      %v421 = vunpack.c.l.bf16 %v293
      %v422 = vunpack.c.l.bf16 %v294
      %v423 = vunpack.c.l.bf16 %v295
      %v424 = vunpack.c.l.bf16 %v296
      %v425 = vunpack.c.l.bf16 %v297
      %v426 = vunpack.c.l.bf16 %v298
      %v427 = vunpack.c.l.bf16 %v299
      %v428 = vunpack.c.l.bf16 %v300
      %v429 = vunpack.c.l.bf16 %v301
      %v430 = vunpack.c.l.bf16 %v302
      %v431 = vunpack.c.l.bf16 %v303
      %v432 = vunpack.c.l.bf16 %v304
      %v433 = vunpack.c.l.bf16 %v305
      %v434 = vunpack.c.l.bf16 %v306
      %v435 = vunpack.c.l.bf16 %v307
      %v436 = vunpack.c.l.bf16 %v308
      %v437 = vunpack.c.l.bf16 %v309
      %v438 = vunpack.c.l.bf16 %v310
      %v439 = vunpack.c.l.bf16 %v311
      %v440 = vunpack.c.l.bf16 %v312
      %v441 = vunpack.c.l.bf16 %v313
      %v442 = vunpack.c.l.bf16 %v314
      %v443 = vunpack.c.l.bf16 %v315
      %v444 = vunpack.c.l.bf16 %v316
      %v445 = vunpack.c.l.bf16 %v317
      %v446 = vunpack.c.l.bf16 %v318
      %v447 = vunpack.c.l.bf16 %v319
      %v448 = vunpack.c.l.bf16 %v320
      %v449 = vunpack.c.l.bf16 %v321
      %v450 = vunpack.c.l.bf16 %v322
      %v451 = vunpack.c.l.bf16 %v323
      %v452 = vunpack.c.l.bf16 %v324
      %v453 = vunpack.c.l.bf16 %v325
      %v454 = vunpack.c.l.bf16 %v326
      %v455 = vunpack.c.l.bf16 %v327
      %v456 = vunpack.c.l.bf16 %v328
      %v459 = vcombine.high %v199, %v199
      %v461 = vunpack.c.l.s4 1983009808
      %v462 = vunpack.c.0.s8 %v461
      %v463 = vlaneseq
      %v464 = vshrl.u32 %v463, 7
      %v465 = vsub.s32 %v462, %v464
      %v466 = vrot.slane %v199, %v465
      %v468 = vunpack.c.l.s4 1983009808
      %v469 = vunpack.c.0.s8 %v468
      %v470 = vlaneseq
      %v471 = vshrl.u32 %v470, 7
      %v472 = vsub.s32 %v469, %v471
      %v473 = vrot.slane %v459, %v472
      %v474 = vcombine.high %v466, %v466
      %v475 = vcombine.high %v473, %v473
      %v476 = vcombine.high %v200, %v200
      %v478 = vunpack.c.l.s4 1983009808
      %v479 = vunpack.c.0.s8 %v478
      %v480 = vlaneseq
      %v481 = vshrl.u32 %v480, 7
      %v482 = vsub.s32 %v479, %v481
      %v483 = vrot.slane %v200, %v482
      %v485 = vunpack.c.l.s4 1983009808
      %v486 = vunpack.c.0.s8 %v485
      %v487 = vlaneseq
      %v488 = vshrl.u32 %v487, 7
      %v489 = vsub.s32 %v486, %v488
      %v490 = vrot.slane %v476, %v489
      %v491 = vcombine.high %v483, %v483
      %v492 = vcombine.high %v490, %v490
      %501 = vmatprep.subr.mxu0 0.0
      %502 = vmatpush1.msra.mxu0 %v344
      %503 = vmatprep.subr.mxu0 0.0
      %504 = vmatpush1.msra.mxu0 %v343
      %505 = vmatprep.subr.mxu0 0.0
      %506 = vmatpush1.msra.mxu0 %v342
      %507 = vmatprep.subr.mxu0 0.0
      %508 = vmatpush1.msra.mxu0 %v341
      %509 = vmatprep.subr.mxu0 0.0
      %510 = vmatpush1.msra.mxu0 %v340
      %511 = vmatprep.subr.mxu0 0.0
      %512 = vmatpush1.msra.mxu0 %v339
      %513 = vmatprep.subr.mxu0 0.0
      %514 = vmatpush1.msra.mxu0 %v338
      %515 = vmatprep.subr.mxu0 0.0
      %516 = vmatpush1.msra.mxu0 %v337
      %517 = vmatprep.subr.mxu0 0.0
      %518 = vmatpush1.msra.mxu0 %v336
      %519 = vmatprep.subr.mxu0 0.0
      %520 = vmatpush1.msra.mxu0 %v335
      %521 = vmatprep.subr.mxu0 0.0
      %522 = vmatpush1.msra.mxu0 %v334
      %523 = vmatprep.subr.mxu0 0.0
      %524 = vmatpush1.msra.mxu0 %v333
      %525 = vmatprep.subr.mxu0 0.0
      %526 = vmatpush1.msra.mxu0 %v332
      %527 = vmatprep.subr.mxu0 0.0
      %528 = vmatpush1.msra.mxu0 %v331
      %529 = vmatprep.subr.mxu0 0.0
      %530 = vmatpush1.msra.mxu0 %v330
      %531 = vmatprep.subr.mxu0 0.0
      %532 = vmatpush1.msra.mxu0 %v329
      %533 = vmatprep.subr.mxu0 0.0
      %534 = vmatpush2.msra.mxu0 %v360
      %535 = vmatprep.subr.mxu0 0.0
      %536 = vmatpush2.msra.mxu0 %v359
      %537 = vmatprep.subr.mxu0 0.0
      %538 = vmatpush2.msra.mxu0 %v358
      %539 = vmatprep.subr.mxu0 0.0
      %540 = vmatpush2.msra.mxu0 %v357
      %541 = vmatprep.subr.mxu0 0.0
      %542 = vmatpush2.msra.mxu0 %v356
      %543 = vmatprep.subr.mxu0 0.0
      %544 = vmatpush2.msra.mxu0 %v355
      %545 = vmatprep.subr.mxu0 0.0
      %546 = vmatpush2.msra.mxu0 %v354
      %547 = vmatprep.subr.mxu0 0.0
      %548 = vmatpush2.msra.mxu0 %v353
      %549 = vmatprep.subr.mxu0 0.0
      %550 = vmatpush2.msra.mxu0 %v352
      %551 = vmatprep.subr.mxu0 0.0
      %552 = vmatpush2.msra.mxu0 %v351
      %553 = vmatprep.subr.mxu0 0.0
      %554 = vmatpush2.msra.mxu0 %v350
      %555 = vmatprep.subr.mxu0 0.0
      %556 = vmatpush2.msra.mxu0 %v349
      %557 = vmatprep.subr.mxu0 0.0
      %558 = vmatpush2.msra.mxu0 %v348
      %559 = vmatprep.subr.mxu0 0.0
      %560 = vmatpush2.msra.mxu0 %v347
      %561 = vmatprep.subr.mxu0 0.0
      %562 = vmatpush2.msra.mxu0 %v346
      %563 = vmatprep.subr.mxu0 0.0
      %564 = vmatpush2.msra.mxu0 %v345
      %565 = vmatprep.mubr.f32.mxu0 %v474
      %566 = vmatmul.mubr.f32.gmra.mxu0 %v466
      %v567 = vpop.f32.mrf.mxu0
      %v568 = vadd.f32 0.0, %v567
      %v569 = vpop.f32.mrf.mxu0
      %570 = vdwg.mxu0
      %571 = vmatprep.subr.mxu0 0.0
      %572 = vmatpush1.msra.mxu0 %v376
      %573 = vmatprep.subr.mxu0 0.0
      %574 = vmatpush1.msra.mxu0 %v375
      %575 = vmatprep.subr.mxu0 0.0
      %576 = vmatpush1.msra.mxu0 %v374
      %577 = vmatprep.subr.mxu0 0.0
      %578 = vmatpush1.msra.mxu0 %v373
      %579 = vmatprep.subr.mxu0 0.0
      %580 = vmatpush1.msra.mxu0 %v372
      %581 = vmatprep.subr.mxu0 0.0
      %582 = vmatpush1.msra.mxu0 %v371
      %583 = vmatprep.subr.mxu0 0.0
      %584 = vmatpush1.msra.mxu0 %v370
      %585 = vmatprep.subr.mxu0 0.0
      %586 = vmatpush1.msra.mxu0 %v369
      %587 = vmatprep.subr.mxu0 0.0
      %588 = vmatpush1.msra.mxu0 %v368
      %589 = vmatprep.subr.mxu0 0.0
      %590 = vmatpush1.msra.mxu0 %v367
      %591 = vmatprep.subr.mxu0 0.0
      %592 = vmatpush1.msra.mxu0 %v366
      %593 = vmatprep.subr.mxu0 0.0
      %594 = vmatpush1.msra.mxu0 %v365
      %595 = vmatprep.subr.mxu0 0.0
      %596 = vmatpush1.msra.mxu0 %v364
      %597 = vmatprep.subr.mxu0 0.0
      %598 = vmatpush1.msra.mxu0 %v363
      %599 = vmatprep.subr.mxu0 0.0
      %600 = vmatpush1.msra.mxu0 %v362
      %601 = vmatprep.subr.mxu0 0.0
      %602 = vmatpush1.msra.mxu0 %v361
      %603 = vmatprep.subr.mxu0 0.0
      %604 = vmatpush2.msra.mxu0 %v392
      %605 = vmatprep.subr.mxu0 0.0
      %606 = vmatpush2.msra.mxu0 %v391
      %607 = vmatprep.subr.mxu0 0.0
      %608 = vmatpush2.msra.mxu0 %v390
      %609 = vmatprep.subr.mxu0 0.0
      %610 = vmatpush2.msra.mxu0 %v389
      %611 = vmatprep.subr.mxu0 0.0
      %612 = vmatpush2.msra.mxu0 %v388
      %613 = vmatprep.subr.mxu0 0.0
      %614 = vmatpush2.msra.mxu0 %v387
      %615 = vmatprep.subr.mxu0 0.0
      %616 = vmatpush2.msra.mxu0 %v386
      %617 = vmatprep.subr.mxu0 0.0
      %618 = vmatpush2.msra.mxu0 %v385
      %619 = vmatprep.subr.mxu0 0.0
      %620 = vmatpush2.msra.mxu0 %v384
      %621 = vmatprep.subr.mxu0 0.0
      %622 = vmatpush2.msra.mxu0 %v383
      %623 = vmatprep.subr.mxu0 0.0
      %624 = vmatpush2.msra.mxu0 %v382
      %625 = vmatprep.subr.mxu0 0.0
      %626 = vmatpush2.msra.mxu0 %v381
      %627 = vmatprep.subr.mxu0 0.0
      %628 = vmatpush2.msra.mxu0 %v380
      %629 = vmatprep.subr.mxu0 0.0
      %630 = vmatpush2.msra.mxu0 %v379
      %631 = vmatprep.subr.mxu0 0.0
      %632 = vmatpush2.msra.mxu0 %v378
      %633 = vmatprep.subr.mxu0 0.0
      %634 = vmatpush2.msra.mxu0 %v377
      %635 = vmatprep.mubr.f32.mxu0 %v475
      %636 = vmatmul.mubr.f32.gmra.mxu0 %v473
      %v637 = vpop.f32.mrf.mxu0
      %v638 = vadd.f32 %v568, %v637
      %v639 = vpop.f32.mrf.mxu0
      %640 = vdwg.mxu0
      %641 = vmatprep.subr.mxu0 0.0
      %642 = vmatpush1.msra.mxu0 %v408
      %643 = vmatprep.subr.mxu0 0.0
      %644 = vmatpush1.msra.mxu0 %v407
      %645 = vmatprep.subr.mxu0 0.0
      %646 = vmatpush1.msra.mxu0 %v406
      %647 = vmatprep.subr.mxu0 0.0
      %648 = vmatpush1.msra.mxu0 %v405
      %649 = vmatprep.subr.mxu0 0.0
      %650 = vmatpush1.msra.mxu0 %v404
      %651 = vmatprep.subr.mxu0 0.0
      %652 = vmatpush1.msra.mxu0 %v403
      %653 = vmatprep.subr.mxu0 0.0
      %654 = vmatpush1.msra.mxu0 %v402
      %655 = vmatprep.subr.mxu0 0.0
      %656 = vmatpush1.msra.mxu0 %v401
      %657 = vmatprep.subr.mxu0 0.0
      %658 = vmatpush1.msra.mxu0 %v400
      %659 = vmatprep.subr.mxu0 0.0
      %660 = vmatpush1.msra.mxu0 %v399
      %661 = vmatprep.subr.mxu0 0.0
      %662 = vmatpush1.msra.mxu0 %v398
      %663 = vmatprep.subr.mxu0 0.0
      %664 = vmatpush1.msra.mxu0 %v397
      %665 = vmatprep.subr.mxu0 0.0
      %666 = vmatpush1.msra.mxu0 %v396
      %667 = vmatprep.subr.mxu0 0.0
      %668 = vmatpush1.msra.mxu0 %v395
      %669 = vmatprep.subr.mxu0 0.0
      %670 = vmatpush1.msra.mxu0 %v394
      %671 = vmatprep.subr.mxu0 0.0
      %672 = vmatpush1.msra.mxu0 %v393
      %673 = vmatprep.subr.mxu0 0.0
      %674 = vmatpush2.msra.mxu0 %v424
      %675 = vmatprep.subr.mxu0 0.0
      %676 = vmatpush2.msra.mxu0 %v423
      %677 = vmatprep.subr.mxu0 0.0
      %678 = vmatpush2.msra.mxu0 %v422
      %679 = vmatprep.subr.mxu0 0.0
      %680 = vmatpush2.msra.mxu0 %v421
      %681 = vmatprep.subr.mxu0 0.0
      %682 = vmatpush2.msra.mxu0 %v420
      %683 = vmatprep.subr.mxu0 0.0
      %684 = vmatpush2.msra.mxu0 %v419
      %685 = vmatprep.subr.mxu0 0.0
      %686 = vmatpush2.msra.mxu0 %v418
      %687 = vmatprep.subr.mxu0 0.0
      %688 = vmatpush2.msra.mxu0 %v417
      %689 = vmatprep.subr.mxu0 0.0
      %690 = vmatpush2.msra.mxu0 %v416
      %691 = vmatprep.subr.mxu0 0.0
      %692 = vmatpush2.msra.mxu0 %v415
      %693 = vmatprep.subr.mxu0 0.0
      %694 = vmatpush2.msra.mxu0 %v414
      %695 = vmatprep.subr.mxu0 0.0
      %696 = vmatpush2.msra.mxu0 %v413
      %697 = vmatprep.subr.mxu0 0.0
      %698 = vmatpush2.msra.mxu0 %v412
      %699 = vmatprep.subr.mxu0 0.0
      %700 = vmatpush2.msra.mxu0 %v411
      %701 = vmatprep.subr.mxu0 0.0
      %702 = vmatpush2.msra.mxu0 %v410
      %703 = vmatprep.subr.mxu0 0.0
      %704 = vmatpush2.msra.mxu0 %v409
      %705 = vmatprep.mubr.f32.mxu0 %v491
      %706 = vmatmul.mubr.f32.gmra.mxu0 %v483
      %v707 = vpop.f32.mrf.mxu0
      %v708 = vadd.f32 %v638, %v707
      %v709 = vpop.f32.mrf.mxu0
      %710 = vdwg.mxu0
      %711 = vmatprep.subr.mxu0 0.0
      %712 = vmatpush1.msra.mxu0 %v440
      %713 = vmatprep.subr.mxu0 0.0
      %714 = vmatpush1.msra.mxu0 %v439
      %715 = vmatprep.subr.mxu0 0.0
      %716 = vmatpush1.msra.mxu0 %v438
      %717 = vmatprep.subr.mxu0 0.0
      %718 = vmatpush1.msra.mxu0 %v437
      %719 = vmatprep.subr.mxu0 0.0
      %720 = vmatpush1.msra.mxu0 %v436
      %721 = vmatprep.subr.mxu0 0.0
      %722 = vmatpush1.msra.mxu0 %v435
      %723 = vmatprep.subr.mxu0 0.0
      %724 = vmatpush1.msra.mxu0 %v434
      %725 = vmatprep.subr.mxu0 0.0
      %726 = vmatpush1.msra.mxu0 %v433
      %727 = vmatprep.subr.mxu0 0.0
      %728 = vmatpush1.msra.mxu0 %v432
      %729 = vmatprep.subr.mxu0 0.0
      %730 = vmatpush1.msra.mxu0 %v431
      %731 = vmatprep.subr.mxu0 0.0
      %732 = vmatpush1.msra.mxu0 %v430
      %733 = vmatprep.subr.mxu0 0.0
      %734 = vmatpush1.msra.mxu0 %v429
      %735 = vmatprep.subr.mxu0 0.0
      %736 = vmatpush1.msra.mxu0 %v428
      %737 = vmatprep.subr.mxu0 0.0
      %738 = vmatpush1.msra.mxu0 %v427
      %739 = vmatprep.subr.mxu0 0.0
      %740 = vmatpush1.msra.mxu0 %v426
      %741 = vmatprep.subr.mxu0 0.0
      %742 = vmatpush1.msra.mxu0 %v425
      %743 = vmatprep.subr.mxu0 0.0
      %744 = vmatpush2.msra.mxu0 %v456
      %745 = vmatprep.subr.mxu0 0.0
      %746 = vmatpush2.msra.mxu0 %v455
      %747 = vmatprep.subr.mxu0 0.0
      %748 = vmatpush2.msra.mxu0 %v454
      %749 = vmatprep.subr.mxu0 0.0
      %750 = vmatpush2.msra.mxu0 %v453
      %751 = vmatprep.subr.mxu0 0.0
      %752 = vmatpush2.msra.mxu0 %v452
      %753 = vmatprep.subr.mxu0 0.0
      %754 = vmatpush2.msra.mxu0 %v451
      %755 = vmatprep.subr.mxu0 0.0
      %756 = vmatpush2.msra.mxu0 %v450
      %757 = vmatprep.subr.mxu0 0.0
      %758 = vmatpush2.msra.mxu0 %v449
      %759 = vmatprep.subr.mxu0 0.0
      %760 = vmatpush2.msra.mxu0 %v448
      %761 = vmatprep.subr.mxu0 0.0
      %762 = vmatpush2.msra.mxu0 %v447
      %763 = vmatprep.subr.mxu0 0.0
      %764 = vmatpush2.msra.mxu0 %v446
      %765 = vmatprep.subr.mxu0 0.0
      %766 = vmatpush2.msra.mxu0 %v445
      %767 = vmatprep.subr.mxu0 0.0
      %768 = vmatpush2.msra.mxu0 %v444
      %769 = vmatprep.subr.mxu0 0.0
      %770 = vmatpush2.msra.mxu0 %v443
      %771 = vmatprep.subr.mxu0 0.0
      %772 = vmatpush2.msra.mxu0 %v442
      %773 = vmatprep.subr.mxu0 0.0
      %774 = vmatpush2.msra.mxu0 %v441
      %775 = vmatprep.mubr.f32.mxu0 %v492
      %776 = vmatmul.mubr.f32.gmra.mxu0 %v490
      %v777 = vpop.f32.mrf.mxu0
      %v778 = vadd.f32 %v708, %v777
      %v779 = vpop.f32.mrf.mxu0
      %780 = vdwg.mxu0
      %v781 = vadd.f32 %v198, %v778
      %vm782 = vcmask 680960
      %783 = vst.msk [vmem:[%s191] sm:$0x3] %vm782, %v781
      %p784 = scmp.lt.s32.totalorder %s17, 1
      %s785 = scalar_select %p784, %s17, 1
      %s786 = smul.addr %s785, 2
      %s787 = scalar_lea.vmem %s2, %s786
      // Predicated region
      $region33: #{forward.8} parent=27 // pred_check
        %p788 = pneg %p99
      $region34: #{forward.8} parent=27 // pred_check_branch
        %790 = sbr.rel (%p788) target = $region36
      $region35: #{forward.8} parent=27 // pred_region
        _
      $region36: #{forward.8} parent=27 // pred_fallthru
        _
    $region28: #{forward.8} parent=5 // pred_fallthru
      _
    %p791 = scmp.le.s32.totalorder 2, %s8
    // Predicated region
    $region37: #{forward.8} parent=5 // pred_check
      %p792 = pneg %p791
    $region38: #{forward.8} parent=5 // pred_check_branch
      %794 = sbr.rel (%p792) target = $region40
    $region39: #{forward.8} parent=5 // pred_region
      %s795 = ssub.s32 %s8, 2
      // Predicated region
      $region41: #{forward.8} parent=39 // pred_check
        %p796 = pneg %p105
      $region42: #{forward.8} parent=39 // pred_check_branch
        %798 = sbr.rel (%p796) target = $region44
      $region43: #{forward.8} parent=39 // pred_region
        %p799 = scmp.lt.s32.totalorder %s19, 1
        %s800 = scalar_select %p799, %s19, 1
        %s801 = smul.addr %s800, 2
        %s802 = scalar_lea.vmem %s2, %s801
      $region44: #{forward.8} parent=39 // pred_fallthru
        _
    $region40: #{forward.8} parent=5 // pred_fallthru
      _
  $region6: #{forward.8} parent=0 // loop_footer
    %s12 = sadd.s32 1, %s8
  $region7: #{forward.8} parent=0 // loop_footer_branch
    %7 = sbr.rel target = $region3
  $region8: #{forward.8} parent=0 // loop_exit
    _

// kernel: forward.5
$region0: #{forward.5}
  #allocation0 [shape = 'u32[]', space=smem, size = 0x4, offset = 0x4, fixed_abs, tag = 'smem constant byte address 0x4 - core index']
  #allocation1 [shape = 'u32[144,128]{1,0:T(1,128)}', space=vmem, size = 0x12000, scoped, tag = 'internal scratch']
  #allocation2 [shape = 'f32[1,20,20]{2,1,0:T(8,128)}', space=vmem, size = 0x3000, scoped, tag = 'scratch operand']
  %s0 = inlined_call_operand.vmem [shape: f32[2,16,16], index: 0, kind: input, shape index: {}]
  %s1 = inlined_call_operand.vmem [shape: f32[25,6], index: 1, kind: input, shape index: {}]
  %s2 = inlined_call_operand.vmem [shape: f32[6], index: 2, kind: input, shape index: {}]
  %s3 = inlined_call_operand.vmem [shape: f32[2,6,8,8], index: 3, kind: output, shape index: {}]
  %s4 = sld [smem:[#allocation0]]
  $region53: #{forward.5} parent=0
    _
  %s6 = ssub.s32 1, %s4
  %s7 = scalar_select 0, %s6, %s4
  $region1: #{forward.5} parent=0
    #allocation3 [shape = 'u8[16384]{0}', space=smem, size = 0x4000, scoped, tag = 'input window, operand 1, single buffered']
    #allocation4 [shape = 's32[2]{0}', space=sflag, size = 0x8, scoped, tag = 'scoped memory for forward.5']
    #allocation5 [shape = 'u8[512]{0}', space=smem, size = 0x200, scoped, tag = 'input window, operand 2, single buffered']
    #allocation6 [shape = 's32[1]{0}', space=sflag, size = 0x4, scoped, tag = 'scoped memory for forward.5']
    %8 = vsyncpa [#allocation4], 0
    %9 = vsyncpa [#allocation6], 0
    loop: start=0, step=1, limit=4
    $region2: #{forward.5} parent=1 // loop_pre_header
      _
    $region3: #{forward.5} parent=1 // loop_header
      %s11 = sphi 0, %s15
      %p12 = scmp.ge.s32.totalorder %s11, 4
      %s21 = sphi 0, %s23
      %s24 = sphi 0, %s21
      %s25 = sphi 0, %s24
      %s41 = sphi 0, %s25
      %s45 = sphi 0, %s45
      %s47 = sphi 0, %s45
      %s48 = sphi 0, %s47
      %s62 = sphi 0, %s48
      %s66 = sphi 0, %s66
      %s68 = sphi 0, %s66
      %s69 = sphi 0, %s68
      %s83 = sphi 0, %s69
      %s89 = sphi 0, %s91
      %s92 = sphi 0, %s89
      %s93 = sphi 0, %s92
      %s109 = sphi 0, %s93
    $region4: #{forward.5} parent=1 // loop_header_branch
      %14 = sbr.rel (%p12) target = $region8
    $region5: #{forward.5} parent=1 // loop_body
      %s16 = ssub.s32 %s11, 1
      %s17 = ssub.s32 %s11, 2
      %s18 = sadd.s32 %s11, 1
      %s19 = ssub.s32 %s11, %s18
      %p20 = scmp.eq.s32.totalorder %s19, 0
      %s22 = sadd.s32 %s21, 1
      %s23 = scalar_select %p20, %s21, %s22
      %p26 = pneg %p20
      %p27 = scmp.eq.s32.totalorder %s11, 1
      %p28 = por %p26, %p27
      %p29 = scmp.ne.s32.totalorder %s21, %s24
      %p30 = scmp.eq.s32.totalorder %s11, 0
      %p31 = por %p29, %p30
      %p32 = scmp.ne.s32.totalorder %s21, %s24
      %p33 = scmp.eq.s32.totalorder %s16, 1
      %p34 = por %p32, %p33
      %p35 = scmp.ne.s32.totalorder %s24, %s25
      %p36 = scmp.eq.s32.totalorder %s16, 0
      %p37 = por %p35, %p36
      %p38 = scmp.ne.s32.totalorder %s24, %s25
      %p39 = scmp.eq.s32.totalorder %s17, 1
      %p40 = por %p38, %p39
      %p42 = scmp.ne.s32.totalorder %s25, %s41
      %p43 = scmp.eq.s32.totalorder %s17, 0
      %p44 = por %p42, %p43
      %s46 = sadd.s32 %s45, 1
      %p49 = scmp.eq.s32.totalorder %s11, 1
      %p50 = scmp.ne.s32.totalorder %s45, %s47
      %p51 = scmp.eq.s32.totalorder %s11, 0
      %p52 = por %p50, %p51
      %p53 = scmp.ne.s32.totalorder %s45, %s47
      %p54 = scmp.eq.s32.totalorder %s16, 1
      %p55 = por %p53, %p54
      %p56 = scmp.ne.s32.totalorder %s47, %s48
      %p57 = scmp.eq.s32.totalorder %s16, 0
      %p58 = por %p56, %p57
      %p59 = scmp.ne.s32.totalorder %s47, %s48
      %p60 = scmp.eq.s32.totalorder %s17, 1
      %p61 = por %p59, %p60
      %p63 = scmp.ne.s32.totalorder %s48, %s62
      %p64 = scmp.eq.s32.totalorder %s17, 0
      %p65 = por %p63, %p64
      %s67 = sadd.s32 %s66, 1
      %p70 = scmp.eq.s32.totalorder %s11, 1
      %p71 = scmp.ne.s32.totalorder %s66, %s68
      %p72 = scmp.eq.s32.totalorder %s11, 0
      %p73 = por %p71, %p72
      %p74 = scmp.ne.s32.totalorder %s66, %s68
      %p75 = scmp.eq.s32.totalorder %s16, 1
      %p76 = por %p74, %p75
      %p77 = scmp.ne.s32.totalorder %s68, %s69
      %p78 = scmp.eq.s32.totalorder %s16, 0
      %p79 = por %p77, %p78
      %p80 = scmp.ne.s32.totalorder %s68, %s69
      %p81 = scmp.eq.s32.totalorder %s17, 1
      %p82 = por %p80, %p81
      %p84 = scmp.ne.s32.totalorder %s69, %s83
      %p85 = scmp.eq.s32.totalorder %s17, 0
      %p86 = por %p84, %p85
      %s87 = ssub.s32 %s11, %s18
      %p88 = scmp.eq.s32.totalorder %s87, 0
      %s90 = sadd.s32 %s89, 1
      %s91 = scalar_select %p88, %s89, %s90
      %p94 = pneg %p88
      %p95 = scmp.eq.s32.totalorder %s11, 1
      %p96 = por %p94, %p95
      %p97 = scmp.ne.s32.totalorder %s89, %s92
      %p98 = scmp.eq.s32.totalorder %s11, 0
      %p99 = por %p97, %p98
      %p100 = scmp.ne.s32.totalorder %s89, %s92
      %p101 = scmp.eq.s32.totalorder %s16, 1
      %p102 = por %p100, %p101
      %p103 = scmp.ne.s32.totalorder %s92, %s93
      %p104 = scmp.eq.s32.totalorder %s16, 0
      %p105 = por %p103, %p104
      %p106 = scmp.ne.s32.totalorder %s92, %s93
      %p107 = scmp.eq.s32.totalorder %s17, 1
      %p108 = por %p106, %p107
      %p110 = scmp.ne.s32.totalorder %s93, %s109
      %p111 = scmp.eq.s32.totalorder %s17, 0
      %p112 = por %p110, %p111
      %p113 = scmp.le.s32.totalorder 1, %s11
      %p114 = scmp.lt.s32.totalorder %s11, 3
      %p115 = pnand %p113, %p114
      %p116 = pneg %p115
      // Predicated region
      $region9: #{forward.5} parent=5 // pred_check
        _
      $region10: #{forward.5} parent=5 // pred_check_branch
        %118 = sbr.rel (%p115) target = $region12
      $region11: #{forward.5} parent=5 // pred_region
        %s119 = ssub.s32 %s11, 1
        // Predicated region
        $region13: #{forward.5} parent=11 // pred_check
          %p120 = pneg %p58
        $region14: #{forward.5} parent=11 // pred_check_branch
          %122 = sbr.rel (%p120) target = $region16
        $region15: #{forward.5} parent=11 // pred_region
          %s124 = ssub.s32 512, 512
          %125 = vsyncadd [#allocation4], %s124
          %s126 = sshll.u32 %s1, 4
          %s127 = int_to_ptr.vmem [resolvable:$true] %s126
          %132 = dma.vmem_to_smem %s127, 512, [#allocation3], [#allocation4], 128, 128, 8
        $region16: #{forward.5} parent=11 // pred_fallthru
          _
        // Predicated region
        $region17: #{forward.5} parent=11 // pred_check
          %p133 = pneg %p79
        $region18: #{forward.5} parent=11 // pred_check_branch
          %135 = sbr.rel (%p133) target = $region20
        $region19: #{forward.5} parent=11 // pred_region
          %s137 = ssub.s32 16, 16
          %138 = vsyncadd [#allocation6], %s137
          %s140 = sshll.u32 %s2, 4
          %s141 = int_to_ptr.vmem [resolvable:$true] %s140
          %143 = dma.vmem_to_smem %s141, 16, [#allocation5], [#allocation6]
        $region20: #{forward.5} parent=11 // pred_fallthru
          _
      $region12: #{forward.5} parent=5 // pred_fallthru
        _
      %p144 = scmp.lt.s32.totalorder %s11, 2
      // Predicated region
      $region21: #{forward.5} parent=5 // pred_check
        %p145 = pneg %p144
      $region22: #{forward.5} parent=5 // pred_check_branch
        %147 = sbr.rel (%p145) target = $region24
      $region23: #{forward.5} parent=5 // pred_region
        // Predicated region
        $region25: #{forward.5} parent=23 // pred_check
          %p148 = pneg %p31
        $region26: #{forward.5} parent=23 // pred_check_branch
          %150 = sbr.rel (%p148) target = $region28
        $region27: #{forward.5} parent=23 // pred_region
          %p151 = scmp.lt.s32.totalorder %s11, 1
          %s152 = scalar_select %p151, %s11, 1
          %s153 = smul.addr %s152, 2
          %s154 = smul.addr %s153, 8
          %s155 = scalar_lea.vmem %s0, %s154
        $region28: #{forward.5} parent=23 // pred_fallthru
          _
      $region24: #{forward.5} parent=5 // pred_fallthru
        _
      %p156 = scmp.le.s32.totalorder 1, %s11
      %p157 = scmp.lt.s32.totalorder %s11, 3
      %p158 = pnand %p156, %p157
      %p159 = pneg %p158
      // Predicated region
      $region29: #{forward.5} parent=5 // pred_check
        _
      $region30: #{forward.5} parent=5 // pred_check_branch
        %161 = sbr.rel (%p158) target = $region32
      $region31: #{forward.5} parent=5 // pred_region
        %s162 = ssub.s32 %s11, 1
        // Predicated region
        $region33: #{forward.5} parent=31 // pred_check
          %p163 = pneg %p58
        $region34: #{forward.5} parent=31 // pred_check_branch
          %165 = sbr.rel (%p163) target = $region36
        $region35: #{forward.5} parent=31 // pred_region
          %166 = dma.done [#allocation4], 512
        $region36: #{forward.5} parent=31 // pred_fallthru
          _
        // Predicated region
        $region37: #{forward.5} parent=31 // pred_check
          %p167 = pneg %p79
        $region38: #{forward.5} parent=31 // pred_check_branch
          %169 = sbr.rel (%p167) target = $region40
        $region39: #{forward.5} parent=31 // pred_region
          %170 = dma.done [#allocation6], 16
        $region40: #{forward.5} parent=31 // pred_fallthru
          _
        %171 = sfence
        %p172 = scmp.lt.s32.totalorder %s16, 1
        %s173 = scalar_select %p172, %s16, 1
        %s174 = smul.addr %s173, 2
        %s175 = smul.addr %s174, 8
        %s176 = scalar_lea.vmem %s0, %s175
        %p177 = pneg %p37
        %p178 = pneg %p34
        %p179 = pneg %p58
        %p180 = pneg %p55
        %p181 = pneg %p79
        %p182 = pneg %p76
        %p183 = pneg %p105
        %p184 = pneg %p102
        %p185 = scmp.lt.s32.totalorder %s16, 1
        %s186 = scalar_select %p185, %s16, 1
        %s187 = smul.addr %s186, 6
        %s188 = smul.addr %s187, 8
        %s189 = scalar_lea.vmem %s3, %s188
        %p190 = scmp.lt.s32.totalorder %s16, 1
        %s191 = scalar_select %p190, %s16, 1
        %s192 = smul.addr %s191, 2
        %s193 = smul.addr %s192, 8
        %s194 = scalar_lea.vmem %s0, %s193
        %p195 = scmp.lt.s32.totalorder %s16, 1
        %s196 = scalar_select %p195, %s16, 1
        %s197 = smul.addr %s196, 6
        %s198 = smul.addr %s197, 8
        %s199 = scalar_lea.vmem %s3, %s198
        %vm200 = vcmask 156672
        %201 = vst.msk [vmem:[#allocation2] sm:$0x3] %vm200, 0.0
        %202 = vst.msk [vmem:[#allocation2 + $0x12] sm:$0x3] %vm200, 0.0
        %vm203 = vcmask 15360
        %204 = vst.msk [vmem:[#allocation2] sm:$0xff] %vm203, 0.0
        %205 = vst.msk [vmem:[#allocation2 + $0x8] sm:$0xff] %vm203, 0.0
        %vm206 = vcmask 11264
        %207 = vst.msk [vmem:[#allocation2 + $0x10] sm:$0xf] %vm206, 0.0
        %vm208 = vcmask 162960
        %209 = vst.msk [vmem:[#allocation2] sm:$0xff] %vm208, 0.0
        %210 = vst.msk [vmem:[#allocation2 + $0x8] sm:$0xff] %vm208, 0.0
        %vm211 = vcmask 158864
        %212 = vst.msk [vmem:[#allocation2 + $0x10] sm:$0xf] %vm211, 0.0
        %v213 = vld [vmem:[%s194] sm:$0xff]
        %v214 = vld [vmem:[%s194 + $0x8] sm:$0xff]
        %217 = vrot.lane.b32.xlu0 %v213, 2
        %v218 = vpop.permute.xlu0 %217
        %219 = vrot.lane.b32.xlu0 %v214, 2
        %v220 = vpop.permute.xlu0 %219
        %vm223 = vcmask 146448
        %224 = vst.msk [vmem:[#allocation2 + $0x2] sm:$0xff] %vm223, %v218
        %225 = vst.msk [vmem:[#allocation2 + $0xa] sm:$0xff] %vm223, %v220
        %v226 = vld [vmem:[#allocation2] sm:$0xff]
        %v227 = vld [vmem:[#allocation2 + $0x8] sm:$0xff]
        %v228 = vld [vmem:[#allocation2 + $0x10] sm:$0xf]
        %v229 = vlaneseq
        %v230 = vshrl.u32 %v229, 7
        %v231 = vadd.s32 %v230, 8
        %v232 = vlaneseq
        %v233 = vand.u32 %v232, 127
        %v234 = vmul.u32 %v233, 2
        %vm235 = vcmp.eq.s32.totalorder %v230, %v234
        %vm236 = vcmp.eq.s32.totalorder %v231, %v234
        %v237 = vsel %vm235, 1, 0
        %v238 = vsel %vm236, 1, 0
        %v239 = vcvt.s32.f32 %v237
        %v240 = vcvt.s32.f32 %v238
        %v241 = vadd.s32 %v234, 1
        %vm242 = vcmp.eq.s32.totalorder %v230, %v241
        %vm243 = vcmp.eq.s32.totalorder %v231, %v241
        %v244 = vsel %vm242, 1, 0
        %v245 = vsel %vm243, 1, 0
        %v246 = vcvt.s32.f32 %v244
        %v247 = vcvt.s32.f32 %v245
        %s248 = sld [smem:[#allocation3]]
        %v249 = vstv %s248
        %v250 = vmul.f32 %v249, %v226
        %v251 = vmul.f32 %v249, %v227
        %s252 = sld [smem:[#allocation3 + $0x80]]
        %v253 = vstv %s252
        %v254 = vmul.f32 %v253, %v226
        %v255 = vmul.f32 %v253, %v227
        %258 = vrot.lane.b32.xlu0 %v254, 127
        %v259 = vpop.permute.xlu0 %258
        %260 = vrot.lane.b32.xlu0 %v255, 127
        %v261 = vpop.permute.xlu0 %260
        %v264 = vadd.f32 %v250, %v259
        %v265 = vadd.f32 %v251, %v261
        %s266 = sld [smem:[#allocation3 + $0x100]]
        %v267 = vstv %s266
        %v268 = vmul.f32 %v267, %v226
        %v269 = vmul.f32 %v267, %v227
        %272 = vrot.lane.b32.xlu0 %v268, 126
        %v273 = vpop.permute.xlu0 %272
        %274 = vrot.lane.b32.xlu0 %v269, 126
        %v275 = vpop.permute.xlu0 %274
        %v278 = vadd.f32 %v264, %v273
        %v279 = vadd.f32 %v265, %v275
        %s280 = sld [smem:[#allocation3 + $0x180]]
        %v281 = vstv %s280
        %v282 = vmul.f32 %v281, %v226
        %v283 = vmul.f32 %v281, %v227
        %286 = vrot.lane.b32.xlu0 %v282, 125
        %v287 = vpop.permute.xlu0 %286
        %288 = vrot.lane.b32.xlu0 %v283, 125
        %v289 = vpop.permute.xlu0 %288
        %v292 = vadd.f32 %v278, %v287
        %v293 = vadd.f32 %v279, %v289
        %s294 = sld [smem:[#allocation3 + $0x200]]
        %v295 = vstv %s294
        %v296 = vmul.f32 %v295, %v226
        %v297 = vmul.f32 %v295, %v227
        %300 = vrot.lane.b32.xlu0 %v296, 124
        %v301 = vpop.permute.xlu0 %300
        %302 = vrot.lane.b32.xlu0 %v297, 124
        %v303 = vpop.permute.xlu0 %302
        %v306 = vadd.f32 %v292, %v301
        %v307 = vadd.f32 %v293, %v303
        %s308 = sld [smem:[#allocation3 + $0x280]]
        %v309 = vstv %s308
        %v310 = vmul.f32 %v309, %v226
        %v311 = vmul.f32 %v309, %v227
        %v312 = vmul.f32 %v309, %v228
        %vm316 = vcmask 1046528
        %v317 = vrot.slane %v310, 1
        %v318 = vrot.slane %v311, 1
        %v319 = vsel %vm316, %v317, %v318
        %v320 = vrot.slane %v312, 1
        %v321 = vsel %vm316, %v318, %v320
        %v324 = vadd.f32 %v306, %v319
        %v325 = vadd.f32 %v307, %v321
        %s326 = sld [smem:[#allocation3 + $0x300]]
        %v327 = vstv %s326
        %v328 = vmul.f32 %v327, %v226
        %v329 = vmul.f32 %v327, %v227
        %v330 = vmul.f32 %v327, %v228
        %v334 = vrot.slane %v328, 1
        %v335 = vrot.slane %v329, 1
        %v336 = vsel %vm316, %v334, %v335
        %v337 = vrot.slane %v330, 1
        %v338 = vsel %vm316, %v335, %v337
        %339 = vrot.lane.b32.xlu0 %v336, 127
        %v340 = vpop.permute.xlu0 %339
        %341 = vrot.lane.b32.xlu0 %v338, 127
        %v342 = vpop.permute.xlu0 %341
        %v345 = vadd.f32 %v324, %v340
        %v346 = vadd.f32 %v325, %v342
        %s347 = sld [smem:[#allocation3 + $0x380]]
        %v348 = vstv %s347
        %v349 = vmul.f32 %v348, %v226
        %v350 = vmul.f32 %v348, %v227
        %v351 = vmul.f32 %v348, %v228
        %v355 = vrot.slane %v349, 1
        %v356 = vrot.slane %v350, 1
        %v357 = vsel %vm316, %v355, %v356
        %v358 = vrot.slane %v351, 1
        %v359 = vsel %vm316, %v356, %v358
        %360 = vrot.lane.b32.xlu0 %v357, 126
        %v361 = vpop.permute.xlu0 %360
        %362 = vrot.lane.b32.xlu0 %v359, 126
        %v363 = vpop.permute.xlu0 %362
        %v366 = vadd.f32 %v345, %v361
        %v367 = vadd.f32 %v346, %v363
        %s368 = sld [smem:[#allocation3 + $0x400]]
        %v369 = vstv %s368
        %v370 = vmul.f32 %v369, %v226
        %v371 = vmul.f32 %v369, %v227
        %v372 = vmul.f32 %v369, %v228
        %v376 = vrot.slane %v370, 1
        %v377 = vrot.slane %v371, 1
        %v378 = vsel %vm316, %v376, %v377
        %v379 = vrot.slane %v372, 1
        %v380 = vsel %vm316, %v377, %v379
        %381 = vrot.lane.b32.xlu0 %v378, 125
        %v382 = vpop.permute.xlu0 %381
        %383 = vrot.lane.b32.xlu0 %v380, 125
        %v384 = vpop.permute.xlu0 %383
        %v387 = vadd.f32 %v366, %v382
        %v388 = vadd.f32 %v367, %v384
        %s389 = sld [smem:[#allocation3 + $0x480]]
        %v390 = vstv %s389
        %v391 = vmul.f32 %v390, %v226
        %v392 = vmul.f32 %v390, %v227
        %v393 = vmul.f32 %v390, %v228
        %v397 = vrot.slane %v391, 1
        %v398 = vrot.slane %v392, 1
        %v399 = vsel %vm316, %v397, %v398
        %v400 = vrot.slane %v393, 1
        %v401 = vsel %vm316, %v398, %v400
        %402 = vrot.lane.b32.xlu0 %v399, 124
        %v403 = vpop.permute.xlu0 %402
        %404 = vrot.lane.b32.xlu0 %v401, 124
        %v405 = vpop.permute.xlu0 %404
        %v408 = vadd.f32 %v387, %v403
        %v409 = vadd.f32 %v388, %v405
        %s410 = sld [smem:[#allocation3 + $0x500]]
        %v411 = vstv %s410
        %v412 = vmul.f32 %v411, %v226
        %v413 = vmul.f32 %v411, %v227
        %v414 = vmul.f32 %v411, %v228
        %vm418 = vcmask 1045504
        %v419 = vrot.slane %v412, 2
        %v420 = vrot.slane %v413, 2
        %v421 = vsel %vm418, %v419, %v420
        %v422 = vrot.slane %v414, 2
        %v423 = vsel %vm418, %v420, %v422
        %v426 = vadd.f32 %v408, %v421
        %v427 = vadd.f32 %v409, %v423
        %s428 = sld [smem:[#allocation3 + $0x580]]
        %v429 = vstv %s428
        %v430 = vmul.f32 %v429, %v226
        %v431 = vmul.f32 %v429, %v227
        %v432 = vmul.f32 %v429, %v228
        %v436 = vrot.slane %v430, 2
        %v437 = vrot.slane %v431, 2
        %v438 = vsel %vm418, %v436, %v437
        %v439 = vrot.slane %v432, 2
        %v440 = vsel %vm418, %v437, %v439
        %441 = vrot.lane.b32.xlu0 %v438, 127
        %v442 = vpop.permute.xlu0 %441
        %443 = vrot.lane.b32.xlu0 %v440, 127
        %v444 = vpop.permute.xlu0 %443
        %v447 = vadd.f32 %v426, %v442
        %v448 = vadd.f32 %v427, %v444
        %s449 = sld [smem:[#allocation3 + $0x600]]
        %v450 = vstv %s449
        %v451 = vmul.f32 %v450, %v226
        %v452 = vmul.f32 %v450, %v227
        %v453 = vmul.f32 %v450, %v228
        %v457 = vrot.slane %v451, 2
        %v458 = vrot.slane %v452, 2
        %v459 = vsel %vm418, %v457, %v458
        %v460 = vrot.slane %v453, 2
        %v461 = vsel %vm418, %v458, %v460
        %462 = vrot.lane.b32.xlu0 %v459, 126
        %v463 = vpop.permute.xlu0 %462
        %464 = vrot.lane.b32.xlu0 %v461, 126
        %v465 = vpop.permute.xlu0 %464
        %v468 = vadd.f32 %v447, %v463
        %v469 = vadd.f32 %v448, %v465
        %s470 = sld [smem:[#allocation3 + $0x680]]
        %v471 = vstv %s470
        %v472 = vmul.f32 %v471, %v226
        %v473 = vmul.f32 %v471, %v227
        %v474 = vmul.f32 %v471, %v228
        %v478 = vrot.slane %v472, 2
        %v479 = vrot.slane %v473, 2
        %v480 = vsel %vm418, %v478, %v479
        %v481 = vrot.slane %v474, 2
        %v482 = vsel %vm418, %v479, %v481
        %483 = vrot.lane.b32.xlu0 %v480, 125
        %v484 = vpop.permute.xlu0 %483
        %485 = vrot.lane.b32.xlu0 %v482, 125
        %v486 = vpop.permute.xlu0 %485
        %v489 = vadd.f32 %v468, %v484
        %v490 = vadd.f32 %v469, %v486
        %s491 = sld [smem:[#allocation3 + $0x700]]
        %v492 = vstv %s491
        %v493 = vmul.f32 %v492, %v226
        %v494 = vmul.f32 %v492, %v227
        %v495 = vmul.f32 %v492, %v228
        %v499 = vrot.slane %v493, 2
        %v500 = vrot.slane %v494, 2
        %v501 = vsel %vm418, %v499, %v500
        %v502 = vrot.slane %v495, 2
        %v503 = vsel %vm418, %v500, %v502
        %504 = vrot.lane.b32.xlu0 %v501, 124
        %v505 = vpop.permute.xlu0 %504
        %506 = vrot.lane.b32.xlu0 %v503, 124
        %v507 = vpop.permute.xlu0 %506
        %v510 = vadd.f32 %v489, %v505
        %v511 = vadd.f32 %v490, %v507
        %s512 = sld [smem:[#allocation3 + $0x780]]
        %v513 = vstv %s512
        %v514 = vmul.f32 %v513, %v226
        %v515 = vmul.f32 %v513, %v227
        %v516 = vmul.f32 %v513, %v228
        %vm520 = vcmask 1044480
        %v521 = vrot.slane %v514, 3
        %v522 = vrot.slane %v515, 3
        %v523 = vsel %vm520, %v521, %v522
        %v524 = vrot.slane %v516, 3
        %v525 = vsel %vm520, %v522, %v524
        %v528 = vadd.f32 %v510, %v523
        %v529 = vadd.f32 %v511, %v525
        %s530 = sld [smem:[#allocation3 + $0x800]]
        %v531 = vstv %s530
        %v532 = vmul.f32 %v531, %v226
        %v533 = vmul.f32 %v531, %v227
        %v534 = vmul.f32 %v531, %v228
        %v538 = vrot.slane %v532, 3
        %v539 = vrot.slane %v533, 3
        %v540 = vsel %vm520, %v538, %v539
        %v541 = vrot.slane %v534, 3
        %v542 = vsel %vm520, %v539, %v541
        %543 = vrot.lane.b32.xlu0 %v540, 127
        %v544 = vpop.permute.xlu0 %543
        %545 = vrot.lane.b32.xlu0 %v542, 127
        %v546 = vpop.permute.xlu0 %545
        %v549 = vadd.f32 %v528, %v544
        %v550 = vadd.f32 %v529, %v546
        %s551 = sld [smem:[#allocation3 + $0x880]]
        %v552 = vstv %s551
        %v553 = vmul.f32 %v552, %v226
        %v554 = vmul.f32 %v552, %v227
        %v555 = vmul.f32 %v552, %v228
        %v559 = vrot.slane %v553, 3
        %v560 = vrot.slane %v554, 3
        %v561 = vsel %vm520, %v559, %v560
        %v562 = vrot.slane %v555, 3
        %v563 = vsel %vm520, %v560, %v562
        %564 = vrot.lane.b32.xlu0 %v561, 126
        %v565 = vpop.permute.xlu0 %564
        %566 = vrot.lane.b32.xlu0 %v563, 126
        %v567 = vpop.permute.xlu0 %566
        %v570 = vadd.f32 %v549, %v565
        %v571 = vadd.f32 %v550, %v567
        %s572 = sld [smem:[#allocation3 + $0x900]]
        %v573 = vstv %s572
        %v574 = vmul.f32 %v573, %v226
        %v575 = vmul.f32 %v573, %v227
        %v576 = vmul.f32 %v573, %v228
        %v580 = vrot.slane %v574, 3
        %v581 = vrot.slane %v575, 3
        %v582 = vsel %vm520, %v580, %v581
        %v583 = vrot.slane %v576, 3
        %v584 = vsel %vm520, %v581, %v583
        %585 = vrot.lane.b32.xlu0 %v582, 125
        %v586 = vpop.permute.xlu0 %585
        %587 = vrot.lane.b32.xlu0 %v584, 125
        %v588 = vpop.permute.xlu0 %587
        %v591 = vadd.f32 %v570, %v586
        %v592 = vadd.f32 %v571, %v588
        %s593 = sld [smem:[#allocation3 + $0x980]]
        %v594 = vstv %s593
        %v595 = vmul.f32 %v594, %v226
        %v596 = vmul.f32 %v594, %v227
        %v597 = vmul.f32 %v594, %v228
        %v601 = vrot.slane %v595, 3
        %v602 = vrot.slane %v596, 3
        %v603 = vsel %vm520, %v601, %v602
        %v604 = vrot.slane %v597, 3
        %v605 = vsel %vm520, %v602, %v604
        %606 = vrot.lane.b32.xlu0 %v603, 124
        %v607 = vpop.permute.xlu0 %606
        %608 = vrot.lane.b32.xlu0 %v605, 124
        %v609 = vpop.permute.xlu0 %608
        %v612 = vadd.f32 %v591, %v607
        %v613 = vadd.f32 %v592, %v609
        %s614 = sld [smem:[#allocation3 + $0xa00]]
        %v615 = vstv %s614
        %v616 = vmul.f32 %v615, %v226
        %v617 = vmul.f32 %v615, %v227
        %v618 = vmul.f32 %v615, %v228
        %vm622 = vcmask 1043456
        %v623 = vrot.slane %v616, 4
        %v624 = vrot.slane %v617, 4
        %v625 = vsel %vm622, %v623, %v624
        %v626 = vrot.slane %v618, 4
        %v627 = vsel %vm622, %v624, %v626
        %v630 = vadd.f32 %v612, %v625
        %v631 = vadd.f32 %v613, %v627
        %s632 = sld [smem:[#allocation3 + $0xa80]]
        %v633 = vstv %s632
        %v634 = vmul.f32 %v633, %v226
        %v635 = vmul.f32 %v633, %v227
        %v636 = vmul.f32 %v633, %v228
        %v640 = vrot.slane %v634, 4
        %v641 = vrot.slane %v635, 4
        %v642 = vsel %vm622, %v640, %v641
        %v643 = vrot.slane %v636, 4
        %v644 = vsel %vm622, %v641, %v643
        %645 = vrot.lane.b32.xlu0 %v642, 127
        %v646 = vpop.permute.xlu0 %645
        %647 = vrot.lane.b32.xlu0 %v644, 127
        %v648 = vpop.permute.xlu0 %647
        %v651 = vadd.f32 %v630, %v646
        %v652 = vadd.f32 %v631, %v648
        %s653 = sld [smem:[#allocation3 + $0xb00]]
        %v654 = vstv %s653
        %v655 = vmul.f32 %v654, %v226
        %v656 = vmul.f32 %v654, %v227
        %v657 = vmul.f32 %v654, %v228
        %v661 = vrot.slane %v655, 4
        %v662 = vrot.slane %v656, 4
        %v663 = vsel %vm622, %v661, %v662
        %v664 = vrot.slane %v657, 4
        %v665 = vsel %vm622, %v662, %v664
        %666 = vrot.lane.b32.xlu0 %v663, 126
        %v667 = vpop.permute.xlu0 %666
        %668 = vrot.lane.b32.xlu0 %v665, 126
        %v669 = vpop.permute.xlu0 %668
        %v672 = vadd.f32 %v651, %v667
        %v673 = vadd.f32 %v652, %v669
        %s674 = sld [smem:[#allocation3 + $0xb80]]
        %v675 = vstv %s674
        %v676 = vmul.f32 %v675, %v226
        %v677 = vmul.f32 %v675, %v227
        %v678 = vmul.f32 %v675, %v228
        %v682 = vrot.slane %v676, 4
        %v683 = vrot.slane %v677, 4
        %v684 = vsel %vm622, %v682, %v683
        %v685 = vrot.slane %v678, 4
        %v686 = vsel %vm622, %v683, %v685
        %687 = vrot.lane.b32.xlu0 %v684, 125
        %v688 = vpop.permute.xlu0 %687
        %689 = vrot.lane.b32.xlu0 %v686, 125
        %v690 = vpop.permute.xlu0 %689
        %v693 = vadd.f32 %v672, %v688
        %v694 = vadd.f32 %v673, %v690
        %s695 = sld [smem:[#allocation3 + $0xc00]]
        %v696 = vstv %s695
        %v697 = vmul.f32 %v696, %v226
        %v698 = vmul.f32 %v696, %v227
        %v699 = vmul.f32 %v696, %v228
        %v703 = vrot.slane %v697, 4
        %v704 = vrot.slane %v698, 4
        %v705 = vsel %vm622, %v703, %v704
        %v706 = vrot.slane %v699, 4
        %v707 = vsel %vm622, %v704, %v706
        %708 = vrot.lane.b32.xlu0 %v705, 124
        %v709 = vpop.permute.xlu0 %708
        %710 = vrot.lane.b32.xlu0 %v707, 124
        %v711 = vpop.permute.xlu0 %710
        %v714 = vadd.f32 %v693, %v709
        %v715 = vadd.f32 %v694, %v711
        %s716 = sld [smem:[#allocation5]]
        %v717 = vstv %s716
        %v718 = vadd.f32 %v714, %v717
        %v719 = vadd.f32 %v715, %v717
        %v722 = vcombine.high %v718, %v718
        %v724 = vunpack.c.l.s4 1983009808
        %v725 = vunpack.c.0.s8 %v724
        %v726 = vlaneseq
        %v727 = vshrl.u32 %v726, 7
        %v728 = vsub.s32 %v725, %v727
        %v729 = vrot.slane %v718, %v728
        %v731 = vunpack.c.l.s4 1983009808
        %v732 = vunpack.c.0.s8 %v731
        %v733 = vlaneseq
        %v734 = vshrl.u32 %v733, 7
        %v735 = vsub.s32 %v732, %v734
        %v736 = vrot.slane %v722, %v735
        %v737 = vcombine.high %v729, %v729
        %v738 = vcombine.high %v736, %v736
        %v739 = vcombine.high %v719, %v719
        %v741 = vunpack.c.l.s4 1983009808
        %v742 = vunpack.c.0.s8 %v741
        %v743 = vlaneseq
        %v744 = vshrl.u32 %v743, 7
        %v745 = vsub.s32 %v742, %v744
        %v746 = vrot.slane %v719, %v745
        %v748 = vunpack.c.l.s4 1983009808
        %v749 = vunpack.c.0.s8 %v748
        %v750 = vlaneseq
        %v751 = vshrl.u32 %v750, 7
        %v752 = vsub.s32 %v749, %v751
        %v753 = vrot.slane %v739, %v752
        %v754 = vcombine.high %v746, %v746
        %v755 = vcombine.high %v753, %v753
        %v764 = vrot.slane %v729, 7
        %v765 = vrot.slane %v764, 2
        %v766 = vrot.slane %v737, 7
        %v767 = vrot.slane %v766, 2
        %v768 = vrot.slane %v736, 7
        %v769 = vrot.slane %v768, 2
        %v770 = vrot.slane %v738, 7
        %v771 = vrot.slane %v770, 2
        %v772 = vrot.slane %v746, 7
        %v773 = vrot.slane %v772, 2
        %v774 = vrot.slane %v754, 7
        %v775 = vrot.slane %v774, 2
        %v776 = vrot.slane %v753, 7
        %v777 = vrot.slane %v776, 2
        %v778 = vrot.slane %v755, 7
        %v779 = vrot.slane %v778, 2
        %v788 = vmax.f32 %v729, %v765
        %v789 = vmax.f32 %v737, %v767
        %v790 = vmax.f32 %v736, %v769
        %v791 = vmax.f32 %v738, %v771
        %v792 = vmax.f32 %v746, %v773
        %v793 = vmax.f32 %v754, %v775
        %v794 = vmax.f32 %v753, %v777
        %v795 = vmax.f32 %v755, %v779
        %v804 = vlaneseq
        %v805 = vshrl.u32 %v804, 7
        %v806 = vsub.s32 0, %v805
        %v807 = vrot.slane %v788, %v806
        %v808 = vlaneseq
        %v809 = vshrl.u32 %v808, 7
        %v810 = vsub.s32 0, %v809
        %v811 = vrot.slane %v789, %v810
        %v812 = vlaneseq
        %v813 = vshrl.u32 %v812, 7
        %v814 = vsub.s32 0, %v813
        %v815 = vrot.slane %v790, %v814
        %v816 = vlaneseq
        %v817 = vshrl.u32 %v816, 7
        %v818 = vsub.s32 0, %v817
        %v819 = vrot.slane %v791, %v818
        %v820 = vlaneseq
        %v821 = vshrl.u32 %v820, 7
        %v822 = vsub.s32 0, %v821
        %v823 = vrot.slane %v792, %v822
        %v824 = vlaneseq
        %v825 = vshrl.u32 %v824, 7
        %v826 = vsub.s32 0, %v825
        %v827 = vrot.slane %v793, %v826
        %v828 = vlaneseq
        %v829 = vshrl.u32 %v828, 7
        %v830 = vsub.s32 0, %v829
        %v831 = vrot.slane %v794, %v830
        %v832 = vlaneseq
        %v833 = vshrl.u32 %v832, 7
        %v834 = vsub.s32 0, %v833
        %v835 = vrot.slane %v795, %v834
        %vm836 = vcmask 1041409
        %v837 = vsel %vm836, %v811, %v807
        %vm838 = vcmask 1042434
        %v839 = vsel %vm838, %v815, %v837
        %vm840 = vcmask 1043459
        %v841 = vsel %vm840, %v819, %v839
        %vm842 = vcmask 1044484
        %v843 = vsel %vm842, %v823, %v841
        %vm844 = vcmask 1045509
        %v845 = vsel %vm844, %v827, %v843
        %vm846 = vcmask 1046534
        %v847 = vsel %vm846, %v831, %v845
        %vm848 = vcmask 1047559
        %v849 = vsel %vm848, %v835, %v847
        %vm850 = vcmask 130048
        %v851 = vsel %vm850, %v849, 0
        %853 = vmatprep.subr.mxu0 0.0
        %854 = vmatpush1.msra.mxu0 0.0
        %855 = vmatprep.subr.mxu0 0.0
        %856 = vmatpush1.msra.mxu0 0.0
        %857 = vmatprep.subr.mxu0 0.0
        %858 = vmatpush1.msra.mxu0 0.0
        %859 = vmatprep.subr.mxu0 0.0
        %860 = vmatpush1.msra.mxu0 0.0
        %861 = vmatprep.subr.mxu0 0.0
        %862 = vmatpush1.msra.mxu0 0.0
        %863 = vmatprep.subr.mxu0 0.0
        %864 = vmatpush1.msra.mxu0 0.0
        %865 = vmatprep.subr.mxu0 0.0
        %866 = vmatpush1.msra.mxu0 0.0
        %867 = vmatprep.subr.mxu0 0.0
        %868 = vmatpush1.msra.mxu0 0.0
        %869 = vmatprep.subr.mxu0 0.0
        %870 = vmatpush1.msra.mxu0 0.0
        %871 = vmatprep.subr.mxu0 0.0
        %872 = vmatpush1.msra.mxu0 0.0
        %873 = vmatprep.subr.mxu0 0.0
        %874 = vmatpush1.msra.mxu0 0.0
        %875 = vmatprep.subr.mxu0 0.0
        %876 = vmatpush1.msra.mxu0 0.0
        %877 = vmatprep.subr.mxu0 0.0
        %878 = vmatpush1.msra.mxu0 0.0
        %879 = vmatprep.subr.mxu0 0.0
        %880 = vmatpush1.msra.mxu0 0.0
        %881 = vmatprep.subr.mxu0 0.0
        %882 = vmatpush1.msra.mxu0 %v240
        %883 = vmatprep.subr.mxu0 0.0
        %884 = vmatpush1.msra.mxu0 %v239
        %885 = vmatprep.subr.mxu0 0.0
        %886 = vmatpush2.msra.mxu0 0.0
        %887 = vmatprep.subr.mxu0 0.0
        %888 = vmatpush2.msra.mxu0 0.0
        %889 = vmatprep.subr.mxu0 0.0
        %890 = vmatpush2.msra.mxu0 0.0
        %891 = vmatprep.subr.mxu0 0.0
        %892 = vmatpush2.msra.mxu0 0.0
        %893 = vmatprep.subr.mxu0 0.0
        %894 = vmatpush2.msra.mxu0 0.0
        %895 = vmatprep.subr.mxu0 0.0
        %896 = vmatpush2.msra.mxu0 0.0
        %897 = vmatprep.subr.mxu0 0.0
        %898 = vmatpush2.msra.mxu0 0.0
        %899 = vmatprep.subr.mxu0 0.0
        %900 = vmatpush2.msra.mxu0 0.0
        %901 = vmatprep.subr.mxu0 0.0
        %902 = vmatpush2.msra.mxu0 0.0
        %903 = vmatprep.subr.mxu0 0.0
        %904 = vmatpush2.msra.mxu0 0.0
        %905 = vmatprep.subr.mxu0 0.0
        %906 = vmatpush2.msra.mxu0 0.0
        %907 = vmatprep.subr.mxu0 0.0
        %908 = vmatpush2.msra.mxu0 0.0
        %909 = vmatprep.subr.mxu0 0.0
        %910 = vmatpush2.msra.mxu0 0.0
        %911 = vmatprep.subr.mxu0 0.0
        %912 = vmatpush2.msra.mxu0 0.0
        %913 = vmatprep.subr.mxu0 0.0
        %914 = vmatpush2.msra.mxu0 0.0
        %915 = vmatprep.subr.mxu0 0.0
        %916 = vmatpush2.msra.mxu0 0.0
        %917 = vmatprep.mubr.f32.mxu0 0.0
        %918 = vmatmul.mubr.f32.gmra.mxu0 %v851
        %v919 = vpop.f32.mrf.mxu0
        %v920 = vadd.f32 0.0, %v919
        %v921 = vpop.f32.mrf.mxu0
        %922 = vdwg.mxu0
        %923 = vmatprep.subr.mxu0 0.0
        %924 = vmatpush1.msra.mxu0 0.0
        %925 = vmatprep.subr.mxu0 0.0
        %926 = vmatpush1.msra.mxu0 0.0
        %927 = vmatprep.subr.mxu0 0.0
        %928 = vmatpush1.msra.mxu0 0.0
        %929 = vmatprep.subr.mxu0 0.0
        %930 = vmatpush1.msra.mxu0 0.0
        %931 = vmatprep.subr.mxu0 0.0
        %932 = vmatpush1.msra.mxu0 0.0
        %933 = vmatprep.subr.mxu0 0.0
        %934 = vmatpush1.msra.mxu0 0.0
        %935 = vmatprep.subr.mxu0 0.0
        %936 = vmatpush1.msra.mxu0 0.0
        %937 = vmatprep.subr.mxu0 0.0
        %938 = vmatpush1.msra.mxu0 0.0
        %939 = vmatprep.subr.mxu0 0.0
        %940 = vmatpush1.msra.mxu0 0.0
        %941 = vmatprep.subr.mxu0 0.0
        %942 = vmatpush1.msra.mxu0 0.0
        %943 = vmatprep.subr.mxu0 0.0
        %944 = vmatpush1.msra.mxu0 0.0
        %945 = vmatprep.subr.mxu0 0.0
        %946 = vmatpush1.msra.mxu0 0.0
        %947 = vmatprep.subr.mxu0 0.0
        %948 = vmatpush1.msra.mxu0 0.0
        %949 = vmatprep.subr.mxu0 0.0
        %950 = vmatpush1.msra.mxu0 0.0
        %951 = vmatprep.subr.mxu0 0.0
        %952 = vmatpush1.msra.mxu0 %v247
        %953 = vmatprep.subr.mxu0 0.0
        %954 = vmatpush1.msra.mxu0 %v246
        %955 = vmatprep.subr.mxu0 0.0
        %956 = vmatpush2.msra.mxu0 0.0
        %957 = vmatprep.subr.mxu0 0.0
        %958 = vmatpush2.msra.mxu0 0.0
        %959 = vmatprep.subr.mxu0 0.0
        %960 = vmatpush2.msra.mxu0 0.0
        %961 = vmatprep.subr.mxu0 0.0
        %962 = vmatpush2.msra.mxu0 0.0
        %963 = vmatprep.subr.mxu0 0.0
        %964 = vmatpush2.msra.mxu0 0.0
        %965 = vmatprep.subr.mxu0 0.0
        %966 = vmatpush2.msra.mxu0 0.0
        %967 = vmatprep.subr.mxu0 0.0
        %968 = vmatpush2.msra.mxu0 0.0
        %969 = vmatprep.subr.mxu0 0.0
        %970 = vmatpush2.msra.mxu0 0.0
        %971 = vmatprep.subr.mxu0 0.0
        %972 = vmatpush2.msra.mxu0 0.0
        %973 = vmatprep.subr.mxu0 0.0
        %974 = vmatpush2.msra.mxu0 0.0
        %975 = vmatprep.subr.mxu0 0.0
        %976 = vmatpush2.msra.mxu0 0.0
        %977 = vmatprep.subr.mxu0 0.0
        %978 = vmatpush2.msra.mxu0 0.0
        %979 = vmatprep.subr.mxu0 0.0
        %980 = vmatpush2.msra.mxu0 0.0
        %981 = vmatprep.subr.mxu0 0.0
        %982 = vmatpush2.msra.mxu0 0.0
        %983 = vmatprep.subr.mxu0 0.0
        %984 = vmatpush2.msra.mxu0 0.0
        %985 = vmatprep.subr.mxu0 0.0
        %986 = vmatpush2.msra.mxu0 0.0
        %987 = vmatprep.mubr.f32.mxu0 0.0
        %988 = vmatmul.mubr.f32.gmra.mxu0 %v851
        %v989 = vpop.f32.mrf.mxu0
        %v990 = vadd.f32 0.0, %v989
        %v991 = vpop.f32.mrf.mxu0
        %992 = vdwg.mxu0
        %v993 = vmax.f32 %v920, %v990
        %v994 = vxor.u32 %v993, 2147483648
        %v995 = vmul.f32 %v994, 1.442695
        %v996 = vpow.pop %v995
        %v997 = vadd.f32 %v996, 1.0
        %v998 = vrcp.pop %v997
        %v999 = vmul.f32 1.0, %v998
        %vm1000 = vcmask 64512
        %1001 = vst.msk [vmem:[%s199] sm:$0xff] %vm1000, %v999
        %s1002 = sld [smem:[#allocation3 + $0x1]]
        %v1003 = vstv %s1002
        %v1004 = vmul.f32 %v1003, %v226
        %v1005 = vmul.f32 %v1003, %v227
        %s1006 = sld [smem:[#allocation3 + $0x81]]
        %v1007 = vstv %s1006
        %v1008 = vmul.f32 %v1007, %v226
        %v1009 = vmul.f32 %v1007, %v227
        %1012 = vrot.lane.b32.xlu0 %v1008, 127
        %v1013 = vpop.permute.xlu0 %1012
        %1014 = vrot.lane.b32.xlu0 %v1009, 127
        %v1015 = vpop.permute.xlu0 %1014
        %v1018 = vadd.f32 %v1004, %v1013
        %v1019 = vadd.f32 %v1005, %v1015
        %s1020 = sld [smem:[#allocation3 + $0x101]]
        %v1021 = vstv %s1020
        %v1022 = vmul.f32 %v1021, %v226
        %v1023 = vmul.f32 %v1021, %v227
        %1026 = vrot.lane.b32.xlu0 %v1022, 126
        %v1027 = vpop.permute.xlu0 %1026
        %1028 = vrot.lane.b32.xlu0 %v1023, 126
        %v1029 = vpop.permute.xlu0 %1028
        %v1032 = vadd.f32 %v1018, %v1027
        %v1033 = vadd.f32 %v1019, %v1029
        %s1034 = sld [smem:[#allocation3 + $0x181]]
        %v1035 = vstv %s1034
        %v1036 = vmul.f32 %v1035, %v226
        %v1037 = vmul.f32 %v1035, %v227
        %1040 = vrot.lane.b32.xlu0 %v1036, 125
        %v1041 = vpop.permute.xlu0 %1040
        %1042 = vrot.lane.b32.xlu0 %v1037, 125
        %v1043 = vpop.permute.xlu0 %1042
        %v1046 = vadd.f32 %v1032, %v1041
        %v1047 = vadd.f32 %v1033, %v1043
        %s1048 = sld [smem:[#allocation3 + $0x201]]
        %v1049 = vstv %s1048
        %v1050 = vmul.f32 %v1049, %v226
        %v1051 = vmul.f32 %v1049, %v227
        %1054 = vrot.lane.b32.xlu0 %v1050, 124
        %v1055 = vpop.permute.xlu0 %1054
        %1056 = vrot.lane.b32.xlu0 %v1051, 124
        %v1057 = vpop.permute.xlu0 %1056
        %v1060 = vadd.f32 %v1046, %v1055
        %v1061 = vadd.f32 %v1047, %v1057
        %s1062 = sld [smem:[#allocation3 + $0x281]]
        %v1063 = vstv %s1062
        %v1064 = vmul.f32 %v1063, %v226
        %v1065 = vmul.f32 %v1063, %v227
        %v1066 = vmul.f32 %v1063, %v228
        %v1070 = vrot.slane %v1064, 1
        %v1071 = vrot.slane %v1065, 1
        %v1072 = vsel %vm316, %v1070, %v1071
        %v1073 = vrot.slane %v1066, 1
        %v1074 = vsel %vm316, %v1071, %v1073
        %v1077 = vadd.f32 %v1060, %v1072
        %v1078 = vadd.f32 %v1061, %v1074
        %s1079 = sld [smem:[#allocation3 + $0x301]]
        %v1080 = vstv %s1079
        %v1081 = vmul.f32 %v1080, %v226
        %v1082 = vmul.f32 %v1080, %v227
        %v1083 = vmul.f32 %v1080, %v228
        %v1087 = vrot.slane %v1081, 1
        %v1088 = vrot.slane %v1082, 1
        %v1089 = vsel %vm316, %v1087, %v1088
        %v1090 = vrot.slane %v1083, 1
        %v1091 = vsel %vm316, %v1088, %v1090
        %1092 = vrot.lane.b32.xlu0 %v1089, 127
        %v1093 = vpop.permute.xlu0 %1092
        %1094 = vrot.lane.b32.xlu0 %v1091, 127
        %v1095 = vpop.permute.xlu0 %1094
        %v1098 = vadd.f32 %v1077, %v1093
        %v1099 = vadd.f32 %v1078, %v1095
        %s1100 = sld [smem:[#allocation3 + $0x381]]
        %v1101 = vstv %s1100
        %v1102 = vmul.f32 %v1101, %v226
        %v1103 = vmul.f32 %v1101, %v227
        %v1104 = vmul.f32 %v1101, %v228
        %v1108 = vrot.slane %v1102, 1
        %v1109 = vrot.slane %v1103, 1
        %v1110 = vsel %vm316, %v1108, %v1109
        %v1111 = vrot.slane %v1104, 1
        %v1112 = vsel %vm316, %v1109, %v1111
        %1113 = vrot.lane.b32.xlu0 %v1110, 126
        %v1114 = vpop.permute.xlu0 %1113
        %1115 = vrot.lane.b32.xlu0 %v1112, 126
        %v1116 = vpop.permute.xlu0 %1115
        %v1119 = vadd.f32 %v1098, %v1114
        %v1120 = vadd.f32 %v1099, %v1116
        %s1121 = sld [smem:[#allocation3 + $0x401]]
        %v1122 = vstv %s1121
        %v1123 = vmul.f32 %v1122, %v226
        %v1124 = vmul.f32 %v1122, %v227
        %v1125 = vmul.f32 %v1122, %v228
        %v1129 = vrot.slane %v1123, 1
        %v1130 = vrot.slane %v1124, 1
        %v1131 = vsel %vm316, %v1129, %v1130
        %v1132 = vrot.slane %v1125, 1
        %v1133 = vsel %vm316, %v1130, %v1132
        %1134 = vrot.lane.b32.xlu0 %v1131, 125
        %v1135 = vpop.permute.xlu0 %1134
        %1136 = vrot.lane.b32.xlu0 %v1133, 125
        %v1137 = vpop.permute.xlu0 %1136
        %v1140 = vadd.f32 %v1119, %v1135
        %v1141 = vadd.f32 %v1120, %v1137
        %s1142 = sld [smem:[#allocation3 + $0x481]]
        %v1143 = vstv %s1142
        %v1144 = vmul.f32 %v1143, %v226
        %v1145 = vmul.f32 %v1143, %v227
        %v1146 = vmul.f32 %v1143, %v228
        %v1150 = vrot.slane %v1144, 1
        %v1151 = vrot.slane %v1145, 1
        %v1152 = vsel %vm316, %v1150, %v1151
        %v1153 = vrot.slane %v1146, 1
        %v1154 = vsel %vm316, %v1151, %v1153
        %1155 = vrot.lane.b32.xlu0 %v1152, 124
        %v1156 = vpop.permute.xlu0 %1155
        %1157 = vrot.lane.b32.xlu0 %v1154, 124
        %v1158 = vpop.permute.xlu0 %1157
        %v1161 = vadd.f32 %v1140, %v1156
        %v1162 = vadd.f32 %v1141, %v1158
        %s1163 = sld [smem:[#allocation3 + $0x501]]
        %v1164 = vstv %s1163
        %v1165 = vmul.f32 %v1164, %v226
        %v1166 = vmul.f32 %v1164, %v227
        %v1167 = vmul.f32 %v1164, %v228
        %v1171 = vrot.slane %v1165, 2
        %v1172 = vrot.slane %v1166, 2
        %v1173 = vsel %vm418, %v1171, %v1172
        %v1174 = vrot.slane %v1167, 2
        %v1175 = vsel %vm418, %v1172, %v1174
        %v1178 = vadd.f32 %v1161, %v1173
        %v1179 = vadd.f32 %v1162, %v1175
        %s1180 = sld [smem:[#allocation3 + $0x581]]
        %v1181 = vstv %s1180
        %v1182 = vmul.f32 %v1181, %v226
        %v1183 = vmul.f32 %v1181, %v227
        %v1184 = vmul.f32 %v1181, %v228
        %v1188 = vrot.slane %v1182, 2
        %v1189 = vrot.slane %v1183, 2
        %v1190 = vsel %vm418, %v1188, %v1189
        %v1191 = vrot.slane %v1184, 2
        %v1192 = vsel %vm418, %v1189, %v1191
        %1193 = vrot.lane.b32.xlu0 %v1190, 127
        %v1194 = vpop.permute.xlu0 %1193
        %1195 = vrot.lane.b32.xlu0 %v1192, 127
        %v1196 = vpop.permute.xlu0 %1195
        %v1199 = vadd.f32 %v1178, %v1194
        %v1200 = vadd.f32 %v1179, %v1196
        %s1201 = sld [smem:[#allocation3 + $0x601]]
        %v1202 = vstv %s1201
        %v1203 = vmul.f32 %v1202, %v226
        %v1204 = vmul.f32 %v1202, %v227
        %v1205 = vmul.f32 %v1202, %v228
        %v1209 = vrot.slane %v1203, 2
        %v1210 = vrot.slane %v1204, 2
        %v1211 = vsel %vm418, %v1209, %v1210
        %v1212 = vrot.slane %v1205, 2
        %v1213 = vsel %vm418, %v1210, %v1212
        %1214 = vrot.lane.b32.xlu0 %v1211, 126
        %v1215 = vpop.permute.xlu0 %1214
        %1216 = vrot.lane.b32.xlu0 %v1213, 126
        %v1217 = vpop.permute.xlu0 %1216
        %v1220 = vadd.f32 %v1199, %v1215
        %v1221 = vadd.f32 %v1200, %v1217
        %s1222 = sld [smem:[#allocation3 + $0x681]]
        %v1223 = vstv %s1222
        %v1224 = vmul.f32 %v1223, %v226
        %v1225 = vmul.f32 %v1223, %v227
        %v1226 = vmul.f32 %v1223, %v228
        %v1230 = vrot.slane %v1224, 2
        %v1231 = vrot.slane %v1225, 2
        %v1232 = vsel %vm418, %v1230, %v1231
        %v1233 = vrot.slane %v1226, 2
        %v1234 = vsel %vm418, %v1231, %v1233
        %1235 = vrot.lane.b32.xlu0 %v1232, 125
        %v1236 = vpop.permute.xlu0 %1235
        %1237 = vrot.lane.b32.xlu0 %v1234, 125
        %v1238 = vpop.permute.xlu0 %1237
        %v1241 = vadd.f32 %v1220, %v1236
        %v1242 = vadd.f32 %v1221, %v1238
        %s1243 = sld [smem:[#allocation3 + $0x701]]
        %v1244 = vstv %s1243
        %v1245 = vmul.f32 %v1244, %v226
        %v1246 = vmul.f32 %v1244, %v227
        %v1247 = vmul.f32 %v1244, %v228
        %v1251 = vrot.slane %v1245, 2
        %v1252 = vrot.slane %v1246, 2
        %v1253 = vsel %vm418, %v1251, %v1252
        %v1254 = vrot.slane %v1247, 2
        %v1255 = vsel %vm418, %v1252, %v1254
        %1256 = vrot.lane.b32.xlu0 %v1253, 124
        %v1257 = vpop.permute.xlu0 %1256
        %1258 = vrot.lane.b32.xlu0 %v1255, 124
        %v1259 = vpop.permute.xlu0 %1258
        %v1262 = vadd.f32 %v1241, %v1257
        %v1263 = vadd.f32 %v1242, %v1259
        %s1264 = sld [smem:[#allocation3 + $0x781]]
        %v1265 = vstv %s1264
        %v1266 = vmul.f32 %v1265, %v226
        %v1267 = vmul.f32 %v1265, %v227
        %v1268 = vmul.f32 %v1265, %v228
        %v1272 = vrot.slane %v1266, 3
        %v1273 = vrot.slane %v1267, 3
        %v1274 = vsel %vm520, %v1272, %v1273
        %v1275 = vrot.slane %v1268, 3
        %v1276 = vsel %vm520, %v1273, %v1275
        %v1279 = vadd.f32 %v1262, %v1274
        %v1280 = vadd.f32 %v1263, %v1276
        %s1281 = sld [smem:[#allocation3 + $0x801]]
        %v1282 = vstv %s1281
        %v1283 = vmul.f32 %v1282, %v226
        %v1284 = vmul.f32 %v1282, %v227
        %v1285 = vmul.f32 %v1282, %v228
        %v1289 = vrot.slane %v1283, 3
        %v1290 = vrot.slane %v1284, 3
        %v1291 = vsel %vm520, %v1289, %v1290
        %v1292 = vrot.slane %v1285, 3
        %v1293 = vsel %vm520, %v1290, %v1292
        %1294 = vrot.lane.b32.xlu0 %v1291, 127
        %v1295 = vpop.permute.xlu0 %1294
        %1296 = vrot.lane.b32.xlu0 %v1293, 127
        %v1297 = vpop.permute.xlu0 %1296
        %v1300 = vadd.f32 %v1279, %v1295
        %v1301 = vadd.f32 %v1280, %v1297
        %s1302 = sld [smem:[#allocation3 + $0x881]]
        %v1303 = vstv %s1302
        %v1304 = vmul.f32 %v1303, %v226
        %v1305 = vmul.f32 %v1303, %v227
        %v1306 = vmul.f32 %v1303, %v228
        %v1310 = vrot.slane %v1304, 3
        %v1311 = vrot.slane %v1305, 3
        %v1312 = vsel %vm520, %v1310, %v1311
        %v1313 = vrot.slane %v1306, 3
        %v1314 = vsel %vm520, %v1311, %v1313
        %1315 = vrot.lane.b32.xlu0 %v1312, 126
        %v1316 = vpop.permute.xlu0 %1315
        %1317 = vrot.lane.b32.xlu0 %v1314, 126
        %v1318 = vpop.permute.xlu0 %1317
        %v1321 = vadd.f32 %v1300, %v1316
        %v1322 = vadd.f32 %v1301, %v1318
        %s1323 = sld [smem:[#allocation3 + $0x901]]
        %v1324 = vstv %s1323
        %v1325 = vmul.f32 %v1324, %v226
        %v1326 = vmul.f32 %v1324, %v227
        %v1327 = vmul.f32 %v1324, %v228
        %v1331 = vrot.slane %v1325, 3
        %v1332 = vrot.slane %v1326, 3
        %v1333 = vsel %vm520, %v1331, %v1332
        %v1334 = vrot.slane %v1327, 3
        %v1335 = vsel %vm520, %v1332, %v1334
        %1336 = vrot.lane.b32.xlu0 %v1333, 125
        %v1337 = vpop.permute.xlu0 %1336
        %1338 = vrot.lane.b32.xlu0 %v1335, 125
        %v1339 = vpop.permute.xlu0 %1338
        %v1342 = vadd.f32 %v1321, %v1337
        %v1343 = vadd.f32 %v1322, %v1339
        %s1344 = sld [smem:[#allocation3 + $0x981]]
        %v1345 = vstv %s1344
        %v1346 = vmul.f32 %v1345, %v226
        %v1347 = vmul.f32 %v1345, %v227
        %v1348 = vmul.f32 %v1345, %v228
        %v1352 = vrot.slane %v1346, 3
        %v1353 = vrot.slane %v1347, 3
        %v1354 = vsel %vm520, %v1352, %v1353
        %v1355 = vrot.slane %v1348, 3
        %v1356 = vsel %vm520, %v1353, %v1355
        %1357 = vrot.lane.b32.xlu0 %v1354, 124
        %v1358 = vpop.permute.xlu0 %1357
        %1359 = vrot.lane.b32.xlu0 %v1356, 124
        %v1360 = vpop.permute.xlu0 %1359
        %v1363 = vadd.f32 %v1342, %v1358
        %v1364 = vadd.f32 %v1343, %v1360
        %s1365 = sld [smem:[#allocation3 + $0xa01]]
        %v1366 = vstv %s1365
        %v1367 = vmul.f32 %v1366, %v226
        %v1368 = vmul.f32 %v1366, %v227
        %v1369 = vmul.f32 %v1366, %v228
        %v1373 = vrot.slane %v1367, 4
        %v1374 = vrot.slane %v1368, 4
        %v1375 = vsel %vm622, %v1373, %v1374
        %v1376 = vrot.slane %v1369, 4
        %v1377 = vsel %vm622, %v1374, %v1376
        %v1380 = vadd.f32 %v1363, %v1375
        %v1381 = vadd.f32 %v1364, %v1377
        %s1382 = sld [smem:[#allocation3 + $0xa81]]
        %v1383 = vstv %s1382
        %v1384 = vmul.f32 %v1383, %v226
        %v1385 = vmul.f32 %v1383, %v227
        %v1386 = vmul.f32 %v1383, %v228
        %v1390 = vrot.slane %v1384, 4
        %v1391 = vrot.slane %v1385, 4
        %v1392 = vsel %vm622, %v1390, %v1391
        %v1393 = vrot.slane %v1386, 4
        %v1394 = vsel %vm622, %v1391, %v1393
        %1395 = vrot.lane.b32.xlu0 %v1392, 127
        %v1396 = vpop.permute.xlu0 %1395
        %1397 = vrot.lane.b32.xlu0 %v1394, 127
        %v1398 = vpop.permute.xlu0 %1397
        %v1401 = vadd.f32 %v1380, %v1396
        %v1402 = vadd.f32 %v1381, %v1398
        %s1403 = sld [smem:[#allocation3 + $0xb01]]
        %v1404 = vstv %s1403
        %v1405 = vmul.f32 %v1404, %v226
        %v1406 = vmul.f32 %v1404, %v227
        %v1407 = vmul.f32 %v1404, %v228
        %v1411 = vrot.slane %v1405, 4
        %v1412 = vrot.slane %v1406, 4
        %v1413 = vsel %vm622, %v1411, %v1412
        %v1414 = vrot.slane %v1407, 4
        %v1415 = vsel %vm622, %v1412, %v1414
        %1416 = vrot.lane.b32.xlu0 %v1413, 126
        %v1417 = vpop.permute.xlu0 %1416
        %1418 = vrot.lane.b32.xlu0 %v1415, 126
        %v1419 = vpop.permute.xlu0 %1418
        %v1422 = vadd.f32 %v1401, %v1417
        %v1423 = vadd.f32 %v1402, %v1419
        %s1424 = sld [smem:[#allocation3 + $0xb81]]
        %v1425 = vstv %s1424
        %v1426 = vmul.f32 %v1425, %v226
        %v1427 = vmul.f32 %v1425, %v227
        %v1428 = vmul.f32 %v1425, %v228
        %v1432 = vrot.slane %v1426, 4
        %v1433 = vrot.slane %v1427, 4
        %v1434 = vsel %vm622, %v1432, %v1433
        %v1435 = vrot.slane %v1428, 4
        %v1436 = vsel %vm622, %v1433, %v1435
        %1437 = vrot.lane.b32.xlu0 %v1434, 125
        %v1438 = vpop.permute.xlu0 %1437
        %1439 = vrot.lane.b32.xlu0 %v1436, 125
        %v1440 = vpop.permute.xlu0 %1439
        %v1443 = vadd.f32 %v1422, %v1438
        %v1444 = vadd.f32 %v1423, %v1440
        %s1445 = sld [smem:[#allocation3 + $0xc01]]
        %v1446 = vstv %s1445
        %v1447 = vmul.f32 %v1446, %v226
        %v1448 = vmul.f32 %v1446, %v227
        %v1449 = vmul.f32 %v1446, %v228
        %v1453 = vrot.slane %v1447, 4
        %v1454 = vrot.slane %v1448, 4
        %v1455 = vsel %vm622, %v1453, %v1454
        %v1456 = vrot.slane %v1449, 4
        %v1457 = vsel %vm622, %v1454, %v1456
        %1458 = vrot.lane.b32.xlu0 %v1455, 124
        %v1459 = vpop.permute.xlu0 %1458
        %1460 = vrot.lane.b32.xlu0 %v1457, 124
        %v1461 = vpop.permute.xlu0 %1460
        %v1464 = vadd.f32 %v1443, %v1459
        %v1465 = vadd.f32 %v1444, %v1461
        %s1466 = sld [smem:[#allocation5 + $0x1]]
        %v1467 = vstv %s1466
        %v1468 = vadd.f32 %v1464, %v1467
        %v1469 = vadd.f32 %v1465, %v1467
        %v1472 = vcombine.high %v1468, %v1468
        %v1474 = vunpack.c.l.s4 1983009808
        %v1475 = vunpack.c.0.s8 %v1474
        %v1476 = vlaneseq
        %v1477 = vshrl.u32 %v1476, 7
        %v1478 = vsub.s32 %v1475, %v1477
        %v1479 = vrot.slane %v1468, %v1478
        %v1481 = vunpack.c.l.s4 1983009808
        %v1482 = vunpack.c.0.s8 %v1481
        %v1483 = vlaneseq
        %v1484 = vshrl.u32 %v1483, 7
        %v1485 = vsub.s32 %v1482, %v1484
        %v1486 = vrot.slane %v1472, %v1485
        %v1487 = vcombine.high %v1479, %v1479
        %v1488 = vcombine.high %v1486, %v1486
        %v1489 = vcombine.high %v1469, %v1469
        %v1491 = vunpack.c.l.s4 1983009808
        %v1492 = vunpack.c.0.s8 %v1491
        %v1493 = vlaneseq
        %v1494 = vshrl.u32 %v1493, 7
        %v1495 = vsub.s32 %v1492, %v1494
        %v1496 = vrot.slane %v1469, %v1495
        %v1498 = vunpack.c.l.s4 1983009808
        %v1499 = vunpack.c.0.s8 %v1498
        %v1500 = vlaneseq
        %v1501 = vshrl.u32 %v1500, 7
        %v1502 = vsub.s32 %v1499, %v1501
        %v1503 = vrot.slane %v1489, %v1502
        %v1504 = vcombine.high %v1496, %v1496
        %v1505 = vcombine.high %v1503, %v1503
        %v1514 = vrot.slane %v1479, 7
        %v1515 = vrot.slane %v1514, 2
        %v1516 = vrot.slane %v1487, 7
        %v1517 = vrot.slane %v1516, 2
        %v1518 = vrot.slane %v1486, 7
        %v1519 = vrot.slane %v1518, 2
        %v1520 = vrot.slane %v1488, 7
        %v1521 = vrot.slane %v1520, 2
        %v1522 = vrot.slane %v1496, 7
        %v1523 = vrot.slane %v1522, 2
        %v1524 = vrot.slane %v1504, 7
        %v1525 = vrot.slane %v1524, 2
        %v1526 = vrot.slane %v1503, 7
        %v1527 = vrot.slane %v1526, 2
        %v1528 = vrot.slane %v1505, 7
        %v1529 = vrot.slane %v1528, 2
        %v1538 = vmax.f32 %v1479, %v1515
        %v1539 = vmax.f32 %v1487, %v1517
        %v1540 = vmax.f32 %v1486, %v1519
        %v1541 = vmax.f32 %v1488, %v1521
        %v1542 = vmax.f32 %v1496, %v1523
        %v1543 = vmax.f32 %v1504, %v1525
        %v1544 = vmax.f32 %v1503, %v1527
        %v1545 = vmax.f32 %v1505, %v1529
        %v1554 = vlaneseq
        %v1555 = vshrl.u32 %v1554, 7
        %v1556 = vsub.s32 0, %v1555
        %v1557 = vrot.slane %v1538, %v1556
        %v1558 = vlaneseq
        %v1559 = vshrl.u32 %v1558, 7
        %v1560 = vsub.s32 0, %v1559
        %v1561 = vrot.slane %v1539, %v1560
        %v1562 = vlaneseq
        %v1563 = vshrl.u32 %v1562, 7
        %v1564 = vsub.s32 0, %v1563
        %v1565 = vrot.slane %v1540, %v1564
        %v1566 = vlaneseq
        %v1567 = vshrl.u32 %v1566, 7
        %v1568 = vsub.s32 0, %v1567
        %v1569 = vrot.slane %v1541, %v1568
        %v1570 = vlaneseq
        %v1571 = vshrl.u32 %v1570, 7
        %v1572 = vsub.s32 0, %v1571
        %v1573 = vrot.slane %v1542, %v1572
        %v1574 = vlaneseq
        %v1575 = vshrl.u32 %v1574, 7
        %v1576 = vsub.s32 0, %v1575
        %v1577 = vrot.slane %v1543, %v1576
        %v1578 = vlaneseq
        %v1579 = vshrl.u32 %v1578, 7
        %v1580 = vsub.s32 0, %v1579
        %v1581 = vrot.slane %v1544, %v1580
        %v1582 = vlaneseq
        %v1583 = vshrl.u32 %v1582, 7
        %v1584 = vsub.s32 0, %v1583
        %v1585 = vrot.slane %v1545, %v1584
        %v1586 = vsel %vm836, %v1561, %v1557
        %v1587 = vsel %vm838, %v1565, %v1586
        %v1588 = vsel %vm840, %v1569, %v1587
        %v1589 = vsel %vm842, %v1573, %v1588
        %v1590 = vsel %vm844, %v1577, %v1589
        %v1591 = vsel %vm846, %v1581, %v1590
        %v1592 = vsel %vm848, %v1585, %v1591
        %v1593 = vsel %vm850, %v1592, 0
        %1595 = vmatprep.subr.mxu0 0.0
        %1596 = vmatpush1.msra.mxu0 0.0
        %1597 = vmatprep.subr.mxu0 0.0
        %1598 = vmatpush1.msra.mxu0 0.0
        %1599 = vmatprep.subr.mxu0 0.0
        %1600 = vmatpush1.msra.mxu0 0.0
        %1601 = vmatprep.subr.mxu0 0.0
        %1602 = vmatpush1.msra.mxu0 0.0
        %1603 = vmatprep.subr.mxu0 0.0
        %1604 = vmatpush1.msra.mxu0 0.0
        %1605 = vmatprep.subr.mxu0 0.0
        %1606 = vmatpush1.msra.mxu0 0.0
        %1607 = vmatprep.subr.mxu0 0.0
        %1608 = vmatpush1.msra.mxu0 0.0
        %1609 = vmatprep.subr.mxu0 0.0
        %1610 = vmatpush1.msra.mxu0 0.0
        %1611 = vmatprep.subr.mxu0 0.0
        %1612 = vmatpush1.msra.mxu0 0.0
        %1613 = vmatprep.subr.mxu0 0.0
        %1614 = vmatpush1.msra.mxu0 0.0
        %1615 = vmatprep.subr.mxu0 0.0
        %1616 = vmatpush1.msra.mxu0 0.0
        %1617 = vmatprep.subr.mxu0 0.0
        %1618 = vmatpush1.msra.mxu0 0.0
        %1619 = vmatprep.subr.mxu0 0.0
        %1620 = vmatpush1.msra.mxu0 0.0
        %1621 = vmatprep.subr.mxu0 0.0
        %1622 = vmatpush1.msra.mxu0 0.0
        %1623 = vmatprep.subr.mxu0 0.0
        %1624 = vmatpush1.msra.mxu0 %v240
        %1625 = vmatprep.subr.mxu0 0.0
        %1626 = vmatpush1.msra.mxu0 %v239
        %1627 = vmatprep.subr.mxu0 0.0
        %1628 = vmatpush2.msra.mxu0 0.0
        %1629 = vmatprep.subr.mxu0 0.0
        %1630 = vmatpush2.msra.mxu0 0.0
        %1631 = vmatprep.subr.mxu0 0.0
        %1632 = vmatpush2.msra.mxu0 0.0
        %1633 = vmatprep.subr.mxu0 0.0
        %1634 = vmatpush2.msra.mxu0 0.0
        %1635 = vmatprep.subr.mxu0 0.0
        %1636 = vmatpush2.msra.mxu0 0.0
        %1637 = vmatprep.subr.mxu0 0.0
        %1638 = vmatpush2.msra.mxu0 0.0
        %1639 = vmatprep.subr.mxu0 0.0
        %1640 = vmatpush2.msra.mxu0 0.0
        %1641 = vmatprep.subr.mxu0 0.0
        %1642 = vmatpush2.msra.mxu0 0.0
        %1643 = vmatprep.subr.mxu0 0.0
        %1644 = vmatpush2.msra.mxu0 0.0
        %1645 = vmatprep.subr.mxu0 0.0
        %1646 = vmatpush2.msra.mxu0 0.0
        %1647 = vmatprep.subr.mxu0 0.0
        %1648 = vmatpush2.msra.mxu0 0.0
        %1649 = vmatprep.subr.mxu0 0.0
        %1650 = vmatpush2.msra.mxu0 0.0
        %1651 = vmatprep.subr.mxu0 0.0
        %1652 = vmatpush2.msra.mxu0 0.0
        %1653 = vmatprep.subr.mxu0 0.0
        %1654 = vmatpush2.msra.mxu0 0.0
        %1655 = vmatprep.subr.mxu0 0.0
        %1656 = vmatpush2.msra.mxu0 0.0
        %1657 = vmatprep.subr.mxu0 0.0
        %1658 = vmatpush2.msra.mxu0 0.0
        %1659 = vmatprep.mubr.f32.mxu0 0.0
        %1660 = vmatmul.mubr.f32.gmra.mxu0 %v1593
        %v1661 = vpop.f32.mrf.mxu0
        %v1662 = vadd.f32 0.0, %v1661
        %v1663 = vpop.f32.mrf.mxu0
        %1664 = vdwg.mxu0
        %1665 = vmatprep.subr.mxu0 0.0
        %1666 = vmatpush1.msra.mxu0 0.0
        %1667 = vmatprep.subr.mxu0 0.0
        %1668 = vmatpush1.msra.mxu0 0.0
        %1669 = vmatprep.subr.mxu0 0.0
        %1670 = vmatpush1.msra.mxu0 0.0
        %1671 = vmatprep.subr.mxu0 0.0
        %1672 = vmatpush1.msra.mxu0 0.0
        %1673 = vmatprep.subr.mxu0 0.0
        %1674 = vmatpush1.msra.mxu0 0.0
        %1675 = vmatprep.subr.mxu0 0.0
        %1676 = vmatpush1.msra.mxu0 0.0
        %1677 = vmatprep.subr.mxu0 0.0
        %1678 = vmatpush1.msra.mxu0 0.0
        %1679 = vmatprep.subr.mxu0 0.0
        %1680 = vmatpush1.msra.mxu0 0.0
        %1681 = vmatprep.subr.mxu0 0.0
        %1682 = vmatpush1.msra.mxu0 0.0
        %1683 = vmatprep.subr.mxu0 0.0
        %1684 = vmatpush1.msra.mxu0 0.0
        %1685 = vmatprep.subr.mxu0 0.0
        %1686 = vmatpush1.msra.mxu0 0.0
        %1687 = vmatprep.subr.mxu0 0.0
        %1688 = vmatpush1.msra.mxu0 0.0
        %1689 = vmatprep.subr.mxu0 0.0
        %1690 = vmatpush1.msra.mxu0 0.0
        %1691 = vmatprep.subr.mxu0 0.0
        %1692 = vmatpush1.msra.mxu0 0.0
        %1693 = vmatprep.subr.mxu0 0.0
        %1694 = vmatpush1.msra.mxu0 %v247
        %1695 = vmatprep.subr.mxu0 0.0
        %1696 = vmatpush1.msra.mxu0 %v246
        %1697 = vmatprep.subr.mxu0 0.0
        %1698 = vmatpush2.msra.mxu0 0.0
        %1699 = vmatprep.subr.mxu0 0.0
        %1700 = vmatpush2.msra.mxu0 0.0
        %1701 = vmatprep.subr.mxu0 0.0
        %1702 = vmatpush2.msra.mxu0 0.0
        %1703 = vmatprep.subr.mxu0 0.0
        %1704 = vmatpush2.msra.mxu0 0.0
        %1705 = vmatprep.subr.mxu0 0.0
        %1706 = vmatpush2.msra.mxu0 0.0
        %1707 = vmatprep.subr.mxu0 0.0
        %1708 = vmatpush2.msra.mxu0 0.0
        %1709 = vmatprep.subr.mxu0 0.0
        %1710 = vmatpush2.msra.mxu0 0.0
        %1711 = vmatprep.subr.mxu0 0.0
        %1712 = vmatpush2.msra.mxu0 0.0
        %1713 = vmatprep.subr.mxu0 0.0
        %1714 = vmatpush2.msra.mxu0 0.0
        %1715 = vmatprep.subr.mxu0 0.0
        %1716 = vmatpush2.msra.mxu0 0.0
        %1717 = vmatprep.subr.mxu0 0.0
        %1718 = vmatpush2.msra.mxu0 0.0
        %1719 = vmatprep.subr.mxu0 0.0
        %1720 = vmatpush2.msra.mxu0 0.0
        %1721 = vmatprep.subr.mxu0 0.0
        %1722 = vmatpush2.msra.mxu0 0.0
        %1723 = vmatprep.subr.mxu0 0.0
        %1724 = vmatpush2.msra.mxu0 0.0
        %1725 = vmatprep.subr.mxu0 0.0
        %1726 = vmatpush2.msra.mxu0 0.0
        %1727 = vmatprep.subr.mxu0 0.0
        %1728 = vmatpush2.msra.mxu0 0.0
        %1729 = vmatprep.mubr.f32.mxu0 0.0
        %1730 = vmatmul.mubr.f32.gmra.mxu0 %v1593
        %v1731 = vpop.f32.mrf.mxu0
        %v1732 = vadd.f32 0.0, %v1731
        %v1733 = vpop.f32.mrf.mxu0
        %1734 = vdwg.mxu0
        %v1735 = vmax.f32 %v1662, %v1732
        %v1736 = vxor.u32 %v1735, 2147483648
        %v1737 = vmul.f32 %v1736, 1.442695
        %v1738 = vpow.pop %v1737
        %v1739 = vadd.f32 %v1738, 1.0
        %v1740 = vrcp.pop %v1739
        %v1741 = vmul.f32 1.0, %v1740
        %s1742 = scalar_lea.vmem %s199, 8
        %1743 = vst.msk [vmem:[%s1742] sm:$0xff] %vm1000, %v1741
        %s1744 = sld [smem:[#allocation3 + $0x2]]
        %v1745 = vstv %s1744
        %v1746 = vmul.f32 %v1745, %v226
        %v1747 = vmul.f32 %v1745, %v227
        %s1748 = sld [smem:[#allocation3 + $0x82]]
        %v1749 = vstv %s1748
        %v1750 = vmul.f32 %v1749, %v226
        %v1751 = vmul.f32 %v1749, %v227
        %1754 = vrot.lane.b32.xlu0 %v1750, 127
        %v1755 = vpop.permute.xlu0 %1754
        %1756 = vrot.lane.b32.xlu0 %v1751, 127
        %v1757 = vpop.permute.xlu0 %1756
        %v1760 = vadd.f32 %v1746, %v1755
        %v1761 = vadd.f32 %v1747, %v1757
        %s1762 = sld [smem:[#allocation3 + $0x102]]
        %v1763 = vstv %s1762
        %v1764 = vmul.f32 %v1763, %v226
        %v1765 = vmul.f32 %v1763, %v227
        %1768 = vrot.lane.b32.xlu0 %v1764, 126
        %v1769 = vpop.permute.xlu0 %1768
        %1770 = vrot.lane.b32.xlu0 %v1765, 126
        %v1771 = vpop.permute.xlu0 %1770
        %v1774 = vadd.f32 %v1760, %v1769
        %v1775 = vadd.f32 %v1761, %v1771
        %s1776 = sld [smem:[#allocation3 + $0x182]]
        %v1777 = vstv %s1776
        %v1778 = vmul.f32 %v1777, %v226
        %v1779 = vmul.f32 %v1777, %v227
        %1782 = vrot.lane.b32.xlu0 %v1778, 125
        %v1783 = vpop.permute.xlu0 %1782
        %1784 = vrot.lane.b32.xlu0 %v1779, 125
        %v1785 = vpop.permute.xlu0 %1784
        %v1788 = vadd.f32 %v1774, %v1783
        %v1789 = vadd.f32 %v1775, %v1785
        %s1790 = sld [smem:[#allocation3 + $0x202]]
        %v1791 = vstv %s1790
        %v1792 = vmul.f32 %v1791, %v226
        %v1793 = vmul.f32 %v1791, %v227
        %1796 = vrot.lane.b32.xlu0 %v1792, 124
        %v1797 = vpop.permute.xlu0 %1796
        %1798 = vrot.lane.b32.xlu0 %v1793, 124
        %v1799 = vpop.permute.xlu0 %1798
        %v1802 = vadd.f32 %v1788, %v1797
        %v1803 = vadd.f32 %v1789, %v1799
        %s1804 = sld [smem:[#allocation3 + $0x282]]
        %v1805 = vstv %s1804
        %v1806 = vmul.f32 %v1805, %v226
        %v1807 = vmul.f32 %v1805, %v227
        %v1808 = vmul.f32 %v1805, %v228
        %v1812 = vrot.slane %v1806, 1
        %v1813 = vrot.slane %v1807, 1
        %v1814 = vsel %vm316, %v1812, %v1813
        %v1815 = vrot.slane %v1808, 1
        %v1816 = vsel %vm316, %v1813, %v1815
        %v1819 = vadd.f32 %v1802, %v1814
        %v1820 = vadd.f32 %v1803, %v1816
        %s1821 = sld [smem:[#allocation3 + $0x302]]
        %v1822 = vstv %s1821
        %v1823 = vmul.f32 %v1822, %v226
        %v1824 = vmul.f32 %v1822, %v227
        %v1825 = vmul.f32 %v1822, %v228
        %v1829 = vrot.slane %v1823, 1
        %v1830 = vrot.slane %v1824, 1
        %v1831 = vsel %vm316, %v1829, %v1830
        %v1832 = vrot.slane %v1825, 1
        %v1833 = vsel %vm316, %v1830, %v1832
        %1834 = vrot.lane.b32.xlu0 %v1831, 127
        %v1835 = vpop.permute.xlu0 %1834
        %1836 = vrot.lane.b32.xlu0 %v1833, 127
        %v1837 = vpop.permute.xlu0 %1836
        %v1840 = vadd.f32 %v1819, %v1835
        %v1841 = vadd.f32 %v1820, %v1837
        %s1842 = sld [smem:[#allocation3 + $0x382]]
        %v1843 = vstv %s1842
        %v1844 = vmul.f32 %v1843, %v226
        %v1845 = vmul.f32 %v1843, %v227
        %v1846 = vmul.f32 %v1843, %v228
        %v1850 = vrot.slane %v1844, 1
        %v1851 = vrot.slane %v1845, 1
        %v1852 = vsel %vm316, %v1850, %v1851
        %v1853 = vrot.slane %v1846, 1
        %v1854 = vsel %vm316, %v1851, %v1853
        %1855 = vrot.lane.b32.xlu0 %v1852, 126
        %v1856 = vpop.permute.xlu0 %1855
        %1857 = vrot.lane.b32.xlu0 %v1854, 126
        %v1858 = vpop.permute.xlu0 %1857
        %v1861 = vadd.f32 %v1840, %v1856
        %v1862 = vadd.f32 %v1841, %v1858
        %s1863 = sld [smem:[#allocation3 + $0x402]]
        %v1864 = vstv %s1863
        %v1865 = vmul.f32 %v1864, %v226
        %v1866 = vmul.f32 %v1864, %v227
        %v1867 = vmul.f32 %v1864, %v228
        %v1871 = vrot.slane %v1865, 1
        %v1872 = vrot.slane %v1866, 1
        %v1873 = vsel %vm316, %v1871, %v1872
        %v1874 = vrot.slane %v1867, 1
        %v1875 = vsel %vm316, %v1872, %v1874
        %1876 = vrot.lane.b32.xlu0 %v1873, 125
        %v1877 = vpop.permute.xlu0 %1876
        %1878 = vrot.lane.b32.xlu0 %v1875, 125
        %v1879 = vpop.permute.xlu0 %1878
        %v1882 = vadd.f32 %v1861, %v1877
        %v1883 = vadd.f32 %v1862, %v1879
        %s1884 = sld [smem:[#allocation3 + $0x482]]
        %v1885 = vstv %s1884
        %v1886 = vmul.f32 %v1885, %v226
        %v1887 = vmul.f32 %v1885, %v227
        %v1888 = vmul.f32 %v1885, %v228
        %v1892 = vrot.slane %v1886, 1
        %v1893 = vrot.slane %v1887, 1
        %v1894 = vsel %vm316, %v1892, %v1893
        %v1895 = vrot.slane %v1888, 1
        %v1896 = vsel %vm316, %v1893, %v1895
        %1897 = vrot.lane.b32.xlu0 %v1894, 124
        %v1898 = vpop.permute.xlu0 %1897
        %1899 = vrot.lane.b32.xlu0 %v1896, 124
        %v1900 = vpop.permute.xlu0 %1899
        %v1903 = vadd.f32 %v1882, %v1898
        %v1904 = vadd.f32 %v1883, %v1900
        %s1905 = sld [smem:[#allocation3 + $0x502]]
        %v1906 = vstv %s1905
        %v1907 = vmul.f32 %v1906, %v226
        %v1908 = vmul.f32 %v1906, %v227
        %v1909 = vmul.f32 %v1906, %v228
        %v1913 = vrot.slane %v1907, 2
        %v1914 = vrot.slane %v1908, 2
        %v1915 = vsel %vm418, %v1913, %v1914
        %v1916 = vrot.slane %v1909, 2
        %v1917 = vsel %vm418, %v1914, %v1916
        %v1920 = vadd.f32 %v1903, %v1915
        %v1921 = vadd.f32 %v1904, %v1917
        %s1922 = sld [smem:[#allocation3 + $0x582]]
        %v1923 = vstv %s1922
        %v1924 = vmul.f32 %v1923, %v226
        %v1925 = vmul.f32 %v1923, %v227
        %v1926 = vmul.f32 %v1923, %v228
        %v1930 = vrot.slane %v1924, 2
        %v1931 = vrot.slane %v1925, 2
        %v1932 = vsel %vm418, %v1930, %v1931
        %v1933 = vrot.slane %v1926, 2
        %v1934 = vsel %vm418, %v1931, %v1933
        %1935 = vrot.lane.b32.xlu0 %v1932, 127
        %v1936 = vpop.permute.xlu0 %1935
        %1937 = vrot.lane.b32.xlu0 %v1934, 127
        %v1938 = vpop.permute.xlu0 %1937
        %v1941 = vadd.f32 %v1920, %v1936
        %v1942 = vadd.f32 %v1921, %v1938
        %s1943 = sld [smem:[#allocation3 + $0x602]]
        %v1944 = vstv %s1943
        %v1945 = vmul.f32 %v1944, %v226
        %v1946 = vmul.f32 %v1944, %v227
        %v1947 = vmul.f32 %v1944, %v228
        %v1951 = vrot.slane %v1945, 2
        %v1952 = vrot.slane %v1946, 2
        %v1953 = vsel %vm418, %v1951, %v1952
        %v1954 = vrot.slane %v1947, 2
        %v1955 = vsel %vm418, %v1952, %v1954
        %1956 = vrot.lane.b32.xlu0 %v1953, 126
        %v1957 = vpop.permute.xlu0 %1956
        %1958 = vrot.lane.b32.xlu0 %v1955, 126
        %v1959 = vpop.permute.xlu0 %1958
        %v1962 = vadd.f32 %v1941, %v1957
        %v1963 = vadd.f32 %v1942, %v1959
        %s1964 = sld [smem:[#allocation3 + $0x682]]
        %v1965 = vstv %s1964
        %v1966 = vmul.f32 %v1965, %v226
        %v1967 = vmul.f32 %v1965, %v227
        %v1968 = vmul.f32 %v1965, %v228
        %v1972 = vrot.slane %v1966, 2
        %v1973 = vrot.slane %v1967, 2
        %v1974 = vsel %vm418, %v1972, %v1973
        %v1975 = vrot.slane %v1968, 2
        %v1976 = vsel %vm418, %v1973, %v1975
        %1977 = vrot.lane.b32.xlu0 %v1974, 125
        %v1978 = vpop.permute.xlu0 %1977
        %1979 = vrot.lane.b32.xlu0 %v1976, 125
        %v1980 = vpop.permute.xlu0 %1979
        %v1983 = vadd.f32 %v1962, %v1978
        %v1984 = vadd.f32 %v1963, %v1980
        %s1985 = sld [smem:[#allocation3 + $0x702]]
        %v1986 = vstv %s1985
        %v1987 = vmul.f32 %v1986, %v226
        %v1988 = vmul.f32 %v1986, %v227
        %v1989 = vmul.f32 %v1986, %v228
        %v1993 = vrot.slane %v1987, 2
        %v1994 = vrot.slane %v1988, 2
        %v1995 = vsel %vm418, %v1993, %v1994
        %v1996 = vrot.slane %v1989, 2
        %v1997 = vsel %vm418, %v1994, %v1996
        %1998 = vrot.lane.b32.xlu0 %v1995, 124
        %v1999 = vpop.permute.xlu0 %1998
        %2000 = vrot.lane.b32.xlu0 %v1997, 124
        %v2001 = vpop.permute.xlu0 %2000
        %v2004 = vadd.f32 %v1983, %v1999
        %v2005 = vadd.f32 %v1984, %v2001
        %s2006 = sld [smem:[#allocation3 + $0x782]]
        %v2007 = vstv %s2006
        %v2008 = vmul.f32 %v2007, %v226
        %v2009 = vmul.f32 %v2007, %v227
        %v2010 = vmul.f32 %v2007, %v228
        %v2014 = vrot.slane %v2008, 3
        %v2015 = vrot.slane %v2009, 3
        %v2016 = vsel %vm520, %v2014, %v2015
        %v2017 = vrot.slane %v2010, 3
        %v2018 = vsel %vm520, %v2015, %v2017
        %v2021 = vadd.f32 %v2004, %v2016
        %v2022 = vadd.f32 %v2005, %v2018
        %s2023 = sld [smem:[#allocation3 + $0x802]]
        %v2024 = vstv %s2023
        %v2025 = vmul.f32 %v2024, %v226
        %v2026 = vmul.f32 %v2024, %v227
        %v2027 = vmul.f32 %v2024, %v228
        %v2031 = vrot.slane %v2025, 3
        %v2032 = vrot.slane %v2026, 3
        %v2033 = vsel %vm520, %v2031, %v2032
        %v2034 = vrot.slane %v2027, 3
        %v2035 = vsel %vm520, %v2032, %v2034
        %2036 = vrot.lane.b32.xlu0 %v2033, 127
        %v2037 = vpop.permute.xlu0 %2036
        %2038 = vrot.lane.b32.xlu0 %v2035, 127
        %v2039 = vpop.permute.xlu0 %2038
        %v2042 = vadd.f32 %v2021, %v2037
        %v2043 = vadd.f32 %v2022, %v2039
        %s2044 = sld [smem:[#allocation3 + $0x882]]
        %v2045 = vstv %s2044
        %v2046 = vmul.f32 %v2045, %v226
        %v2047 = vmul.f32 %v2045, %v227
        %v2048 = vmul.f32 %v2045, %v228
        %v2052 = vrot.slane %v2046, 3
        %v2053 = vrot.slane %v2047, 3
        %v2054 = vsel %vm520, %v2052, %v2053
        %v2055 = vrot.slane %v2048, 3
        %v2056 = vsel %vm520, %v2053, %v2055
        %2057 = vrot.lane.b32.xlu0 %v2054, 126
        %v2058 = vpop.permute.xlu0 %2057
        %2059 = vrot.lane.b32.xlu0 %v2056, 126
        %v2060 = vpop.permute.xlu0 %2059
        %v2063 = vadd.f32 %v2042, %v2058
        %v2064 = vadd.f32 %v2043, %v2060
        %s2065 = sld [smem:[#allocation3 + $0x902]]
        %v2066 = vstv %s2065
        %v2067 = vmul.f32 %v2066, %v226
        %v2068 = vmul.f32 %v2066, %v227
        %v2069 = vmul.f32 %v2066, %v228
        %v2073 = vrot.slane %v2067, 3
        %v2074 = vrot.slane %v2068, 3
        %v2075 = vsel %vm520, %v2073, %v2074
        %v2076 = vrot.slane %v2069, 3
        %v2077 = vsel %vm520, %v2074, %v2076
        %2078 = vrot.lane.b32.xlu0 %v2075, 125
        %v2079 = vpop.permute.xlu0 %2078
        %2080 = vrot.lane.b32.xlu0 %v2077, 125
        %v2081 = vpop.permute.xlu0 %2080
        %v2084 = vadd.f32 %v2063, %v2079
        %v2085 = vadd.f32 %v2064, %v2081
        %s2086 = sld [smem:[#allocation3 + $0x982]]
        %v2087 = vstv %s2086
        %v2088 = vmul.f32 %v2087, %v226
        %v2089 = vmul.f32 %v2087, %v227
        %v2090 = vmul.f32 %v2087, %v228
        %v2094 = vrot.slane %v2088, 3
        %v2095 = vrot.slane %v2089, 3
        %v2096 = vsel %vm520, %v2094, %v2095
        %v2097 = vrot.slane %v2090, 3
        %v2098 = vsel %vm520, %v2095, %v2097
        %2099 = vrot.lane.b32.xlu0 %v2096, 124
        %v2100 = vpop.permute.xlu0 %2099
        %2101 = vrot.lane.b32.xlu0 %v2098, 124
        %v2102 = vpop.permute.xlu0 %2101
        %v2105 = vadd.f32 %v2084, %v2100
        %v2106 = vadd.f32 %v2085, %v2102
        %s2107 = sld [smem:[#allocation3 + $0xa02]]
        %v2108 = vstv %s2107
        %v2109 = vmul.f32 %v2108, %v226
        %v2110 = vmul.f32 %v2108, %v227
        %v2111 = vmul.f32 %v2108, %v228
        %v2115 = vrot.slane %v2109, 4
        %v2116 = vrot.slane %v2110, 4
        %v2117 = vsel %vm622, %v2115, %v2116
        %v2118 = vrot.slane %v2111, 4
        %v2119 = vsel %vm622, %v2116, %v2118
        %v2122 = vadd.f32 %v2105, %v2117
        %v2123 = vadd.f32 %v2106, %v2119
        %s2124 = sld [smem:[#allocation3 + $0xa82]]
        %v2125 = vstv %s2124
        %v2126 = vmul.f32 %v2125, %v226
        %v2127 = vmul.f32 %v2125, %v227
        %v2128 = vmul.f32 %v2125, %v228
        %v2132 = vrot.slane %v2126, 4
        %v2133 = vrot.slane %v2127, 4
        %v2134 = vsel %vm622, %v2132, %v2133
        %v2135 = vrot.slane %v2128, 4
        %v2136 = vsel %vm622, %v2133, %v2135
        %2137 = vrot.lane.b32.xlu0 %v2134, 127
        %v2138 = vpop.permute.xlu0 %2137
        %2139 = vrot.lane.b32.xlu0 %v2136, 127
        %v2140 = vpop.permute.xlu0 %2139
        %v2143 = vadd.f32 %v2122, %v2138
        %v2144 = vadd.f32 %v2123, %v2140
        %s2145 = sld [smem:[#allocation3 + $0xb02]]
        %v2146 = vstv %s2145
        %v2147 = vmul.f32 %v2146, %v226
        %v2148 = vmul.f32 %v2146, %v227
        %v2149 = vmul.f32 %v2146, %v228
        %v2153 = vrot.slane %v2147, 4
        %v2154 = vrot.slane %v2148, 4
        %v2155 = vsel %vm622, %v2153, %v2154
        %v2156 = vrot.slane %v2149, 4
        %v2157 = vsel %vm622, %v2154, %v2156
        %2158 = vrot.lane.b32.xlu0 %v2155, 126
        %v2159 = vpop.permute.xlu0 %2158
        %2160 = vrot.lane.b32.xlu0 %v2157, 126
        %v2161 = vpop.permute.xlu0 %2160
        %v2164 = vadd.f32 %v2143, %v2159
        %v2165 = vadd.f32 %v2144, %v2161
        %s2166 = sld [smem:[#allocation3 + $0xb82]]
        %v2167 = vstv %s2166
        %v2168 = vmul.f32 %v2167, %v226
        %v2169 = vmul.f32 %v2167, %v227
        %v2170 = vmul.f32 %v2167, %v228
        %v2174 = vrot.slane %v2168, 4
        %v2175 = vrot.slane %v2169, 4
        %v2176 = vsel %vm622, %v2174, %v2175
        %v2177 = vrot.slane %v2170, 4
        %v2178 = vsel %vm622, %v2175, %v2177
        %2179 = vrot.lane.b32.xlu0 %v2176, 125
        %v2180 = vpop.permute.xlu0 %2179
        %2181 = vrot.lane.b32.xlu0 %v2178, 125
        %v2182 = vpop.permute.xlu0 %2181
        %v2185 = vadd.f32 %v2164, %v2180
        %v2186 = vadd.f32 %v2165, %v2182
        %s2187 = sld [smem:[#allocation3 + $0xc02]]
        %v2188 = vstv %s2187
        %v2189 = vmul.f32 %v2188, %v226
        %v2190 = vmul.f32 %v2188, %v227
        %v2191 = vmul.f32 %v2188, %v228
        %v2195 = vrot.slane %v2189, 4
        %v2196 = vrot.slane %v2190, 4
        %v2197 = vsel %vm622, %v2195, %v2196
        %v2198 = vrot.slane %v2191, 4
        %v2199 = vsel %vm622, %v2196, %v2198
        %2200 = vrot.lane.b32.xlu0 %v2197, 124
        %v2201 = vpop.permute.xlu0 %2200
        %2202 = vrot.lane.b32.xlu0 %v2199, 124
        %v2203 = vpop.permute.xlu0 %2202
        %v2206 = vadd.f32 %v2185, %v2201
        %v2207 = vadd.f32 %v2186, %v2203
        %s2208 = sld [smem:[#allocation5 + $0x2]]
        %v2209 = vstv %s2208
        %v2210 = vadd.f32 %v2206, %v2209
        %v2211 = vadd.f32 %v2207, %v2209
        %v2214 = vcombine.high %v2210, %v2210
        %v2216 = vunpack.c.l.s4 1983009808
        %v2217 = vunpack.c.0.s8 %v2216
        %v2218 = vlaneseq
        %v2219 = vshrl.u32 %v2218, 7
        %v2220 = vsub.s32 %v2217, %v2219
        %v2221 = vrot.slane %v2210, %v2220
        %v2223 = vunpack.c.l.s4 1983009808
        %v2224 = vunpack.c.0.s8 %v2223
        %v2225 = vlaneseq
        %v2226 = vshrl.u32 %v2225, 7
        %v2227 = vsub.s32 %v2224, %v2226
        %v2228 = vrot.slane %v2214, %v2227
        %v2229 = vcombine.high %v2221, %v2221
        %v2230 = vcombine.high %v2228, %v2228
        %v2231 = vcombine.high %v2211, %v2211
        %v2233 = vunpack.c.l.s4 1983009808
        %v2234 = vunpack.c.0.s8 %v2233
        %v2235 = vlaneseq
        %v2236 = vshrl.u32 %v2235, 7
        %v2237 = vsub.s32 %v2234, %v2236
        %v2238 = vrot.slane %v2211, %v2237
        %v2240 = vunpack.c.l.s4 1983009808
        %v2241 = vunpack.c.0.s8 %v2240
        %v2242 = vlaneseq
        %v2243 = vshrl.u32 %v2242, 7
        %v2244 = vsub.s32 %v2241, %v2243
        %v2245 = vrot.slane %v2231, %v2244
        %v2246 = vcombine.high %v2238, %v2238
        %v2247 = vcombine.high %v2245, %v2245
        %v2256 = vrot.slane %v2221, 7
        %v2257 = vrot.slane %v2256, 2
        %v2258 = vrot.slane %v2229, 7
        %v2259 = vrot.slane %v2258, 2
        %v2260 = vrot.slane %v2228, 7
        %v2261 = vrot.slane %v2260, 2
        %v2262 = vrot.slane %v2230, 7
        %v2263 = vrot.slane %v2262, 2
        %v2264 = vrot.slane %v2238, 7
        %v2265 = vrot.slane %v2264, 2
        %v2266 = vrot.slane %v2246, 7
        %v2267 = vrot.slane %v2266, 2
        %v2268 = vrot.slane %v2245, 7
        %v2269 = vrot.slane %v2268, 2
        %v2270 = vrot.slane %v2247, 7
        %v2271 = vrot.slane %v2270, 2
        %v2280 = vmax.f32 %v2221, %v2257
        %v2281 = vmax.f32 %v2229, %v2259
        %v2282 = vmax.f32 %v2228, %v2261
        %v2283 = vmax.f32 %v2230, %v2263
        %v2284 = vmax.f32 %v2238, %v2265
        %v2285 = vmax.f32 %v2246, %v2267
        %v2286 = vmax.f32 %v2245, %v2269
        %v2287 = vmax.f32 %v2247, %v2271
        %v2296 = vlaneseq
        %v2297 = vshrl.u32 %v2296, 7
        %v2298 = vsub.s32 0, %v2297
        %v2299 = vrot.slane %v2280, %v2298
        %v2300 = vlaneseq
        %v2301 = vshrl.u32 %v2300, 7
        %v2302 = vsub.s32 0, %v2301
        %v2303 = vrot.slane %v2281, %v2302
        %v2304 = vlaneseq
        %v2305 = vshrl.u32 %v2304, 7
        %v2306 = vsub.s32 0, %v2305
        %v2307 = vrot.slane %v2282, %v2306
        %v2308 = vlaneseq
        %v2309 = vshrl.u32 %v2308, 7
        %v2310 = vsub.s32 0, %v2309
        %v2311 = vrot.slane %v2283, %v2310
        %v2312 = vlaneseq
        %v2313 = vshrl.u32 %v2312, 7
        %v2314 = vsub.s32 0, %v2313
        %v2315 = vrot.slane %v2284, %v2314
        %v2316 = vlaneseq
        %v2317 = vshrl.u32 %v2316, 7
        %v2318 = vsub.s32 0, %v2317
        %v2319 = vrot.slane %v2285, %v2318
        %v2320 = vlaneseq
        %v2321 = vshrl.u32 %v2320, 7
        %v2322 = vsub.s32 0, %v2321
        %v2323 = vrot.slane %v2286, %v2322
        %v2324 = vlaneseq
        %v2325 = vshrl.u32 %v2324, 7
        %v2326 = vsub.s32 0, %v2325
        %v2327 = vrot.slane %v2287, %v2326
        %v2328 = vsel %vm836, %v2303, %v2299
        %v2329 = vsel %vm838, %v2307, %v2328
        %v2330 = vsel %vm840, %v2311, %v2329
        %v2331 = vsel %vm842, %v2315, %v2330
        %v2332 = vsel %vm844, %v2319, %v2331
        %v2333 = vsel %vm846, %v2323, %v2332
        %v2334 = vsel %vm848, %v2327, %v2333
        %v2335 = vsel %vm850, %v2334, 0
        %2337 = vmatprep.subr.mxu0 0.0
        %2338 = vmatpush1.msra.mxu0 0.0
        %2339 = vmatprep.subr.mxu0 0.0
        %2340 = vmatpush1.msra.mxu0 0.0
        %2341 = vmatprep.subr.mxu0 0.0
        %2342 = vmatpush1.msra.mxu0 0.0
        %2343 = vmatprep.subr.mxu0 0.0
        %2344 = vmatpush1.msra.mxu0 0.0
        %2345 = vmatprep.subr.mxu0 0.0
        %2346 = vmatpush1.msra.mxu0 0.0
        %2347 = vmatprep.subr.mxu0 0.0
        %2348 = vmatpush1.msra.mxu0 0.0
        %2349 = vmatprep.subr.mxu0 0.0
        %2350 = vmatpush1.msra.mxu0 0.0
        %2351 = vmatprep.subr.mxu0 0.0
        %2352 = vmatpush1.msra.mxu0 0.0
        %2353 = vmatprep.subr.mxu0 0.0
        %2354 = vmatpush1.msra.mxu0 0.0
        %2355 = vmatprep.subr.mxu0 0.0
        %2356 = vmatpush1.msra.mxu0 0.0
        %2357 = vmatprep.subr.mxu0 0.0
        %2358 = vmatpush1.msra.mxu0 0.0
        %2359 = vmatprep.subr.mxu0 0.0
        %2360 = vmatpush1.msra.mxu0 0.0
        %2361 = vmatprep.subr.mxu0 0.0
        %2362 = vmatpush1.msra.mxu0 0.0
        %2363 = vmatprep.subr.mxu0 0.0
        %2364 = vmatpush1.msra.mxu0 0.0
        %2365 = vmatprep.subr.mxu0 0.0
        %2366 = vmatpush1.msra.mxu0 %v240
        %2367 = vmatprep.subr.mxu0 0.0
        %2368 = vmatpush1.msra.mxu0 %v239
        %2369 = vmatprep.subr.mxu0 0.0
        %2370 = vmatpush2.msra.mxu0 0.0
        %2371 = vmatprep.subr.mxu0 0.0
        %2372 = vmatpush2.msra.mxu0 0.0
        %2373 = vmatprep.subr.mxu0 0.0
        %2374 = vmatpush2.msra.mxu0 0.0
        %2375 = vmatprep.subr.mxu0 0.0
        %2376 = vmatpush2.msra.mxu0 0.0
        %2377 = vmatprep.subr.mxu0 0.0
        %2378 = vmatpush2.msra.mxu0 0.0
        %2379 = vmatprep.subr.mxu0 0.0
        %2380 = vmatpush2.msra.mxu0 0.0
        %2381 = vmatprep.subr.mxu0 0.0
        %2382 = vmatpush2.msra.mxu0 0.0
        %2383 = vmatprep.subr.mxu0 0.0
        %2384 = vmatpush2.msra.mxu0 0.0
        %2385 = vmatprep.subr.mxu0 0.0
        %2386 = vmatpush2.msra.mxu0 0.0
        %2387 = vmatprep.subr.mxu0 0.0
        %2388 = vmatpush2.msra.mxu0 0.0
        %2389 = vmatprep.subr.mxu0 0.0
        %2390 = vmatpush2.msra.mxu0 0.0
        %2391 = vmatprep.subr.mxu0 0.0
        %2392 = vmatpush2.msra.mxu0 0.0
        %2393 = vmatprep.subr.mxu0 0.0
        %2394 = vmatpush2.msra.mxu0 0.0
        %2395 = vmatprep.subr.mxu0 0.0
        %2396 = vmatpush2.msra.mxu0 0.0
        %2397 = vmatprep.subr.mxu0 0.0
        %2398 = vmatpush2.msra.mxu0 0.0
        %2399 = vmatprep.subr.mxu0 0.0
        %2400 = vmatpush2.msra.mxu0 0.0
        %2401 = vmatprep.mubr.f32.mxu0 0.0
        %2402 = vmatmul.mubr.f32.gmra.mxu0 %v2335
        %v2403 = vpop.f32.mrf.mxu0
        %v2404 = vadd.f32 0.0, %v2403
        %v2405 = vpop.f32.mrf.mxu0
        %2406 = vdwg.mxu0
        %2407 = vmatprep.subr.mxu0 0.0
        %2408 = vmatpush1.msra.mxu0 0.0
        %2409 = vmatprep.subr.mxu0 0.0
        %2410 = vmatpush1.msra.mxu0 0.0
        %2411 = vmatprep.subr.mxu0 0.0
        %2412 = vmatpush1.msra.mxu0 0.0
        %2413 = vmatprep.subr.mxu0 0.0
        %2414 = vmatpush1.msra.mxu0 0.0
        %2415 = vmatprep.subr.mxu0 0.0
        %2416 = vmatpush1.msra.mxu0 0.0
        %2417 = vmatprep.subr.mxu0 0.0
        %2418 = vmatpush1.msra.mxu0 0.0
        %2419 = vmatprep.subr.mxu0 0.0
        %2420 = vmatpush1.msra.mxu0 0.0
        %2421 = vmatprep.subr.mxu0 0.0
        %2422 = vmatpush1.msra.mxu0 0.0
        %2423 = vmatprep.subr.mxu0 0.0
        %2424 = vmatpush1.msra.mxu0 0.0
        %2425 = vmatprep.subr.mxu0 0.0
        %2426 = vmatpush1.msra.mxu0 0.0
        %2427 = vmatprep.subr.mxu0 0.0
        %2428 = vmatpush1.msra.mxu0 0.0
        %2429 = vmatprep.subr.mxu0 0.0
        %2430 = vmatpush1.msra.mxu0 0.0
        %2431 = vmatprep.subr.mxu0 0.0
        %2432 = vmatpush1.msra.mxu0 0.0
        %2433 = vmatprep.subr.mxu0 0.0
        %2434 = vmatpush1.msra.mxu0 0.0
        %2435 = vmatprep.subr.mxu0 0.0
        %2436 = vmatpush1.msra.mxu0 %v247
        %2437 = vmatprep.subr.mxu0 0.0
        %2438 = vmatpush1.msra.mxu0 %v246
        %2439 = vmatprep.subr.mxu0 0.0
        %2440 = vmatpush2.msra.mxu0 0.0
        %2441 = vmatprep.subr.mxu0 0.0
        %2442 = vmatpush2.msra.mxu0 0.0
        %2443 = vmatprep.subr.mxu0 0.0
        %2444 = vmatpush2.msra.mxu0 0.0
        %2445 = vmatprep.subr.mxu0 0.0
        %2446 = vmatpush2.msra.mxu0 0.0
        %2447 = vmatprep.subr.mxu0 0.0
        %2448 = vmatpush2.msra.mxu0 0.0
        %2449 = vmatprep.subr.mxu0 0.0
        %2450 = vmatpush2.msra.mxu0 0.0
        %2451 = vmatprep.subr.mxu0 0.0
        %2452 = vmatpush2.msra.mxu0 0.0
        %2453 = vmatprep.subr.mxu0 0.0
        %2454 = vmatpush2.msra.mxu0 0.0
        %2455 = vmatprep.subr.mxu0 0.0
        %2456 = vmatpush2.msra.mxu0 0.0
        %2457 = vmatprep.subr.mxu0 0.0
        %2458 = vmatpush2.msra.mxu0 0.0
        %2459 = vmatprep.subr.mxu0 0.0
        %2460 = vmatpush2.msra.mxu0 0.0
        %2461 = vmatprep.subr.mxu0 0.0
        %2462 = vmatpush2.msra.mxu0 0.0
        %2463 = vmatprep.subr.mxu0 0.0
        %2464 = vmatpush2.msra.mxu0 0.0
        %2465 = vmatprep.subr.mxu0 0.0
        %2466 = vmatpush2.msra.mxu0 0.0
        %2467 = vmatprep.subr.mxu0 0.0
        %2468 = vmatpush2.msra.mxu0 0.0
        %2469 = vmatprep.subr.mxu0 0.0
        %2470 = vmatpush2.msra.mxu0 0.0
        %2471 = vmatprep.mubr.f32.mxu0 0.0
        %2472 = vmatmul.mubr.f32.gmra.mxu0 %v2335
        %v2473 = vpop.f32.mrf.mxu0
        %v2474 = vadd.f32 0.0, %v2473
        %v2475 = vpop.f32.mrf.mxu0
        %2476 = vdwg.mxu0
        %v2477 = vmax.f32 %v2404, %v2474
        %v2478 = vxor.u32 %v2477, 2147483648
        %v2479 = vmul.f32 %v2478, 1.442695
        %v2480 = vpow.pop %v2479
        %v2481 = vadd.f32 %v2480, 1.0
        %v2482 = vrcp.pop %v2481
        %v2483 = vmul.f32 1.0, %v2482
        %s2484 = scalar_lea.vmem %s199, 16
        %2485 = vst.msk [vmem:[%s2484] sm:$0xff] %vm1000, %v2483
        %s2486 = sld [smem:[#allocation3 + $0x3]]
        %v2487 = vstv %s2486
        %v2488 = vmul.f32 %v2487, %v226
        %v2489 = vmul.f32 %v2487, %v227
        %s2490 = sld [smem:[#allocation3 + $0x83]]
        %v2491 = vstv %s2490
        %v2492 = vmul.f32 %v2491, %v226
        %v2493 = vmul.f32 %v2491, %v227
        %2496 = vrot.lane.b32.xlu0 %v2492, 127
        %v2497 = vpop.permute.xlu0 %2496
        %2498 = vrot.lane.b32.xlu0 %v2493, 127
        %v2499 = vpop.permute.xlu0 %2498
        %v2502 = vadd.f32 %v2488, %v2497
        %v2503 = vadd.f32 %v2489, %v2499
        %s2504 = sld [smem:[#allocation3 + $0x103]]
        %v2505 = vstv %s2504
        %v2506 = vmul.f32 %v2505, %v226
        %v2507 = vmul.f32 %v2505, %v227
        %2510 = vrot.lane.b32.xlu0 %v2506, 126
        %v2511 = vpop.permute.xlu0 %2510
        %2512 = vrot.lane.b32.xlu0 %v2507, 126
        %v2513 = vpop.permute.xlu0 %2512
        %v2516 = vadd.f32 %v2502, %v2511
        %v2517 = vadd.f32 %v2503, %v2513
        %s2518 = sld [smem:[#allocation3 + $0x183]]
        %v2519 = vstv %s2518
        %v2520 = vmul.f32 %v2519, %v226
        %v2521 = vmul.f32 %v2519, %v227
        %2524 = vrot.lane.b32.xlu0 %v2520, 125
        %v2525 = vpop.permute.xlu0 %2524
        %2526 = vrot.lane.b32.xlu0 %v2521, 125
        %v2527 = vpop.permute.xlu0 %2526
        %v2530 = vadd.f32 %v2516, %v2525
        %v2531 = vadd.f32 %v2517, %v2527
        %s2532 = sld [smem:[#allocation3 + $0x203]]
        %v2533 = vstv %s2532
        %v2534 = vmul.f32 %v2533, %v226
        %v2535 = vmul.f32 %v2533, %v227
        %2538 = vrot.lane.b32.xlu0 %v2534, 124
        %v2539 = vpop.permute.xlu0 %2538
        %2540 = vrot.lane.b32.xlu0 %v2535, 124
        %v2541 = vpop.permute.xlu0 %2540
        %v2544 = vadd.f32 %v2530, %v2539
        %v2545 = vadd.f32 %v2531, %v2541
        %s2546 = sld [smem:[#allocation3 + $0x283]]
        %v2547 = vstv %s2546
        %v2548 = vmul.f32 %v2547, %v226
        %v2549 = vmul.f32 %v2547, %v227
        %v2550 = vmul.f32 %v2547, %v228
        %v2554 = vrot.slane %v2548, 1
        %v2555 = vrot.slane %v2549, 1
        %v2556 = vsel %vm316, %v2554, %v2555
        %v2557 = vrot.slane %v2550, 1
        %v2558 = vsel %vm316, %v2555, %v2557
        %v2561 = vadd.f32 %v2544, %v2556
        %v2562 = vadd.f32 %v2545, %v2558
        %s2563 = sld [smem:[#allocation3 + $0x303]]
        %v2564 = vstv %s2563
        %v2565 = vmul.f32 %v2564, %v226
        %v2566 = vmul.f32 %v2564, %v227
        %v2567 = vmul.f32 %v2564, %v228
        %v2571 = vrot.slane %v2565, 1
        %v2572 = vrot.slane %v2566, 1
        %v2573 = vsel %vm316, %v2571, %v2572
        %v2574 = vrot.slane %v2567, 1
        %v2575 = vsel %vm316, %v2572, %v2574
        %2576 = vrot.lane.b32.xlu0 %v2573, 127
        %v2577 = vpop.permute.xlu0 %2576
        %2578 = vrot.lane.b32.xlu0 %v2575, 127
        %v2579 = vpop.permute.xlu0 %2578
        %v2582 = vadd.f32 %v2561, %v2577
        %v2583 = vadd.f32 %v2562, %v2579
        %s2584 = sld [smem:[#allocation3 + $0x383]]
        %v2585 = vstv %s2584
        %v2586 = vmul.f32 %v2585, %v226
        %v2587 = vmul.f32 %v2585, %v227
        %v2588 = vmul.f32 %v2585, %v228
        %v2592 = vrot.slane %v2586, 1
        %v2593 = vrot.slane %v2587, 1
        %v2594 = vsel %vm316, %v2592, %v2593
        %v2595 = vrot.slane %v2588, 1
        %v2596 = vsel %vm316, %v2593, %v2595
        %2597 = vrot.lane.b32.xlu0 %v2594, 126
        %v2598 = vpop.permute.xlu0 %2597
        %2599 = vrot.lane.b32.xlu0 %v2596, 126
        %v2600 = vpop.permute.xlu0 %2599
        %v2603 = vadd.f32 %v2582, %v2598
        %v2604 = vadd.f32 %v2583, %v2600
        %s2605 = sld [smem:[#allocation3 + $0x403]]
        %v2606 = vstv %s2605
        %v2607 = vmul.f32 %v2606, %v226
        %v2608 = vmul.f32 %v2606, %v227
        %v2609 = vmul.f32 %v2606, %v228
        %v2613 = vrot.slane %v2607, 1
        %v2614 = vrot.slane %v2608, 1
        %v2615 = vsel %vm316, %v2613, %v2614
        %v2616 = vrot.slane %v2609, 1
        %v2617 = vsel %vm316, %v2614, %v2616
        %2618 = vrot.lane.b32.xlu0 %v2615, 125
        %v2619 = vpop.permute.xlu0 %2618
        %2620 = vrot.lane.b32.xlu0 %v2617, 125
        %v2621 = vpop.permute.xlu0 %2620
        %v2624 = vadd.f32 %v2603, %v2619
        %v2625 = vadd.f32 %v2604, %v2621
        %s2626 = sld [smem:[#allocation3 + $0x483]]
        %v2627 = vstv %s2626
        %v2628 = vmul.f32 %v2627, %v226
        %v2629 = vmul.f32 %v2627, %v227
        %v2630 = vmul.f32 %v2627, %v228
        %v2634 = vrot.slane %v2628, 1
        %v2635 = vrot.slane %v2629, 1
        %v2636 = vsel %vm316, %v2634, %v2635
        %v2637 = vrot.slane %v2630, 1
        %v2638 = vsel %vm316, %v2635, %v2637
        %2639 = vrot.lane.b32.xlu0 %v2636, 124
        %v2640 = vpop.permute.xlu0 %2639
        %2641 = vrot.lane.b32.xlu0 %v2638, 124
        %v2642 = vpop.permute.xlu0 %2641
        %v2645 = vadd.f32 %v2624, %v2640
        %v2646 = vadd.f32 %v2625, %v2642
        %s2647 = sld [smem:[#allocation3 + $0x503]]
        %v2648 = vstv %s2647
        %v2649 = vmul.f32 %v2648, %v226
        %v2650 = vmul.f32 %v2648, %v227
        %v2651 = vmul.f32 %v2648, %v228
        %v2655 = vrot.slane %v2649, 2
        %v2656 = vrot.slane %v2650, 2
        %v2657 = vsel %vm418, %v2655, %v2656
        %v2658 = vrot.slane %v2651, 2
        %v2659 = vsel %vm418, %v2656, %v2658
        %v2662 = vadd.f32 %v2645, %v2657
        %v2663 = vadd.f32 %v2646, %v2659
        %s2664 = sld [smem:[#allocation3 + $0x583]]
        %v2665 = vstv %s2664
        %v2666 = vmul.f32 %v2665, %v226
        %v2667 = vmul.f32 %v2665, %v227
        %v2668 = vmul.f32 %v2665, %v228
        %v2672 = vrot.slane %v2666, 2
        %v2673 = vrot.slane %v2667, 2
        %v2674 = vsel %vm418, %v2672, %v2673
        %v2675 = vrot.slane %v2668, 2
        %v2676 = vsel %vm418, %v2673, %v2675
        %2677 = vrot.lane.b32.xlu0 %v2674, 127
        %v2678 = vpop.permute.xlu0 %2677
        %2679 = vrot.lane.b32.xlu0 %v2676, 127
        %v2680 = vpop.permute.xlu0 %2679
        %v2683 = vadd.f32 %v2662, %v2678
        %v2684 = vadd.f32 %v2663, %v2680
        %s2685 = sld [smem:[#allocation3 + $0x603]]
        %v2686 = vstv %s2685
        %v2687 = vmul.f32 %v2686, %v226
        %v2688 = vmul.f32 %v2686, %v227
        %v2689 = vmul.f32 %v2686, %v228
        %v2693 = vrot.slane %v2687, 2
        %v2694 = vrot.slane %v2688, 2
        %v2695 = vsel %vm418, %v2693, %v2694
        %v2696 = vrot.slane %v2689, 2
        %v2697 = vsel %vm418, %v2694, %v2696
        %2698 = vrot.lane.b32.xlu0 %v2695, 126
        %v2699 = vpop.permute.xlu0 %2698
        %2700 = vrot.lane.b32.xlu0 %v2697, 126
        %v2701 = vpop.permute.xlu0 %2700
        %v2704 = vadd.f32 %v2683, %v2699
        %v2705 = vadd.f32 %v2684, %v2701
        %s2706 = sld [smem:[#allocation3 + $0x683]]
        %v2707 = vstv %s2706
        %v2708 = vmul.f32 %v2707, %v226
        %v2709 = vmul.f32 %v2707, %v227
        %v2710 = vmul.f32 %v2707, %v228
        %v2714 = vrot.slane %v2708, 2
        %v2715 = vrot.slane %v2709, 2
        %v2716 = vsel %vm418, %v2714, %v2715
        %v2717 = vrot.slane %v2710, 2
        %v2718 = vsel %vm418, %v2715, %v2717
        %2719 = vrot.lane.b32.xlu0 %v2716, 125
        %v2720 = vpop.permute.xlu0 %2719
        %2721 = vrot.lane.b32.xlu0 %v2718, 125
        %v2722 = vpop.permute.xlu0 %2721
        %v2725 = vadd.f32 %v2704, %v2720
        %v2726 = vadd.f32 %v2705, %v2722
        %s2727 = sld [smem:[#allocation3 + $0x703]]
        %v2728 = vstv %s2727
        %v2729 = vmul.f32 %v2728, %v226
        %v2730 = vmul.f32 %v2728, %v227
        %v2731 = vmul.f32 %v2728, %v228
        %v2735 = vrot.slane %v2729, 2
        %v2736 = vrot.slane %v2730, 2
        %v2737 = vsel %vm418, %v2735, %v2736
        %v2738 = vrot.slane %v2731, 2
        %v2739 = vsel %vm418, %v2736, %v2738
        %2740 = vrot.lane.b32.xlu0 %v2737, 124
        %v2741 = vpop.permute.xlu0 %2740
        %2742 = vrot.lane.b32.xlu0 %v2739, 124
        %v2743 = vpop.permute.xlu0 %2742
        %v2746 = vadd.f32 %v2725, %v2741
        %v2747 = vadd.f32 %v2726, %v2743
        %s2748 = sld [smem:[#allocation3 + $0x783]]
        %v2749 = vstv %s2748
        %v2750 = vmul.f32 %v2749, %v226
        %v2751 = vmul.f32 %v2749, %v227
        %v2752 = vmul.f32 %v2749, %v228
        %v2756 = vrot.slane %v2750, 3
        %v2757 = vrot.slane %v2751, 3
        %v2758 = vsel %vm520, %v2756, %v2757
        %v2759 = vrot.slane %v2752, 3
        %v2760 = vsel %vm520, %v2757, %v2759
        %v2763 = vadd.f32 %v2746, %v2758
        %v2764 = vadd.f32 %v2747, %v2760
        %s2765 = sld [smem:[#allocation3 + $0x803]]
        %v2766 = vstv %s2765
        %v2767 = vmul.f32 %v2766, %v226
        %v2768 = vmul.f32 %v2766, %v227
        %v2769 = vmul.f32 %v2766, %v228
        %v2773 = vrot.slane %v2767, 3
        %v2774 = vrot.slane %v2768, 3
        %v2775 = vsel %vm520, %v2773, %v2774
        %v2776 = vrot.slane %v2769, 3
        %v2777 = vsel %vm520, %v2774, %v2776
        %2778 = vrot.lane.b32.xlu0 %v2775, 127
        %v2779 = vpop.permute.xlu0 %2778
        %2780 = vrot.lane.b32.xlu0 %v2777, 127
        %v2781 = vpop.permute.xlu0 %2780
        %v2784 = vadd.f32 %v2763, %v2779
        %v2785 = vadd.f32 %v2764, %v2781
        %s2786 = sld [smem:[#allocation3 + $0x883]]
        %v2787 = vstv %s2786
        %v2788 = vmul.f32 %v2787, %v226
        %v2789 = vmul.f32 %v2787, %v227
        %v2790 = vmul.f32 %v2787, %v228
        %v2794 = vrot.slane %v2788, 3
        %v2795 = vrot.slane %v2789, 3
        %v2796 = vsel %vm520, %v2794, %v2795
        %v2797 = vrot.slane %v2790, 3
        %v2798 = vsel %vm520, %v2795, %v2797
        %2799 = vrot.lane.b32.xlu0 %v2796, 126
        %v2800 = vpop.permute.xlu0 %2799
        %2801 = vrot.lane.b32.xlu0 %v2798, 126
        %v2802 = vpop.permute.xlu0 %2801
        %v2805 = vadd.f32 %v2784, %v2800
        %v2806 = vadd.f32 %v2785, %v2802
        %s2807 = sld [smem:[#allocation3 + $0x903]]
        %v2808 = vstv %s2807
        %v2809 = vmul.f32 %v2808, %v226
        %v2810 = vmul.f32 %v2808, %v227
        %v2811 = vmul.f32 %v2808, %v228
        %v2815 = vrot.slane %v2809, 3
        %v2816 = vrot.slane %v2810, 3
        %v2817 = vsel %vm520, %v2815, %v2816
        %v2818 = vrot.slane %v2811, 3
        %v2819 = vsel %vm520, %v2816, %v2818
        %2820 = vrot.lane.b32.xlu0 %v2817, 125
        %v2821 = vpop.permute.xlu0 %2820
        %2822 = vrot.lane.b32.xlu0 %v2819, 125
        %v2823 = vpop.permute.xlu0 %2822
        %v2826 = vadd.f32 %v2805, %v2821
        %v2827 = vadd.f32 %v2806, %v2823
        %s2828 = sld [smem:[#allocation3 + $0x983]]
        %v2829 = vstv %s2828
        %v2830 = vmul.f32 %v2829, %v226
        %v2831 = vmul.f32 %v2829, %v227
        %v2832 = vmul.f32 %v2829, %v228
        %v2836 = vrot.slane %v2830, 3
        %v2837 = vrot.slane %v2831, 3
        %v2838 = vsel %vm520, %v2836, %v2837
        %v2839 = vrot.slane %v2832, 3
        %v2840 = vsel %vm520, %v2837, %v2839
        %2841 = vrot.lane.b32.xlu0 %v2838, 124
        %v2842 = vpop.permute.xlu0 %2841
        %2843 = vrot.lane.b32.xlu0 %v2840, 124
        %v2844 = vpop.permute.xlu0 %2843
        %v2847 = vadd.f32 %v2826, %v2842
        %v2848 = vadd.f32 %v2827, %v2844
        %s2849 = sld [smem:[#allocation3 + $0xa03]]
        %v2850 = vstv %s2849
        %v2851 = vmul.f32 %v2850, %v226
        %v2852 = vmul.f32 %v2850, %v227
        %v2853 = vmul.f32 %v2850, %v228
        %v2857 = vrot.slane %v2851, 4
        %v2858 = vrot.slane %v2852, 4
        %v2859 = vsel %vm622, %v2857, %v2858
        %v2860 = vrot.slane %v2853, 4
        %v2861 = vsel %vm622, %v2858, %v2860
        %v2864 = vadd.f32 %v2847, %v2859
        %v2865 = vadd.f32 %v2848, %v2861
        %s2866 = sld [smem:[#allocation3 + $0xa83]]
        %v2867 = vstv %s2866
        %v2868 = vmul.f32 %v2867, %v226
        %v2869 = vmul.f32 %v2867, %v227
        %v2870 = vmul.f32 %v2867, %v228
        %v2874 = vrot.slane %v2868, 4
        %v2875 = vrot.slane %v2869, 4
        %v2876 = vsel %vm622, %v2874, %v2875
        %v2877 = vrot.slane %v2870, 4
        %v2878 = vsel %vm622, %v2875, %v2877
        %2879 = vrot.lane.b32.xlu0 %v2876, 127
        %v2880 = vpop.permute.xlu0 %2879
        %2881 = vrot.lane.b32.xlu0 %v2878, 127
        %v2882 = vpop.permute.xlu0 %2881
        %v2885 = vadd.f32 %v2864, %v2880
        %v2886 = vadd.f32 %v2865, %v2882
        %s2887 = sld [smem:[#allocation3 + $0xb03]]
        %v2888 = vstv %s2887
        %v2889 = vmul.f32 %v2888, %v226
        %v2890 = vmul.f32 %v2888, %v227
        %v2891 = vmul.f32 %v2888, %v228
        %v2895 = vrot.slane %v2889, 4
        %v2896 = vrot.slane %v2890, 4
        %v2897 = vsel %vm622, %v2895, %v2896
        %v2898 = vrot.slane %v2891, 4
        %v2899 = vsel %vm622, %v2896, %v2898
        %2900 = vrot.lane.b32.xlu0 %v2897, 126
        %v2901 = vpop.permute.xlu0 %2900
        %2902 = vrot.lane.b32.xlu0 %v2899, 126
        %v2903 = vpop.permute.xlu0 %2902
        %v2906 = vadd.f32 %v2885, %v2901
        %v2907 = vadd.f32 %v2886, %v2903
        %s2908 = sld [smem:[#allocation3 + $0xb83]]
        %v2909 = vstv %s2908
        %v2910 = vmul.f32 %v2909, %v226
        %v2911 = vmul.f32 %v2909, %v227
        %v2912 = vmul.f32 %v2909, %v228
        %v2916 = vrot.slane %v2910, 4
        %v2917 = vrot.slane %v2911, 4
        %v2918 = vsel %vm622, %v2916, %v2917
        %v2919 = vrot.slane %v2912, 4
        %v2920 = vsel %vm622, %v2917, %v2919
        %2921 = vrot.lane.b32.xlu0 %v2918, 125
        %v2922 = vpop.permute.xlu0 %2921
        %2923 = vrot.lane.b32.xlu0 %v2920, 125
        %v2924 = vpop.permute.xlu0 %2923
        %v2927 = vadd.f32 %v2906, %v2922
        %v2928 = vadd.f32 %v2907, %v2924
        %s2929 = sld [smem:[#allocation3 + $0xc03]]
        %v2930 = vstv %s2929
        %v2931 = vmul.f32 %v2930, %v226
        %v2932 = vmul.f32 %v2930, %v227
        %v2933 = vmul.f32 %v2930, %v228
        %v2937 = vrot.slane %v2931, 4
        %v2938 = vrot.slane %v2932, 4
        %v2939 = vsel %vm622, %v2937, %v2938
        %v2940 = vrot.slane %v2933, 4
        %v2941 = vsel %vm622, %v2938, %v2940
        %2942 = vrot.lane.b32.xlu0 %v2939, 124
        %v2943 = vpop.permute.xlu0 %2942
        %2944 = vrot.lane.b32.xlu0 %v2941, 124
        %v2945 = vpop.permute.xlu0 %2944
        %v2948 = vadd.f32 %v2927, %v2943
        %v2949 = vadd.f32 %v2928, %v2945
        %s2950 = sld [smem:[#allocation5 + $0x3]]
        %v2951 = vstv %s2950
        %v2952 = vadd.f32 %v2948, %v2951
        %v2953 = vadd.f32 %v2949, %v2951
        %v2956 = vcombine.high %v2952, %v2952
        %v2958 = vunpack.c.l.s4 1983009808
        %v2959 = vunpack.c.0.s8 %v2958
        %v2960 = vlaneseq
        %v2961 = vshrl.u32 %v2960, 7
        %v2962 = vsub.s32 %v2959, %v2961
        %v2963 = vrot.slane %v2952, %v2962
        %v2965 = vunpack.c.l.s4 1983009808
        %v2966 = vunpack.c.0.s8 %v2965
        %v2967 = vlaneseq
        %v2968 = vshrl.u32 %v2967, 7
        %v2969 = vsub.s32 %v2966, %v2968
        %v2970 = vrot.slane %v2956, %v2969
        %v2971 = vcombine.high %v2963, %v2963
        %v2972 = vcombine.high %v2970, %v2970
        %v2973 = vcombine.high %v2953, %v2953
        %v2975 = vunpack.c.l.s4 1983009808
        %v2976 = vunpack.c.0.s8 %v2975
        %v2977 = vlaneseq
        %v2978 = vshrl.u32 %v2977, 7
        %v2979 = vsub.s32 %v2976, %v2978
        %v2980 = vrot.slane %v2953, %v2979
        %v2982 = vunpack.c.l.s4 1983009808
        %v2983 = vunpack.c.0.s8 %v2982
        %v2984 = vlaneseq
        %v2985 = vshrl.u32 %v2984, 7
        %v2986 = vsub.s32 %v2983, %v2985
        %v2987 = vrot.slane %v2973, %v2986
        %v2988 = vcombine.high %v2980, %v2980
        %v2989 = vcombine.high %v2987, %v2987
        %v2998 = vrot.slane %v2963, 7
        %v2999 = vrot.slane %v2998, 2
        %v3000 = vrot.slane %v2971, 7
        %v3001 = vrot.slane %v3000, 2
        %v3002 = vrot.slane %v2970, 7
        %v3003 = vrot.slane %v3002, 2
        %v3004 = vrot.slane %v2972, 7
        %v3005 = vrot.slane %v3004, 2
        %v3006 = vrot.slane %v2980, 7
        %v3007 = vrot.slane %v3006, 2
        %v3008 = vrot.slane %v2988, 7
        %v3009 = vrot.slane %v3008, 2
        %v3010 = vrot.slane %v2987, 7
        %v3011 = vrot.slane %v3010, 2
        %v3012 = vrot.slane %v2989, 7
        %v3013 = vrot.slane %v3012, 2
        %v3022 = vmax.f32 %v2963, %v2999
        %v3023 = vmax.f32 %v2971, %v3001
        %v3024 = vmax.f32 %v2970, %v3003
        %v3025 = vmax.f32 %v2972, %v3005
        %v3026 = vmax.f32 %v2980, %v3007
        %v3027 = vmax.f32 %v2988, %v3009
        %v3028 = vmax.f32 %v2987, %v3011
        %v3029 = vmax.f32 %v2989, %v3013
        %v3038 = vlaneseq
        %v3039 = vshrl.u32 %v3038, 7
        %v3040 = vsub.s32 0, %v3039
        %v3041 = vrot.slane %v3022, %v3040
        %v3042 = vlaneseq
        %v3043 = vshrl.u32 %v3042, 7
        %v3044 = vsub.s32 0, %v3043
        %v3045 = vrot.slane %v3023, %v3044
        %v3046 = vlaneseq
        %v3047 = vshrl.u32 %v3046, 7
        %v3048 = vsub.s32 0, %v3047
        %v3049 = vrot.slane %v3024, %v3048
        %v3050 = vlaneseq
        %v3051 = vshrl.u32 %v3050, 7
        %v3052 = vsub.s32 0, %v3051
        %v3053 = vrot.slane %v3025, %v3052
        %v3054 = vlaneseq
        %v3055 = vshrl.u32 %v3054, 7
        %v3056 = vsub.s32 0, %v3055
        %v3057 = vrot.slane %v3026, %v3056
        %v3058 = vlaneseq
        %v3059 = vshrl.u32 %v3058, 7
        %v3060 = vsub.s32 0, %v3059
        %v3061 = vrot.slane %v3027, %v3060
        %v3062 = vlaneseq
        %v3063 = vshrl.u32 %v3062, 7
        %v3064 = vsub.s32 0, %v3063
        %v3065 = vrot.slane %v3028, %v3064
        %v3066 = vlaneseq
        %v3067 = vshrl.u32 %v3066, 7
        %v3068 = vsub.s32 0, %v3067
        %v3069 = vrot.slane %v3029, %v3068
        %v3070 = vsel %vm836, %v3045, %v3041
        %v3071 = vsel %vm838, %v3049, %v3070
        %v3072 = vsel %vm840, %v3053, %v3071
        %v3073 = vsel %vm842, %v3057, %v3072
        %v3074 = vsel %vm844, %v3061, %v3073
        %v3075 = vsel %vm846, %v3065, %v3074
        %v3076 = vsel %vm848, %v3069, %v3075
        %v3077 = vsel %vm850, %v3076, 0
        %3079 = vmatprep.subr.mxu0 0.0
        %3080 = vmatpush1.msra.mxu0 0.0
        %3081 = vmatprep.subr.mxu0 0.0
        %3082 = vmatpush1.msra.mxu0 0.0
        %3083 = vmatprep.subr.mxu0 0.0
        %3084 = vmatpush1.msra.mxu0 0.0
        %3085 = vmatprep.subr.mxu0 0.0
        %3086 = vmatpush1.msra.mxu0 0.0
        %3087 = vmatprep.subr.mxu0 0.0
        %3088 = vmatpush1.msra.mxu0 0.0
        %3089 = vmatprep.subr.mxu0 0.0
        %3090 = vmatpush1.msra.mxu0 0.0
        %3091 = vmatprep.subr.mxu0 0.0
        %3092 = vmatpush1.msra.mxu0 0.0
        %3093 = vmatprep.subr.mxu0 0.0
        %3094 = vmatpush1.msra.mxu0 0.0
        %3095 = vmatprep.subr.mxu0 0.0
        %3096 = vmatpush1.msra.mxu0 0.0
        %3097 = vmatprep.subr.mxu0 0.0
        %3098 = vmatpush1.msra.mxu0 0.0
        %3099 = vmatprep.subr.mxu0 0.0
        %3100 = vmatpush1.msra.mxu0 0.0
        %3101 = vmatprep.subr.mxu0 0.0
        %3102 = vmatpush1.msra.mxu0 0.0
        %3103 = vmatprep.subr.mxu0 0.0
        %3104 = vmatpush1.msra.mxu0 0.0
        %3105 = vmatprep.subr.mxu0 0.0
        %3106 = vmatpush1.msra.mxu0 0.0
        %3107 = vmatprep.subr.mxu0 0.0
        %3108 = vmatpush1.msra.mxu0 %v240
        %3109 = vmatprep.subr.mxu0 0.0
        %3110 = vmatpush1.msra.mxu0 %v239
        %3111 = vmatprep.subr.mxu0 0.0
        %3112 = vmatpush2.msra.mxu0 0.0
        %3113 = vmatprep.subr.mxu0 0.0
        %3114 = vmatpush2.msra.mxu0 0.0
        %3115 = vmatprep.subr.mxu0 0.0
        %3116 = vmatpush2.msra.mxu0 0.0
        %3117 = vmatprep.subr.mxu0 0.0
        %3118 = vmatpush2.msra.mxu0 0.0
        %3119 = vmatprep.subr.mxu0 0.0
        %3120 = vmatpush2.msra.mxu0 0.0
        %3121 = vmatprep.subr.mxu0 0.0
        %3122 = vmatpush2.msra.mxu0 0.0
        %3123 = vmatprep.subr.mxu0 0.0
        %3124 = vmatpush2.msra.mxu0 0.0
        %3125 = vmatprep.subr.mxu0 0.0
        %3126 = vmatpush2.msra.mxu0 0.0
        %3127 = vmatprep.subr.mxu0 0.0
        %3128 = vmatpush2.msra.mxu0 0.0
        %3129 = vmatprep.subr.mxu0 0.0
        %3130 = vmatpush2.msra.mxu0 0.0
        %3131 = vmatprep.subr.mxu0 0.0
        %3132 = vmatpush2.msra.mxu0 0.0
        %3133 = vmatprep.subr.mxu0 0.0
        %3134 = vmatpush2.msra.mxu0 0.0
        %3135 = vmatprep.subr.mxu0 0.0
        %3136 = vmatpush2.msra.mxu0 0.0
        %3137 = vmatprep.subr.mxu0 0.0
        %3138 = vmatpush2.msra.mxu0 0.0
        %3139 = vmatprep.subr.mxu0 0.0
        %3140 = vmatpush2.msra.mxu0 0.0
        %3141 = vmatprep.subr.mxu0 0.0
        %3142 = vmatpush2.msra.mxu0 0.0
        %3143 = vmatprep.mubr.f32.mxu0 0.0
        %3144 = vmatmul.mubr.f32.gmra.mxu0 %v3077
        %v3145 = vpop.f32.mrf.mxu0
        %v3146 = vadd.f32 0.0, %v3145
        %v3147 = vpop.f32.mrf.mxu0
        %3148 = vdwg.mxu0
        %3149 = vmatprep.subr.mxu0 0.0
        %3150 = vmatpush1.msra.mxu0 0.0
        %3151 = vmatprep.subr.mxu0 0.0
        %3152 = vmatpush1.msra.mxu0 0.0
        %3153 = vmatprep.subr.mxu0 0.0
        %3154 = vmatpush1.msra.mxu0 0.0
        %3155 = vmatprep.subr.mxu0 0.0
        %3156 = vmatpush1.msra.mxu0 0.0
        %3157 = vmatprep.subr.mxu0 0.0
        %3158 = vmatpush1.msra.mxu0 0.0
        %3159 = vmatprep.subr.mxu0 0.0
        %3160 = vmatpush1.msra.mxu0 0.0
        %3161 = vmatprep.subr.mxu0 0.0
        %3162 = vmatpush1.msra.mxu0 0.0
        %3163 = vmatprep.subr.mxu0 0.0
        %3164 = vmatpush1.msra.mxu0 0.0
        %3165 = vmatprep.subr.mxu0 0.0
        %3166 = vmatpush1.msra.mxu0 0.0
        %3167 = vmatprep.subr.mxu0 0.0
        %3168 = vmatpush1.msra.mxu0 0.0
        %3169 = vmatprep.subr.mxu0 0.0
        %3170 = vmatpush1.msra.mxu0 0.0
        %3171 = vmatprep.subr.mxu0 0.0
        %3172 = vmatpush1.msra.mxu0 0.0
        %3173 = vmatprep.subr.mxu0 0.0
        %3174 = vmatpush1.msra.mxu0 0.0
        %3175 = vmatprep.subr.mxu0 0.0
        %3176 = vmatpush1.msra.mxu0 0.0
        %3177 = vmatprep.subr.mxu0 0.0
        %3178 = vmatpush1.msra.mxu0 %v247
        %3179 = vmatprep.subr.mxu0 0.0
        %3180 = vmatpush1.msra.mxu0 %v246
        %3181 = vmatprep.subr.mxu0 0.0
        %3182 = vmatpush2.msra.mxu0 0.0
        %3183 = vmatprep.subr.mxu0 0.0
        %3184 = vmatpush2.msra.mxu0 0.0
        %3185 = vmatprep.subr.mxu0 0.0
        %3186 = vmatpush2.msra.mxu0 0.0
        %3187 = vmatprep.subr.mxu0 0.0
        %3188 = vmatpush2.msra.mxu0 0.0
        %3189 = vmatprep.subr.mxu0 0.0
        %3190 = vmatpush2.msra.mxu0 0.0
        %3191 = vmatprep.subr.mxu0 0.0
        %3192 = vmatpush2.msra.mxu0 0.0
        %3193 = vmatprep.subr.mxu0 0.0
        %3194 = vmatpush2.msra.mxu0 0.0
        %3195 = vmatprep.subr.mxu0 0.0
        %3196 = vmatpush2.msra.mxu0 0.0
        %3197 = vmatprep.subr.mxu0 0.0
        %3198 = vmatpush2.msra.mxu0 0.0
        %3199 = vmatprep.subr.mxu0 0.0
        %3200 = vmatpush2.msra.mxu0 0.0
        %3201 = vmatprep.subr.mxu0 0.0
        %3202 = vmatpush2.msra.mxu0 0.0
        %3203 = vmatprep.subr.mxu0 0.0
        %3204 = vmatpush2.msra.mxu0 0.0
        %3205 = vmatprep.subr.mxu0 0.0
        %3206 = vmatpush2.msra.mxu0 0.0
        %3207 = vmatprep.subr.mxu0 0.0
        %3208 = vmatpush2.msra.mxu0 0.0
        %3209 = vmatprep.subr.mxu0 0.0
        %3210 = vmatpush2.msra.mxu0 0.0
        %3211 = vmatprep.subr.mxu0 0.0
        %3212 = vmatpush2.msra.mxu0 0.0
        %3213 = vmatprep.mubr.f32.mxu0 0.0
        %3214 = vmatmul.mubr.f32.gmra.mxu0 %v3077
        %v3215 = vpop.f32.mrf.mxu0
        %v3216 = vadd.f32 0.0, %v3215
        %v3217 = vpop.f32.mrf.mxu0
        %3218 = vdwg.mxu0
        %v3219 = vmax.f32 %v3146, %v3216
        %v3220 = vxor.u32 %v3219, 2147483648
        %v3221 = vmul.f32 %v3220, 1.442695
        %v3222 = vpow.pop %v3221
        %v3223 = vadd.f32 %v3222, 1.0
        %v3224 = vrcp.pop %v3223
        %v3225 = vmul.f32 1.0, %v3224
        %s3226 = scalar_lea.vmem %s199, 24
        %3227 = vst.msk [vmem:[%s3226] sm:$0xff] %vm1000, %v3225
        %s3228 = sld [smem:[#allocation3 + $0x4]]
        %v3229 = vstv %s3228
        %v3230 = vmul.f32 %v3229, %v226
        %v3231 = vmul.f32 %v3229, %v227
        %s3232 = sld [smem:[#allocation3 + $0x84]]
        %v3233 = vstv %s3232
        %v3234 = vmul.f32 %v3233, %v226
        %v3235 = vmul.f32 %v3233, %v227
        %3238 = vrot.lane.b32.xlu0 %v3234, 127
        %v3239 = vpop.permute.xlu0 %3238
        %3240 = vrot.lane.b32.xlu0 %v3235, 127
        %v3241 = vpop.permute.xlu0 %3240
        %v3244 = vadd.f32 %v3230, %v3239
        %v3245 = vadd.f32 %v3231, %v3241
        %s3246 = sld [smem:[#allocation3 + $0x104]]
        %v3247 = vstv %s3246
        %v3248 = vmul.f32 %v3247, %v226
        %v3249 = vmul.f32 %v3247, %v227
        %3252 = vrot.lane.b32.xlu0 %v3248, 126
        %v3253 = vpop.permute.xlu0 %3252
        %3254 = vrot.lane.b32.xlu0 %v3249, 126
        %v3255 = vpop.permute.xlu0 %3254
        %v3258 = vadd.f32 %v3244, %v3253
        %v3259 = vadd.f32 %v3245, %v3255
        %s3260 = sld [smem:[#allocation3 + $0x184]]
        %v3261 = vstv %s3260
        %v3262 = vmul.f32 %v3261, %v226
        %v3263 = vmul.f32 %v3261, %v227
        %3266 = vrot.lane.b32.xlu0 %v3262, 125
        %v3267 = vpop.permute.xlu0 %3266
        %3268 = vrot.lane.b32.xlu0 %v3263, 125
        %v3269 = vpop.permute.xlu0 %3268
        %v3272 = vadd.f32 %v3258, %v3267
        %v3273 = vadd.f32 %v3259, %v3269
        %s3274 = sld [smem:[#allocation3 + $0x204]]
        %v3275 = vstv %s3274
        %v3276 = vmul.f32 %v3275, %v226
        %v3277 = vmul.f32 %v3275, %v227
        %3280 = vrot.lane.b32.xlu0 %v3276, 124
        %v3281 = vpop.permute.xlu0 %3280
        %3282 = vrot.lane.b32.xlu0 %v3277, 124
        %v3283 = vpop.permute.xlu0 %3282
        %v3286 = vadd.f32 %v3272, %v3281
        %v3287 = vadd.f32 %v3273, %v3283
        %s3288 = sld [smem:[#allocation3 + $0x284]]
        %v3289 = vstv %s3288
        %v3290 = vmul.f32 %v3289, %v226
        %v3291 = vmul.f32 %v3289, %v227
        %v3292 = vmul.f32 %v3289, %v228
        %v3296 = vrot.slane %v3290, 1
        %v3297 = vrot.slane %v3291, 1
        %v3298 = vsel %vm316, %v3296, %v3297
        %v3299 = vrot.slane %v3292, 1
        %v3300 = vsel %vm316, %v3297, %v3299
        %v3303 = vadd.f32 %v3286, %v3298
        %v3304 = vadd.f32 %v3287, %v3300
        %s3305 = sld [smem:[#allocation3 + $0x304]]
        %v3306 = vstv %s3305
        %v3307 = vmul.f32 %v3306, %v226
        %v3308 = vmul.f32 %v3306, %v227
        %v3309 = vmul.f32 %v3306, %v228
        %v3313 = vrot.slane %v3307, 1
        %v3314 = vrot.slane %v3308, 1
        %v3315 = vsel %vm316, %v3313, %v3314
        %v3316 = vrot.slane %v3309, 1
        %v3317 = vsel %vm316, %v3314, %v3316
        %3318 = vrot.lane.b32.xlu0 %v3315, 127
        %v3319 = vpop.permute.xlu0 %3318
        %3320 = vrot.lane.b32.xlu0 %v3317, 127
        %v3321 = vpop.permute.xlu0 %3320
        %v3324 = vadd.f32 %v3303, %v3319
        %v3325 = vadd.f32 %v3304, %v3321
        %s3326 = sld [smem:[#allocation3 + $0x384]]
        %v3327 = vstv %s3326
        %v3328 = vmul.f32 %v3327, %v226
        %v3329 = vmul.f32 %v3327, %v227
        %v3330 = vmul.f32 %v3327, %v228
        %v3334 = vrot.slane %v3328, 1
        %v3335 = vrot.slane %v3329, 1
        %v3336 = vsel %vm316, %v3334, %v3335
        %v3337 = vrot.slane %v3330, 1
        %v3338 = vsel %vm316, %v3335, %v3337
        %3339 = vrot.lane.b32.xlu0 %v3336, 126
        %v3340 = vpop.permute.xlu0 %3339
        %3341 = vrot.lane.b32.xlu0 %v3338, 126
        %v3342 = vpop.permute.xlu0 %3341
        %v3345 = vadd.f32 %v3324, %v3340
        %v3346 = vadd.f32 %v3325, %v3342
        %s3347 = sld [smem:[#allocation3 + $0x404]]
        %v3348 = vstv %s3347
        %v3349 = vmul.f32 %v3348, %v226
        %v3350 = vmul.f32 %v3348, %v227
        %v3351 = vmul.f32 %v3348, %v228
        %v3355 = vrot.slane %v3349, 1
        %v3356 = vrot.slane %v3350, 1
        %v3357 = vsel %vm316, %v3355, %v3356
        %v3358 = vrot.slane %v3351, 1
        %v3359 = vsel %vm316, %v3356, %v3358
        %3360 = vrot.lane.b32.xlu0 %v3357, 125
        %v3361 = vpop.permute.xlu0 %3360
        %3362 = vrot.lane.b32.xlu0 %v3359, 125
        %v3363 = vpop.permute.xlu0 %3362
        %v3366 = vadd.f32 %v3345, %v3361
        %v3367 = vadd.f32 %v3346, %v3363
        %s3368 = sld [smem:[#allocation3 + $0x484]]
        %v3369 = vstv %s3368
        %v3370 = vmul.f32 %v3369, %v226
        %v3371 = vmul.f32 %v3369, %v227
        %v3372 = vmul.f32 %v3369, %v228
        %v3376 = vrot.slane %v3370, 1
        %v3377 = vrot.slane %v3371, 1
        %v3378 = vsel %vm316, %v3376, %v3377
        %v3379 = vrot.slane %v3372, 1
        %v3380 = vsel %vm316, %v3377, %v3379
        %3381 = vrot.lane.b32.xlu0 %v3378, 124
        %v3382 = vpop.permute.xlu0 %3381
        %3383 = vrot.lane.b32.xlu0 %v3380, 124
        %v3384 = vpop.permute.xlu0 %3383
        %v3387 = vadd.f32 %v3366, %v3382
        %v3388 = vadd.f32 %v3367, %v3384
        %s3389 = sld [smem:[#allocation3 + $0x504]]
        %v3390 = vstv %s3389
        %v3391 = vmul.f32 %v3390, %v226
        %v3392 = vmul.f32 %v3390, %v227
        %v3393 = vmul.f32 %v3390, %v228
        %v3397 = vrot.slane %v3391, 2
        %v3398 = vrot.slane %v3392, 2
        %v3399 = vsel %vm418, %v3397, %v3398
        %v3400 = vrot.slane %v3393, 2
        %v3401 = vsel %vm418, %v3398, %v3400
        %v3404 = vadd.f32 %v3387, %v3399
        %v3405 = vadd.f32 %v3388, %v3401
        %s3406 = sld [smem:[#allocation3 + $0x584]]
        %v3407 = vstv %s3406
        %v3408 = vmul.f32 %v3407, %v226
        %v3409 = vmul.f32 %v3407, %v227
        %v3410 = vmul.f32 %v3407, %v228
        %v3414 = vrot.slane %v3408, 2
        %v3415 = vrot.slane %v3409, 2
        %v3416 = vsel %vm418, %v3414, %v3415
        %v3417 = vrot.slane %v3410, 2
        %v3418 = vsel %vm418, %v3415, %v3417
        %3419 = vrot.lane.b32.xlu0 %v3416, 127
        %v3420 = vpop.permute.xlu0 %3419
        %3421 = vrot.lane.b32.xlu0 %v3418, 127
        %v3422 = vpop.permute.xlu0 %3421
        %v3425 = vadd.f32 %v3404, %v3420
        %v3426 = vadd.f32 %v3405, %v3422
        %s3427 = sld [smem:[#allocation3 + $0x604]]
        %v3428 = vstv %s3427
        %v3429 = vmul.f32 %v3428, %v226
        %v3430 = vmul.f32 %v3428, %v227
        %v3431 = vmul.f32 %v3428, %v228
        %v3435 = vrot.slane %v3429, 2
        %v3436 = vrot.slane %v3430, 2
        %v3437 = vsel %vm418, %v3435, %v3436
        %v3438 = vrot.slane %v3431, 2
        %v3439 = vsel %vm418, %v3436, %v3438
        %3440 = vrot.lane.b32.xlu0 %v3437, 126
        %v3441 = vpop.permute.xlu0 %3440
        %3442 = vrot.lane.b32.xlu0 %v3439, 126
        %v3443 = vpop.permute.xlu0 %3442
        %v3446 = vadd.f32 %v3425, %v3441
        %v3447 = vadd.f32 %v3426, %v3443
        %s3448 = sld [smem:[#allocation3 + $0x684]]
        %v3449 = vstv %s3448
        %v3450 = vmul.f32 %v3449, %v226
        %v3451 = vmul.f32 %v3449, %v227
        %v3452 = vmul.f32 %v3449, %v228
        %v3456 = vrot.slane %v3450, 2
        %v3457 = vrot.slane %v3451, 2
        %v3458 = vsel %vm418, %v3456, %v3457
        %v3459 = vrot.slane %v3452, 2
        %v3460 = vsel %vm418, %v3457, %v3459
        %3461 = vrot.lane.b32.xlu0 %v3458, 125
        %v3462 = vpop.permute.xlu0 %3461
        %3463 = vrot.lane.b32.xlu0 %v3460, 125
        %v3464 = vpop.permute.xlu0 %3463
        %v3467 = vadd.f32 %v3446, %v3462
        %v3468 = vadd.f32 %v3447, %v3464
        %s3469 = sld [smem:[#allocation3 + $0x704]]
        %v3470 = vstv %s3469
        %v3471 = vmul.f32 %v3470, %v226
        %v3472 = vmul.f32 %v3470, %v227
        %v3473 = vmul.f32 %v3470, %v228
        %v3477 = vrot.slane %v3471, 2
        %v3478 = vrot.slane %v3472, 2
        %v3479 = vsel %vm418, %v3477, %v3478
        %v3480 = vrot.slane %v3473, 2
        %v3481 = vsel %vm418, %v3478, %v3480
        %3482 = vrot.lane.b32.xlu0 %v3479, 124
        %v3483 = vpop.permute.xlu0 %3482
        %3484 = vrot.lane.b32.xlu0 %v3481, 124
        %v3485 = vpop.permute.xlu0 %3484
        %v3488 = vadd.f32 %v3467, %v3483
        %v3489 = vadd.f32 %v3468, %v3485
        %s3490 = sld [smem:[#allocation3 + $0x784]]
        %v3491 = vstv %s3490
        %v3492 = vmul.f32 %v3491, %v226
        %v3493 = vmul.f32 %v3491, %v227
        %v3494 = vmul.f32 %v3491, %v228
        %v3498 = vrot.slane %v3492, 3
        %v3499 = vrot.slane %v3493, 3
        %v3500 = vsel %vm520, %v3498, %v3499
        %v3501 = vrot.slane %v3494, 3
        %v3502 = vsel %vm520, %v3499, %v3501
        %v3505 = vadd.f32 %v3488, %v3500
        %v3506 = vadd.f32 %v3489, %v3502
        %s3507 = sld [smem:[#allocation3 + $0x804]]
        %v3508 = vstv %s3507
        %v3509 = vmul.f32 %v3508, %v226
        %v3510 = vmul.f32 %v3508, %v227
        %v3511 = vmul.f32 %v3508, %v228
        %v3515 = vrot.slane %v3509, 3
        %v3516 = vrot.slane %v3510, 3
        %v3517 = vsel %vm520, %v3515, %v3516
        %v3518 = vrot.slane %v3511, 3
        %v3519 = vsel %vm520, %v3516, %v3518
        %3520 = vrot.lane.b32.xlu0 %v3517, 127
        %v3521 = vpop.permute.xlu0 %3520
        %3522 = vrot.lane.b32.xlu0 %v3519, 127
        %v3523 = vpop.permute.xlu0 %3522
        %v3526 = vadd.f32 %v3505, %v3521
        %v3527 = vadd.f32 %v3506, %v3523
        %s3528 = sld [smem:[#allocation3 + $0x884]]
        %v3529 = vstv %s3528
        %v3530 = vmul.f32 %v3529, %v226
        %v3531 = vmul.f32 %v3529, %v227
        %v3532 = vmul.f32 %v3529, %v228
        %v3536 = vrot.slane %v3530, 3
        %v3537 = vrot.slane %v3531, 3
        %v3538 = vsel %vm520, %v3536, %v3537
        %v3539 = vrot.slane %v3532, 3
        %v3540 = vsel %vm520, %v3537, %v3539
        %3541 = vrot.lane.b32.xlu0 %v3538, 126
        %v3542 = vpop.permute.xlu0 %3541
        %3543 = vrot.lane.b32.xlu0 %v3540, 126
        %v3544 = vpop.permute.xlu0 %3543
        %v3547 = vadd.f32 %v3526, %v3542
        %v3548 = vadd.f32 %v3527, %v3544
        %s3549 = sld [smem:[#allocation3 + $0x904]]
        %v3550 = vstv %s3549
        %v3551 = vmul.f32 %v3550, %v226
        %v3552 = vmul.f32 %v3550, %v227
        %v3553 = vmul.f32 %v3550, %v228
        %v3557 = vrot.slane %v3551, 3
        %v3558 = vrot.slane %v3552, 3
        %v3559 = vsel %vm520, %v3557, %v3558
        %v3560 = vrot.slane %v3553, 3
        %v3561 = vsel %vm520, %v3558, %v3560
        %3562 = vrot.lane.b32.xlu0 %v3559, 125
        %v3563 = vpop.permute.xlu0 %3562
        %3564 = vrot.lane.b32.xlu0 %v3561, 125
        %v3565 = vpop.permute.xlu0 %3564
        %v3568 = vadd.f32 %v3547, %v3563
        %v3569 = vadd.f32 %v3548, %v3565
        %s3570 = sld [smem:[#allocation3 + $0x984]]
        %v3571 = vstv %s3570
        %v3572 = vmul.f32 %v3571, %v226
        %v3573 = vmul.f32 %v3571, %v227
        %v3574 = vmul.f32 %v3571, %v228
        %v3578 = vrot.slane %v3572, 3
        %v3579 = vrot.slane %v3573, 3
        %v3580 = vsel %vm520, %v3578, %v3579
        %v3581 = vrot.slane %v3574, 3
        %v3582 = vsel %vm520, %v3579, %v3581
        %3583 = vrot.lane.b32.xlu0 %v3580, 124
        %v3584 = vpop.permute.xlu0 %3583
        %3585 = vrot.lane.b32.xlu0 %v3582, 124
        %v3586 = vpop.permute.xlu0 %3585
        %v3589 = vadd.f32 %v3568, %v3584
        %v3590 = vadd.f32 %v3569, %v3586
        %s3591 = sld [smem:[#allocation3 + $0xa04]]
        %v3592 = vstv %s3591
        %v3593 = vmul.f32 %v3592, %v226
        %v3594 = vmul.f32 %v3592, %v227
        %v3595 = vmul.f32 %v3592, %v228
        %v3599 = vrot.slane %v3593, 4
        %v3600 = vrot.slane %v3594, 4
        %v3601 = vsel %vm622, %v3599, %v3600
        %v3602 = vrot.slane %v3595, 4
        %v3603 = vsel %vm622, %v3600, %v3602
        %v3606 = vadd.f32 %v3589, %v3601
        %v3607 = vadd.f32 %v3590, %v3603
        %s3608 = sld [smem:[#allocation3 + $0xa84]]
        %v3609 = vstv %s3608
        %v3610 = vmul.f32 %v3609, %v226
        %v3611 = vmul.f32 %v3609, %v227
        %v3612 = vmul.f32 %v3609, %v228
        %v3616 = vrot.slane %v3610, 4
        %v3617 = vrot.slane %v3611, 4
        %v3618 = vsel %vm622, %v3616, %v3617
        %v3619 = vrot.slane %v3612, 4
        %v3620 = vsel %vm622, %v3617, %v3619
        %3621 = vrot.lane.b32.xlu0 %v3618, 127
        %v3622 = vpop.permute.xlu0 %3621
        %3623 = vrot.lane.b32.xlu0 %v3620, 127
        %v3624 = vpop.permute.xlu0 %3623
        %v3627 = vadd.f32 %v3606, %v3622
        %v3628 = vadd.f32 %v3607, %v3624
        %s3629 = sld [smem:[#allocation3 + $0xb04]]
        %v3630 = vstv %s3629
        %v3631 = vmul.f32 %v3630, %v226
        %v3632 = vmul.f32 %v3630, %v227
        %v3633 = vmul.f32 %v3630, %v228
        %v3637 = vrot.slane %v3631, 4
        %v3638 = vrot.slane %v3632, 4
        %v3639 = vsel %vm622, %v3637, %v3638
        %v3640 = vrot.slane %v3633, 4
        %v3641 = vsel %vm622, %v3638, %v3640
        %3642 = vrot.lane.b32.xlu0 %v3639, 126
        %v3643 = vpop.permute.xlu0 %3642
        %3644 = vrot.lane.b32.xlu0 %v3641, 126
        %v3645 = vpop.permute.xlu0 %3644
        %v3648 = vadd.f32 %v3627, %v3643
        %v3649 = vadd.f32 %v3628, %v3645
        %s3650 = sld [smem:[#allocation3 + $0xb84]]
        %v3651 = vstv %s3650
        %v3652 = vmul.f32 %v3651, %v226
        %v3653 = vmul.f32 %v3651, %v227
        %v3654 = vmul.f32 %v3651, %v228
        %v3658 = vrot.slane %v3652, 4
        %v3659 = vrot.slane %v3653, 4
        %v3660 = vsel %vm622, %v3658, %v3659
        %v3661 = vrot.slane %v3654, 4
        %v3662 = vsel %vm622, %v3659, %v3661
        %3663 = vrot.lane.b32.xlu0 %v3660, 125
        %v3664 = vpop.permute.xlu0 %3663
        %3665 = vrot.lane.b32.xlu0 %v3662, 125
        %v3666 = vpop.permute.xlu0 %3665
        %v3669 = vadd.f32 %v3648, %v3664
        %v3670 = vadd.f32 %v3649, %v3666
        %s3671 = sld [smem:[#allocation3 + $0xc04]]
        %v3672 = vstv %s3671
        %v3673 = vmul.f32 %v3672, %v226
        %v3674 = vmul.f32 %v3672, %v227
        %v3675 = vmul.f32 %v3672, %v228
        %v3679 = vrot.slane %v3673, 4
        %v3680 = vrot.slane %v3674, 4
        %v3681 = vsel %vm622, %v3679, %v3680
        %v3682 = vrot.slane %v3675, 4
        %v3683 = vsel %vm622, %v3680, %v3682
        %3684 = vrot.lane.b32.xlu0 %v3681, 124
        %v3685 = vpop.permute.xlu0 %3684
        %3686 = vrot.lane.b32.xlu0 %v3683, 124
        %v3687 = vpop.permute.xlu0 %3686
        %v3690 = vadd.f32 %v3669, %v3685
        %v3691 = vadd.f32 %v3670, %v3687
        %s3692 = sld [smem:[#allocation5 + $0x4]]
        %v3693 = vstv %s3692
        %v3694 = vadd.f32 %v3690, %v3693
        %v3695 = vadd.f32 %v3691, %v3693
        %v3698 = vcombine.high %v3694, %v3694
        %v3700 = vunpack.c.l.s4 1983009808
        %v3701 = vunpack.c.0.s8 %v3700
        %v3702 = vlaneseq
        %v3703 = vshrl.u32 %v3702, 7
        %v3704 = vsub.s32 %v3701, %v3703
        %v3705 = vrot.slane %v3694, %v3704
        %v3707 = vunpack.c.l.s4 1983009808
        %v3708 = vunpack.c.0.s8 %v3707
        %v3709 = vlaneseq
        %v3710 = vshrl.u32 %v3709, 7
        %v3711 = vsub.s32 %v3708, %v3710
        %v3712 = vrot.slane %v3698, %v3711
        %v3713 = vcombine.high %v3705, %v3705
        %v3714 = vcombine.high %v3712, %v3712
        %v3715 = vcombine.high %v3695, %v3695
        %v3717 = vunpack.c.l.s4 1983009808
        %v3718 = vunpack.c.0.s8 %v3717
        %v3719 = vlaneseq
        %v3720 = vshrl.u32 %v3719, 7
        %v3721 = vsub.s32 %v3718, %v3720
        %v3722 = vrot.slane %v3695, %v3721
        %v3724 = vunpack.c.l.s4 1983009808
        %v3725 = vunpack.c.0.s8 %v3724
        %v3726 = vlaneseq
        %v3727 = vshrl.u32 %v3726, 7
        %v3728 = vsub.s32 %v3725, %v3727
        %v3729 = vrot.slane %v3715, %v3728
        %v3730 = vcombine.high %v3722, %v3722
        %v3731 = vcombine.high %v3729, %v3729
        %v3740 = vrot.slane %v3705, 7
        %v3741 = vrot.slane %v3740, 2
        %v3742 = vrot.slane %v3713, 7
        %v3743 = vrot.slane %v3742, 2
        %v3744 = vrot.slane %v3712, 7
        %v3745 = vrot.slane %v3744, 2
        %v3746 = vrot.slane %v3714, 7
        %v3747 = vrot.slane %v3746, 2
        %v3748 = vrot.slane %v3722, 7
        %v3749 = vrot.slane %v3748, 2
        %v3750 = vrot.slane %v3730, 7
        %v3751 = vrot.slane %v3750, 2
        %v3752 = vrot.slane %v3729, 7
        %v3753 = vrot.slane %v3752, 2
        %v3754 = vrot.slane %v3731, 7
        %v3755 = vrot.slane %v3754, 2
        %v3764 = vmax.f32 %v3705, %v3741
        %v3765 = vmax.f32 %v3713, %v3743
        %v3766 = vmax.f32 %v3712, %v3745
        %v3767 = vmax.f32 %v3714, %v3747
        %v3768 = vmax.f32 %v3722, %v3749
        %v3769 = vmax.f32 %v3730, %v3751
        %v3770 = vmax.f32 %v3729, %v3753
        %v3771 = vmax.f32 %v3731, %v3755
        %v3780 = vlaneseq
        %v3781 = vshrl.u32 %v3780, 7
        %v3782 = vsub.s32 0, %v3781
        %v3783 = vrot.slane %v3764, %v3782
        %v3784 = vlaneseq
        %v3785 = vshrl.u32 %v3784, 7
        %v3786 = vsub.s32 0, %v3785
        %v3787 = vrot.slane %v3765, %v3786
        %v3788 = vlaneseq
        %v3789 = vshrl.u32 %v3788, 7
        %v3790 = vsub.s32 0, %v3789
        %v3791 = vrot.slane %v3766, %v3790
        %v3792 = vlaneseq
        %v3793 = vshrl.u32 %v3792, 7
        %v3794 = vsub.s32 0, %v3793
        %v3795 = vrot.slane %v3767, %v3794
        %v3796 = vlaneseq
        %v3797 = vshrl.u32 %v3796, 7
        %v3798 = vsub.s32 0, %v3797
        %v3799 = vrot.slane %v3768, %v3798
        %v3800 = vlaneseq
        %v3801 = vshrl.u32 %v3800, 7
        %v3802 = vsub.s32 0, %v3801
        %v3803 = vrot.slane %v3769, %v3802
        %v3804 = vlaneseq
        %v3805 = vshrl.u32 %v3804, 7
        %v3806 = vsub.s32 0, %v3805
        %v3807 = vrot.slane %v3770, %v3806
        %v3808 = vlaneseq
        %v3809 = vshrl.u32 %v3808, 7
        %v3810 = vsub.s32 0, %v3809
        %v3811 = vrot.slane %v3771, %v3810
        %v3812 = vsel %vm836, %v3787, %v3783
        %v3813 = vsel %vm838, %v3791, %v3812
        %v3814 = vsel %vm840, %v3795, %v3813
        %v3815 = vsel %vm842, %v3799, %v3814
        %v3816 = vsel %vm844, %v3803, %v3815
        %v3817 = vsel %vm846, %v3807, %v3816
        %v3818 = vsel %vm848, %v3811, %v3817
        %v3819 = vsel %vm850, %v3818, 0
        %3821 = vmatprep.subr.mxu0 0.0
        %3822 = vmatpush1.msra.mxu0 0.0
        %3823 = vmatprep.subr.mxu0 0.0
        %3824 = vmatpush1.msra.mxu0 0.0
        %3825 = vmatprep.subr.mxu0 0.0
        %3826 = vmatpush1.msra.mxu0 0.0
        %3827 = vmatprep.subr.mxu0 0.0
        %3828 = vmatpush1.msra.mxu0 0.0
        %3829 = vmatprep.subr.mxu0 0.0
        %3830 = vmatpush1.msra.mxu0 0.0
        %3831 = vmatprep.subr.mxu0 0.0
        %3832 = vmatpush1.msra.mxu0 0.0
        %3833 = vmatprep.subr.mxu0 0.0
        %3834 = vmatpush1.msra.mxu0 0.0
        %3835 = vmatprep.subr.mxu0 0.0
        %3836 = vmatpush1.msra.mxu0 0.0
        %3837 = vmatprep.subr.mxu0 0.0
        %3838 = vmatpush1.msra.mxu0 0.0
        %3839 = vmatprep.subr.mxu0 0.0
        %3840 = vmatpush1.msra.mxu0 0.0
        %3841 = vmatprep.subr.mxu0 0.0
        %3842 = vmatpush1.msra.mxu0 0.0
        %3843 = vmatprep.subr.mxu0 0.0
        %3844 = vmatpush1.msra.mxu0 0.0
        %3845 = vmatprep.subr.mxu0 0.0
        %3846 = vmatpush1.msra.mxu0 0.0
        %3847 = vmatprep.subr.mxu0 0.0
        %3848 = vmatpush1.msra.mxu0 0.0
        %3849 = vmatprep.subr.mxu0 0.0
        %3850 = vmatpush1.msra.mxu0 %v240
        %3851 = vmatprep.subr.mxu0 0.0
        %3852 = vmatpush1.msra.mxu0 %v239
        %3853 = vmatprep.subr.mxu0 0.0
        %3854 = vmatpush2.msra.mxu0 0.0
        %3855 = vmatprep.subr.mxu0 0.0
        %3856 = vmatpush2.msra.mxu0 0.0
        %3857 = vmatprep.subr.mxu0 0.0
        %3858 = vmatpush2.msra.mxu0 0.0
        %3859 = vmatprep.subr.mxu0 0.0
        %3860 = vmatpush2.msra.mxu0 0.0
        %3861 = vmatprep.subr.mxu0 0.0
        %3862 = vmatpush2.msra.mxu0 0.0
        %3863 = vmatprep.subr.mxu0 0.0
        %3864 = vmatpush2.msra.mxu0 0.0
        %3865 = vmatprep.subr.mxu0 0.0
        %3866 = vmatpush2.msra.mxu0 0.0
        %3867 = vmatprep.subr.mxu0 0.0
        %3868 = vmatpush2.msra.mxu0 0.0
        %3869 = vmatprep.subr.mxu0 0.0
        %3870 = vmatpush2.msra.mxu0 0.0
        %3871 = vmatprep.subr.mxu0 0.0
        %3872 = vmatpush2.msra.mxu0 0.0
        %3873 = vmatprep.subr.mxu0 0.0
        %3874 = vmatpush2.msra.mxu0 0.0
        %3875 = vmatprep.subr.mxu0 0.0
        %3876 = vmatpush2.msra.mxu0 0.0
        %3877 = vmatprep.subr.mxu0 0.0
        %3878 = vmatpush2.msra.mxu0 0.0
        %3879 = vmatprep.subr.mxu0 0.0
        %3880 = vmatpush2.msra.mxu0 0.0
        %3881 = vmatprep.subr.mxu0 0.0
        %3882 = vmatpush2.msra.mxu0 0.0
        %3883 = vmatprep.subr.mxu0 0.0
        %3884 = vmatpush2.msra.mxu0 0.0
        %3885 = vmatprep.mubr.f32.mxu0 0.0
        %3886 = vmatmul.mubr.f32.gmra.mxu0 %v3819
        %v3887 = vpop.f32.mrf.mxu0
        %v3888 = vadd.f32 0.0, %v3887
        %v3889 = vpop.f32.mrf.mxu0
        %3890 = vdwg.mxu0
        %3891 = vmatprep.subr.mxu0 0.0
        %3892 = vmatpush1.msra.mxu0 0.0
        %3893 = vmatprep.subr.mxu0 0.0
        %3894 = vmatpush1.msra.mxu0 0.0
        %3895 = vmatprep.subr.mxu0 0.0
        %3896 = vmatpush1.msra.mxu0 0.0
        %3897 = vmatprep.subr.mxu0 0.0
        %3898 = vmatpush1.msra.mxu0 0.0
        %3899 = vmatprep.subr.mxu0 0.0
        %3900 = vmatpush1.msra.mxu0 0.0
        %3901 = vmatprep.subr.mxu0 0.0
        %3902 = vmatpush1.msra.mxu0 0.0
        %3903 = vmatprep.subr.mxu0 0.0
        %3904 = vmatpush1.msra.mxu0 0.0
        %3905 = vmatprep.subr.mxu0 0.0
        %3906 = vmatpush1.msra.mxu0 0.0
        %3907 = vmatprep.subr.mxu0 0.0
        %3908 = vmatpush1.msra.mxu0 0.0
        %3909 = vmatprep.subr.mxu0 0.0
        %3910 = vmatpush1.msra.mxu0 0.0
        %3911 = vmatprep.subr.mxu0 0.0
        %3912 = vmatpush1.msra.mxu0 0.0
        %3913 = vmatprep.subr.mxu0 0.0
        %3914 = vmatpush1.msra.mxu0 0.0
        %3915 = vmatprep.subr.mxu0 0.0
        %3916 = vmatpush1.msra.mxu0 0.0
        %3917 = vmatprep.subr.mxu0 0.0
        %3918 = vmatpush1.msra.mxu0 0.0
        %3919 = vmatprep.subr.mxu0 0.0
        %3920 = vmatpush1.msra.mxu0 %v247
        %3921 = vmatprep.subr.mxu0 0.0
        %3922 = vmatpush1.msra.mxu0 %v246
        %3923 = vmatprep.subr.mxu0 0.0
        %3924 = vmatpush2.msra.mxu0 0.0
        %3925 = vmatprep.subr.mxu0 0.0
        %3926 = vmatpush2.msra.mxu0 0.0
        %3927 = vmatprep.subr.mxu0 0.0
        %3928 = vmatpush2.msra.mxu0 0.0
        %3929 = vmatprep.subr.mxu0 0.0
        %3930 = vmatpush2.msra.mxu0 0.0
        %3931 = vmatprep.subr.mxu0 0.0
        %3932 = vmatpush2.msra.mxu0 0.0
        %3933 = vmatprep.subr.mxu0 0.0
        %3934 = vmatpush2.msra.mxu0 0.0
        %3935 = vmatprep.subr.mxu0 0.0
        %3936 = vmatpush2.msra.mxu0 0.0
        %3937 = vmatprep.subr.mxu0 0.0
        %3938 = vmatpush2.msra.mxu0 0.0
        %3939 = vmatprep.subr.mxu0 0.0
        %3940 = vmatpush2.msra.mxu0 0.0
        %3941 = vmatprep.subr.mxu0 0.0
        %3942 = vmatpush2.msra.mxu0 0.0
        %3943 = vmatprep.subr.mxu0 0.0
        %3944 = vmatpush2.msra.mxu0 0.0
        %3945 = vmatprep.subr.mxu0 0.0
        %3946 = vmatpush2.msra.mxu0 0.0
        %3947 = vmatprep.subr.mxu0 0.0
        %3948 = vmatpush2.msra.mxu0 0.0
        %3949 = vmatprep.subr.mxu0 0.0
        %3950 = vmatpush2.msra.mxu0 0.0
        %3951 = vmatprep.subr.mxu0 0.0
        %3952 = vmatpush2.msra.mxu0 0.0
        %3953 = vmatprep.subr.mxu0 0.0
        %3954 = vmatpush2.msra.mxu0 0.0
        %3955 = vmatprep.mubr.f32.mxu0 0.0
        %3956 = vmatmul.mubr.f32.gmra.mxu0 %v3819
        %v3957 = vpop.f32.mrf.mxu0
        %v3958 = vadd.f32 0.0, %v3957
        %v3959 = vpop.f32.mrf.mxu0
        %3960 = vdwg.mxu0
        %v3961 = vmax.f32 %v3888, %v3958
        %v3962 = vxor.u32 %v3961, 2147483648
        %v3963 = vmul.f32 %v3962, 1.442695
        %v3964 = vpow.pop %v3963
        %v3965 = vadd.f32 %v3964, 1.0
        %v3966 = vrcp.pop %v3965
        %v3967 = vmul.f32 1.0, %v3966
        %s3968 = scalar_lea.vmem %s199, 32
        %3969 = vst.msk [vmem:[%s3968] sm:$0xff] %vm1000, %v3967
        %s3970 = sld [smem:[#allocation3 + $0x5]]
        %v3971 = vstv %s3970
        %v3972 = vmul.f32 %v3971, %v226
        %v3973 = vmul.f32 %v3971, %v227
        %s3974 = sld [smem:[#allocation3 + $0x85]]
        %v3975 = vstv %s3974
        %v3976 = vmul.f32 %v3975, %v226
        %v3977 = vmul.f32 %v3975, %v227
        %3980 = vrot.lane.b32.xlu0 %v3976, 127
        %v3981 = vpop.permute.xlu0 %3980
        %3982 = vrot.lane.b32.xlu0 %v3977, 127
        %v3983 = vpop.permute.xlu0 %3982
        %v3986 = vadd.f32 %v3972, %v3981
        %v3987 = vadd.f32 %v3973, %v3983
        %s3988 = sld [smem:[#allocation3 + $0x105]]
        %v3989 = vstv %s3988
        %v3990 = vmul.f32 %v3989, %v226
        %v3991 = vmul.f32 %v3989, %v227
        %3994 = vrot.lane.b32.xlu0 %v3990, 126
        %v3995 = vpop.permute.xlu0 %3994
        %3996 = vrot.lane.b32.xlu0 %v3991, 126
        %v3997 = vpop.permute.xlu0 %3996
        %v4000 = vadd.f32 %v3986, %v3995
        %v4001 = vadd.f32 %v3987, %v3997
        %s4002 = sld [smem:[#allocation3 + $0x185]]
        %v4003 = vstv %s4002
        %v4004 = vmul.f32 %v4003, %v226
        %v4005 = vmul.f32 %v4003, %v227
        %4008 = vrot.lane.b32.xlu0 %v4004, 125
        %v4009 = vpop.permute.xlu0 %4008
        %4010 = vrot.lane.b32.xlu0 %v4005, 125
        %v4011 = vpop.permute.xlu0 %4010
        %v4014 = vadd.f32 %v4000, %v4009
        %v4015 = vadd.f32 %v4001, %v4011
        %s4016 = sld [smem:[#allocation3 + $0x205]]
        %v4017 = vstv %s4016
        %v4018 = vmul.f32 %v4017, %v226
        %v4019 = vmul.f32 %v4017, %v227
        %4022 = vrot.lane.b32.xlu0 %v4018, 124
        %v4023 = vpop.permute.xlu0 %4022
        %4024 = vrot.lane.b32.xlu0 %v4019, 124
        %v4025 = vpop.permute.xlu0 %4024
        %v4028 = vadd.f32 %v4014, %v4023
        %v4029 = vadd.f32 %v4015, %v4025
        %s4030 = sld [smem:[#allocation3 + $0x285]]
        %v4031 = vstv %s4030
        %v4032 = vmul.f32 %v4031, %v226
        %v4033 = vmul.f32 %v4031, %v227
        %v4034 = vmul.f32 %v4031, %v228
        %v4038 = vrot.slane %v4032, 1
        %v4039 = vrot.slane %v4033, 1
        %v4040 = vsel %vm316, %v4038, %v4039
        %v4041 = vrot.slane %v4034, 1
        %v4042 = vsel %vm316, %v4039, %v4041
        %v4045 = vadd.f32 %v4028, %v4040
        %v4046 = vadd.f32 %v4029, %v4042
        %s4047 = sld [smem:[#allocation3 + $0x305]]
        %v4048 = vstv %s4047
        %v4049 = vmul.f32 %v4048, %v226
        %v4050 = vmul.f32 %v4048, %v227
        %v4051 = vmul.f32 %v4048, %v228
        %v4055 = vrot.slane %v4049, 1
        %v4056 = vrot.slane %v4050, 1
        %v4057 = vsel %vm316, %v4055, %v4056
        %v4058 = vrot.slane %v4051, 1
        %v4059 = vsel %vm316, %v4056, %v4058
        %4060 = vrot.lane.b32.xlu0 %v4057, 127
        %v4061 = vpop.permute.xlu0 %4060
        %4062 = vrot.lane.b32.xlu0 %v4059, 127
        %v4063 = vpop.permute.xlu0 %4062
        %v4066 = vadd.f32 %v4045, %v4061
        %v4067 = vadd.f32 %v4046, %v4063
        %s4068 = sld [smem:[#allocation3 + $0x385]]
        %v4069 = vstv %s4068
        %v4070 = vmul.f32 %v4069, %v226
        %v4071 = vmul.f32 %v4069, %v227
        %v4072 = vmul.f32 %v4069, %v228
        %v4076 = vrot.slane %v4070, 1
        %v4077 = vrot.slane %v4071, 1
        %v4078 = vsel %vm316, %v4076, %v4077
        %v4079 = vrot.slane %v4072, 1
        %v4080 = vsel %vm316, %v4077, %v4079
        %4081 = vrot.lane.b32.xlu0 %v4078, 126
        %v4082 = vpop.permute.xlu0 %4081
        %4083 = vrot.lane.b32.xlu0 %v4080, 126
        %v4084 = vpop.permute.xlu0 %4083
        %v4087 = vadd.f32 %v4066, %v4082
        %v4088 = vadd.f32 %v4067, %v4084
        %s4089 = sld [smem:[#allocation3 + $0x405]]
        %v4090 = vstv %s4089
        %v4091 = vmul.f32 %v4090, %v226
        %v4092 = vmul.f32 %v4090, %v227
        %v4093 = vmul.f32 %v4090, %v228
        %v4097 = vrot.slane %v4091, 1
        %v4098 = vrot.slane %v4092, 1
        %v4099 = vsel %vm316, %v4097, %v4098
        %v4100 = vrot.slane %v4093, 1
        %v4101 = vsel %vm316, %v4098, %v4100
        %4102 = vrot.lane.b32.xlu0 %v4099, 125
        %v4103 = vpop.permute.xlu0 %4102
        %4104 = vrot.lane.b32.xlu0 %v4101, 125
        %v4105 = vpop.permute.xlu0 %4104
        %v4108 = vadd.f32 %v4087, %v4103
        %v4109 = vadd.f32 %v4088, %v4105
        %s4110 = sld [smem:[#allocation3 + $0x485]]
        %v4111 = vstv %s4110
        %v4112 = vmul.f32 %v4111, %v226
        %v4113 = vmul.f32 %v4111, %v227
        %v4114 = vmul.f32 %v4111, %v228
        %v4118 = vrot.slane %v4112, 1
        %v4119 = vrot.slane %v4113, 1
        %v4120 = vsel %vm316, %v4118, %v4119
        %v4121 = vrot.slane %v4114, 1
        %v4122 = vsel %vm316, %v4119, %v4121
        %4123 = vrot.lane.b32.xlu0 %v4120, 124
        %v4124 = vpop.permute.xlu0 %4123
        %4125 = vrot.lane.b32.xlu0 %v4122, 124
        %v4126 = vpop.permute.xlu0 %4125
        %v4129 = vadd.f32 %v4108, %v4124
        %v4130 = vadd.f32 %v4109, %v4126
        %s4131 = sld [smem:[#allocation3 + $0x505]]
        %v4132 = vstv %s4131
        %v4133 = vmul.f32 %v4132, %v226
        %v4134 = vmul.f32 %v4132, %v227
        %v4135 = vmul.f32 %v4132, %v228
        %v4139 = vrot.slane %v4133, 2
        %v4140 = vrot.slane %v4134, 2
        %v4141 = vsel %vm418, %v4139, %v4140
        %v4142 = vrot.slane %v4135, 2
        %v4143 = vsel %vm418, %v4140, %v4142
        %v4146 = vadd.f32 %v4129, %v4141
        %v4147 = vadd.f32 %v4130, %v4143
        %s4148 = sld [smem:[#allocation3 + $0x585]]
        %v4149 = vstv %s4148
        %v4150 = vmul.f32 %v4149, %v226
        %v4151 = vmul.f32 %v4149, %v227
        %v4152 = vmul.f32 %v4149, %v228
        %v4156 = vrot.slane %v4150, 2
        %v4157 = vrot.slane %v4151, 2
        %v4158 = vsel %vm418, %v4156, %v4157
        %v4159 = vrot.slane %v4152, 2
        %v4160 = vsel %vm418, %v4157, %v4159
        %4161 = vrot.lane.b32.xlu0 %v4158, 127
        %v4162 = vpop.permute.xlu0 %4161
        %4163 = vrot.lane.b32.xlu0 %v4160, 127
        %v4164 = vpop.permute.xlu0 %4163
        %v4167 = vadd.f32 %v4146, %v4162
        %v4168 = vadd.f32 %v4147, %v4164
        %s4169 = sld [smem:[#allocation3 + $0x605]]
        %v4170 = vstv %s4169
        %v4171 = vmul.f32 %v4170, %v226
        %v4172 = vmul.f32 %v4170, %v227
        %v4173 = vmul.f32 %v4170, %v228
        %v4177 = vrot.slane %v4171, 2
        %v4178 = vrot.slane %v4172, 2
        %v4179 = vsel %vm418, %v4177, %v4178
        %v4180 = vrot.slane %v4173, 2
        %v4181 = vsel %vm418, %v4178, %v4180
        %4182 = vrot.lane.b32.xlu0 %v4179, 126
        %v4183 = vpop.permute.xlu0 %4182
        %4184 = vrot.lane.b32.xlu0 %v4181, 126
        %v4185 = vpop.permute.xlu0 %4184
        %v4188 = vadd.f32 %v4167, %v4183
        %v4189 = vadd.f32 %v4168, %v4185
        %s4190 = sld [smem:[#allocation3 + $0x685]]
        %v4191 = vstv %s4190
        %v4192 = vmul.f32 %v4191, %v226
        %v4193 = vmul.f32 %v4191, %v227
        %v4194 = vmul.f32 %v4191, %v228
        %v4198 = vrot.slane %v4192, 2
        %v4199 = vrot.slane %v4193, 2
        %v4200 = vsel %vm418, %v4198, %v4199
        %v4201 = vrot.slane %v4194, 2
        %v4202 = vsel %vm418, %v4199, %v4201
        %4203 = vrot.lane.b32.xlu0 %v4200, 125
        %v4204 = vpop.permute.xlu0 %4203
        %4205 = vrot.lane.b32.xlu0 %v4202, 125
        %v4206 = vpop.permute.xlu0 %4205
        %v4209 = vadd.f32 %v4188, %v4204
        %v4210 = vadd.f32 %v4189, %v4206
        %s4211 = sld [smem:[#allocation3 + $0x705]]
        %v4212 = vstv %s4211
        %v4213 = vmul.f32 %v4212, %v226
        %v4214 = vmul.f32 %v4212, %v227
        %v4215 = vmul.f32 %v4212, %v228
        %v4219 = vrot.slane %v4213, 2
        %v4220 = vrot.slane %v4214, 2
        %v4221 = vsel %vm418, %v4219, %v4220
        %v4222 = vrot.slane %v4215, 2
        %v4223 = vsel %vm418, %v4220, %v4222
        %4224 = vrot.lane.b32.xlu0 %v4221, 124
        %v4225 = vpop.permute.xlu0 %4224
        %4226 = vrot.lane.b32.xlu0 %v4223, 124
        %v4227 = vpop.permute.xlu0 %4226
        %v4230 = vadd.f32 %v4209, %v4225
        %v4231 = vadd.f32 %v4210, %v4227
        %s4232 = sld [smem:[#allocation3 + $0x785]]
        %v4233 = vstv %s4232
        %v4234 = vmul.f32 %v4233, %v226
        %v4235 = vmul.f32 %v4233, %v227
        %v4236 = vmul.f32 %v4233, %v228
        %v4240 = vrot.slane %v4234, 3
        %v4241 = vrot.slane %v4235, 3
        %v4242 = vsel %vm520, %v4240, %v4241
        %v4243 = vrot.slane %v4236, 3
        %v4244 = vsel %vm520, %v4241, %v4243
        %v4247 = vadd.f32 %v4230, %v4242
        %v4248 = vadd.f32 %v4231, %v4244
        %s4249 = sld [smem:[#allocation3 + $0x805]]
        %v4250 = vstv %s4249
        %v4251 = vmul.f32 %v4250, %v226
        %v4252 = vmul.f32 %v4250, %v227
        %v4253 = vmul.f32 %v4250, %v228
        %v4257 = vrot.slane %v4251, 3
        %v4258 = vrot.slane %v4252, 3
        %v4259 = vsel %vm520, %v4257, %v4258
        %v4260 = vrot.slane %v4253, 3
        %v4261 = vsel %vm520, %v4258, %v4260
        %4262 = vrot.lane.b32.xlu0 %v4259, 127
        %v4263 = vpop.permute.xlu0 %4262
        %4264 = vrot.lane.b32.xlu0 %v4261, 127
        %v4265 = vpop.permute.xlu0 %4264
        %v4268 = vadd.f32 %v4247, %v4263
        %v4269 = vadd.f32 %v4248, %v4265
        %s4270 = sld [smem:[#allocation3 + $0x885]]
        %v4271 = vstv %s4270
        %v4272 = vmul.f32 %v4271, %v226
        %v4273 = vmul.f32 %v4271, %v227
        %v4274 = vmul.f32 %v4271, %v228
        %v4278 = vrot.slane %v4272, 3
        %v4279 = vrot.slane %v4273, 3
        %v4280 = vsel %vm520, %v4278, %v4279
        %v4281 = vrot.slane %v4274, 3
        %v4282 = vsel %vm520, %v4279, %v4281
        %4283 = vrot.lane.b32.xlu0 %v4280, 126
        %v4284 = vpop.permute.xlu0 %4283
        %4285 = vrot.lane.b32.xlu0 %v4282, 126
        %v4286 = vpop.permute.xlu0 %4285
        %v4289 = vadd.f32 %v4268, %v4284
        %v4290 = vadd.f32 %v4269, %v4286
        %s4291 = sld [smem:[#allocation3 + $0x905]]
        %v4292 = vstv %s4291
        %v4293 = vmul.f32 %v4292, %v226
        %v4294 = vmul.f32 %v4292, %v227
        %v4295 = vmul.f32 %v4292, %v228
        %v4299 = vrot.slane %v4293, 3
        %v4300 = vrot.slane %v4294, 3
        %v4301 = vsel %vm520, %v4299, %v4300
        %v4302 = vrot.slane %v4295, 3
        %v4303 = vsel %vm520, %v4300, %v4302
        %4304 = vrot.lane.b32.xlu0 %v4301, 125
        %v4305 = vpop.permute.xlu0 %4304
        %4306 = vrot.lane.b32.xlu0 %v4303, 125
        %v4307 = vpop.permute.xlu0 %4306
        %v4310 = vadd.f32 %v4289, %v4305
        %v4311 = vadd.f32 %v4290, %v4307
        %s4312 = sld [smem:[#allocation3 + $0x985]]
        %v4313 = vstv %s4312
        %v4314 = vmul.f32 %v4313, %v226
        %v4315 = vmul.f32 %v4313, %v227
        %v4316 = vmul.f32 %v4313, %v228
        %v4320 = vrot.slane %v4314, 3
        %v4321 = vrot.slane %v4315, 3
        %v4322 = vsel %vm520, %v4320, %v4321
        %v4323 = vrot.slane %v4316, 3
        %v4324 = vsel %vm520, %v4321, %v4323
        %4325 = vrot.lane.b32.xlu0 %v4322, 124
        %v4326 = vpop.permute.xlu0 %4325
        %4327 = vrot.lane.b32.xlu0 %v4324, 124
        %v4328 = vpop.permute.xlu0 %4327
        %v4331 = vadd.f32 %v4310, %v4326
        %v4332 = vadd.f32 %v4311, %v4328
        %s4333 = sld [smem:[#allocation3 + $0xa05]]
        %v4334 = vstv %s4333
        %v4335 = vmul.f32 %v4334, %v226
        %v4336 = vmul.f32 %v4334, %v227
        %v4337 = vmul.f32 %v4334, %v228
        %v4341 = vrot.slane %v4335, 4
        %v4342 = vrot.slane %v4336, 4
        %v4343 = vsel %vm622, %v4341, %v4342
        %v4344 = vrot.slane %v4337, 4
        %v4345 = vsel %vm622, %v4342, %v4344
        %v4348 = vadd.f32 %v4331, %v4343
        %v4349 = vadd.f32 %v4332, %v4345
        %s4350 = sld [smem:[#allocation3 + $0xa85]]
        %v4351 = vstv %s4350
        %v4352 = vmul.f32 %v4351, %v226
        %v4353 = vmul.f32 %v4351, %v227
        %v4354 = vmul.f32 %v4351, %v228
        %v4358 = vrot.slane %v4352, 4
        %v4359 = vrot.slane %v4353, 4
        %v4360 = vsel %vm622, %v4358, %v4359
        %v4361 = vrot.slane %v4354, 4
        %v4362 = vsel %vm622, %v4359, %v4361
        %4363 = vrot.lane.b32.xlu0 %v4360, 127
        %v4364 = vpop.permute.xlu0 %4363
        %4365 = vrot.lane.b32.xlu0 %v4362, 127
        %v4366 = vpop.permute.xlu0 %4365
        %v4369 = vadd.f32 %v4348, %v4364
        %v4370 = vadd.f32 %v4349, %v4366
        %s4371 = sld [smem:[#allocation3 + $0xb05]]
        %v4372 = vstv %s4371
        %v4373 = vmul.f32 %v4372, %v226
        %v4374 = vmul.f32 %v4372, %v227
        %v4375 = vmul.f32 %v4372, %v228
        %v4379 = vrot.slane %v4373, 4
        %v4380 = vrot.slane %v4374, 4
        %v4381 = vsel %vm622, %v4379, %v4380
        %v4382 = vrot.slane %v4375, 4
        %v4383 = vsel %vm622, %v4380, %v4382
        %4384 = vrot.lane.b32.xlu0 %v4381, 126
        %v4385 = vpop.permute.xlu0 %4384
        %4386 = vrot.lane.b32.xlu0 %v4383, 126
        %v4387 = vpop.permute.xlu0 %4386
        %v4390 = vadd.f32 %v4369, %v4385
        %v4391 = vadd.f32 %v4370, %v4387
        %s4392 = sld [smem:[#allocation3 + $0xb85]]
        %v4393 = vstv %s4392
        %v4394 = vmul.f32 %v4393, %v226
        %v4395 = vmul.f32 %v4393, %v227
        %v4396 = vmul.f32 %v4393, %v228
        %v4400 = vrot.slane %v4394, 4
        %v4401 = vrot.slane %v4395, 4
        %v4402 = vsel %vm622, %v4400, %v4401
        %v4403 = vrot.slane %v4396, 4
        %v4404 = vsel %vm622, %v4401, %v4403
        %4405 = vrot.lane.b32.xlu0 %v4402, 125
        %v4406 = vpop.permute.xlu0 %4405
        %4407 = vrot.lane.b32.xlu0 %v4404, 125
        %v4408 = vpop.permute.xlu0 %4407
        %v4411 = vadd.f32 %v4390, %v4406
        %v4412 = vadd.f32 %v4391, %v4408
        %s4413 = sld [smem:[#allocation3 + $0xc05]]
        %v4414 = vstv %s4413
        %v4415 = vmul.f32 %v4414, %v226
        %v4416 = vmul.f32 %v4414, %v227
        %v4417 = vmul.f32 %v4414, %v228
        %v4421 = vrot.slane %v4415, 4
        %v4422 = vrot.slane %v4416, 4
        %v4423 = vsel %vm622, %v4421, %v4422
        %v4424 = vrot.slane %v4417, 4
        %v4425 = vsel %vm622, %v4422, %v4424
        %4426 = vrot.lane.b32.xlu0 %v4423, 124
        %v4427 = vpop.permute.xlu0 %4426
        %4428 = vrot.lane.b32.xlu0 %v4425, 124
        %v4429 = vpop.permute.xlu0 %4428
        %v4432 = vadd.f32 %v4411, %v4427
        %v4433 = vadd.f32 %v4412, %v4429
        %s4434 = sld [smem:[#allocation5 + $0x5]]
        %v4435 = vstv %s4434
        %v4436 = vadd.f32 %v4432, %v4435
        %v4437 = vadd.f32 %v4433, %v4435
        %v4440 = vcombine.high %v4436, %v4436
        %v4442 = vunpack.c.l.s4 1983009808
        %v4443 = vunpack.c.0.s8 %v4442
        %v4444 = vlaneseq
        %v4445 = vshrl.u32 %v4444, 7
        %v4446 = vsub.s32 %v4443, %v4445
        %v4447 = vrot.slane %v4436, %v4446
        %v4449 = vunpack.c.l.s4 1983009808
        %v4450 = vunpack.c.0.s8 %v4449
        %v4451 = vlaneseq
        %v4452 = vshrl.u32 %v4451, 7
        %v4453 = vsub.s32 %v4450, %v4452
        %v4454 = vrot.slane %v4440, %v4453
        %v4455 = vcombine.high %v4447, %v4447
        %v4456 = vcombine.high %v4454, %v4454
        %v4457 = vcombine.high %v4437, %v4437
        %v4459 = vunpack.c.l.s4 1983009808
        %v4460 = vunpack.c.0.s8 %v4459
        %v4461 = vlaneseq
        %v4462 = vshrl.u32 %v4461, 7
        %v4463 = vsub.s32 %v4460, %v4462
        %v4464 = vrot.slane %v4437, %v4463
        %v4466 = vunpack.c.l.s4 1983009808
        %v4467 = vunpack.c.0.s8 %v4466
        %v4468 = vlaneseq
        %v4469 = vshrl.u32 %v4468, 7
        %v4470 = vsub.s32 %v4467, %v4469
        %v4471 = vrot.slane %v4457, %v4470
        %v4472 = vcombine.high %v4464, %v4464
        %v4473 = vcombine.high %v4471, %v4471
        %v4482 = vrot.slane %v4447, 7
        %v4483 = vrot.slane %v4482, 2
        %v4484 = vrot.slane %v4455, 7
        %v4485 = vrot.slane %v4484, 2
        %v4486 = vrot.slane %v4454, 7
        %v4487 = vrot.slane %v4486, 2
        %v4488 = vrot.slane %v4456, 7
        %v4489 = vrot.slane %v4488, 2
        %v4490 = vrot.slane %v4464, 7
        %v4491 = vrot.slane %v4490, 2
        %v4492 = vrot.slane %v4472, 7
        %v4493 = vrot.slane %v4492, 2
        %v4494 = vrot.slane %v4471, 7
        %v4495 = vrot.slane %v4494, 2
        %v4496 = vrot.slane %v4473, 7
        %v4497 = vrot.slane %v4496, 2
        %v4506 = vmax.f32 %v4447, %v4483
        %v4507 = vmax.f32 %v4455, %v4485
        %v4508 = vmax.f32 %v4454, %v4487
        %v4509 = vmax.f32 %v4456, %v4489
        %v4510 = vmax.f32 %v4464, %v4491
        %v4511 = vmax.f32 %v4472, %v4493
        %v4512 = vmax.f32 %v4471, %v4495
        %v4513 = vmax.f32 %v4473, %v4497
        %v4522 = vlaneseq
        %v4523 = vshrl.u32 %v4522, 7
        %v4524 = vsub.s32 0, %v4523
        %v4525 = vrot.slane %v4506, %v4524
        %v4526 = vlaneseq
        %v4527 = vshrl.u32 %v4526, 7
        %v4528 = vsub.s32 0, %v4527
        %v4529 = vrot.slane %v4507, %v4528
        %v4530 = vlaneseq
        %v4531 = vshrl.u32 %v4530, 7
        %v4532 = vsub.s32 0, %v4531
        %v4533 = vrot.slane %v4508, %v4532
        %v4534 = vlaneseq
        %v4535 = vshrl.u32 %v4534, 7
        %v4536 = vsub.s32 0, %v4535
        %v4537 = vrot.slane %v4509, %v4536
        %v4538 = vlaneseq
        %v4539 = vshrl.u32 %v4538, 7
        %v4540 = vsub.s32 0, %v4539
        %v4541 = vrot.slane %v4510, %v4540
        %v4542 = vlaneseq
        %v4543 = vshrl.u32 %v4542, 7
        %v4544 = vsub.s32 0, %v4543
        %v4545 = vrot.slane %v4511, %v4544
        %v4546 = vlaneseq
        %v4547 = vshrl.u32 %v4546, 7
        %v4548 = vsub.s32 0, %v4547
        %v4549 = vrot.slane %v4512, %v4548
        %v4550 = vlaneseq
        %v4551 = vshrl.u32 %v4550, 7
        %v4552 = vsub.s32 0, %v4551
        %v4553 = vrot.slane %v4513, %v4552
        %v4554 = vsel %vm836, %v4529, %v4525
        %v4555 = vsel %vm838, %v4533, %v4554
        %v4556 = vsel %vm840, %v4537, %v4555
        %v4557 = vsel %vm842, %v4541, %v4556
        %v4558 = vsel %vm844, %v4545, %v4557
        %v4559 = vsel %vm846, %v4549, %v4558
        %v4560 = vsel %vm848, %v4553, %v4559
        %v4561 = vsel %vm850, %v4560, 0
        %4563 = vmatprep.subr.mxu0 0.0
        %4564 = vmatpush1.msra.mxu0 0.0
        %4565 = vmatprep.subr.mxu0 0.0
        %4566 = vmatpush1.msra.mxu0 0.0
        %4567 = vmatprep.subr.mxu0 0.0
        %4568 = vmatpush1.msra.mxu0 0.0
        %4569 = vmatprep.subr.mxu0 0.0
        %4570 = vmatpush1.msra.mxu0 0.0
        %4571 = vmatprep.subr.mxu0 0.0
        %4572 = vmatpush1.msra.mxu0 0.0
        %4573 = vmatprep.subr.mxu0 0.0
        %4574 = vmatpush1.msra.mxu0 0.0
        %4575 = vmatprep.subr.mxu0 0.0
        %4576 = vmatpush1.msra.mxu0 0.0
        %4577 = vmatprep.subr.mxu0 0.0
        %4578 = vmatpush1.msra.mxu0 0.0
        %4579 = vmatprep.subr.mxu0 0.0
        %4580 = vmatpush1.msra.mxu0 0.0
        %4581 = vmatprep.subr.mxu0 0.0
        %4582 = vmatpush1.msra.mxu0 0.0
        %4583 = vmatprep.subr.mxu0 0.0
        %4584 = vmatpush1.msra.mxu0 0.0
        %4585 = vmatprep.subr.mxu0 0.0
        %4586 = vmatpush1.msra.mxu0 0.0
        %4587 = vmatprep.subr.mxu0 0.0
        %4588 = vmatpush1.msra.mxu0 0.0
        %4589 = vmatprep.subr.mxu0 0.0
        %4590 = vmatpush1.msra.mxu0 0.0
        %4591 = vmatprep.subr.mxu0 0.0
        %4592 = vmatpush1.msra.mxu0 %v240
        %4593 = vmatprep.subr.mxu0 0.0
        %4594 = vmatpush1.msra.mxu0 %v239
        %4595 = vmatprep.subr.mxu0 0.0
        %4596 = vmatpush2.msra.mxu0 0.0
        %4597 = vmatprep.subr.mxu0 0.0
        %4598 = vmatpush2.msra.mxu0 0.0
        %4599 = vmatprep.subr.mxu0 0.0
        %4600 = vmatpush2.msra.mxu0 0.0
        %4601 = vmatprep.subr.mxu0 0.0
        %4602 = vmatpush2.msra.mxu0 0.0
        %4603 = vmatprep.subr.mxu0 0.0
        %4604 = vmatpush2.msra.mxu0 0.0
        %4605 = vmatprep.subr.mxu0 0.0
        %4606 = vmatpush2.msra.mxu0 0.0
        %4607 = vmatprep.subr.mxu0 0.0
        %4608 = vmatpush2.msra.mxu0 0.0
        %4609 = vmatprep.subr.mxu0 0.0
        %4610 = vmatpush2.msra.mxu0 0.0
        %4611 = vmatprep.subr.mxu0 0.0
        %4612 = vmatpush2.msra.mxu0 0.0
        %4613 = vmatprep.subr.mxu0 0.0
        %4614 = vmatpush2.msra.mxu0 0.0
        %4615 = vmatprep.subr.mxu0 0.0
        %4616 = vmatpush2.msra.mxu0 0.0
        %4617 = vmatprep.subr.mxu0 0.0
        %4618 = vmatpush2.msra.mxu0 0.0
        %4619 = vmatprep.subr.mxu0 0.0
        %4620 = vmatpush2.msra.mxu0 0.0
        %4621 = vmatprep.subr.mxu0 0.0
        %4622 = vmatpush2.msra.mxu0 0.0
        %4623 = vmatprep.subr.mxu0 0.0
        %4624 = vmatpush2.msra.mxu0 0.0
        %4625 = vmatprep.subr.mxu0 0.0
        %4626 = vmatpush2.msra.mxu0 0.0
        %4627 = vmatprep.mubr.f32.mxu0 0.0
        %4628 = vmatmul.mubr.f32.gmra.mxu0 %v4561
        %v4629 = vpop.f32.mrf.mxu0
        %v4630 = vadd.f32 0.0, %v4629
        %v4631 = vpop.f32.mrf.mxu0
        %4632 = vdwg.mxu0
        %4633 = vmatprep.subr.mxu0 0.0
        %4634 = vmatpush1.msra.mxu0 0.0
        %4635 = vmatprep.subr.mxu0 0.0
        %4636 = vmatpush1.msra.mxu0 0.0
        %4637 = vmatprep.subr.mxu0 0.0
        %4638 = vmatpush1.msra.mxu0 0.0
        %4639 = vmatprep.subr.mxu0 0.0
        %4640 = vmatpush1.msra.mxu0 0.0
        %4641 = vmatprep.subr.mxu0 0.0
        %4642 = vmatpush1.msra.mxu0 0.0
        %4643 = vmatprep.subr.mxu0 0.0
        %4644 = vmatpush1.msra.mxu0 0.0
        %4645 = vmatprep.subr.mxu0 0.0
        %4646 = vmatpush1.msra.mxu0 0.0
        %4647 = vmatprep.subr.mxu0 0.0
        %4648 = vmatpush1.msra.mxu0 0.0
        %4649 = vmatprep.subr.mxu0 0.0
        %4650 = vmatpush1.msra.mxu0 0.0
        %4651 = vmatprep.subr.mxu0 0.0
        %4652 = vmatpush1.msra.mxu0 0.0
        %4653 = vmatprep.subr.mxu0 0.0
        %4654 = vmatpush1.msra.mxu0 0.0
        %4655 = vmatprep.subr.mxu0 0.0
        %4656 = vmatpush1.msra.mxu0 0.0
        %4657 = vmatprep.subr.mxu0 0.0
        %4658 = vmatpush1.msra.mxu0 0.0
        %4659 = vmatprep.subr.mxu0 0.0
        %4660 = vmatpush1.msra.mxu0 0.0
        %4661 = vmatprep.subr.mxu0 0.0
        %4662 = vmatpush1.msra.mxu0 %v247
        %4663 = vmatprep.subr.mxu0 0.0
        %4664 = vmatpush1.msra.mxu0 %v246
        %4665 = vmatprep.subr.mxu0 0.0
        %4666 = vmatpush2.msra.mxu0 0.0
        %4667 = vmatprep.subr.mxu0 0.0
        %4668 = vmatpush2.msra.mxu0 0.0
        %4669 = vmatprep.subr.mxu0 0.0
        %4670 = vmatpush2.msra.mxu0 0.0
        %4671 = vmatprep.subr.mxu0 0.0
        %4672 = vmatpush2.msra.mxu0 0.0
        %4673 = vmatprep.subr.mxu0 0.0
        %4674 = vmatpush2.msra.mxu0 0.0
        %4675 = vmatprep.subr.mxu0 0.0
        %4676 = vmatpush2.msra.mxu0 0.0
        %4677 = vmatprep.subr.mxu0 0.0
        %4678 = vmatpush2.msra.mxu0 0.0
        %4679 = vmatprep.subr.mxu0 0.0
        %4680 = vmatpush2.msra.mxu0 0.0
        %4681 = vmatprep.subr.mxu0 0.0
        %4682 = vmatpush2.msra.mxu0 0.0
        %4683 = vmatprep.subr.mxu0 0.0
        %4684 = vmatpush2.msra.mxu0 0.0
        %4685 = vmatprep.subr.mxu0 0.0
        %4686 = vmatpush2.msra.mxu0 0.0
        %4687 = vmatprep.subr.mxu0 0.0
        %4688 = vmatpush2.msra.mxu0 0.0
        %4689 = vmatprep.subr.mxu0 0.0
        %4690 = vmatpush2.msra.mxu0 0.0
        %4691 = vmatprep.subr.mxu0 0.0
        %4692 = vmatpush2.msra.mxu0 0.0
        %4693 = vmatprep.subr.mxu0 0.0
        %4694 = vmatpush2.msra.mxu0 0.0
        %4695 = vmatprep.subr.mxu0 0.0
        %4696 = vmatpush2.msra.mxu0 0.0
        %4697 = vmatprep.mubr.f32.mxu0 0.0
        %4698 = vmatmul.mubr.f32.gmra.mxu0 %v4561
        %v4699 = vpop.f32.mrf.mxu0
        %v4700 = vadd.f32 0.0, %v4699
        %v4701 = vpop.f32.mrf.mxu0
        %4702 = vdwg.mxu0
        %v4703 = vmax.f32 %v4630, %v4700
        %v4704 = vxor.u32 %v4703, 2147483648
        %v4705 = vmul.f32 %v4704, 1.442695
        %v4706 = vpow.pop %v4705
        %v4707 = vadd.f32 %v4706, 1.0
        %v4708 = vrcp.pop %v4707
        %v4709 = vmul.f32 1.0, %v4708
        %s4710 = scalar_lea.vmem %s199, 40
        %4711 = vst.msk [vmem:[%s4710] sm:$0xff] %vm1000, %v4709
        %p4712 = scmp.lt.s32.totalorder %s16, 1
        %s4713 = scalar_select %p4712, %s16, 1
        %s4714 = smul.addr %s4713, 6
        %s4715 = smul.addr %s4714, 8
        %s4716 = scalar_lea.vmem %s3, %s4715
        // Predicated region
        $region41: #{forward.5} parent=31 // pred_check
          %p4717 = pneg %p102
        $region42: #{forward.5} parent=31 // pred_check_branch
          %4719 = sbr.rel (%p4717) target = $region44
        $region43: #{forward.5} parent=31 // pred_region
          _
        $region44: #{forward.5} parent=31 // pred_fallthru
          _
      $region32: #{forward.5} parent=5 // pred_fallthru
        _
      %p4720 = scmp.le.s32.totalorder 2, %s11
      // Predicated region
      $region45: #{forward.5} parent=5 // pred_check
        %p4721 = pneg %p4720
      $region46: #{forward.5} parent=5 // pred_check_branch
        %4723 = sbr.rel (%p4721) target = $region48
      $region47: #{forward.5} parent=5 // pred_region
        %s4724 = ssub.s32 %s11, 2
        // Predicated region
        $region49: #{forward.5} parent=47 // pred_check
          %p4725 = pneg %p108
        $region50: #{forward.5} parent=47 // pred_check_branch
          %4727 = sbr.rel (%p4725) target = $region52
        $region51: #{forward.5} parent=47 // pred_region
          %p4728 = scmp.lt.s32.totalorder %s17, 1
          %s4729 = scalar_select %p4728, %s17, 1
          %s4730 = smul.addr %s4729, 6
          %s4731 = smul.addr %s4730, 8
          %s4732 = scalar_lea.vmem %s3, %s4731
        $region52: #{forward.5} parent=47 // pred_fallthru
          _
      $region48: #{forward.5} parent=5 // pred_fallthru
        _
    $region6: #{forward.5} parent=1 // loop_footer
      %s15 = sadd.s32 1, %s11
    $region7: #{forward.5} parent=1 // loop_footer_branch
      %10 = sbr.rel target = $region3
    $region8: #{forward.5} parent=1 // loop_exit
      _
    %4733 = vsyncpa [#allocation4], 1
    %s4734 = scalar_lea.sflag [#allocation4], 1
    %4735 = vsyncpa %s4734, 1
    %4736 = vsyncpa [#allocation6], 1

</llo_original>
